<compile_context>
chip_gen: v5e
topology: v5e:2x2
jax: 0.10.0
libtpu: 0.0.40
codegen_flags: <defaults>
</compile_context>

<pallas_src>
import functools

import jax
import jax.numpy as jnp
from jax import lax
from jax.experimental import pallas as pl
from jax.experimental.pallas import tpu as pltpu


# ----------------------------------------------------------------------------
# In-kernel helpers
# ----------------------------------------------------------------------------
def _fill_padded(xp_ref, src, H, W, C, P):
    """Zero the P-wide halo of the padded f32 VMEM scratch and write `src`
    into the interior.  (Scratch stays f32 so interior/halo stores land on
    32-bit word boundaries; operands are cast to the matmul dtype per tap.)"""
    Hp, Wp = H + 2 * P, W + 2 * P
    f32 = jnp.float32
    xp_ref[0:P, :, :] = jnp.zeros((P, Wp, C), f32)
    xp_ref[H + P:Hp, :, :] = jnp.zeros((Hp - H - P, Wp, C), f32)
    xp_ref[:, 0:P, :] = jnp.zeros((Hp, P, C), f32)
    xp_ref[:, W + P:Wp, :] = jnp.zeros((Hp, Wp - W - P, C), f32)
    xp_ref[P:P + H, P:P + W, :] = src.astype(f32)


def _lateral_1x1(x_ref, w_ref, b_ref, cdt):
    """1x1 lateral projection of one NHWC image block (single MXU matmul)."""
    _, Hi, Wi, Ci = x_ref.shape
    F = w_ref.shape[-1]
    x = x_ref[0].reshape(Hi * Wi, Ci).astype(cdt)
    y = jnp.dot(x, w_ref[...], preferred_element_type=jnp.float32) + b_ref[...]
    return y.reshape(Hi, Wi, F)                       # f32


def _upsample_nearest(y, fy, fx):
    """Integer-factor nearest upsample.  The fy (row) repeat is a leading-dim
    broadcast (cheap); only the fx repeat needs a sublane interleave."""
    Hi, Wi, C = y.shape
    if fy > 1:
        y = jnp.broadcast_to(y[:, None, :, :], (Hi, fy, Wi, C)).reshape(Hi * fy, Wi, C)
    if fx > 1:
        y = jnp.broadcast_to(y[:, :, None, :], (Hi * fy, Wi, fx, C)).reshape(Hi * fy, Wi * fx, C)
    return y


def _conv3x3_s1(xp_ref, w_ref, b_ref, H, W, Cin, Cout, K, cdt):
    """'Same' KxK stride-1 conv as K*K per-tap MXU matmuls (contraction=Cin),
    f32 accumulation; shifted windows read straight from the padded scratch."""
    acc = jnp.zeros((H * W, Cout), jnp.float32) + b_ref[...]
    for dy in range(K):
        for dx in range(K):
            patch = xp_ref[dy:dy + H, dx:dx + W, :].reshape(H * W, Cin)
            acc = acc + jnp.dot(patch.astype(cdt), w_ref[dy * K + dx],
                                preferred_element_type=jnp.float32)
    return acc                                        # (H*W, Cout) f32


def _conv3x3_s2(xp_ref, w_ref, b_ref, H, W, Cin, Cout, K, cdt):
    """KxK stride-2 pad-1 conv computing only the stride-2 output positions:
    the padded map is split once into its 4 (row, col) parity sub-grids so
    each tap contracts a contiguous (Ho, Wo) window."""
    Ho, Wo = H // 2, W // 2
    Hp, Wp, _ = xp_ref.shape                          # even (H, W even, P = 1)
    xp = xp_ref[...]                                  # (Hp, Wp, Cin) f32
    rows = [xp.reshape(Hp // 2, 2, Wp, Cin)[:, p] for p in (0, 1)]
    par = [[r.reshape(Hp // 2, Wp // 2, 2, Cin)[:, :, p, :] for p in (0, 1)]
           for r in rows]
    acc = jnp.zeros((Ho * Wo, Cout), jnp.float32) + b_ref[...]
    for dy in range(K):
        for dx in range(K):
            sub = par[dy % 2][dx % 2]
            patch = sub[dy // 2:dy // 2 + Ho, dx // 2:dx // 2 + Wo, :]
            acc = acc + jnp.dot(patch.reshape(Ho * Wo, Cin).astype(cdt),
                                w_ref[dy * K + dx],
                                preferred_element_type=jnp.float32)
    return acc                                        # (Ho*Wo, Cout) f32


# ----------------------------------------------------------------------------
# Kernel A: fused top-down chain  (p5_out, p4_out, p3_out)
# ----------------------------------------------------------------------------
def _fpn_topdown_kernel(c3_ref, c4_ref, c5_ref,
                        w13_ref, b13_ref, w14_ref, b14_ref, w15_ref, b15_ref,
                        w33_ref, b33_ref, w34_ref, b34_ref, w35_ref, b35_ref,
                        p3_ref, p4_ref, p5_ref,
                        xp3_ref, xp4_ref, xp5_ref, *, F, K, P, cdt):
    _, H3, W3, _ = c3_ref.shape
    _, H4, W4, _ = c4_ref.shape
    _, H5, W5, _ = c5_ref.shape

    # ---- P5: lateral 1x1 + 3x3 (lateral computed exactly once) -------------
    p5_in = _lateral_1x1(c5_ref, w15_ref, b15_ref, cdt)
    _fill_padded(xp5_ref, p5_in, H5, W5, F, P)
    acc5 = _conv3x3_s1(xp5_ref, w35_ref, b35_ref, H5, W5, F, F, K, cdt)
    p5_ref[0] = acc5.astype(p5_ref.dtype)

    # ---- P4: reuse p5_in (upsample + add entirely in VMEM) -----------------
    p4_in = _lateral_1x1(c4_ref, w14_ref, b14_ref, cdt)
    p4_sum = _upsample_nearest(p5_in, H4 // H5, W4 // W5) + p4_in
    _fill_padded(xp4_ref, p4_sum, H4, W4, F, P)
    acc4 = _conv3x3_s1(xp4_ref, w34_ref, b34_ref, H4, W4, F, F, K, cdt)
    p4_ref[0] = acc4.astype(p4_ref.dtype)

    # ---- P3: reuse p4_sum ----------------------------------------------------
    p3_in = _lateral_1x1(c3_ref, w13_ref, b13_ref, cdt)
    p3_sum = _upsample_nearest(p4_sum, H3 // H4, W3 // W4) + p3_in
    _fill_padded(xp3_ref, p3_sum, H3, W3, F, P)
    acc3 = _conv3x3_s1(xp3_ref, w33_ref, b33_ref, H3, W3, F, F, K, cdt)
    p3_ref[0] = acc3.astype(p3_ref.dtype)


# ----------------------------------------------------------------------------
# Kernel B: fused p6/p7 head (p6 kept in VMEM, no HBM round trip before p7)
# ----------------------------------------------------------------------------
def _fpn_p6p7_kernel(c5_ref, w6_ref, b6_ref, w7_ref, b7_ref,
                     p6_ref, p7_ref, xp6_ref, xp7_ref, *, F, K, P, cdt):
    _, H5, W5, C5 = c5_ref.shape
    H6, W6 = H5 // 2, W5 // 2

    # P6 = 3x3 stride-2 conv on raw c5 (pre-ReLU result is the module output)
    _fill_padded(xp6_ref, c5_ref[0], H5, W5, C5, P)
    acc6 = _conv3x3_s2(xp6_ref, w6_ref, b6_ref, H5, W5, C5, F, K, cdt)
    p6_ref[0] = acc6.astype(p6_ref.dtype)

    # P7 = 3x3 stride-2 conv on relu(P6)
    p6_relu = jnp.maximum(acc6, 0.0).reshape(H6, W6, F)
    _fill_padded(xp7_ref, p6_relu, H6, W6, F, P)
    acc7 = _conv3x3_s2(xp7_ref, w7_ref, b7_ref, H6, W6, F, F, K, cdt)
    p7_ref[0] = acc7.astype(p7_ref.dtype)


# ----------------------------------------------------------------------------
# Wrappers
# ----------------------------------------------------------------------------
def _prep_lateral(p, cdt):
    w, b = p                                          # w: (1,1,Ci,F) HWIO
    return w.reshape(w.shape[2], w.shape[3]).astype(cdt), b.astype(jnp.float32)


def _prep_conv3(p, cdt):
    w, b = p                                          # w: (K,K,Cin,F) HWIO
    K, _, Ci, Co = w.shape
    return w.reshape(K * K, Ci, Co).astype(cdt), b.astype(jnp.float32)


def _full_spec(a):
    return pl.BlockSpec(a.shape, lambda n: (0,) * a.ndim)


def _out_shape_spec(N, Ho, Wo, Cout, dtype):
    M = Ho * Wo
    return (jax.ShapeDtypeStruct((N, M, Cout), dtype),
            pl.BlockSpec((1, M, Cout), lambda n: (n, 0, 0)))


def fpn_topdown(params, c3, c4, c5, compute_dtype):
    N, H3, W3, C3 = c3.shape
    _, H4, W4, C4 = c4.shape
    _, H5, W5, C5 = c5.shape
    K, P = 3, 1
    cdt = compute_dtype
    F = params["p5_in"][0].shape[-1]
    assert H4 % H5 == 0 and W4 % W5 == 0 and H3 % H4 == 0 and W3 % W4 == 0, \
        "nearest upsample requires integer scale factors between pyramid levels"
    # TODO(synk): non-integer interpolate factors would need an in-kernel gather.

    w13, b13 = _prep_lateral(params["p3_in"], cdt)
    w14, b14 = _prep_lateral(params["p4_in"], cdt)
    w15, b15 = _prep_lateral(params["p5_in"], cdt)
    w33, b33 = _prep_conv3(params["p3_out"], cdt)
    w34, b34 = _prep_conv3(params["p4_out"], cdt)
    w35, b35 = _prep_conv3(params["p5_out"], cdt)

    args = [c3, c4, c5, w13, b13, w14, b14, w15, b15,
            w33, b33, w34, b34, w35, b35]
    in_specs = [pl.BlockSpec((1, H3, W3, C3), lambda n: (n, 0, 0, 0)),
                pl.BlockSpec((1, H4, W4, C4), lambda n: (n, 0, 0, 0)),
                pl.BlockSpec((1, H5, W5, C5), lambda n: (n, 0, 0, 0))]
    in_specs += [_full_spec(a) for a in args[3:]]

    o3, s3 = _out_shape_spec(N, H3, W3, F, c3.dtype)
    o4, s4 = _out_shape_spec(N, H4, W4, F, c3.dtype)
    o5, s5 = _out_shape_spec(N, H5, W5, F, c3.dtype)

    scratch = [pltpu.VMEM((H3 + 2 * P, W3 + 2 * P, F), jnp.float32),
               pltpu.VMEM((H4 + 2 * P, W4 + 2 * P, F), jnp.float32),
               pltpu.VMEM((H5 + 2 * P, W5 + 2 * P, F), jnp.float32)]

    flops = (2 * N * (H3 * W3 * C3 + H4 * W4 * C4 + H5 * W5 * C5) * F
             + 2 * N * K * K * (H3 * W3 + H4 * W4 + H5 * W5) * F * F)
    bytes_accessed = (sum(int(a.size) * a.dtype.itemsize for a in args)
                      + N * (H3 * W3 + H4 * W4 + H5 * W5) * F * c3.dtype.itemsize)

    p3f, p4f, p5f = pl.pallas_call(
        functools.partial(_fpn_topdown_kernel, F=F, K=K, P=P, cdt=cdt),
        out_shape=(o3, o4, o5),
        grid=(N,),
        in_specs=in_specs,
        out_specs=(s3, s4, s5),
        scratch_shapes=scratch,
        compiler_params=pltpu.CompilerParams(
            dimension_semantics=("parallel",),          # N>=2 -> both v7x TCs
            vmem_limit_bytes=32 * 1024 * 1024),
        cost_estimate=pl.CostEstimate(flops=int(flops), transcendentals=0,
                                      bytes_accessed=int(bytes_accessed)),
    )(*args)
    return (p3f.reshape(N, H3, W3, F),
            p4f.reshape(N, H4, W4, F),
            p5f.reshape(N, H5, W5, F))


def fpn_p6p7(params, c5, compute_dtype):
    N, H5, W5, C5 = c5.shape
    K, P = 3, 1
    cdt = compute_dtype
    F = params["p6_out"][0].shape[-1]
    assert (H5 % 2 == 0 and W5 % 2 == 0
            and (H5 // 2) % 2 == 0 and (W5 // 2) % 2 == 0), \
        "stride-2 parity path assumes even spatial dims at both levels"
    # TODO(synk): odd-size stride-2 levels need ceil output sizes + asymmetric halo.
    H6, W6 = H5 // 2, W5 // 2
    H7, W7 = H6 // 2, W6 // 2

    w6, b6 = _prep_conv3(params["p6_out"], cdt)
    w7, b7 = _prep_conv3(params["p7_out"], cdt)
    args = [c5, w6, b6, w7, b7]
    in_specs = [pl.BlockSpec((1, H5, W5, C5), lambda n: (n, 0, 0, 0)),
                _full_spec(w6), _full_spec(b6), _full_spec(w7), _full_spec(b7)]

    o6, s6 = _out_shape_spec(N, H6, W6, F, c5.dtype)
    o7, s7 = _out_shape_spec(N, H7, W7, F, c5.dtype)
    scratch = [pltpu.VMEM((H5 + 2 * P, W5 + 2 * P, C5), jnp.float32),
               pltpu.VMEM((H6 + 2 * P, W6 + 2 * P, F), jnp.float32)]

    flops = 2 * N * K * K * (H6 * W6 * C5 * F + H7 * W7 * F * F)
    bytes_accessed = (sum(int(a.size) * a.dtype.itemsize for a in args)
                      + N * (H6 * W6 + H7 * W7) * F * c5.dtype.itemsize)

    p6f, p7f = pl.pallas_call(
        functools.partial(_fpn_p6p7_kernel, F=F, K=K, P=P, cdt=cdt),
        out_shape=(o6, o7),
        grid=(N,),
        in_specs=in_specs,
        out_specs=(s6, s7),
        scratch_shapes=scratch,
        compiler_params=pltpu.CompilerParams(
            dimension_semantics=("parallel",),
            vmem_limit_bytes=32 * 1024 * 1024),
        cost_estimate=pl.CostEstimate(flops=int(flops), transcendentals=0,
                                      bytes_accessed=int(bytes_accessed)),
    )(*args)
    return p6f.reshape(N, H6, W6, F), p7f.reshape(N, H7, W7, F)


@functools.partial(jax.jit, static_argnames="compute_dtype")
def fpn_forward(params, c3, c4, c5, compute_dtype=jnp.bfloat16):
    """FCOS FPN forward (NHWC): two fused Pallas calls instead of one per conv."""
    p3, p4, p5 = fpn_topdown(params, c3, c4, c5, compute_dtype)
    p6, p7 = fpn_p6p7(params, c5, compute_dtype)
    return {3: p3, 4: p4, 5: p5, 6: p6, 7: p7}


# ----------------------------------------------------------------------------
# Pure-JAX reference (for verification) — follows the module structure.
# ----------------------------------------------------------------------------
def _conv_ref(x, w, b, stride, padding):
    y = lax.conv_general_dilated(
        x, w, window_strides=(stride, stride),
        padding=[(padding, padding), (padding, padding)],
        dimension_numbers=("NHWC", "HWIO", "NHWC"))
    return y + b[0]


def _ups_add_ref(x, y):
    N, h, w, C = x.shape
    _, H, W, _ = y.shape
    fy, fx = H // h, W // w
    xb = jnp.broadcast_to(x[:, :, None, :, None, :], (N, h, fy, w, fx, C))
    return xb.reshape(N, H, W, C) + y


def fpn_ref(params, c3, c4, c5):
    p5_in = _conv_ref(c5, *params["p5_in"], 1, 0)
    p4_in = _conv_ref(c4, *params["p4_in"], 1, 0)
    p3_in = _conv_ref(c3, *params["p3_in"], 1, 0)
    p5_out = _conv_ref(p5_in, *params["p5_out"], 1, 1)
    p4_sum = _ups_add_ref(p5_in, p4_in)
    p4_out = _conv_ref(p4_sum, *params["p4_out"], 1, 1)
    p3_sum = _ups_add_ref(p4_sum, p3_in)
    p3_out = _conv_ref(p3_sum, *params["p3_out"], 1, 1)
    p6_out = _conv_ref(c5, *params["p6_out"], 2, 1)
    p7_out = _conv_ref(jnp.maximum(p6_out, 0.0), *params["p7_out"], 2, 1)
    return {3: p3_out, 4: p4_out, 5: p5_out, 6: p6_out, 7: p7_out}


# ----------------------------------------------------------------------------
# Parameter init (deterministic, PyTorch-Conv2d-style uniform bounds)
# ----------------------------------------------------------------------------
def init_conv(key, k, cin, cout):
    wkey, bkey = jax.random.split(key)
    bound = 1.0 / (cin * k * k) ** 0.5
    w = jax.random.uniform(wkey, (k, k, cin, cout), jnp.float32, -bound, bound)
    b = jax.random.uniform(bkey, (1, cout), jnp.float32, -bound, bound)
    return w, b


if __name__ == "__main__":
    key = jax.random.PRNGKey(0)

    # small shapes: batch=2, backbone channels (c3,c4,c5)=(4,6,8), filter=8,
    # spatial 16/8/4 (exact 2x pyramid).
    N = 2
    c3_size, c4_size, c5_size = 4, 6, 8
    filter_size = 8

    keys = jax.random.split(key, 11)
    params = {
        "p3_in": init_conv(keys[0], 1, c3_size, filter_size),
        "p4_in": init_conv(keys[1], 1, c4_size, filter_size),
        "p5_in": init_conv(keys[2], 1, c5_size, filter_size),
        "p3_out": init_conv(keys[3], 3, filter_size, filter_size),
        "p4_out": init_conv(keys[4], 3, filter_size, filter_size),
        "p5_out": init_conv(keys[5], 3, filter_size, filter_size),
        "p6_out": init_conv(keys[6], 3, c5_size, filter_size),
        "p7_out": init_conv(keys[7], 3, filter_size, filter_size),
    }

    # inputs built in PyTorch NCHW convention, then transposed to NHWC
    c3_nchw = jax.random.normal(keys[8], (N, c3_size, 16, 16), jnp.float32)
    c4_nchw = jax.random.normal(keys[9], (N, c4_size, 8, 8), jnp.float32)
    c5_nchw = jax.random.normal(keys[10], (N, c5_size, 4, 4), jnp.float32)
    c3 = jnp.transpose(c3_nchw, (0, 2, 3, 1))
    c4 = jnp.transpose(c4_nchw, (0, 2, 3, 1))
    c5 = jnp.transpose(c5_nchw, (0, 2, 3, 1))

    refs = fpn_ref(params, c3, c4, c5)

    # float32 compute path (module semantics; tolerance covers the MXU's
    # default bf16 operand rounding used by both the kernel and XLA's conv).
    outs = fpn_forward(params, c3, c4, c5, compute_dtype=jnp.float32)
    jax.block_until_ready(outs)
    for lvl in (3, 4, 5, 6, 7):
        assert outs[lvl].shape == refs[lvl].shape, (lvl, outs[lvl].shape, refs[lvl].shape)
        assert jnp.allclose(outs[lvl], refs[lvl], atol=2e-2, rtol=1e-2), f"f32 mismatch at P{lvl}"

    # bfloat16 matmul-operand path (default; v6e/v7x MXU rate, halved weight
    # DMA) with f32 accumulation — looser tolerance for bf16 operand rounding.
    outs_bf16 = fpn_forward(params, c3, c4, c5, compute_dtype=jnp.bfloat16)
    jax.block_until_ready(outs_bf16)
    for lvl in (3, 4, 5, 6, 7):
        assert outs_bf16[lvl].shape == refs[lvl].shape
        assert jnp.allclose(outs_bf16[lvl], refs[lvl], atol=5e-2, rtol=2e-2), f"bf16 mismatch at P{lvl}"

    print("KERNEL_OK")
</pallas_src>

<mosaic_0001>
module attributes {stable_mosaic.version = 11 : i64} {
  func.func @_fpn_topdown_kernel(%arg0: i32, %arg1: memref<1x16x16x4xf32, #tpu.memory_space<vmem>>, %arg2: memref<1x8x8x6xf32, #tpu.memory_space<vmem>>, %arg3: memref<1x4x4x8xf32, #tpu.memory_space<vmem>>, %arg4: memref<4x8xf32, #tpu.memory_space<vmem>>, %arg5: memref<1x8xf32, #tpu.memory_space<vmem>>, %arg6: memref<6x8xf32, #tpu.memory_space<vmem>>, %arg7: memref<1x8xf32, #tpu.memory_space<vmem>>, %arg8: memref<8x8xf32, #tpu.memory_space<vmem>>, %arg9: memref<1x8xf32, #tpu.memory_space<vmem>>, %arg10: memref<9x8x8xf32, #tpu.memory_space<vmem>>, %arg11: memref<1x8xf32, #tpu.memory_space<vmem>>, %arg12: memref<9x8x8xf32, #tpu.memory_space<vmem>>, %arg13: memref<1x8xf32, #tpu.memory_space<vmem>>, %arg14: memref<9x8x8xf32, #tpu.memory_space<vmem>>, %arg15: memref<1x8xf32, #tpu.memory_space<vmem>>, %arg16: memref<1x256x8xf32, #tpu.memory_space<vmem>>, %arg17: memref<1x64x8xf32, #tpu.memory_space<vmem>>, %arg18: memref<1x16x8xf32, #tpu.memory_space<vmem>>, %arg19: memref<18x18x8xf32, #tpu.memory_space<vmem>>, %arg20: memref<10x10x8xf32, #tpu.memory_space<vmem>>, %arg21: memref<6x6x8xf32, #tpu.memory_space<vmem>>) attributes {dimension_semantics = [#tpu.dimension_semantics<parallel>], iteration_bounds = array<i64: 2>, scalar_prefetch = 0 : i64, scratch_operands = 3 : i64, tpu.core_type = #tpu.core_type<tc>, window_params = [{transform_indices = @transform_0, window_bounds = array<i64: 1, 16, 16, 4>}, {transform_indices = @transform_1, window_bounds = array<i64: 1, 8, 8, 6>}, {transform_indices = @transform_2, window_bounds = array<i64: 1, 4, 4, 8>}, {pipeline_mode = #tpu.pipeline_mode<synchronous>, transform_indices = @transform_3, window_bounds = array<i64: 4, 8>}, {pipeline_mode = #tpu.pipeline_mode<synchronous>, transform_indices = @transform_4, window_bounds = array<i64: 1, 8>}, {pipeline_mode = #tpu.pipeline_mode<synchronous>, transform_indices = @transform_5, window_bounds = array<i64: 6, 8>}, {pipeline_mode = #tpu.pipeline_mode<synchronous>, transform_indices = @transform_6, window_bounds = array<i64: 1, 8>}, {pipeline_mode = #tpu.pipeline_mode<synchronous>, transform_indices = @transform_7, window_bounds = array<i64: 8, 8>}, {pipeline_mode = #tpu.pipeline_mode<synchronous>, transform_indices = @transform_8, window_bounds = array<i64: 1, 8>}, {pipeline_mode = #tpu.pipeline_mode<synchronous>, transform_indices = @transform_9, window_bounds = array<i64: 9, 8, 8>}, {pipeline_mode = #tpu.pipeline_mode<synchronous>, transform_indices = @transform_10, window_bounds = array<i64: 1, 8>}, {pipeline_mode = #tpu.pipeline_mode<synchronous>, transform_indices = @transform_11, window_bounds = array<i64: 9, 8, 8>}, {pipeline_mode = #tpu.pipeline_mode<synchronous>, transform_indices = @transform_12, window_bounds = array<i64: 1, 8>}, {pipeline_mode = #tpu.pipeline_mode<synchronous>, transform_indices = @transform_13, window_bounds = array<i64: 9, 8, 8>}, {pipeline_mode = #tpu.pipeline_mode<synchronous>, transform_indices = @transform_14, window_bounds = array<i64: 1, 8>}, {transform_indices = @transform_15, window_bounds = array<i64: 1, 256, 8>}, {transform_indices = @transform_16, window_bounds = array<i64: 1, 64, 8>}, {transform_indices = @transform_17, window_bounds = array<i64: 1, 16, 8>}]} {
    %c0 = arith.constant 0 : index
    %c0_0 = arith.constant 0 : index
    %c0_1 = arith.constant 0 : index
    %c0_2 = arith.constant 0 : index
    %0 = vector.load %arg3[%c0, %c0_0, %c0_1, %c0_2] : memref<1x4x4x8xf32, #tpu.memory_space<vmem>>, vector<1x4x4x8xf32>
    %1 = vector.shape_cast %0 : vector<1x4x4x8xf32> to vector<4x4x8xf32>
    %2 = vector.shape_cast %1 : vector<4x4x8xf32> to vector<16x8xf32>
    %c0_3 = arith.constant 0 : index
    %c0_4 = arith.constant 0 : index
    %3 = vector.load %arg8[%c0_3, %c0_4] : memref<8x8xf32, #tpu.memory_space<vmem>>, vector<8x8xf32>
    %cst = arith.constant dense<0.000000e+00> : vector<16x8xf32>
    %4 = tpu.matmul %2, %3, %cst {dimension_numbers = #tpu.dot_dimension_numbers<[1], [0], [0], [1], [0, 0, 1, 1], [], []>} : vector<16x8xf32>, vector<8x8xf32>, vector<16x8xf32> -> vector<16x8xf32>
    %c0_5 = arith.constant 0 : index
    %c0_6 = arith.constant 0 : index
    %5 = vector.load %arg9[%c0_5, %c0_6] : memref<1x8xf32, #tpu.memory_space<vmem>>, vector<1x8xf32>
    %6 = vector.broadcast %5 : vector<1x8xf32> to vector<16x8xf32>
    %7 = arith.addf %4, %6 : vector<16x8xf32>
    %8 = vector.shape_cast %7 : vector<16x8xf32> to vector<4x4x8xf32>
    %cst_7 = arith.constant 0.000000e+00 : f32
    %9 = vector.broadcast %cst_7 : f32 to vector<1x6x8xf32>
    %c0_8 = arith.constant 0 : index
    %c0_9 = arith.constant 0 : index
    %c0_10 = arith.constant 0 : index
    %10 = vector.load %arg21[%c0_8, %c0_9, %c0_10] : memref<6x6x8xf32, #tpu.memory_space<vmem>>, vector<1x6x8xf32>
    tpu.vector_store %arg21[%c0_8, %c0_9, %c0_10], %9 {strides = array<i32>} : memref<6x6x8xf32, #tpu.memory_space<vmem>>, vector<1x6x8xf32>,
    %cst_11 = arith.constant 0.000000e+00 : f32
    %11 = vector.broadcast %cst_11 : f32 to vector<1x6x8xf32>
    %c5 = arith.constant 5 : index
    %c0_12 = arith.constant 0 : index
    %c0_13 = arith.constant 0 : index
    %12 = vector.load %arg21[%c5, %c0_12, %c0_13] : memref<6x6x8xf32, #tpu.memory_space<vmem>>, vector<1x6x8xf32>
    tpu.vector_store %arg21[%c5, %c0_12, %c0_13], %11 {strides = array<i32>} : memref<6x6x8xf32, #tpu.memory_space<vmem>>, vector<1x6x8xf32>,
    %cst_14 = arith.constant 0.000000e+00 : f32
    %13 = vector.broadcast %cst_14 : f32 to vector<6x1x8xf32>
    %c0_15 = arith.constant 0 : index
    %c0_16 = arith.constant 0 : index
    %c0_17 = arith.constant 0 : index
    %14 = vector.load %arg21[%c0_15, %c0_16, %c0_17] : memref<6x6x8xf32, #tpu.memory_space<vmem>>, vector<6x1x8xf32>
    tpu.vector_store %arg21[%c0_15, %c0_16, %c0_17], %13 {strides = array<i32>} : memref<6x6x8xf32, #tpu.memory_space<vmem>>, vector<6x1x8xf32>,
    %cst_18 = arith.constant 0.000000e+00 : f32
    %15 = vector.broadcast %cst_18 : f32 to vector<6x1x8xf32>
    %c0_19 = arith.constant 0 : index
    %c5_20 = arith.constant 5 : index
    %c0_21 = arith.constant 0 : index
    %16 = vector.load %arg21[%c0_19, %c5_20, %c0_21] : memref<6x6x8xf32, #tpu.memory_space<vmem>>, vector<6x1x8xf32>
    tpu.vector_store %arg21[%c0_19, %c5_20, %c0_21], %15 {strides = array<i32>} : memref<6x6x8xf32, #tpu.memory_space<vmem>>, vector<6x1x8xf32>,
    %c1 = arith.constant 1 : index
    %c1_22 = arith.constant 1 : index
    %c0_23 = arith.constant 0 : index
    %17 = vector.load %arg21[%c1, %c1_22, %c0_23] : memref<6x6x8xf32, #tpu.memory_space<vmem>>, vector<4x4x8xf32>
    tpu.vector_store %arg21[%c1, %c1_22, %c0_23], %8 {strides = array<i32>} : memref<6x6x8xf32, #tpu.memory_space<vmem>>, vector<4x4x8xf32>,
    %cst_24 = arith.constant 0.000000e+00 : f32
    %18 = vector.broadcast %cst_24 : f32 to vector<16x8xf32>
    %c0_25 = arith.constant 0 : index
    %c0_26 = arith.constant 0 : index
    %19 = vector.load %arg15[%c0_25, %c0_26] : memref<1x8xf32, #tpu.memory_space<vmem>>, vector<1x8xf32>
    %20 = vector.broadcast %19 : vector<1x8xf32> to vector<16x8xf32>
    %21 = arith.addf %18, %20 : vector<16x8xf32>
    %c0_27 = arith.constant 0 : index
    %c0_28 = arith.constant 0 : index
    %c0_29 = arith.constant 0 : index
    %22 = vector.load %arg21[%c0_27, %c0_28, %c0_29] : memref<6x6x8xf32, #tpu.memory_space<vmem>>, vector<4x4x8xf32>
    %23 = vector.shape_cast %22 : vector<4x4x8xf32> to vector<16x8xf32>
    %c0_30 = arith.constant 0 : index
    %c0_31 = arith.constant 0 : index
    %c0_32 = arith.constant 0 : index
    %24 = vector.load %arg14[%c0_30, %c0_31, %c0_32] : memref<9x8x8xf32, #tpu.memory_space<vmem>>, vector<1x8x8xf32>
    %25 = vector.shape_cast %24 : vector<1x8x8xf32> to vector<8x8xf32>
    %cst_33 = arith.constant dense<0.000000e+00> : vector<16x8xf32>
    %26 = tpu.matmul %23, %25, %cst_33 {dimension_numbers = #tpu.dot_dimension_numbers<[1], [0], [0], [1], [0, 0, 1, 1], [], []>} : vector<16x8xf32>, vector<8x8xf32>, vector<16x8xf32> -> vector<16x8xf32>
    %27 = arith.addf %21, %26 : vector<16x8xf32>
    %c0_34 = arith.constant 0 : index
    %c1_35 = arith.constant 1 : index
    %c0_36 = arith.constant 0 : index
    %28 = vector.load %arg21[%c0_34, %c1_35, %c0_36] : memref<6x6x8xf32, #tpu.memory_space<vmem>>, vector<4x4x8xf32>
    %29 = vector.shape_cast %28 : vector<4x4x8xf32> to vector<16x8xf32>
    %c1_37 = arith.constant 1 : index
    %c0_38 = arith.constant 0 : index
    %c0_39 = arith.constant 0 : index
    %30 = vector.load %arg14[%c1_37, %c0_38, %c0_39] : memref<9x8x8xf32, #tpu.memory_space<vmem>>, vector<1x8x8xf32>
    %31 = vector.shape_cast %30 : vector<1x8x8xf32> to vector<8x8xf32>
    %cst_40 = arith.constant dense<0.000000e+00> : vector<16x8xf32>
    %32 = tpu.matmul %29, %31, %cst_40 {dimension_numbers = #tpu.dot_dimension_numbers<[1], [0], [0], [1], [0, 0, 1, 1], [], []>} : vector<16x8xf32>, vector<8x8xf32>, vector<16x8xf32> -> vector<16x8xf32>
    %33 = arith.addf %27, %32 : vector<16x8xf32>
    %c0_41 = arith.constant 0 : index
    %c2 = arith.constant 2 : index
    %c0_42 = arith.constant 0 : index
    %34 = vector.load %arg21[%c0_41, %c2, %c0_42] : memref<6x6x8xf32, #tpu.memory_space<vmem>>, vector<4x4x8xf32>
    %35 = vector.shape_cast %34 : vector<4x4x8xf32> to vector<16x8xf32>
    %c2_43 = arith.constant 2 : index
    %c0_44 = arith.constant 0 : index
    %c0_45 = arith.constant 0 : index
    %36 = vector.load %arg14[%c2_43, %c0_44, %c0_45] : memref<9x8x8xf32, #tpu.memory_space<vmem>>, vector<1x8x8xf32>
    %37 = vector.shape_cast %36 : vector<1x8x8xf32> to vector<8x8xf32>
    %cst_46 = arith.constant dense<0.000000e+00> : vector<16x8xf32>
    %38 = tpu.matmul %35, %37, %cst_46 {dimension_numbers = #tpu.dot_dimension_numbers<[1], [0], [0], [1], [0, 0, 1, 1], [], []>} : vector<16x8xf32>, vector<8x8xf32>, vector<16x8xf32> -> vector<16x8xf32>
    %39 = arith.addf %33, %38 : vector<16x8xf32>
    %c1_47 = arith.constant 1 : index
    %c0_48 = arith.constant 0 : index
    %c0_49 = arith.constant 0 : index
    %40 = vector.load %arg21[%c1_47, %c0_48, %c0_49] : memref<6x6x8xf32, #tpu.memory_space<vmem>>, vector<4x4x8xf32>
    %41 = vector.shape_cast %40 : vector<4x4x8xf32> to vector<16x8xf32>
    %c3 = arith.constant 3 : index
    %c0_50 = arith.constant 0 : index
    %c0_51 = arith.constant 0 : index
    %42 = vector.load %arg14[%c3, %c0_50, %c0_51] : memref<9x8x8xf32, #tpu.memory_space<vmem>>, vector<1x8x8xf32>
    %43 = vector.shape_cast %42 : vector<1x8x8xf32> to vector<8x8xf32>
    %cst_52 = arith.constant dense<0.000000e+00> : vector<16x8xf32>
    %44 = tpu.matmul %41, %43, %cst_52 {dimension_numbers = #tpu.dot_dimension_numbers<[1], [0], [0], [1], [0, 0, 1, 1], [], []>} : vector<16x8xf32>, vector<8x8xf32>, vector<16x8xf32> -> vector<16x8xf32>
    %45 = arith.addf %39, %44 : vector<16x8xf32>
    %c1_53 = arith.constant 1 : index
    %c1_54 = arith.constant 1 : index
    %c0_55 = arith.constant 0 : index
    %46 = vector.load %arg21[%c1_53, %c1_54, %c0_55] : memref<6x6x8xf32, #tpu.memory_space<vmem>>, vector<4x4x8xf32>
    %47 = vector.shape_cast %46 : vector<4x4x8xf32> to vector<16x8xf32>
    %c4 = arith.constant 4 : index
    %c0_56 = arith.constant 0 : index
    %c0_57 = arith.constant 0 : index
    %48 = vector.load %arg14[%c4, %c0_56, %c0_57] : memref<9x8x8xf32, #tpu.memory_space<vmem>>, vector<1x8x8xf32>
    %49 = vector.shape_cast %48 : vector<1x8x8xf32> to vector<8x8xf32>
    %cst_58 = arith.constant dense<0.000000e+00> : vector<16x8xf32>
    %50 = tpu.matmul %47, %49, %cst_58 {dimension_numbers = #tpu.dot_dimension_numbers<[1], [0], [0], [1], [0, 0, 1, 1], [], []>} : vector<16x8xf32>, vector<8x8xf32>, vector<16x8xf32> -> vector<16x8xf32>
    %51 = arith.addf %45, %50 : vector<16x8xf32>
    %c1_59 = arith.constant 1 : index
    %c2_60 = arith.constant 2 : index
    %c0_61 = arith.constant 0 : index
    %52 = vector.load %arg21[%c1_59, %c2_60, %c0_61] : memref<6x6x8xf32, #tpu.memory_space<vmem>>, vector<4x4x8xf32>
    %53 = vector.shape_cast %52 : vector<4x4x8xf32> to vector<16x8xf32>
    %c5_62 = arith.constant 5 : index
    %c0_63 = arith.constant 0 : index
    %c0_64 = arith.constant 0 : index
    %54 = vector.load %arg14[%c5_62, %c0_63, %c0_64] : memref<9x8x8xf32, #tpu.memory_space<vmem>>, vector<1x8x8xf32>
    %55 = vector.shape_cast %54 : vector<1x8x8xf32> to vector<8x8xf32>
    %cst_65 = arith.constant dense<0.000000e+00> : vector<16x8xf32>
    %56 = tpu.matmul %53, %55, %cst_65 {dimension_numbers = #tpu.dot_dimension_numbers<[1], [0], [0], [1], [0, 0, 1, 1], [], []>} : vector<16x8xf32>, vector<8x8xf32>, vector<16x8xf32> -> vector<16x8xf32>
    %57 = arith.addf %51, %56 : vector<16x8xf32>
    %c2_66 = arith.constant 2 : index
    %c0_67 = arith.constant 0 : index
    %c0_68 = arith.constant 0 : index
    %58 = vector.load %arg21[%c2_66, %c0_67, %c0_68] : memref<6x6x8xf32, #tpu.memory_space<vmem>>, vector<4x4x8xf32>
    %59 = vector.shape_cast %58 : vector<4x4x8xf32> to vector<16x8xf32>
    %c6 = arith.constant 6 : index
    %c0_69 = arith.constant 0 : index
    %c0_70 = arith.constant 0 : index
    %60 = vector.load %arg14[%c6, %c0_69, %c0_70] : memref<9x8x8xf32, #tpu.memory_space<vmem>>, vector<1x8x8xf32>
    %61 = vector.shape_cast %60 : vector<1x8x8xf32> to vector<8x8xf32>
    %cst_71 = arith.constant dense<0.000000e+00> : vector<16x8xf32>
    %62 = tpu.matmul %59, %61, %cst_71 {dimension_numbers = #tpu.dot_dimension_numbers<[1], [0], [0], [1], [0, 0, 1, 1], [], []>} : vector<16x8xf32>, vector<8x8xf32>, vector<16x8xf32> -> vector<16x8xf32>
    %63 = arith.addf %57, %62 : vector<16x8xf32>
    %c2_72 = arith.constant 2 : index
    %c1_73 = arith.constant 1 : index
    %c0_74 = arith.constant 0 : index
    %64 = vector.load %arg21[%c2_72, %c1_73, %c0_74] : memref<6x6x8xf32, #tpu.memory_space<vmem>>, vector<4x4x8xf32>
    %65 = vector.shape_cast %64 : vector<4x4x8xf32> to vector<16x8xf32>
    %c7 = arith.constant 7 : index
    %c0_75 = arith.constant 0 : index
    %c0_76 = arith.constant 0 : index
    %66 = vector.load %arg14[%c7, %c0_75, %c0_76] : memref<9x8x8xf32, #tpu.memory_space<vmem>>, vector<1x8x8xf32>
    %67 = vector.shape_cast %66 : vector<1x8x8xf32> to vector<8x8xf32>
    %cst_77 = arith.constant dense<0.000000e+00> : vector<16x8xf32>
    %68 = tpu.matmul %65, %67, %cst_77 {dimension_numbers = #tpu.dot_dimension_numbers<[1], [0], [0], [1], [0, 0, 1, 1], [], []>} : vector<16x8xf32>, vector<8x8xf32>, vector<16x8xf32> -> vector<16x8xf32>
    %69 = arith.addf %63, %68 : vector<16x8xf32>
    %c2_78 = arith.constant 2 : index
    %c2_79 = arith.constant 2 : index
    %c0_80 = arith.constant 0 : index
    %70 = vector.load %arg21[%c2_78, %c2_79, %c0_80] : memref<6x6x8xf32, #tpu.memory_space<vmem>>, vector<4x4x8xf32>
    %71 = vector.shape_cast %70 : vector<4x4x8xf32> to vector<16x8xf32>
    %c8 = arith.constant 8 : index
    %c0_81 = arith.constant 0 : index
    %c0_82 = arith.constant 0 : index
    %72 = vector.load %arg14[%c8, %c0_81, %c0_82] : memref<9x8x8xf32, #tpu.memory_space<vmem>>, vector<1x8x8xf32>
    %73 = vector.shape_cast %72 : vector<1x8x8xf32> to vector<8x8xf32>
    %cst_83 = arith.constant dense<0.000000e+00> : vector<16x8xf32>
    %74 = tpu.matmul %71, %73, %cst_83 {dimension_numbers = #tpu.dot_dimension_numbers<[1], [0], [0], [1], [0, 0, 1, 1], [], []>} : vector<16x8xf32>, vector<8x8xf32>, vector<16x8xf32> -> vector<16x8xf32>
    %75 = arith.addf %69, %74 : vector<16x8xf32>
    %c0_84 = arith.constant 0 : index
    %c0_85 = arith.constant 0 : index
    %c0_86 = arith.constant 0 : index
    %76 = vector.load %arg18[%c0_84, %c0_85, %c0_86] : memref<1x16x8xf32, #tpu.memory_space<vmem>>, vector<1x16x8xf32>
    %77 = vector.shape_cast %76 : vector<1x16x8xf32> to vector<16x8xf32>
    %78 = vector.shape_cast %75 : vector<16x8xf32> to vector<1x16x8xf32>
    tpu.vector_store %arg18[%c0_84, %c0_85, %c0_86], %78 {strides = array<i32>} : memref<1x16x8xf32, #tpu.memory_space<vmem>>, vector<1x16x8xf32>,
    %c0_87 = arith.constant 0 : index
    %c0_88 = arith.constant 0 : index
    %c0_89 = arith.constant 0 : index
    %c0_90 = arith.constant 0 : index
    %79 = vector.load %arg2[%c0_87, %c0_88, %c0_89, %c0_90] : memref<1x8x8x6xf32, #tpu.memory_space<vmem>>, vector<1x8x8x6xf32>
    %80 = vector.shape_cast %79 : vector<1x8x8x6xf32> to vector<8x8x6xf32>
    %81 = vector.shape_cast %80 : vector<8x8x6xf32> to vector<64x6xf32>
    %c0_91 = arith.constant 0 : index
    %c0_92 = arith.constant 0 : index
    %82 = vector.load %arg6[%c0_91, %c0_92] : memref<6x8xf32, #tpu.memory_space<vmem>>, vector<6x8xf32>
    %cst_93 = arith.constant dense<0.000000e+00> : vector<64x8xf32>
    %83 = tpu.matmul %81, %82, %cst_93 {dimension_numbers = #tpu.dot_dimension_numbers<[1], [0], [0], [1], [0, 0, 1, 1], [], []>} : vector<64x6xf32>, vector<6x8xf32>, vector<64x8xf32> -> vector<64x8xf32>
    %c0_94 = arith.constant 0 : index
    %c0_95 = arith.constant 0 : index
    %84 = vector.load %arg7[%c0_94, %c0_95] : memref<1x8xf32, #tpu.memory_space<vmem>>, vector<1x8xf32>
    %85 = vector.broadcast %84 : vector<1x8xf32> to vector<64x8xf32>
    %86 = arith.addf %83, %85 : vector<64x8xf32>
    %87 = vector.shape_cast %86 : vector<64x8xf32> to vector<8x8x8xf32>
    %88 = vector.shape_cast %8 : vector<4x4x8xf32> to vector<4x1x4x8xf32>
    %89 = vector.shape_cast %88 : vector<4x1x4x8xf32> to vector<4x1x4x8xf32>
    %90 = vector.broadcast %89 : vector<4x1x4x8xf32> to vector<4x2x4x8xf32>
    %91 = vector.shape_cast %90 : vector<4x2x4x8xf32> to vector<8x4x8xf32>
    %92 = vector.shape_cast %91 : vector<8x4x8xf32> to vector<8x4x1x8xf32>
    %93 = vector.shape_cast %92 : vector<8x4x1x8xf32> to vector<8x4x1x8xf32>
    %94 = vector.broadcast %93 : vector<8x4x1x8xf32> to vector<8x4x2x8xf32>
    %95 = vector.shape_cast %94 : vector<8x4x2x8xf32> to vector<8x8x8xf32>
    %96 = arith.addf %95, %87 : vector<8x8x8xf32>
    %cst_96 = arith.constant 0.000000e+00 : f32
    %97 = vector.broadcast %cst_96 : f32 to vector<1x10x8xf32>
    %c0_97 = arith.constant 0 : index
    %c0_98 = arith.constant 0 : index
    %c0_99 = arith.constant 0 : index
    %98 = vector.load %arg20[%c0_97, %c0_98, %c0_99] : memref<10x10x8xf32, #tpu.memory_space<vmem>>, vector<1x10x8xf32>
    tpu.vector_store %arg20[%c0_97, %c0_98, %c0_99], %97 {strides = array<i32>} : memref<10x10x8xf32, #tpu.memory_space<vmem>>, vector<1x10x8xf32>,
    %cst_100 = arith.constant 0.000000e+00 : f32
    %99 = vector.broadcast %cst_100 : f32 to vector<1x10x8xf32>
    %c9 = arith.constant 9 : index
    %c0_101 = arith.constant 0 : index
    %c0_102 = arith.constant 0 : index
    %100 = vector.load %arg20[%c9, %c0_101, %c0_102] : memref<10x10x8xf32, #tpu.memory_space<vmem>>, vector<1x10x8xf32>
    tpu.vector_store %arg20[%c9, %c0_101, %c0_102], %99 {strides = array<i32>} : memref<10x10x8xf32, #tpu.memory_space<vmem>>, vector<1x10x8xf32>,
    %cst_103 = arith.constant 0.000000e+00 : f32
    %101 = vector.broadcast %cst_103 : f32 to vector<10x1x8xf32>
    %c0_104 = arith.constant 0 : index
    %c0_105 = arith.constant 0 : index
    %c0_106 = arith.constant 0 : index
    %102 = vector.load %arg20[%c0_104, %c0_105, %c0_106] : memref<10x10x8xf32, #tpu.memory_space<vmem>>, vector<10x1x8xf32>
    tpu.vector_store %arg20[%c0_104, %c0_105, %c0_106], %101 {strides = array<i32>} : memref<10x10x8xf32, #tpu.memory_space<vmem>>, vector<10x1x8xf32>,
    %cst_107 = arith.constant 0.000000e+00 : f32
    %103 = vector.broadcast %cst_107 : f32 to vector<10x1x8xf32>
    %c0_108 = arith.constant 0 : index
    %c9_109 = arith.constant 9 : index
    %c0_110 = arith.constant 0 : index
    %104 = vector.load %arg20[%c0_108, %c9_109, %c0_110] : memref<10x10x8xf32, #tpu.memory_space<vmem>>, vector<10x1x8xf32>
    tpu.vector_store %arg20[%c0_108, %c9_109, %c0_110], %103 {strides = array<i32>} : memref<10x10x8xf32, #tpu.memory_space<vmem>>, vector<10x1x8xf32>,
    %c1_111 = arith.constant 1 : index
    %c1_112 = arith.constant 1 : index
    %c0_113 = arith.constant 0 : index
    %105 = vector.load %arg20[%c1_111, %c1_112, %c0_113] : memref<10x10x8xf32, #tpu.memory_space<vmem>>, vector<8x8x8xf32>
    tpu.vector_store %arg20[%c1_111, %c1_112, %c0_113], %96 {strides = array<i32>} : memref<10x10x8xf32, #tpu.memory_space<vmem>>, vector<8x8x8xf32>,
    %cst_114 = arith.constant 0.000000e+00 : f32
    %106 = vector.broadcast %cst_114 : f32 to vector<64x8xf32>
    %c0_115 = arith.constant 0 : index
    %c0_116 = arith.constant 0 : index
    %107 = vector.load %arg13[%c0_115, %c0_116] : memref<1x8xf32, #tpu.memory_space<vmem>>, vector<1x8xf32>
    %108 = vector.broadcast %107 : vector<1x8xf32> to vector<64x8xf32>
    %109 = arith.addf %106, %108 : vector<64x8xf32>
    %c0_117 = arith.constant 0 : index
    %c0_118 = arith.constant 0 : index
    %c0_119 = arith.constant 0 : index
    %110 = vector.load %arg20[%c0_117, %c0_118, %c0_119] : memref<10x10x8xf32, #tpu.memory_space<vmem>>, vector<8x8x8xf32>
    %111 = vector.shape_cast %110 : vector<8x8x8xf32> to vector<64x8xf32>
    %c0_120 = arith.constant 0 : index
    %c0_121 = arith.constant 0 : index
    %c0_122 = arith.constant 0 : index
    %112 = vector.load %arg12[%c0_120, %c0_121, %c0_122] : memref<9x8x8xf32, #tpu.memory_space<vmem>>, vector<1x8x8xf32>
    %113 = vector.shape_cast %112 : vector<1x8x8xf32> to vector<8x8xf32>
    %cst_123 = arith.constant dense<0.000000e+00> : vector<64x8xf32>
    %114 = tpu.matmul %111, %113, %cst_123 {dimension_numbers = #tpu.dot_dimension_numbers<[1], [0], [0], [1], [0, 0, 1, 1], [], []>} : vector<64x8xf32>, vector<8x8xf32>, vector<64x8xf32> -> vector<64x8xf32>
    %115 = arith.addf %109, %114 : vector<64x8xf32>
    %c0_124 = arith.constant 0 : index
    %c1_125 = arith.constant 1 : index
    %c0_126 = arith.constant 0 : index
    %116 = vector.load %arg20[%c0_124, %c1_125, %c0_126] : memref<10x10x8xf32, #tpu.memory_space<vmem>>, vector<8x8x8xf32>
    %117 = vector.shape_cast %116 : vector<8x8x8xf32> to vector<64x8xf32>
    %c1_127 = arith.constant 1 : index
    %c0_128 = arith.constant 0 : index
    %c0_129 = arith.constant 0 : index
    %118 = vector.load %arg12[%c1_127, %c0_128, %c0_129] : memref<9x8x8xf32, #tpu.memory_space<vmem>>, vector<1x8x8xf32>
    %119 = vector.shape_cast %118 : vector<1x8x8xf32> to vector<8x8xf32>
    %cst_130 = arith.constant dense<0.000000e+00> : vector<64x8xf32>
    %120 = tpu.matmul %117, %119, %cst_130 {dimension_numbers = #tpu.dot_dimension_numbers<[1], [0], [0], [1], [0, 0, 1, 1], [], []>} : vector<64x8xf32>, vector<8x8xf32>, vector<64x8xf32> -> vector<64x8xf32>
    %121 = arith.addf %115, %120 : vector<64x8xf32>
    %c0_131 = arith.constant 0 : index
    %c2_132 = arith.constant 2 : index
    %c0_133 = arith.constant 0 : index
    %122 = vector.load %arg20[%c0_131, %c2_132, %c0_133] : memref<10x10x8xf32, #tpu.memory_space<vmem>>, vector<8x8x8xf32>
    %123 = vector.shape_cast %122 : vector<8x8x8xf32> to vector<64x8xf32>
    %c2_134 = arith.constant 2 : index
    %c0_135 = arith.constant 0 : index
    %c0_136 = arith.constant 0 : index
    %124 = vector.load %arg12[%c2_134, %c0_135, %c0_136] : memref<9x8x8xf32, #tpu.memory_space<vmem>>, vector<1x8x8xf32>
    %125 = vector.shape_cast %124 : vector<1x8x8xf32> to vector<8x8xf32>
    %cst_137 = arith.constant dense<0.000000e+00> : vector<64x8xf32>
    %126 = tpu.matmul %123, %125, %cst_137 {dimension_numbers = #tpu.dot_dimension_numbers<[1], [0], [0], [1], [0, 0, 1, 1], [], []>} : vector<64x8xf32>, vector<8x8xf32>, vector<64x8xf32> -> vector<64x8xf32>
    %127 = arith.addf %121, %126 : vector<64x8xf32>
    %c1_138 = arith.constant 1 : index
    %c0_139 = arith.constant 0 : index
    %c0_140 = arith.constant 0 : index
    %128 = vector.load %arg20[%c1_138, %c0_139, %c0_140] : memref<10x10x8xf32, #tpu.memory_space<vmem>>, vector<8x8x8xf32>
    %129 = vector.shape_cast %128 : vector<8x8x8xf32> to vector<64x8xf32>
    %c3_141 = arith.constant 3 : index
    %c0_142 = arith.constant 0 : index
    %c0_143 = arith.constant 0 : index
    %130 = vector.load %arg12[%c3_141, %c0_142, %c0_143] : memref<9x8x8xf32, #tpu.memory_space<vmem>>, vector<1x8x8xf32>
    %131 = vector.shape_cast %130 : vector<1x8x8xf32> to vector<8x8xf32>
    %cst_144 = arith.constant dense<0.000000e+00> : vector<64x8xf32>
    %132 = tpu.matmul %129, %131, %cst_144 {dimension_numbers = #tpu.dot_dimension_numbers<[1], [0], [0], [1], [0, 0, 1, 1], [], []>} : vector<64x8xf32>, vector<8x8xf32>, vector<64x8xf32> -> vector<64x8xf32>
    %133 = arith.addf %127, %132 : vector<64x8xf32>
    %c1_145 = arith.constant 1 : index
    %c1_146 = arith.constant 1 : index
    %c0_147 = arith.constant 0 : index
    %134 = vector.load %arg20[%c1_145, %c1_146, %c0_147] : memref<10x10x8xf32, #tpu.memory_space<vmem>>, vector<8x8x8xf32>
    %135 = vector.shape_cast %134 : vector<8x8x8xf32> to vector<64x8xf32>
    %c4_148 = arith.constant 4 : index
    %c0_149 = arith.constant 0 : index
    %c0_150 = arith.constant 0 : index
    %136 = vector.load %arg12[%c4_148, %c0_149, %c0_150] : memref<9x8x8xf32, #tpu.memory_space<vmem>>, vector<1x8x8xf32>
    %137 = vector.shape_cast %136 : vector<1x8x8xf32> to vector<8x8xf32>
    %cst_151 = arith.constant dense<0.000000e+00> : vector<64x8xf32>
    %138 = tpu.matmul %135, %137, %cst_151 {dimension_numbers = #tpu.dot_dimension_numbers<[1], [0], [0], [1], [0, 0, 1, 1], [], []>} : vector<64x8xf32>, vector<8x8xf32>, vector<64x8xf32> -> vector<64x8xf32>
    %139 = arith.addf %133, %138 : vector<64x8xf32>
    %c1_152 = arith.constant 1 : index
    %c2_153 = arith.constant 2 : index
    %c0_154 = arith.constant 0 : index
    %140 = vector.load %arg20[%c1_152, %c2_153, %c0_154] : memref<10x10x8xf32, #tpu.memory_space<vmem>>, vector<8x8x8xf32>
    %141 = vector.shape_cast %140 : vector<8x8x8xf32> to vector<64x8xf32>
    %c5_155 = arith.constant 5 : index
    %c0_156 = arith.constant 0 : index
    %c0_157 = arith.constant 0 : index
    %142 = vector.load %arg12[%c5_155, %c0_156, %c0_157] : memref<9x8x8xf32, #tpu.memory_space<vmem>>, vector<1x8x8xf32>
    %143 = vector.shape_cast %142 : vector<1x8x8xf32> to vector<8x8xf32>
    %cst_158 = arith.constant dense<0.000000e+00> : vector<64x8xf32>
    %144 = tpu.matmul %141, %143, %cst_158 {dimension_numbers = #tpu.dot_dimension_numbers<[1], [0], [0], [1], [0, 0, 1, 1], [], []>} : vector<64x8xf32>, vector<8x8xf32>, vector<64x8xf32> -> vector<64x8xf32>
    %145 = arith.addf %139, %144 : vector<64x8xf32>
    %c2_159 = arith.constant 2 : index
    %c0_160 = arith.constant 0 : index
    %c0_161 = arith.constant 0 : index
    %146 = vector.load %arg20[%c2_159, %c0_160, %c0_161] : memref<10x10x8xf32, #tpu.memory_space<vmem>>, vector<8x8x8xf32>
    %147 = vector.shape_cast %146 : vector<8x8x8xf32> to vector<64x8xf32>
    %c6_162 = arith.constant 6 : index
    %c0_163 = arith.constant 0 : index
    %c0_164 = arith.constant 0 : index
    %148 = vector.load %arg12[%c6_162, %c0_163, %c0_164] : memref<9x8x8xf32, #tpu.memory_space<vmem>>, vector<1x8x8xf32>
    %149 = vector.shape_cast %148 : vector<1x8x8xf32> to vector<8x8xf32>
    %cst_165 = arith.constant dense<0.000000e+00> : vector<64x8xf32>
    %150 = tpu.matmul %147, %149, %cst_165 {dimension_numbers = #tpu.dot_dimension_numbers<[1], [0], [0], [1], [0, 0, 1, 1], [], []>} : vector<64x8xf32>, vector<8x8xf32>, vector<64x8xf32> -> vector<64x8xf32>
    %151 = arith.addf %145, %150 : vector<64x8xf32>
    %c2_166 = arith.constant 2 : index
    %c1_167 = arith.constant 1 : index
    %c0_168 = arith.constant 0 : index
    %152 = vector.load %arg20[%c2_166, %c1_167, %c0_168] : memref<10x10x8xf32, #tpu.memory_space<vmem>>, vector<8x8x8xf32>
    %153 = vector.shape_cast %152 : vector<8x8x8xf32> to vector<64x8xf32>
    %c7_169 = arith.constant 7 : index
    %c0_170 = arith.constant 0 : index
    %c0_171 = arith.constant 0 : index
    %154 = vector.load %arg12[%c7_169, %c0_170, %c0_171] : memref<9x8x8xf32, #tpu.memory_space<vmem>>, vector<1x8x8xf32>
    %155 = vector.shape_cast %154 : vector<1x8x8xf32> to vector<8x8xf32>
    %cst_172 = arith.constant dense<0.000000e+00> : vector<64x8xf32>
    %156 = tpu.matmul %153, %155, %cst_172 {dimension_numbers = #tpu.dot_dimension_numbers<[1], [0], [0], [1], [0, 0, 1, 1], [], []>} : vector<64x8xf32>, vector<8x8xf32>, vector<64x8xf32> -> vector<64x8xf32>
    %157 = arith.addf %151, %156 : vector<64x8xf32>
    %c2_173 = arith.constant 2 : index
    %c2_174 = arith.constant 2 : index
    %c0_175 = arith.constant 0 : index
    %158 = vector.load %arg20[%c2_173, %c2_174, %c0_175] : memref<10x10x8xf32, #tpu.memory_space<vmem>>, vector<8x8x8xf32>
    %159 = vector.shape_cast %158 : vector<8x8x8xf32> to vector<64x8xf32>
    %c8_176 = arith.constant 8 : index
    %c0_177 = arith.constant 0 : index
    %c0_178 = arith.constant 0 : index
    %160 = vector.load %arg12[%c8_176, %c0_177, %c0_178] : memref<9x8x8xf32, #tpu.memory_space<vmem>>, vector<1x8x8xf32>
    %161 = vector.shape_cast %160 : vector<1x8x8xf32> to vector<8x8xf32>
    %cst_179 = arith.constant dense<0.000000e+00> : vector<64x8xf32>
    %162 = tpu.matmul %159, %161, %cst_179 {dimension_numbers = #tpu.dot_dimension_numbers<[1], [0], [0], [1], [0, 0, 1, 1], [], []>} : vector<64x8xf32>, vector<8x8xf32>, vector<64x8xf32> -> vector<64x8xf32>
    %163 = arith.addf %157, %162 : vector<64x8xf32>
    %c0_180 = arith.constant 0 : index
    %c0_181 = arith.constant 0 : index
    %c0_182 = arith.constant 0 : index
    %164 = vector.load %arg17[%c0_180, %c0_181, %c0_182] : memref<1x64x8xf32, #tpu.memory_space<vmem>>, vector<1x64x8xf32>
    %165 = vector.shape_cast %164 : vector<1x64x8xf32> to vector<64x8xf32>
    %166 = vector.shape_cast %163 : vector<64x8xf32> to vector<1x64x8xf32>
    tpu.vector_store %arg17[%c0_180, %c0_181, %c0_182], %166 {strides = array<i32>} : memref<1x64x8xf32, #tpu.memory_space<vmem>>, vector<1x64x8xf32>,
    %c0_183 = arith.constant 0 : index
    %c0_184 = arith.constant 0 : index
    %c0_185 = arith.constant 0 : index
    %c0_186 = arith.constant 0 : index
    %167 = vector.load %arg1[%c0_183, %c0_184, %c0_185, %c0_186] : memref<1x16x16x4xf32, #tpu.memory_space<vmem>>, vector<1x16x16x4xf32>
    %168 = vector.shape_cast %167 : vector<1x16x16x4xf32> to vector<16x16x4xf32>
    %169 = vector.shape_cast %168 : vector<16x16x4xf32> to vector<256x4xf32>
    %c0_187 = arith.constant 0 : index
    %c0_188 = arith.constant 0 : index
    %170 = vector.load %arg4[%c0_187, %c0_188] : memref<4x8xf32, #tpu.memory_space<vmem>>, vector<4x8xf32>
    %cst_189 = arith.constant dense<0.000000e+00> : vector<256x8xf32>
    %171 = tpu.matmul %169, %170, %cst_189 {dimension_numbers = #tpu.dot_dimension_numbers<[1], [0], [0], [1], [0, 0, 1, 1], [], []>} : vector<256x4xf32>, vector<4x8xf32>, vector<256x8xf32> -> vector<256x8xf32>
    %c0_190 = arith.constant 0 : index
    %c0_191 = arith.constant 0 : index
    %172 = vector.load %arg5[%c0_190, %c0_191] : memref<1x8xf32, #tpu.memory_space<vmem>>, vector<1x8xf32>
    %173 = vector.broadcast %172 : vector<1x8xf32> to vector<256x8xf32>
    %174 = arith.addf %171, %173 : vector<256x8xf32>
    %175 = vector.shape_cast %174 : vector<256x8xf32> to vector<16x16x8xf32>
    %176 = vector.shape_cast %96 : vector<8x8x8xf32> to vector<8x1x8x8xf32>
    %177 = vector.shape_cast %176 : vector<8x1x8x8xf32> to vector<8x1x8x8xf32>
    %178 = vector.broadcast %177 : vector<8x1x8x8xf32> to vector<8x2x8x8xf32>
    %179 = vector.shape_cast %178 : vector<8x2x8x8xf32> to vector<16x8x8xf32>
    %180 = vector.shape_cast %179 : vector<16x8x8xf32> to vector<16x8x1x8xf32>
    %181 = vector.shape_cast %180 : vector<16x8x1x8xf32> to vector<16x8x1x8xf32>
    %182 = vector.broadcast %181 : vector<16x8x1x8xf32> to vector<16x8x2x8xf32>
    %183 = vector.shape_cast %182 : vector<16x8x2x8xf32> to vector<16x16x8xf32>
    %184 = arith.addf %183, %175 : vector<16x16x8xf32>
    %cst_192 = arith.constant 0.000000e+00 : f32
    %185 = vector.broadcast %cst_192 : f32 to vector<1x18x8xf32>
    %c0_193 = arith.constant 0 : index
    %c0_194 = arith.constant 0 : index
    %c0_195 = arith.constant 0 : index
    %186 = vector.load %arg19[%c0_193, %c0_194, %c0_195] : memref<18x18x8xf32, #tpu.memory_space<vmem>>, vector<1x18x8xf32>
    tpu.vector_store %arg19[%c0_193, %c0_194, %c0_195], %185 {strides = array<i32>} : memref<18x18x8xf32, #tpu.memory_space<vmem>>, vector<1x18x8xf32>,
    %cst_196 = arith.constant 0.000000e+00 : f32
    %187 = vector.broadcast %cst_196 : f32 to vector<1x18x8xf32>
    %c17 = arith.constant 17 : index
    %c0_197 = arith.constant 0 : index
    %c0_198 = arith.constant 0 : index
    %188 = vector.load %arg19[%c17, %c0_197, %c0_198] : memref<18x18x8xf32, #tpu.memory_space<vmem>>, vector<1x18x8xf32>
    tpu.vector_store %arg19[%c17, %c0_197, %c0_198], %187 {strides = array<i32>} : memref<18x18x8xf32, #tpu.memory_space<vmem>>, vector<1x18x8xf32>,
    %cst_199 = arith.constant 0.000000e+00 : f32
    %189 = vector.broadcast %cst_199 : f32 to vector<18x1x8xf32>
    %c0_200 = arith.constant 0 : index
    %c0_201 = arith.constant 0 : index
    %c0_202 = arith.constant 0 : index
    %190 = vector.load %arg19[%c0_200, %c0_201, %c0_202] : memref<18x18x8xf32, #tpu.memory_space<vmem>>, vector<18x1x8xf32>
    tpu.vector_store %arg19[%c0_200, %c0_201, %c0_202], %189 {strides = array<i32>} : memref<18x18x8xf32, #tpu.memory_space<vmem>>, vector<18x1x8xf32>,
    %cst_203 = arith.constant 0.000000e+00 : f32
    %191 = vector.broadcast %cst_203 : f32 to vector<18x1x8xf32>
    %c0_204 = arith.constant 0 : index
    %c17_205 = arith.constant 17 : index
    %c0_206 = arith.constant 0 : index
    %192 = vector.load %arg19[%c0_204, %c17_205, %c0_206] : memref<18x18x8xf32, #tpu.memory_space<vmem>>, vector<18x1x8xf32>
    tpu.vector_store %arg19[%c0_204, %c17_205, %c0_206], %191 {strides = array<i32>} : memref<18x18x8xf32, #tpu.memory_space<vmem>>, vector<18x1x8xf32>,
    %c1_207 = arith.constant 1 : index
    %c1_208 = arith.constant 1 : index
    %c0_209 = arith.constant 0 : index
    %193 = vector.load %arg19[%c1_207, %c1_208, %c0_209] : memref<18x18x8xf32, #tpu.memory_space<vmem>>, vector<16x16x8xf32>
    tpu.vector_store %arg19[%c1_207, %c1_208, %c0_209], %184 {strides = array<i32>} : memref<18x18x8xf32, #tpu.memory_space<vmem>>, vector<16x16x8xf32>,
    %cst_210 = arith.constant 0.000000e+00 : f32
    %194 = vector.broadcast %cst_210 : f32 to vector<256x8xf32>
    %c0_211 = arith.constant 0 : index
    %c0_212 = arith.constant 0 : index
    %195 = vector.load %arg11[%c0_211, %c0_212] : memref<1x8xf32, #tpu.memory_space<vmem>>, vector<1x8xf32>
    %196 = vector.broadcast %195 : vector<1x8xf32> to vector<256x8xf32>
    %197 = arith.addf %194, %196 : vector<256x8xf32>
    %c0_213 = arith.constant 0 : index
    %c0_214 = arith.constant 0 : index
    %c0_215 = arith.constant 0 : index
    %198 = vector.load %arg19[%c0_213, %c0_214, %c0_215] : memref<18x18x8xf32, #tpu.memory_space<vmem>>, vector<16x16x8xf32>
    %199 = vector.shape_cast %198 : vector<16x16x8xf32> to vector<256x8xf32>
    %c0_216 = arith.constant 0 : index
    %c0_217 = arith.constant 0 : index
    %c0_218 = arith.constant 0 : index
    %200 = vector.load %arg10[%c0_216, %c0_217, %c0_218] : memref<9x8x8xf32, #tpu.memory_space<vmem>>, vector<1x8x8xf32>
    %201 = vector.shape_cast %200 : vector<1x8x8xf32> to vector<8x8xf32>
    %cst_219 = arith.constant dense<0.000000e+00> : vector<256x8xf32>
    %202 = tpu.matmul %199, %201, %cst_219 {dimension_numbers = #tpu.dot_dimension_numbers<[1], [0], [0], [1], [0, 0, 1, 1], [], []>} : vector<256x8xf32>, vector<8x8xf32>, vector<256x8xf32> -> vector<256x8xf32>
    %203 = arith.addf %197, %202 : vector<256x8xf32>
    %c0_220 = arith.constant 0 : index
    %c1_221 = arith.constant 1 : index
    %c0_222 = arith.constant 0 : index
    %204 = vector.load %arg19[%c0_220, %c1_221, %c0_222] : memref<18x18x8xf32, #tpu.memory_space<vmem>>, vector<16x16x8xf32>
    %205 = vector.shape_cast %204 : vector<16x16x8xf32> to vector<256x8xf32>
    %c1_223 = arith.constant 1 : index
    %c0_224 = arith.constant 0 : index
    %c0_225 = arith.constant 0 : index
    %206 = vector.load %arg10[%c1_223, %c0_224, %c0_225] : memref<9x8x8xf32, #tpu.memory_space<vmem>>, vector<1x8x8xf32>
    %207 = vector.shape_cast %206 : vector<1x8x8xf32> to vector<8x8xf32>
    %cst_226 = arith.constant dense<0.000000e+00> : vector<256x8xf32>
    %208 = tpu.matmul %205, %207, %cst_226 {dimension_numbers = #tpu.dot_dimension_numbers<[1], [0], [0], [1], [0, 0, 1, 1], [], []>} : vector<256x8xf32>, vector<8x8xf32>, vector<256x8xf32> -> vector<256x8xf32>
    %209 = arith.addf %203, %208 : vector<256x8xf32>
    %c0_227 = arith.constant 0 : index
    %c2_228 = arith.constant 2 : index
    %c0_229 = arith.constant 0 : index
    %210 = vector.load %arg19[%c0_227, %c2_228, %c0_229] : memref<18x18x8xf32, #tpu.memory_space<vmem>>, vector<16x16x8xf32>
    %211 = vector.shape_cast %210 : vector<16x16x8xf32> to vector<256x8xf32>
    %c2_230 = arith.constant 2 : index
    %c0_231 = arith.constant 0 : index
    %c0_232 = arith.constant 0 : index
    %212 = vector.load %arg10[%c2_230, %c0_231, %c0_232] : memref<9x8x8xf32, #tpu.memory_space<vmem>>, vector<1x8x8xf32>
    %213 = vector.shape_cast %212 : vector<1x8x8xf32> to vector<8x8xf32>
    %cst_233 = arith.constant dense<0.000000e+00> : vector<256x8xf32>
    %214 = tpu.matmul %211, %213, %cst_233 {dimension_numbers = #tpu.dot_dimension_numbers<[1], [0], [0], [1], [0, 0, 1, 1], [], []>} : vector<256x8xf32>, vector<8x8xf32>, vector<256x8xf32> -> vector<256x8xf32>
    %215 = arith.addf %209, %214 : vector<256x8xf32>
    %c1_234 = arith.constant 1 : index
    %c0_235 = arith.constant 0 : index
    %c0_236 = arith.constant 0 : index
    %216 = vector.load %arg19[%c1_234, %c0_235, %c0_236] : memref<18x18x8xf32, #tpu.memory_space<vmem>>, vector<16x16x8xf32>
    %217 = vector.shape_cast %216 : vector<16x16x8xf32> to vector<256x8xf32>
    %c3_237 = arith.constant 3 : index
    %c0_238 = arith.constant 0 : index
    %c0_239 = arith.constant 0 : index
    %218 = vector.load %arg10[%c3_237, %c0_238, %c0_239] : memref<9x8x8xf32, #tpu.memory_space<vmem>>, vector<1x8x8xf32>
    %219 = vector.shape_cast %218 : vector<1x8x8xf32> to vector<8x8xf32>
    %cst_240 = arith.constant dense<0.000000e+00> : vector<256x8xf32>
    %220 = tpu.matmul %217, %219, %cst_240 {dimension_numbers = #tpu.dot_dimension_numbers<[1], [0], [0], [1], [0, 0, 1, 1], [], []>} : vector<256x8xf32>, vector<8x8xf32>, vector<256x8xf32> -> vector<256x8xf32>
    %221 = arith.addf %215, %220 : vector<256x8xf32>
    %c1_241 = arith.constant 1 : index
    %c1_242 = arith.constant 1 : index
    %c0_243 = arith.constant 0 : index
    %222 = vector.load %arg19[%c1_241, %c1_242, %c0_243] : memref<18x18x8xf32, #tpu.memory_space<vmem>>, vector<16x16x8xf32>
    %223 = vector.shape_cast %222 : vector<16x16x8xf32> to vector<256x8xf32>
    %c4_244 = arith.constant 4 : index
    %c0_245 = arith.constant 0 : index
    %c0_246 = arith.constant 0 : index
    %224 = vector.load %arg10[%c4_244, %c0_245, %c0_246] : memref<9x8x8xf32, #tpu.memory_space<vmem>>, vector<1x8x8xf32>
    %225 = vector.shape_cast %224 : vector<1x8x8xf32> to vector<8x8xf32>
    %cst_247 = arith.constant dense<0.000000e+00> : vector<256x8xf32>
    %226 = tpu.matmul %223, %225, %cst_247 {dimension_numbers = #tpu.dot_dimension_numbers<[1], [0], [0], [1], [0, 0, 1, 1], [], []>} : vector<256x8xf32>, vector<8x8xf32>, vector<256x8xf32> -> vector<256x8xf32>
    %227 = arith.addf %221, %226 : vector<256x8xf32>
    %c1_248 = arith.constant 1 : index
    %c2_249 = arith.constant 2 : index
    %c0_250 = arith.constant 0 : index
    %228 = vector.load %arg19[%c1_248, %c2_249, %c0_250] : memref<18x18x8xf32, #tpu.memory_space<vmem>>, vector<16x16x8xf32>
    %229 = vector.shape_cast %228 : vector<16x16x8xf32> to vector<256x8xf32>
    %c5_251 = arith.constant 5 : index
    %c0_252 = arith.constant 0 : index
    %c0_253 = arith.constant 0 : index
    %230 = vector.load %arg10[%c5_251, %c0_252, %c0_253] : memref<9x8x8xf32, #tpu.memory_space<vmem>>, vector<1x8x8xf32>
    %231 = vector.shape_cast %230 : vector<1x8x8xf32> to vector<8x8xf32>
    %cst_254 = arith.constant dense<0.000000e+00> : vector<256x8xf32>
    %232 = tpu.matmul %229, %231, %cst_254 {dimension_numbers = #tpu.dot_dimension_numbers<[1], [0], [0], [1], [0, 0, 1, 1], [], []>} : vector<256x8xf32>, vector<8x8xf32>, vector<256x8xf32> -> vector<256x8xf32>
    %233 = arith.addf %227, %232 : vector<256x8xf32>
    %c2_255 = arith.constant 2 : index
    %c0_256 = arith.constant 0 : index
    %c0_257 = arith.constant 0 : index
    %234 = vector.load %arg19[%c2_255, %c0_256, %c0_257] : memref<18x18x8xf32, #tpu.memory_space<vmem>>, vector<16x16x8xf32>
    %235 = vector.shape_cast %234 : vector<16x16x8xf32> to vector<256x8xf32>
    %c6_258 = arith.constant 6 : index
    %c0_259 = arith.constant 0 : index
    %c0_260 = arith.constant 0 : index
    %236 = vector.load %arg10[%c6_258, %c0_259, %c0_260] : memref<9x8x8xf32, #tpu.memory_space<vmem>>, vector<1x8x8xf32>
    %237 = vector.shape_cast %236 : vector<1x8x8xf32> to vector<8x8xf32>
    %cst_261 = arith.constant dense<0.000000e+00> : vector<256x8xf32>
    %238 = tpu.matmul %235, %237, %cst_261 {dimension_numbers = #tpu.dot_dimension_numbers<[1], [0], [0], [1], [0, 0, 1, 1], [], []>} : vector<256x8xf32>, vector<8x8xf32>, vector<256x8xf32> -> vector<256x8xf32>
    %239 = arith.addf %233, %238 : vector<256x8xf32>
    %c2_262 = arith.constant 2 : index
    %c1_263 = arith.constant 1 : index
    %c0_264 = arith.constant 0 : index
    %240 = vector.load %arg19[%c2_262, %c1_263, %c0_264] : memref<18x18x8xf32, #tpu.memory_space<vmem>>, vector<16x16x8xf32>
    %241 = vector.shape_cast %240 : vector<16x16x8xf32> to vector<256x8xf32>
    %c7_265 = arith.constant 7 : index
    %c0_266 = arith.constant 0 : index
    %c0_267 = arith.constant 0 : index
    %242 = vector.load %arg10[%c7_265, %c0_266, %c0_267] : memref<9x8x8xf32, #tpu.memory_space<vmem>>, vector<1x8x8xf32>
    %243 = vector.shape_cast %242 : vector<1x8x8xf32> to vector<8x8xf32>
    %cst_268 = arith.constant dense<0.000000e+00> : vector<256x8xf32>
    %244 = tpu.matmul %241, %243, %cst_268 {dimension_numbers = #tpu.dot_dimension_numbers<[1], [0], [0], [1], [0, 0, 1, 1], [], []>} : vector<256x8xf32>, vector<8x8xf32>, vector<256x8xf32> -> vector<256x8xf32>
    %245 = arith.addf %239, %244 : vector<256x8xf32>
    %c2_269 = arith.constant 2 : index
    %c2_270 = arith.constant 2 : index
    %c0_271 = arith.constant 0 : index
    %246 = vector.load %arg19[%c2_269, %c2_270, %c0_271] : memref<18x18x8xf32, #tpu.memory_space<vmem>>, vector<16x16x8xf32>
    %247 = vector.shape_cast %246 : vector<16x16x8xf32> to vector<256x8xf32>
    %c8_272 = arith.constant 8 : index
    %c0_273 = arith.constant 0 : index
    %c0_274 = arith.constant 0 : index
    %248 = vector.load %arg10[%c8_272, %c0_273, %c0_274] : memref<9x8x8xf32, #tpu.memory_space<vmem>>, vector<1x8x8xf32>
    %249 = vector.shape_cast %248 : vector<1x8x8xf32> to vector<8x8xf32>
    %cst_275 = arith.constant dense<0.000000e+00> : vector<256x8xf32>
    %250 = tpu.matmul %247, %249, %cst_275 {dimension_numbers = #tpu.dot_dimension_numbers<[1], [0], [0], [1], [0, 0, 1, 1], [], []>} : vector<256x8xf32>, vector<8x8xf32>, vector<256x8xf32> -> vector<256x8xf32>
    %251 = arith.addf %245, %250 : vector<256x8xf32>
    %c0_276 = arith.constant 0 : index
    %c0_277 = arith.constant 0 : index
    %c0_278 = arith.constant 0 : index
    %252 = vector.load %arg16[%c0_276, %c0_277, %c0_278] : memref<1x256x8xf32, #tpu.memory_space<vmem>>, vector<1x256x8xf32>
    %253 = vector.shape_cast %252 : vector<1x256x8xf32> to vector<256x8xf32>
    %254 = vector.shape_cast %251 : vector<256x8xf32> to vector<1x256x8xf32>
    tpu.vector_store %arg16[%c0_276, %c0_277, %c0_278], %254 {strides = array<i32>} : memref<1x256x8xf32, #tpu.memory_space<vmem>>, vector<1x256x8xf32>,
    return
  }
  func.func @transform_0(%arg0: i32) -> (i32, i32, i32, i32) {
    %c0_i32 = arith.constant 0 : i32
    %c0_i32_0 = arith.constant 0 : i32
    %c0_i32_1 = arith.constant 0 : i32
    %c0_i32_2 = arith.constant 0 : i32
    return %arg0, %c0_i32, %c0_i32_0, %c0_i32_1 : i32, i32, i32, i32
  }
  func.func @transform_1(%arg0: i32) -> (i32, i32, i32, i32) {
    %c0_i32 = arith.constant 0 : i32
    %c0_i32_0 = arith.constant 0 : i32
    %c0_i32_1 = arith.constant 0 : i32
    %c0_i32_2 = arith.constant 0 : i32
    return %arg0, %c0_i32, %c0_i32_0, %c0_i32_1 : i32, i32, i32, i32
  }
  func.func @transform_2(%arg0: i32) -> (i32, i32, i32, i32) {
    %c0_i32 = arith.constant 0 : i32
    %c0_i32_0 = arith.constant 0 : i32
    %c0_i32_1 = arith.constant 0 : i32
    %c0_i32_2 = arith.constant 0 : i32
    return %arg0, %c0_i32, %c0_i32_0, %c0_i32_1 : i32, i32, i32, i32
  }
  func.func @transform_3(%arg0: i32) -> (i32, i32) {
    %c0_i32 = arith.constant 0 : i32
    %c0_i32_0 = arith.constant 0 : i32
    %c0_i32_1 = arith.constant 0 : i32
    return %c0_i32, %c0_i32_0 : i32, i32
  }
  func.func @transform_4(%arg0: i32) -> (i32, i32) {
    %c0_i32 = arith.constant 0 : i32
    %c0_i32_0 = arith.constant 0 : i32
    %c0_i32_1 = arith.constant 0 : i32
    return %c0_i32, %c0_i32_0 : i32, i32
  }
  func.func @transform_5(%arg0: i32) -> (i32, i32) {
    %c0_i32 = arith.constant 0 : i32
    %c0_i32_0 = arith.constant 0 : i32
    %c0_i32_1 = arith.constant 0 : i32
    return %c0_i32, %c0_i32_0 : i32, i32
  }
  func.func @transform_6(%arg0: i32) -> (i32, i32) {
    %c0_i32 = arith.constant 0 : i32
    %c0_i32_0 = arith.constant 0 : i32
    %c0_i32_1 = arith.constant 0 : i32
    return %c0_i32, %c0_i32_0 : i32, i32
  }
  func.func @transform_7(%arg0: i32) -> (i32, i32) {
    %c0_i32 = arith.constant 0 : i32
    %c0_i32_0 = arith.constant 0 : i32
    %c0_i32_1 = arith.constant 0 : i32
    return %c0_i32, %c0_i32_0 : i32, i32
  }
  func.func @transform_8(%arg0: i32) -> (i32, i32) {
    %c0_i32 = arith.constant 0 : i32
    %c0_i32_0 = arith.constant 0 : i32
    %c0_i32_1 = arith.constant 0 : i32
    return %c0_i32, %c0_i32_0 : i32, i32
  }
  func.func @transform_9(%arg0: i32) -> (i32, i32, i32) {
    %c0_i32 = arith.constant 0 : i32
    %c0_i32_0 = arith.constant 0 : i32
    %c0_i32_1 = arith.constant 0 : i32
    %c0_i32_2 = arith.constant 0 : i32
    return %c0_i32, %c0_i32_0, %c0_i32_1 : i32, i32, i32
  }
  func.func @transform_10(%arg0: i32) -> (i32, i32) {
    %c0_i32 = arith.constant 0 : i32
    %c0_i32_0 = arith.constant 0 : i32
    %c0_i32_1 = arith.constant 0 : i32
    return %c0_i32, %c0_i32_0 : i32, i32
  }
  func.func @transform_11(%arg0: i32) -> (i32, i32, i32) {
    %c0_i32 = arith.constant 0 : i32
    %c0_i32_0 = arith.constant 0 : i32
    %c0_i32_1 = arith.constant 0 : i32
    %c0_i32_2 = arith.constant 0 : i32
    return %c0_i32, %c0_i32_0, %c0_i32_1 : i32, i32, i32
  }
  func.func @transform_12(%arg0: i32) -> (i32, i32) {
    %c0_i32 = arith.constant 0 : i32
    %c0_i32_0 = arith.constant 0 : i32
    %c0_i32_1 = arith.constant 0 : i32
    return %c0_i32, %c0_i32_0 : i32, i32
  }
  func.func @transform_13(%arg0: i32) -> (i32, i32, i32) {
    %c0_i32 = arith.constant 0 : i32
    %c0_i32_0 = arith.constant 0 : i32
    %c0_i32_1 = arith.constant 0 : i32
    %c0_i32_2 = arith.constant 0 : i32
    return %c0_i32, %c0_i32_0, %c0_i32_1 : i32, i32, i32
  }
  func.func @transform_14(%arg0: i32) -> (i32, i32) {
    %c0_i32 = arith.constant 0 : i32
    %c0_i32_0 = arith.constant 0 : i32
    %c0_i32_1 = arith.constant 0 : i32
    return %c0_i32, %c0_i32_0 : i32, i32
  }
  func.func @transform_15(%arg0: i32) -> (i32, i32, i32) {
    %c0_i32 = arith.constant 0 : i32
    %c0_i32_0 = arith.constant 0 : i32
    %c0_i32_1 = arith.constant 0 : i32
    return %arg0, %c0_i32, %c0_i32_0 : i32, i32, i32
  }
  func.func @transform_16(%arg0: i32) -> (i32, i32, i32) {
    %c0_i32 = arith.constant 0 : i32
    %c0_i32_0 = arith.constant 0 : i32
    %c0_i32_1 = arith.constant 0 : i32
    return %arg0, %c0_i32, %c0_i32_0 : i32, i32, i32
  }
  func.func @transform_17(%arg0: i32) -> (i32, i32, i32) {
    %c0_i32 = arith.constant 0 : i32
    %c0_i32_0 = arith.constant 0 : i32
    %c0_i32_1 = arith.constant 0 : i32
    return %arg0, %c0_i32, %c0_i32_0 : i32, i32, i32
  }
}

module attributes {stable_mosaic.version = 11 : i64} {
  func.func @_fpn_p6p7_kernel(%arg0: i32, %arg1: memref<1x4x4x8xf32, #tpu.memory_space<vmem>>, %arg2: memref<9x8x8xf32, #tpu.memory_space<vmem>>, %arg3: memref<1x8xf32, #tpu.memory_space<vmem>>, %arg4: memref<9x8x8xf32, #tpu.memory_space<vmem>>, %arg5: memref<1x8xf32, #tpu.memory_space<vmem>>, %arg6: memref<1x4x8xf32, #tpu.memory_space<vmem>>, %arg7: memref<1x1x8xf32, #tpu.memory_space<vmem>>, %arg8: memref<6x6x8xf32, #tpu.memory_space<vmem>>, %arg9: memref<4x4x8xf32, #tpu.memory_space<vmem>>) attributes {dimension_semantics = [#tpu.dimension_semantics<parallel>], iteration_bounds = array<i64: 2>, scalar_prefetch = 0 : i64, scratch_operands = 2 : i64, tpu.core_type = #tpu.core_type<tc>, window_params = [{transform_indices = @transform_0, window_bounds = array<i64: 1, 4, 4, 8>}, {pipeline_mode = #tpu.pipeline_mode<synchronous>, transform_indices = @transform_1, window_bounds = array<i64: 9, 8, 8>}, {pipeline_mode = #tpu.pipeline_mode<synchronous>, transform_indices = @transform_2, window_bounds = array<i64: 1, 8>}, {pipeline_mode = #tpu.pipeline_mode<synchronous>, transform_indices = @transform_3, window_bounds = array<i64: 9, 8, 8>}, {pipeline_mode = #tpu.pipeline_mode<synchronous>, transform_indices = @transform_4, window_bounds = array<i64: 1, 8>}, {transform_indices = @transform_5, window_bounds = array<i64: 1, 4, 8>}, {transform_indices = @transform_6, window_bounds = array<i64: 1, 1, 8>}]} {
    %c0 = arith.constant 0 : index
    %c0_0 = arith.constant 0 : index
    %c0_1 = arith.constant 0 : index
    %c0_2 = arith.constant 0 : index
    %0 = vector.load %arg1[%c0, %c0_0, %c0_1, %c0_2] : memref<1x4x4x8xf32, #tpu.memory_space<vmem>>, vector<1x4x4x8xf32>
    %1 = vector.shape_cast %0 : vector<1x4x4x8xf32> to vector<4x4x8xf32>
    %cst = arith.constant 0.000000e+00 : f32
    %2 = vector.broadcast %cst : f32 to vector<1x6x8xf32>
    %c0_3 = arith.constant 0 : index
    %c0_4 = arith.constant 0 : index
    %c0_5 = arith.constant 0 : index
    %3 = vector.load %arg8[%c0_3, %c0_4, %c0_5] : memref<6x6x8xf32, #tpu.memory_space<vmem>>, vector<1x6x8xf32>
    tpu.vector_store %arg8[%c0_3, %c0_4, %c0_5], %2 {strides = array<i32>} : memref<6x6x8xf32, #tpu.memory_space<vmem>>, vector<1x6x8xf32>,
    %cst_6 = arith.constant 0.000000e+00 : f32
    %4 = vector.broadcast %cst_6 : f32 to vector<1x6x8xf32>
    %c5 = arith.constant 5 : index
    %c0_7 = arith.constant 0 : index
    %c0_8 = arith.constant 0 : index
    %5 = vector.load %arg8[%c5, %c0_7, %c0_8] : memref<6x6x8xf32, #tpu.memory_space<vmem>>, vector<1x6x8xf32>
    tpu.vector_store %arg8[%c5, %c0_7, %c0_8], %4 {strides = array<i32>} : memref<6x6x8xf32, #tpu.memory_space<vmem>>, vector<1x6x8xf32>,
    %cst_9 = arith.constant 0.000000e+00 : f32
    %6 = vector.broadcast %cst_9 : f32 to vector<6x1x8xf32>
    %c0_10 = arith.constant 0 : index
    %c0_11 = arith.constant 0 : index
    %c0_12 = arith.constant 0 : index
    %7 = vector.load %arg8[%c0_10, %c0_11, %c0_12] : memref<6x6x8xf32, #tpu.memory_space<vmem>>, vector<6x1x8xf32>
    tpu.vector_store %arg8[%c0_10, %c0_11, %c0_12], %6 {strides = array<i32>} : memref<6x6x8xf32, #tpu.memory_space<vmem>>, vector<6x1x8xf32>,
    %cst_13 = arith.constant 0.000000e+00 : f32
    %8 = vector.broadcast %cst_13 : f32 to vector<6x1x8xf32>
    %c0_14 = arith.constant 0 : index
    %c5_15 = arith.constant 5 : index
    %c0_16 = arith.constant 0 : index
    %9 = vector.load %arg8[%c0_14, %c5_15, %c0_16] : memref<6x6x8xf32, #tpu.memory_space<vmem>>, vector<6x1x8xf32>
    tpu.vector_store %arg8[%c0_14, %c5_15, %c0_16], %8 {strides = array<i32>} : memref<6x6x8xf32, #tpu.memory_space<vmem>>, vector<6x1x8xf32>,
    %c1 = arith.constant 1 : index
    %c1_17 = arith.constant 1 : index
    %c0_18 = arith.constant 0 : index
    %10 = vector.load %arg8[%c1, %c1_17, %c0_18] : memref<6x6x8xf32, #tpu.memory_space<vmem>>, vector<4x4x8xf32>
    tpu.vector_store %arg8[%c1, %c1_17, %c0_18], %1 {strides = array<i32>} : memref<6x6x8xf32, #tpu.memory_space<vmem>>, vector<4x4x8xf32>,
    %c0_19 = arith.constant 0 : index
    %c0_20 = arith.constant 0 : index
    %c0_21 = arith.constant 0 : index
    %11 = vector.load %arg8[%c0_19, %c0_20, %c0_21] : memref<6x6x8xf32, #tpu.memory_space<vmem>>, vector<6x6x8xf32>
    %12 = vector.shape_cast %11 : vector<6x6x8xf32> to vector<3x2x6x8xf32>
    %13 = vector.extract_strided_slice %12 {offsets = [0, 0, 0, 0], sizes = [3, 1, 6, 8], strides = [1, 1, 1, 1]} : vector<3x2x6x8xf32> to vector<3x1x6x8xf32>
    %14 = vector.shape_cast %13 : vector<3x1x6x8xf32> to vector<3x6x8xf32>
    %15 = vector.shape_cast %11 : vector<6x6x8xf32> to vector<3x2x6x8xf32>
    %16 = vector.extract_strided_slice %15 {offsets = [0, 1, 0, 0], sizes = [3, 1, 6, 8], strides = [1, 1, 1, 1]} : vector<3x2x6x8xf32> to vector<3x1x6x8xf32>
    %17 = vector.shape_cast %16 : vector<3x1x6x8xf32> to vector<3x6x8xf32>
    %18 = vector.shape_cast %14 : vector<3x6x8xf32> to vector<3x3x2x8xf32>
    %19 = vector.extract_strided_slice %18 {offsets = [0, 0, 0, 0], sizes = [3, 3, 1, 8], strides = [1, 1, 1, 1]} : vector<3x3x2x8xf32> to vector<3x3x1x8xf32>
    %20 = vector.shape_cast %19 : vector<3x3x1x8xf32> to vector<3x3x8xf32>
    %21 = vector.shape_cast %14 : vector<3x6x8xf32> to vector<3x3x2x8xf32>
    %22 = vector.extract_strided_slice %21 {offsets = [0, 0, 1, 0], sizes = [3, 3, 1, 8], strides = [1, 1, 1, 1]} : vector<3x3x2x8xf32> to vector<3x3x1x8xf32>
    %23 = vector.shape_cast %22 : vector<3x3x1x8xf32> to vector<3x3x8xf32>
    %24 = vector.shape_cast %17 : vector<3x6x8xf32> to vector<3x3x2x8xf32>
    %25 = vector.extract_strided_slice %24 {offsets = [0, 0, 0, 0], sizes = [3, 3, 1, 8], strides = [1, 1, 1, 1]} : vector<3x3x2x8xf32> to vector<3x3x1x8xf32>
    %26 = vector.shape_cast %25 : vector<3x3x1x8xf32> to vector<3x3x8xf32>
    %27 = vector.shape_cast %17 : vector<3x6x8xf32> to vector<3x3x2x8xf32>
    %28 = vector.extract_strided_slice %27 {offsets = [0, 0, 1, 0], sizes = [3, 3, 1, 8], strides = [1, 1, 1, 1]} : vector<3x3x2x8xf32> to vector<3x3x1x8xf32>
    %29 = vector.shape_cast %28 : vector<3x3x1x8xf32> to vector<3x3x8xf32>
    %cst_22 = arith.constant 0.000000e+00 : f32
    %30 = vector.broadcast %cst_22 : f32 to vector<4x8xf32>
    %c0_23 = arith.constant 0 : index
    %c0_24 = arith.constant 0 : index
    %31 = vector.load %arg3[%c0_23, %c0_24] : memref<1x8xf32, #tpu.memory_space<vmem>>, vector<1x8xf32>
    %32 = vector.broadcast %31 : vector<1x8xf32> to vector<4x8xf32>
    %33 = arith.addf %30, %32 : vector<4x8xf32>
    %34 = vector.extract_strided_slice %20 {offsets = [0, 0, 0], sizes = [2, 2, 8], strides = [1, 1, 1]} : vector<3x3x8xf32> to vector<2x2x8xf32>
    %35 = vector.shape_cast %34 : vector<2x2x8xf32> to vector<4x8xf32>
    %c0_25 = arith.constant 0 : index
    %c0_26 = arith.constant 0 : index
    %c0_27 = arith.constant 0 : index
    %36 = vector.load %arg2[%c0_25, %c0_26, %c0_27] : memref<9x8x8xf32, #tpu.memory_space<vmem>>, vector<1x8x8xf32>
    %37 = vector.shape_cast %36 : vector<1x8x8xf32> to vector<8x8xf32>
    %cst_28 = arith.constant dense<0.000000e+00> : vector<4x8xf32>
    %38 = tpu.matmul %35, %37, %cst_28 {dimension_numbers = #tpu.dot_dimension_numbers<[1], [0], [0], [1], [0, 0, 1, 1], [], []>} : vector<4x8xf32>, vector<8x8xf32>, vector<4x8xf32> -> vector<4x8xf32>
    %39 = arith.addf %33, %38 : vector<4x8xf32>
    %40 = vector.extract_strided_slice %23 {offsets = [0, 0, 0], sizes = [2, 2, 8], strides = [1, 1, 1]} : vector<3x3x8xf32> to vector<2x2x8xf32>
    %41 = vector.shape_cast %40 : vector<2x2x8xf32> to vector<4x8xf32>
    %c1_29 = arith.constant 1 : index
    %c0_30 = arith.constant 0 : index
    %c0_31 = arith.constant 0 : index
    %42 = vector.load %arg2[%c1_29, %c0_30, %c0_31] : memref<9x8x8xf32, #tpu.memory_space<vmem>>, vector<1x8x8xf32>
    %43 = vector.shape_cast %42 : vector<1x8x8xf32> to vector<8x8xf32>
    %cst_32 = arith.constant dense<0.000000e+00> : vector<4x8xf32>
    %44 = tpu.matmul %41, %43, %cst_32 {dimension_numbers = #tpu.dot_dimension_numbers<[1], [0], [0], [1], [0, 0, 1, 1], [], []>} : vector<4x8xf32>, vector<8x8xf32>, vector<4x8xf32> -> vector<4x8xf32>
    %45 = arith.addf %39, %44 : vector<4x8xf32>
    %46 = vector.extract_strided_slice %20 {offsets = [0, 1, 0], sizes = [2, 2, 8], strides = [1, 1, 1]} : vector<3x3x8xf32> to vector<2x2x8xf32>
    %47 = vector.shape_cast %46 : vector<2x2x8xf32> to vector<4x8xf32>
    %c2 = arith.constant 2 : index
    %c0_33 = arith.constant 0 : index
    %c0_34 = arith.constant 0 : index
    %48 = vector.load %arg2[%c2, %c0_33, %c0_34] : memref<9x8x8xf32, #tpu.memory_space<vmem>>, vector<1x8x8xf32>
    %49 = vector.shape_cast %48 : vector<1x8x8xf32> to vector<8x8xf32>
    %cst_35 = arith.constant dense<0.000000e+00> : vector<4x8xf32>
    %50 = tpu.matmul %47, %49, %cst_35 {dimension_numbers = #tpu.dot_dimension_numbers<[1], [0], [0], [1], [0, 0, 1, 1], [], []>} : vector<4x8xf32>, vector<8x8xf32>, vector<4x8xf32> -> vector<4x8xf32>
    %51 = arith.addf %45, %50 : vector<4x8xf32>
    %52 = vector.extract_strided_slice %26 {offsets = [0, 0, 0], sizes = [2, 2, 8], strides = [1, 1, 1]} : vector<3x3x8xf32> to vector<2x2x8xf32>
    %53 = vector.shape_cast %52 : vector<2x2x8xf32> to vector<4x8xf32>
    %c3 = arith.constant 3 : index
    %c0_36 = arith.constant 0 : index
    %c0_37 = arith.constant 0 : index
    %54 = vector.load %arg2[%c3, %c0_36, %c0_37] : memref<9x8x8xf32, #tpu.memory_space<vmem>>, vector<1x8x8xf32>
    %55 = vector.shape_cast %54 : vector<1x8x8xf32> to vector<8x8xf32>
    %cst_38 = arith.constant dense<0.000000e+00> : vector<4x8xf32>
    %56 = tpu.matmul %53, %55, %cst_38 {dimension_numbers = #tpu.dot_dimension_numbers<[1], [0], [0], [1], [0, 0, 1, 1], [], []>} : vector<4x8xf32>, vector<8x8xf32>, vector<4x8xf32> -> vector<4x8xf32>
    %57 = arith.addf %51, %56 : vector<4x8xf32>
    %58 = vector.extract_strided_slice %29 {offsets = [0, 0, 0], sizes = [2, 2, 8], strides = [1, 1, 1]} : vector<3x3x8xf32> to vector<2x2x8xf32>
    %59 = vector.shape_cast %58 : vector<2x2x8xf32> to vector<4x8xf32>
    %c4 = arith.constant 4 : index
    %c0_39 = arith.constant 0 : index
    %c0_40 = arith.constant 0 : index
    %60 = vector.load %arg2[%c4, %c0_39, %c0_40] : memref<9x8x8xf32, #tpu.memory_space<vmem>>, vector<1x8x8xf32>
    %61 = vector.shape_cast %60 : vector<1x8x8xf32> to vector<8x8xf32>
    %cst_41 = arith.constant dense<0.000000e+00> : vector<4x8xf32>
    %62 = tpu.matmul %59, %61, %cst_41 {dimension_numbers = #tpu.dot_dimension_numbers<[1], [0], [0], [1], [0, 0, 1, 1], [], []>} : vector<4x8xf32>, vector<8x8xf32>, vector<4x8xf32> -> vector<4x8xf32>
    %63 = arith.addf %57, %62 : vector<4x8xf32>
    %64 = vector.extract_strided_slice %26 {offsets = [0, 1, 0], sizes = [2, 2, 8], strides = [1, 1, 1]} : vector<3x3x8xf32> to vector<2x2x8xf32>
    %65 = vector.shape_cast %64 : vector<2x2x8xf32> to vector<4x8xf32>
    %c5_42 = arith.constant 5 : index
    %c0_43 = arith.constant 0 : index
    %c0_44 = arith.constant 0 : index
    %66 = vector.load %arg2[%c5_42, %c0_43, %c0_44] : memref<9x8x8xf32, #tpu.memory_space<vmem>>, vector<1x8x8xf32>
    %67 = vector.shape_cast %66 : vector<1x8x8xf32> to vector<8x8xf32>
    %cst_45 = arith.constant dense<0.000000e+00> : vector<4x8xf32>
    %68 = tpu.matmul %65, %67, %cst_45 {dimension_numbers = #tpu.dot_dimension_numbers<[1], [0], [0], [1], [0, 0, 1, 1], [], []>} : vector<4x8xf32>, vector<8x8xf32>, vector<4x8xf32> -> vector<4x8xf32>
    %69 = arith.addf %63, %68 : vector<4x8xf32>
    %70 = vector.extract_strided_slice %20 {offsets = [1, 0, 0], sizes = [2, 2, 8], strides = [1, 1, 1]} : vector<3x3x8xf32> to vector<2x2x8xf32>
    %71 = vector.shape_cast %70 : vector<2x2x8xf32> to vector<4x8xf32>
    %c6 = arith.constant 6 : index
    %c0_46 = arith.constant 0 : index
    %c0_47 = arith.constant 0 : index
    %72 = vector.load %arg2[%c6, %c0_46, %c0_47] : memref<9x8x8xf32, #tpu.memory_space<vmem>>, vector<1x8x8xf32>
    %73 = vector.shape_cast %72 : vector<1x8x8xf32> to vector<8x8xf32>
    %cst_48 = arith.constant dense<0.000000e+00> : vector<4x8xf32>
    %74 = tpu.matmul %71, %73, %cst_48 {dimension_numbers = #tpu.dot_dimension_numbers<[1], [0], [0], [1], [0, 0, 1, 1], [], []>} : vector<4x8xf32>, vector<8x8xf32>, vector<4x8xf32> -> vector<4x8xf32>
    %75 = arith.addf %69, %74 : vector<4x8xf32>
    %76 = vector.extract_strided_slice %23 {offsets = [1, 0, 0], sizes = [2, 2, 8], strides = [1, 1, 1]} : vector<3x3x8xf32> to vector<2x2x8xf32>
    %77 = vector.shape_cast %76 : vector<2x2x8xf32> to vector<4x8xf32>
    %c7 = arith.constant 7 : index
    %c0_49 = arith.constant 0 : index
    %c0_50 = arith.constant 0 : index
    %78 = vector.load %arg2[%c7, %c0_49, %c0_50] : memref<9x8x8xf32, #tpu.memory_space<vmem>>, vector<1x8x8xf32>
    %79 = vector.shape_cast %78 : vector<1x8x8xf32> to vector<8x8xf32>
    %cst_51 = arith.constant dense<0.000000e+00> : vector<4x8xf32>
    %80 = tpu.matmul %77, %79, %cst_51 {dimension_numbers = #tpu.dot_dimension_numbers<[1], [0], [0], [1], [0, 0, 1, 1], [], []>} : vector<4x8xf32>, vector<8x8xf32>, vector<4x8xf32> -> vector<4x8xf32>
    %81 = arith.addf %75, %80 : vector<4x8xf32>
    %82 = vector.extract_strided_slice %20 {offsets = [1, 1, 0], sizes = [2, 2, 8], strides = [1, 1, 1]} : vector<3x3x8xf32> to vector<2x2x8xf32>
    %83 = vector.shape_cast %82 : vector<2x2x8xf32> to vector<4x8xf32>
    %c8 = arith.constant 8 : index
    %c0_52 = arith.constant 0 : index
    %c0_53 = arith.constant 0 : index
    %84 = vector.load %arg2[%c8, %c0_52, %c0_53] : memref<9x8x8xf32, #tpu.memory_space<vmem>>, vector<1x8x8xf32>
    %85 = vector.shape_cast %84 : vector<1x8x8xf32> to vector<8x8xf32>
    %cst_54 = arith.constant dense<0.000000e+00> : vector<4x8xf32>
    %86 = tpu.matmul %83, %85, %cst_54 {dimension_numbers = #tpu.dot_dimension_numbers<[1], [0], [0], [1], [0, 0, 1, 1], [], []>} : vector<4x8xf32>, vector<8x8xf32>, vector<4x8xf32> -> vector<4x8xf32>
    %87 = arith.addf %81, %86 : vector<4x8xf32>
    %c0_55 = arith.constant 0 : index
    %c0_56 = arith.constant 0 : index
    %c0_57 = arith.constant 0 : index
    %88 = vector.load %arg6[%c0_55, %c0_56, %c0_57] : memref<1x4x8xf32, #tpu.memory_space<vmem>>, vector<1x4x8xf32>
    %89 = vector.shape_cast %88 : vector<1x4x8xf32> to vector<4x8xf32>
    %90 = vector.shape_cast %87 : vector<4x8xf32> to vector<1x4x8xf32>
    tpu.vector_store %arg6[%c0_55, %c0_56, %c0_57], %90 {strides = array<i32>} : memref<1x4x8xf32, #tpu.memory_space<vmem>>, vector<1x4x8xf32>,
    %cst_58 = arith.constant 0.000000e+00 : f32
    %91 = vector.broadcast %cst_58 : f32 to vector<4x8xf32>
    %92 = arith.maximumf %87, %91 : vector<4x8xf32>
    %93 = vector.shape_cast %92 : vector<4x8xf32> to vector<2x2x8xf32>
    %cst_59 = arith.constant 0.000000e+00 : f32
    %94 = vector.broadcast %cst_59 : f32 to vector<1x4x8xf32>
    %c0_60 = arith.constant 0 : index
    %c0_61 = arith.constant 0 : index
    %c0_62 = arith.constant 0 : index
    %95 = vector.load %arg9[%c0_60, %c0_61, %c0_62] : memref<4x4x8xf32, #tpu.memory_space<vmem>>, vector<1x4x8xf32>
    tpu.vector_store %arg9[%c0_60, %c0_61, %c0_62], %94 {strides = array<i32>} : memref<4x4x8xf32, #tpu.memory_space<vmem>>, vector<1x4x8xf32>,
    %cst_63 = arith.constant 0.000000e+00 : f32
    %96 = vector.broadcast %cst_63 : f32 to vector<1x4x8xf32>
    %c3_64 = arith.constant 3 : index
    %c0_65 = arith.constant 0 : index
    %c0_66 = arith.constant 0 : index
    %97 = vector.load %arg9[%c3_64, %c0_65, %c0_66] : memref<4x4x8xf32, #tpu.memory_space<vmem>>, vector<1x4x8xf32>
    tpu.vector_store %arg9[%c3_64, %c0_65, %c0_66], %96 {strides = array<i32>} : memref<4x4x8xf32, #tpu.memory_space<vmem>>, vector<1x4x8xf32>,
    %cst_67 = arith.constant 0.000000e+00 : f32
    %98 = vector.broadcast %cst_67 : f32 to vector<4x1x8xf32>
    %c0_68 = arith.constant 0 : index
    %c0_69 = arith.constant 0 : index
    %c0_70 = arith.constant 0 : index
    %99 = vector.load %arg9[%c0_68, %c0_69, %c0_70] : memref<4x4x8xf32, #tpu.memory_space<vmem>>, vector<4x1x8xf32>
    tpu.vector_store %arg9[%c0_68, %c0_69, %c0_70], %98 {strides = array<i32>} : memref<4x4x8xf32, #tpu.memory_space<vmem>>, vector<4x1x8xf32>,
    %cst_71 = arith.constant 0.000000e+00 : f32
    %100 = vector.broadcast %cst_71 : f32 to vector<4x1x8xf32>
    %c0_72 = arith.constant 0 : index
    %c3_73 = arith.constant 3 : index
    %c0_74 = arith.constant 0 : index
    %101 = vector.load %arg9[%c0_72, %c3_73, %c0_74] : memref<4x4x8xf32, #tpu.memory_space<vmem>>, vector<4x1x8xf32>
    tpu.vector_store %arg9[%c0_72, %c3_73, %c0_74], %100 {strides = array<i32>} : memref<4x4x8xf32, #tpu.memory_space<vmem>>, vector<4x1x8xf32>,
    %c1_75 = arith.constant 1 : index
    %c1_76 = arith.constant 1 : index
    %c0_77 = arith.constant 0 : index
    %102 = vector.load %arg9[%c1_75, %c1_76, %c0_77] : memref<4x4x8xf32, #tpu.memory_space<vmem>>, vector<2x2x8xf32>
    tpu.vector_store %arg9[%c1_75, %c1_76, %c0_77], %93 {strides = array<i32>} : memref<4x4x8xf32, #tpu.memory_space<vmem>>, vector<2x2x8xf32>,
    %c0_78 = arith.constant 0 : index
    %c0_79 = arith.constant 0 : index
    %c0_80 = arith.constant 0 : index
    %103 = vector.load %arg9[%c0_78, %c0_79, %c0_80] : memref<4x4x8xf32, #tpu.memory_space<vmem>>, vector<4x4x8xf32>
    %104 = vector.shape_cast %103 : vector<4x4x8xf32> to vector<2x2x4x8xf32>
    %105 = vector.extract_strided_slice %104 {offsets = [0, 0, 0, 0], sizes = [2, 1, 4, 8], strides = [1, 1, 1, 1]} : vector<2x2x4x8xf32> to vector<2x1x4x8xf32>
    %106 = vector.shape_cast %105 : vector<2x1x4x8xf32> to vector<2x4x8xf32>
    %107 = vector.shape_cast %103 : vector<4x4x8xf32> to vector<2x2x4x8xf32>
    %108 = vector.extract_strided_slice %107 {offsets = [0, 1, 0, 0], sizes = [2, 1, 4, 8], strides = [1, 1, 1, 1]} : vector<2x2x4x8xf32> to vector<2x1x4x8xf32>
    %109 = vector.shape_cast %108 : vector<2x1x4x8xf32> to vector<2x4x8xf32>
    %110 = vector.shape_cast %106 : vector<2x4x8xf32> to vector<2x2x2x8xf32>
    %111 = vector.extract_strided_slice %110 {offsets = [0, 0, 0, 0], sizes = [2, 2, 1, 8], strides = [1, 1, 1, 1]} : vector<2x2x2x8xf32> to vector<2x2x1x8xf32>
    %112 = vector.shape_cast %111 : vector<2x2x1x8xf32> to vector<2x2x8xf32>
    %113 = vector.shape_cast %106 : vector<2x4x8xf32> to vector<2x2x2x8xf32>
    %114 = vector.extract_strided_slice %113 {offsets = [0, 0, 1, 0], sizes = [2, 2, 1, 8], strides = [1, 1, 1, 1]} : vector<2x2x2x8xf32> to vector<2x2x1x8xf32>
    %115 = vector.shape_cast %114 : vector<2x2x1x8xf32> to vector<2x2x8xf32>
    %116 = vector.shape_cast %109 : vector<2x4x8xf32> to vector<2x2x2x8xf32>
    %117 = vector.extract_strided_slice %116 {offsets = [0, 0, 0, 0], sizes = [2, 2, 1, 8], strides = [1, 1, 1, 1]} : vector<2x2x2x8xf32> to vector<2x2x1x8xf32>
    %118 = vector.shape_cast %117 : vector<2x2x1x8xf32> to vector<2x2x8xf32>
    %119 = vector.shape_cast %109 : vector<2x4x8xf32> to vector<2x2x2x8xf32>
    %120 = vector.extract_strided_slice %119 {offsets = [0, 0, 1, 0], sizes = [2, 2, 1, 8], strides = [1, 1, 1, 1]} : vector<2x2x2x8xf32> to vector<2x2x1x8xf32>
    %121 = vector.shape_cast %120 : vector<2x2x1x8xf32> to vector<2x2x8xf32>
    %cst_81 = arith.constant 0.000000e+00 : f32
    %122 = vector.broadcast %cst_81 : f32 to vector<1x8xf32>
    %c0_82 = arith.constant 0 : index
    %c0_83 = arith.constant 0 : index
    %123 = vector.load %arg5[%c0_82, %c0_83] : memref<1x8xf32, #tpu.memory_space<vmem>>, vector<1x8xf32>
    %124 = arith.addf %122, %123 : vector<1x8xf32>
    %125 = vector.extract_strided_slice %112 {offsets = [0, 0, 0], sizes = [1, 1, 8], strides = [1, 1, 1]} : vector<2x2x8xf32> to vector<1x1x8xf32>
    %126 = vector.shape_cast %125 : vector<1x1x8xf32> to vector<1x8xf32>
    %c0_84 = arith.constant 0 : index
    %c0_85 = arith.constant 0 : index
    %c0_86 = arith.constant 0 : index
    %127 = vector.load %arg4[%c0_84, %c0_85, %c0_86] : memref<9x8x8xf32, #tpu.memory_space<vmem>>, vector<1x8x8xf32>
    %128 = vector.shape_cast %127 : vector<1x8x8xf32> to vector<8x8xf32>
    %cst_87 = arith.constant dense<0.000000e+00> : vector<1x8xf32>
    %129 = tpu.matmul %126, %128, %cst_87 {dimension_numbers = #tpu.dot_dimension_numbers<[1], [0], [0], [1], [0, 0, 1, 1], [], []>} : vector<1x8xf32>, vector<8x8xf32>, vector<1x8xf32> -> vector<1x8xf32>
    %130 = arith.addf %124, %129 : vector<1x8xf32>
    %131 = vector.extract_strided_slice %115 {offsets = [0, 0, 0], sizes = [1, 1, 8], strides = [1, 1, 1]} : vector<2x2x8xf32> to vector<1x1x8xf32>
    %132 = vector.shape_cast %131 : vector<1x1x8xf32> to vector<1x8xf32>
    %c1_88 = arith.constant 1 : index
    %c0_89 = arith.constant 0 : index
    %c0_90 = arith.constant 0 : index
    %133 = vector.load %arg4[%c1_88, %c0_89, %c0_90] : memref<9x8x8xf32, #tpu.memory_space<vmem>>, vector<1x8x8xf32>
    %134 = vector.shape_cast %133 : vector<1x8x8xf32> to vector<8x8xf32>
    %cst_91 = arith.constant dense<0.000000e+00> : vector<1x8xf32>
    %135 = tpu.matmul %132, %134, %cst_91 {dimension_numbers = #tpu.dot_dimension_numbers<[1], [0], [0], [1], [0, 0, 1, 1], [], []>} : vector<1x8xf32>, vector<8x8xf32>, vector<1x8xf32> -> vector<1x8xf32>
    %136 = arith.addf %130, %135 : vector<1x8xf32>
    %137 = vector.extract_strided_slice %112 {offsets = [0, 1, 0], sizes = [1, 1, 8], strides = [1, 1, 1]} : vector<2x2x8xf32> to vector<1x1x8xf32>
    %138 = vector.shape_cast %137 : vector<1x1x8xf32> to vector<1x8xf32>
    %c2_92 = arith.constant 2 : index
    %c0_93 = arith.constant 0 : index
    %c0_94 = arith.constant 0 : index
    %139 = vector.load %arg4[%c2_92, %c0_93, %c0_94] : memref<9x8x8xf32, #tpu.memory_space<vmem>>, vector<1x8x8xf32>
    %140 = vector.shape_cast %139 : vector<1x8x8xf32> to vector<8x8xf32>
    %cst_95 = arith.constant dense<0.000000e+00> : vector<1x8xf32>
    %141 = tpu.matmul %138, %140, %cst_95 {dimension_numbers = #tpu.dot_dimension_numbers<[1], [0], [0], [1], [0, 0, 1, 1], [], []>} : vector<1x8xf32>, vector<8x8xf32>, vector<1x8xf32> -> vector<1x8xf32>
    %142 = arith.addf %136, %141 : vector<1x8xf32>
    %143 = vector.extract_strided_slice %118 {offsets = [0, 0, 0], sizes = [1, 1, 8], strides = [1, 1, 1]} : vector<2x2x8xf32> to vector<1x1x8xf32>
    %144 = vector.shape_cast %143 : vector<1x1x8xf32> to vector<1x8xf32>
    %c3_96 = arith.constant 3 : index
    %c0_97 = arith.constant 0 : index
    %c0_98 = arith.constant 0 : index
    %145 = vector.load %arg4[%c3_96, %c0_97, %c0_98] : memref<9x8x8xf32, #tpu.memory_space<vmem>>, vector<1x8x8xf32>
    %146 = vector.shape_cast %145 : vector<1x8x8xf32> to vector<8x8xf32>
    %cst_99 = arith.constant dense<0.000000e+00> : vector<1x8xf32>
    %147 = tpu.matmul %144, %146, %cst_99 {dimension_numbers = #tpu.dot_dimension_numbers<[1], [0], [0], [1], [0, 0, 1, 1], [], []>} : vector<1x8xf32>, vector<8x8xf32>, vector<1x8xf32> -> vector<1x8xf32>
    %148 = arith.addf %142, %147 : vector<1x8xf32>
    %149 = vector.extract_strided_slice %121 {offsets = [0, 0, 0], sizes = [1, 1, 8], strides = [1, 1, 1]} : vector<2x2x8xf32> to vector<1x1x8xf32>
    %150 = vector.shape_cast %149 : vector<1x1x8xf32> to vector<1x8xf32>
    %c4_100 = arith.constant 4 : index
    %c0_101 = arith.constant 0 : index
    %c0_102 = arith.constant 0 : index
    %151 = vector.load %arg4[%c4_100, %c0_101, %c0_102] : memref<9x8x8xf32, #tpu.memory_space<vmem>>, vector<1x8x8xf32>
    %152 = vector.shape_cast %151 : vector<1x8x8xf32> to vector<8x8xf32>
    %cst_103 = arith.constant dense<0.000000e+00> : vector<1x8xf32>
    %153 = tpu.matmul %150, %152, %cst_103 {dimension_numbers = #tpu.dot_dimension_numbers<[1], [0], [0], [1], [0, 0, 1, 1], [], []>} : vector<1x8xf32>, vector<8x8xf32>, vector<1x8xf32> -> vector<1x8xf32>
    %154 = arith.addf %148, %153 : vector<1x8xf32>
    %155 = vector.extract_strided_slice %118 {offsets = [0, 1, 0], sizes = [1, 1, 8], strides = [1, 1, 1]} : vector<2x2x8xf32> to vector<1x1x8xf32>
    %156 = vector.shape_cast %155 : vector<1x1x8xf32> to vector<1x8xf32>
    %c5_104 = arith.constant 5 : index
    %c0_105 = arith.constant 0 : index
    %c0_106 = arith.constant 0 : index
    %157 = vector.load %arg4[%c5_104, %c0_105, %c0_106] : memref<9x8x8xf32, #tpu.memory_space<vmem>>, vector<1x8x8xf32>
    %158 = vector.shape_cast %157 : vector<1x8x8xf32> to vector<8x8xf32>
    %cst_107 = arith.constant dense<0.000000e+00> : vector<1x8xf32>
    %159 = tpu.matmul %156, %158, %cst_107 {dimension_numbers = #tpu.dot_dimension_numbers<[1], [0], [0], [1], [0, 0, 1, 1], [], []>} : vector<1x8xf32>, vector<8x8xf32>, vector<1x8xf32> -> vector<1x8xf32>
    %160 = arith.addf %154, %159 : vector<1x8xf32>
    %161 = vector.extract_strided_slice %112 {offsets = [1, 0, 0], sizes = [1, 1, 8], strides = [1, 1, 1]} : vector<2x2x8xf32> to vector<1x1x8xf32>
    %162 = vector.shape_cast %161 : vector<1x1x8xf32> to vector<1x8xf32>
    %c6_108 = arith.constant 6 : index
    %c0_109 = arith.constant 0 : index
    %c0_110 = arith.constant 0 : index
    %163 = vector.load %arg4[%c6_108, %c0_109, %c0_110] : memref<9x8x8xf32, #tpu.memory_space<vmem>>, vector<1x8x8xf32>
    %164 = vector.shape_cast %163 : vector<1x8x8xf32> to vector<8x8xf32>
    %cst_111 = arith.constant dense<0.000000e+00> : vector<1x8xf32>
    %165 = tpu.matmul %162, %164, %cst_111 {dimension_numbers = #tpu.dot_dimension_numbers<[1], [0], [0], [1], [0, 0, 1, 1], [], []>} : vector<1x8xf32>, vector<8x8xf32>, vector<1x8xf32> -> vector<1x8xf32>
    %166 = arith.addf %160, %165 : vector<1x8xf32>
    %167 = vector.extract_strided_slice %115 {offsets = [1, 0, 0], sizes = [1, 1, 8], strides = [1, 1, 1]} : vector<2x2x8xf32> to vector<1x1x8xf32>
    %168 = vector.shape_cast %167 : vector<1x1x8xf32> to vector<1x8xf32>
    %c7_112 = arith.constant 7 : index
    %c0_113 = arith.constant 0 : index
    %c0_114 = arith.constant 0 : index
    %169 = vector.load %arg4[%c7_112, %c0_113, %c0_114] : memref<9x8x8xf32, #tpu.memory_space<vmem>>, vector<1x8x8xf32>
    %170 = vector.shape_cast %169 : vector<1x8x8xf32> to vector<8x8xf32>
    %cst_115 = arith.constant dense<0.000000e+00> : vector<1x8xf32>
    %171 = tpu.matmul %168, %170, %cst_115 {dimension_numbers = #tpu.dot_dimension_numbers<[1], [0], [0], [1], [0, 0, 1, 1], [], []>} : vector<1x8xf32>, vector<8x8xf32>, vector<1x8xf32> -> vector<1x8xf32>
    %172 = arith.addf %166, %171 : vector<1x8xf32>
    %173 = vector.extract_strided_slice %112 {offsets = [1, 1, 0], sizes = [1, 1, 8], strides = [1, 1, 1]} : vector<2x2x8xf32> to vector<1x1x8xf32>
    %174 = vector.shape_cast %173 : vector<1x1x8xf32> to vector<1x8xf32>
    %c8_116 = arith.constant 8 : index
    %c0_117 = arith.constant 0 : index
    %c0_118 = arith.constant 0 : index
    %175 = vector.load %arg4[%c8_116, %c0_117, %c0_118] : memref<9x8x8xf32, #tpu.memory_space<vmem>>, vector<1x8x8xf32>
    %176 = vector.shape_cast %175 : vector<1x8x8xf32> to vector<8x8xf32>
    %cst_119 = arith.constant dense<0.000000e+00> : vector<1x8xf32>
    %177 = tpu.matmul %174, %176, %cst_119 {dimension_numbers = #tpu.dot_dimension_numbers<[1], [0], [0], [1], [0, 0, 1, 1], [], []>} : vector<1x8xf32>, vector<8x8xf32>, vector<1x8xf32> -> vector<1x8xf32>
    %178 = arith.addf %172, %177 : vector<1x8xf32>
    %c0_120 = arith.constant 0 : index
    %c0_121 = arith.constant 0 : index
    %c0_122 = arith.constant 0 : index
    %179 = vector.load %arg7[%c0_120, %c0_121, %c0_122] : memref<1x1x8xf32, #tpu.memory_space<vmem>>, vector<1x1x8xf32>
    %180 = vector.shape_cast %179 : vector<1x1x8xf32> to vector<1x8xf32>
    %181 = vector.shape_cast %178 : vector<1x8xf32> to vector<1x1x8xf32>
    tpu.vector_store %arg7[%c0_120, %c0_121, %c0_122], %181 {strides = array<i32>} : memref<1x1x8xf32, #tpu.memory_space<vmem>>, vector<1x1x8xf32>,
    return
  }
  func.func @transform_0(%arg0: i32) -> (i32, i32, i32, i32) {
    %c0_i32 = arith.constant 0 : i32
    %c0_i32_0 = arith.constant 0 : i32
    %c0_i32_1 = arith.constant 0 : i32
    %c0_i32_2 = arith.constant 0 : i32
    return %arg0, %c0_i32, %c0_i32_0, %c0_i32_1 : i32, i32, i32, i32
  }
  func.func @transform_1(%arg0: i32) -> (i32, i32, i32) {
    %c0_i32 = arith.constant 0 : i32
    %c0_i32_0 = arith.constant 0 : i32
    %c0_i32_1 = arith.constant 0 : i32
    %c0_i32_2 = arith.constant 0 : i32
    return %c0_i32, %c0_i32_0, %c0_i32_1 : i32, i32, i32
  }
  func.func @transform_2(%arg0: i32) -> (i32, i32) {
    %c0_i32 = arith.constant 0 : i32
    %c0_i32_0 = arith.constant 0 : i32
    %c0_i32_1 = arith.constant 0 : i32
    return %c0_i32, %c0_i32_0 : i32, i32
  }
  func.func @transform_3(%arg0: i32) -> (i32, i32, i32) {
    %c0_i32 = arith.constant 0 : i32
    %c0_i32_0 = arith.constant 0 : i32
    %c0_i32_1 = arith.constant 0 : i32
    %c0_i32_2 = arith.constant 0 : i32
    return %c0_i32, %c0_i32_0, %c0_i32_1 : i32, i32, i32
  }
  func.func @transform_4(%arg0: i32) -> (i32, i32) {
    %c0_i32 = arith.constant 0 : i32
    %c0_i32_0 = arith.constant 0 : i32
    %c0_i32_1 = arith.constant 0 : i32
    return %c0_i32, %c0_i32_0 : i32, i32
  }
  func.func @transform_5(%arg0: i32) -> (i32, i32, i32) {
    %c0_i32 = arith.constant 0 : i32
    %c0_i32_0 = arith.constant 0 : i32
    %c0_i32_1 = arith.constant 0 : i32
    return %arg0, %c0_i32, %c0_i32_0 : i32, i32, i32
  }
  func.func @transform_6(%arg0: i32) -> (i32, i32, i32) {
    %c0_i32 = arith.constant 0 : i32
    %c0_i32_0 = arith.constant 0 : i32
    %c0_i32_1 = arith.constant 0 : i32
    return %arg0, %c0_i32, %c0_i32_0 : i32, i32, i32
  }
}

</mosaic_0001>

<llo_original>
// kernel: fpn_forward.3
$region0: #{fpn_forward.3}
  #allocation0 [shape = 'u32[]', space=smem, size = 0x4, offset = 0x4, fixed_abs, tag = 'smem constant byte address 0x4 - core index']
  #allocation1 [shape = 'u32[72,128]{1,0:T(1,128)}', space=vmem, size = 0x9000, scoped, tag = 'internal scratch']
  #allocation2 [shape = 'f32[6,6,8]{2,1,0:T(8,128)}', space=vmem, size = 0x6000, scoped, tag = 'scratch operand']
  #allocation3 [shape = 'f32[4,4,8]{2,1,0:T(4,128)}', space=vmem, size = 0x2000, scoped, tag = 'scratch operand']
  %s0 = inlined_call_operand.vmem [shape: f32[2,4,4,8], index: 0, kind: input, shape index: {}]
  %s1 = inlined_call_operand.vmem [shape: f32[9,8,8], index: 1, kind: input, shape index: {}]
  %s2 = inlined_call_operand.vmem [shape: f32[1,8], index: 2, kind: input, shape index: {}]
  %s3 = inlined_call_operand.vmem [shape: f32[9,8,8], index: 3, kind: input, shape index: {}]
  %s4 = inlined_call_operand.vmem [shape: f32[1,8], index: 4, kind: input, shape index: {}]
  %s5 = inlined_call_operand.hbm [shape: f32[2,4,8], index: 5, kind: output, shape index: {0}]
  %s6 = inlined_call_operand.hbm [shape: f32[2,1,8], index: 6, kind: output, shape index: {1}]
  %7 = xla_tuple %s5, %s6
  %s8 = sld [smem:[#allocation0]]
  $region61: #{fpn_forward.3} parent=0
    _
  %s10 = ssub.s32 1, %s8
  %s11 = scalar_select 0, %s10, %s8
  $region1: #{fpn_forward.3} parent=0
    #allocation4 [shape = 'u8[4096]{0}', space=vmem, size = 0x1000, scoped, tag = 'output window, operand 0']
    #allocation5 [shape = 's32[2]{0}', space=sflag, size = 0x8, scoped, tag = 'scoped memory for fpn_forward.3']
    #allocation6 [shape = 'u8[1024]{0}', space=vmem, size = 0x400, scoped, tag = 'output window, operand 1']
    #allocation7 [shape = 's32[2]{0}', space=sflag, size = 0x8, scoped, tag = 'scoped memory for fpn_forward.3']
    %12 = vsyncpa [#allocation5], 0
    %s13 = scalar_lea.sflag [#allocation5], 1
    %14 = vsyncpa %s13, 0
    %15 = vsyncpa [#allocation7], 0
    %s16 = scalar_lea.sflag [#allocation7], 1
    %17 = vsyncpa %s16, 0
    loop: start=0, step=1, limit=4
    $region2: #{fpn_forward.3} parent=1 // loop_pre_header
      _
    $region3: #{fpn_forward.3} parent=1 // loop_header
      %s19 = sphi 0, %s23
      %p20 = scmp.ge.s32.totalorder %s19, 4
      %s29 = sphi 0, %s31
      %s32 = sphi 0, %s29
      %s33 = sphi 0, %s32
      %s49 = sphi 0, %s33
      %s53 = sphi 0, %s53
      %s55 = sphi 0, %s53
      %s56 = sphi 0, %s55
      %s70 = sphi 0, %s56
      %s74 = sphi 0, %s74
      %s76 = sphi 0, %s74
      %s77 = sphi 0, %s76
      %s91 = sphi 0, %s77
      %s95 = sphi 0, %s95
      %s97 = sphi 0, %s95
      %s98 = sphi 0, %s97
      %s112 = sphi 0, %s98
      %s116 = sphi 0, %s116
      %s118 = sphi 0, %s116
      %s119 = sphi 0, %s118
      %s133 = sphi 0, %s119
      %s139 = sphi 0, %s141
      %s142 = sphi 0, %s139
      %s143 = sphi 0, %s142
      %s159 = sphi 0, %s143
      %s165 = sphi 0, %s167
      %s168 = sphi 0, %s165
      %s169 = sphi 0, %s168
      %s185 = sphi 0, %s169
    $region4: #{fpn_forward.3} parent=1 // loop_header_branch
      %22 = sbr.rel (%p20) target = $region8
    $region5: #{fpn_forward.3} parent=1 // loop_body
      %s24 = ssub.s32 %s19, 1
      %s25 = ssub.s32 %s19, 2
      %s26 = sadd.s32 %s19, 1
      %s27 = ssub.s32 %s19, %s26
      %p28 = scmp.eq.s32.totalorder %s27, 0
      %s30 = sadd.s32 %s29, 1
      %s31 = scalar_select %p28, %s29, %s30
      %p34 = pneg %p28
      %p35 = scmp.eq.s32.totalorder %s19, 1
      %p36 = por %p34, %p35
      %p37 = scmp.ne.s32.totalorder %s29, %s32
      %p38 = scmp.eq.s32.totalorder %s19, 0
      %p39 = por %p37, %p38
      %p40 = scmp.ne.s32.totalorder %s29, %s32
      %p41 = scmp.eq.s32.totalorder %s24, 1
      %p42 = por %p40, %p41
      %p43 = scmp.ne.s32.totalorder %s32, %s33
      %p44 = scmp.eq.s32.totalorder %s24, 0
      %p45 = por %p43, %p44
      %p46 = scmp.ne.s32.totalorder %s32, %s33
      %p47 = scmp.eq.s32.totalorder %s25, 1
      %p48 = por %p46, %p47
      %p50 = scmp.ne.s32.totalorder %s33, %s49
      %p51 = scmp.eq.s32.totalorder %s25, 0
      %p52 = por %p50, %p51
      %s54 = sadd.s32 %s53, 1
      %p57 = scmp.eq.s32.totalorder %s19, 1
      %p58 = scmp.ne.s32.totalorder %s53, %s55
      %p59 = scmp.eq.s32.totalorder %s19, 0
      %p60 = por %p58, %p59
      %p61 = scmp.ne.s32.totalorder %s53, %s55
      %p62 = scmp.eq.s32.totalorder %s24, 1
      %p63 = por %p61, %p62
      %p64 = scmp.ne.s32.totalorder %s55, %s56
      %p65 = scmp.eq.s32.totalorder %s24, 0
      %p66 = por %p64, %p65
      %p67 = scmp.ne.s32.totalorder %s55, %s56
      %p68 = scmp.eq.s32.totalorder %s25, 1
      %p69 = por %p67, %p68
      %p71 = scmp.ne.s32.totalorder %s56, %s70
      %p72 = scmp.eq.s32.totalorder %s25, 0
      %p73 = por %p71, %p72
      %s75 = sadd.s32 %s74, 1
      %p78 = scmp.eq.s32.totalorder %s19, 1
      %p79 = scmp.ne.s32.totalorder %s74, %s76
      %p80 = scmp.eq.s32.totalorder %s19, 0
      %p81 = por %p79, %p80
      %p82 = scmp.ne.s32.totalorder %s74, %s76
      %p83 = scmp.eq.s32.totalorder %s24, 1
      %p84 = por %p82, %p83
      %p85 = scmp.ne.s32.totalorder %s76, %s77
      %p86 = scmp.eq.s32.totalorder %s24, 0
      %p87 = por %p85, %p86
      %p88 = scmp.ne.s32.totalorder %s76, %s77
      %p89 = scmp.eq.s32.totalorder %s25, 1
      %p90 = por %p88, %p89
      %p92 = scmp.ne.s32.totalorder %s77, %s91
      %p93 = scmp.eq.s32.totalorder %s25, 0
      %p94 = por %p92, %p93
      %s96 = sadd.s32 %s95, 1
      %p99 = scmp.eq.s32.totalorder %s19, 1
      %p100 = scmp.ne.s32.totalorder %s95, %s97
      %p101 = scmp.eq.s32.totalorder %s19, 0
      %p102 = por %p100, %p101
      %p103 = scmp.ne.s32.totalorder %s95, %s97
      %p104 = scmp.eq.s32.totalorder %s24, 1
      %p105 = por %p103, %p104
      %p106 = scmp.ne.s32.totalorder %s97, %s98
      %p107 = scmp.eq.s32.totalorder %s24, 0
      %p108 = por %p106, %p107
      %p109 = scmp.ne.s32.totalorder %s97, %s98
      %p110 = scmp.eq.s32.totalorder %s25, 1
      %p111 = por %p109, %p110
      %p113 = scmp.ne.s32.totalorder %s98, %s112
      %p114 = scmp.eq.s32.totalorder %s25, 0
      %p115 = por %p113, %p114
      %s117 = sadd.s32 %s116, 1
      %p120 = scmp.eq.s32.totalorder %s19, 1
      %p121 = scmp.ne.s32.totalorder %s116, %s118
      %p122 = scmp.eq.s32.totalorder %s19, 0
      %p123 = por %p121, %p122
      %p124 = scmp.ne.s32.totalorder %s116, %s118
      %p125 = scmp.eq.s32.totalorder %s24, 1
      %p126 = por %p124, %p125
      %p127 = scmp.ne.s32.totalorder %s118, %s119
      %p128 = scmp.eq.s32.totalorder %s24, 0
      %p129 = por %p127, %p128
      %p130 = scmp.ne.s32.totalorder %s118, %s119
      %p131 = scmp.eq.s32.totalorder %s25, 1
      %p132 = por %p130, %p131
      %p134 = scmp.ne.s32.totalorder %s119, %s133
      %p135 = scmp.eq.s32.totalorder %s25, 0
      %p136 = por %p134, %p135
      %s137 = ssub.s32 %s19, %s26
      %p138 = scmp.eq.s32.totalorder %s137, 0
      %s140 = sadd.s32 %s139, 1
      %s141 = scalar_select %p138, %s139, %s140
      %p144 = pneg %p138
      %p145 = scmp.eq.s32.totalorder %s19, 1
      %p146 = por %p144, %p145
      %p147 = scmp.ne.s32.totalorder %s139, %s142
      %p148 = scmp.eq.s32.totalorder %s19, 0
      %p149 = por %p147, %p148
      %p150 = scmp.ne.s32.totalorder %s139, %s142
      %p151 = scmp.eq.s32.totalorder %s24, 1
      %p152 = por %p150, %p151
      %p153 = scmp.ne.s32.totalorder %s142, %s143
      %p154 = scmp.eq.s32.totalorder %s24, 0
      %p155 = por %p153, %p154
      %p156 = scmp.ne.s32.totalorder %s142, %s143
      %p157 = scmp.eq.s32.totalorder %s25, 1
      %p158 = por %p156, %p157
      %p160 = scmp.ne.s32.totalorder %s143, %s159
      %p161 = scmp.eq.s32.totalorder %s25, 0
      %p162 = por %p160, %p161
      %s163 = ssub.s32 %s19, %s26
      %p164 = scmp.eq.s32.totalorder %s163, 0
      %s166 = sadd.s32 %s165, 1
      %s167 = scalar_select %p164, %s165, %s166
      %p170 = pneg %p164
      %p171 = scmp.eq.s32.totalorder %s19, 1
      %p172 = por %p170, %p171
      %p173 = scmp.ne.s32.totalorder %s165, %s168
      %p174 = scmp.eq.s32.totalorder %s19, 0
      %p175 = por %p173, %p174
      %p176 = scmp.ne.s32.totalorder %s165, %s168
      %p177 = scmp.eq.s32.totalorder %s24, 1
      %p178 = por %p176, %p177
      %p179 = scmp.ne.s32.totalorder %s168, %s169
      %p180 = scmp.eq.s32.totalorder %s24, 0
      %p181 = por %p179, %p180
      %p182 = scmp.ne.s32.totalorder %s168, %s169
      %p183 = scmp.eq.s32.totalorder %s25, 1
      %p184 = por %p182, %p183
      %p186 = scmp.ne.s32.totalorder %s169, %s185
      %p187 = scmp.eq.s32.totalorder %s25, 0
      %p188 = por %p186, %p187
      %p189 = scmp.le.s32.totalorder 1, %s19
      %p190 = scmp.lt.s32.totalorder %s19, 3
      %p191 = pnand %p189, %p190
      %p192 = pneg %p191
      // Predicated region
      $region9: #{fpn_forward.3} parent=5 // pred_check
        _
      $region10: #{fpn_forward.3} parent=5 // pred_check_branch
        %194 = sbr.rel (%p191) target = $region12
      $region11: #{fpn_forward.3} parent=5 // pred_region
        %s195 = ssub.s32 %s19, 1
        // Predicated region
        $region13: #{fpn_forward.3} parent=11 // pred_check
          %p196 = pneg %p66
        $region14: #{fpn_forward.3} parent=11 // pred_check_branch
          %198 = sbr.rel (%p196) target = $region16
        $region15: #{fpn_forward.3} parent=11 // pred_region
          _
        $region16: #{fpn_forward.3} parent=11 // pred_fallthru
          _
        // Predicated region
        $region17: #{fpn_forward.3} parent=11 // pred_check
          %p199 = pneg %p87
        $region18: #{fpn_forward.3} parent=11 // pred_check_branch
          %201 = sbr.rel (%p199) target = $region20
        $region19: #{fpn_forward.3} parent=11 // pred_region
          _
        $region20: #{fpn_forward.3} parent=11 // pred_fallthru
          _
        // Predicated region
        $region21: #{fpn_forward.3} parent=11 // pred_check
          %p202 = pneg %p108
        $region22: #{fpn_forward.3} parent=11 // pred_check_branch
          %204 = sbr.rel (%p202) target = $region24
        $region23: #{fpn_forward.3} parent=11 // pred_region
          _
        $region24: #{fpn_forward.3} parent=11 // pred_fallthru
          _
        // Predicated region
        $region25: #{fpn_forward.3} parent=11 // pred_check
          %p205 = pneg %p129
        $region26: #{fpn_forward.3} parent=11 // pred_check_branch
          %207 = sbr.rel (%p205) target = $region28
        $region27: #{fpn_forward.3} parent=11 // pred_region
          _
        $region28: #{fpn_forward.3} parent=11 // pred_fallthru
          _
      $region12: #{fpn_forward.3} parent=5 // pred_fallthru
        _
      %p208 = scmp.lt.s32.totalorder %s19, 2
      // Predicated region
      $region29: #{fpn_forward.3} parent=5 // pred_check
        %p209 = pneg %p208
      $region30: #{fpn_forward.3} parent=5 // pred_check_branch
        %211 = sbr.rel (%p209) target = $region32
      $region31: #{fpn_forward.3} parent=5 // pred_region
        // Predicated region
        $region33: #{fpn_forward.3} parent=31 // pred_check
          %p212 = pneg %p39
        $region34: #{fpn_forward.3} parent=31 // pred_check_branch
          %214 = sbr.rel (%p212) target = $region36
        $region35: #{fpn_forward.3} parent=31 // pred_region
          %p215 = scmp.lt.s32.totalorder %s19, 1
          %s216 = scalar_select %p215, %s19, 1
          %s217 = smul.addr %s216, 4
          %s218 = smul.addr %s217, 4
          %s219 = scalar_lea.vmem %s0, %s218
        $region36: #{fpn_forward.3} parent=31 // pred_fallthru
          _
      $region32: #{fpn_forward.3} parent=5 // pred_fallthru
        _
      %p220 = scmp.le.s32.totalorder 1, %s19
      %p221 = scmp.lt.s32.totalorder %s19, 3
      %p222 = pnand %p220, %p221
      %p223 = pneg %p222
      // Predicated region
      $region37: #{fpn_forward.3} parent=5 // pred_check
        _
      $region38: #{fpn_forward.3} parent=5 // pred_check_branch
        %225 = sbr.rel (%p222) target = $region40
      $region39: #{fpn_forward.3} parent=5 // pred_region
        %s226 = ssub.s32 %s19, 1
        %p227 = scmp.lt.s32.totalorder %s24, 1
        %s228 = scalar_select %p227, %s24, 1
        %s229 = smul.addr %s228, 4
        %s230 = smul.addr %s229, 4
        %s231 = scalar_lea.vmem %s0, %s230
        %p232 = pneg %p45
        %p233 = pneg %p42
        %p234 = pneg %p66
        %p235 = pneg %p63
        %p236 = pneg %p87
        %p237 = pneg %p84
        %p238 = pneg %p108
        %p239 = pneg %p105
        %p240 = pneg %p129
        %p241 = pneg %p126
        %p242 = pneg %p155
        %p243 = pneg %p152
        %s244 = sand.u32 %s142, 1
        %s245 = scalar_lea.sflag [#allocation5], %s244
        %s246 = sand.u32 %s142, 1
        %s247 = smul.addr %s246, 4
        %s248 = scalar_lea.vmem [#allocation4], %s247
        %p249 = pneg %p181
        %p250 = pneg %p178
        %s251 = sand.u32 %s168, 1
        %s252 = scalar_lea.sflag [#allocation7], %s251
        %s253 = sand.u32 %s168, 1
        %s254 = scalar_lea.vmem [#allocation6], %s253
        %p255 = scmp.lt.s32.totalorder %s24, 1
        %s256 = scalar_select %p255, %s24, 1
        %s257 = smul.addr %s256, 4
        %s258 = smul.addr %s257, 4
        %s259 = scalar_lea.vmem %s0, %s258
        %v260 = vld [vmem:[%s259] sm:$0xf]
        %v261 = vld [vmem:[%s259 + $0x4] sm:$0xf]
        %v262 = vld [vmem:[%s259 + $0x8] sm:$0xf]
        %v263 = vld [vmem:[%s259 + $0xc] sm:$0xf]
        %vm264 = vcmask 62464
        %265 = vst.msk [vmem:[#allocation2] sm:$0x3f] %vm264, 0.0
        %s266 = scalar_lea.vmem [#allocation2], 40
        %267 = vst.msk [vmem:[%s266] sm:$0x3f] %vm264, 0.0
        %vm268 = vcmask 57344
        %269 = vst.msk [vmem:[#allocation2] sm:$0x1] %vm268, 0.0
        %270 = vst.msk [vmem:[#allocation2 + $0x8] sm:$0x1] %vm268, 0.0
        %271 = vst.msk [vmem:[#allocation2 + $0x10] sm:$0x1] %vm268, 0.0
        %272 = vst.msk [vmem:[#allocation2 + $0x18] sm:$0x1] %vm268, 0.0
        %273 = vst.msk [vmem:[#allocation2 + $0x20] sm:$0x1] %vm268, 0.0
        %274 = vst.msk [vmem:[#allocation2 + $0x28] sm:$0x1] %vm268, 0.0
        %275 = vst.msk [vmem:[#allocation2 + $0x5] sm:$0x1] %vm268, 0.0
        %276 = vst.msk [vmem:[#allocation2 + $0xd] sm:$0x1] %vm268, 0.0
        %277 = vst.msk [vmem:[#allocation2 + $0x15] sm:$0x1] %vm268, 0.0
        %278 = vst.msk [vmem:[#allocation2 + $0x1d] sm:$0x1] %vm268, 0.0
        %279 = vst.msk [vmem:[#allocation2 + $0x25] sm:$0x1] %vm268, 0.0
        %280 = vst.msk [vmem:[#allocation2 + $0x2d] sm:$0x1] %vm268, 0.0
        %s281 = scalar_lea.vmem [#allocation2], 8
        %vm282 = vcmask 60416
        %283 = vst.msk [vmem:[%s281 + $0x1] sm:$0xf] %vm282, %v260
        %284 = vst.msk [vmem:[%s281 + $0x9] sm:$0xf] %vm282, %v261
        %285 = vst.msk [vmem:[%s281 + $0x11] sm:$0xf] %vm282, %v262
        %286 = vst.msk [vmem:[%s281 + $0x19] sm:$0xf] %vm282, %v263
        %v287 = vld [vmem:[#allocation2] sm:$0x3f]
        %v288 = vld [vmem:[#allocation2 + $0x8] sm:$0x3f]
        %v289 = vld [vmem:[#allocation2 + $0x10] sm:$0x3f]
        %v290 = vld [vmem:[#allocation2 + $0x18] sm:$0x3f]
        %v291 = vld [vmem:[#allocation2 + $0x20] sm:$0x3f]
        %v295 = vrot.slane %v287, 2
        %v296 = vrot.slane %v287, 4
        %v297 = vrot.slane %v289, 2
        %v298 = vrot.slane %v289, 4
        %v299 = vrot.slane %v291, 2
        %v300 = vrot.slane %v291, 4
        %v303 = vrot.slane %v288, 2
        %v304 = vrot.slane %v288, 4
        %v305 = vrot.slane %v290, 2
        %v306 = vrot.slane %v290, 4
        %v307 = vld [vmem:[%s2] sm:$0x1]
        %v309 = vperm.slane %v307, 0
        %v311 = vadd.f32 %v309, 0.0
        %v312 = vld [vmem:[%s1] sm:$0xff]
        %v313 = vperm.slane %v287, 0
        %v314 = vperm.slane %v295, 0
        %v315 = vperm.slane %v289, 0
        %v316 = vperm.slane %v297, 0
        %vm317 = vcmask 1041409
        %v318 = vsel %vm317, %v314, %v313
        %vm319 = vcmask 1042434
        %v320 = vsel %vm319, %v315, %v318
        %vm321 = vcmask 1043459
        %v322 = vsel %vm321, %v316, %v320
        %vm323 = vcmask 64512
        %v324 = vsel %vm323, %v322, 0
        %326 = vmatpush.msra.mxu0 0.0
        %327 = vmatpush.msra.mxu0 0.0
        %328 = vmatpush.msra.mxu0 0.0
        %329 = vmatpush.msra.mxu0 0.0
        %330 = vmatpush.msra.mxu0 0.0
        %331 = vmatpush.msra.mxu0 0.0
        %332 = vmatpush.msra.mxu0 0.0
        %333 = vmatpush.msra.mxu0 0.0
        %334 = vmatpush.msra.mxu0 0.0
        %335 = vmatpush.msra.mxu0 0.0
        %336 = vmatpush.msra.mxu0 0.0
        %337 = vmatpush.msra.mxu0 0.0
        %338 = vmatpush.msra.mxu0 0.0
        %339 = vmatpush.msra.mxu0 0.0
        %340 = vmatpush.msra.mxu0 0.0
        %341 = vmatpush.msra.mxu0 %v312
        %342 = vmatmul.f32.gmra.mxu0 %v324
        %v343 = vpop.f32.mrf.mxu0
        %v344 = vadd.f32 0.0, %v343
        %345 = vdwg.mxu0
        %v346 = vadd.f32 %v311, %v344
        %s347 = scalar_lea.vmem %s1, 8
        %v348 = vld [vmem:[%s347] sm:$0xff]
        %v349 = vperm.slane %v287, 1
        %v350 = vperm.slane %v295, 1
        %v351 = vperm.slane %v289, 1
        %v352 = vperm.slane %v297, 1
        %v353 = vsel %vm317, %v350, %v349
        %v354 = vsel %vm319, %v351, %v353
        %v355 = vsel %vm321, %v352, %v354
        %v356 = vsel %vm323, %v355, 0
        %358 = vmatpush.msra.mxu0 0.0
        %359 = vmatpush.msra.mxu0 0.0
        %360 = vmatpush.msra.mxu0 0.0
        %361 = vmatpush.msra.mxu0 0.0
        %362 = vmatpush.msra.mxu0 0.0
        %363 = vmatpush.msra.mxu0 0.0
        %364 = vmatpush.msra.mxu0 0.0
        %365 = vmatpush.msra.mxu0 0.0
        %366 = vmatpush.msra.mxu0 0.0
        %367 = vmatpush.msra.mxu0 0.0
        %368 = vmatpush.msra.mxu0 0.0
        %369 = vmatpush.msra.mxu0 0.0
        %370 = vmatpush.msra.mxu0 0.0
        %371 = vmatpush.msra.mxu0 0.0
        %372 = vmatpush.msra.mxu0 0.0
        %373 = vmatpush.msra.mxu0 %v348
        %374 = vmatmul.f32.gmra.mxu0 %v356
        %v375 = vpop.f32.mrf.mxu0
        %v376 = vadd.f32 0.0, %v375
        %377 = vdwg.mxu0
        %v378 = vadd.f32 %v346, %v376
        %s379 = scalar_lea.vmem %s1, 16
        %v380 = vld [vmem:[%s379] sm:$0xff]
        %v381 = vperm.slane %v296, 0
        %v382 = vperm.slane %v298, 0
        %v383 = vsel %vm317, %v381, %v314
        %v384 = vsel %vm319, %v316, %v383
        %v385 = vsel %vm321, %v382, %v384
        %v386 = vsel %vm323, %v385, 0
        %388 = vmatpush.msra.mxu0 0.0
        %389 = vmatpush.msra.mxu0 0.0
        %390 = vmatpush.msra.mxu0 0.0
        %391 = vmatpush.msra.mxu0 0.0
        %392 = vmatpush.msra.mxu0 0.0
        %393 = vmatpush.msra.mxu0 0.0
        %394 = vmatpush.msra.mxu0 0.0
        %395 = vmatpush.msra.mxu0 0.0
        %396 = vmatpush.msra.mxu0 0.0
        %397 = vmatpush.msra.mxu0 0.0
        %398 = vmatpush.msra.mxu0 0.0
        %399 = vmatpush.msra.mxu0 0.0
        %400 = vmatpush.msra.mxu0 0.0
        %401 = vmatpush.msra.mxu0 0.0
        %402 = vmatpush.msra.mxu0 0.0
        %403 = vmatpush.msra.mxu0 %v380
        %404 = vmatmul.f32.gmra.mxu0 %v386
        %v405 = vpop.f32.mrf.mxu0
        %v406 = vadd.f32 0.0, %v405
        %407 = vdwg.mxu0
        %v408 = vadd.f32 %v378, %v406
        %s409 = scalar_lea.vmem %s1, 24
        %v410 = vld [vmem:[%s409] sm:$0xff]
        %v411 = vperm.slane %v288, 0
        %v412 = vperm.slane %v303, 0
        %v413 = vperm.slane %v290, 0
        %v414 = vperm.slane %v305, 0
        %v415 = vsel %vm317, %v412, %v411
        %v416 = vsel %vm319, %v413, %v415
        %v417 = vsel %vm321, %v414, %v416
        %v418 = vsel %vm323, %v417, 0
        %420 = vmatpush.msra.mxu0 0.0
        %421 = vmatpush.msra.mxu0 0.0
        %422 = vmatpush.msra.mxu0 0.0
        %423 = vmatpush.msra.mxu0 0.0
        %424 = vmatpush.msra.mxu0 0.0
        %425 = vmatpush.msra.mxu0 0.0
        %426 = vmatpush.msra.mxu0 0.0
        %427 = vmatpush.msra.mxu0 0.0
        %428 = vmatpush.msra.mxu0 0.0
        %429 = vmatpush.msra.mxu0 0.0
        %430 = vmatpush.msra.mxu0 0.0
        %431 = vmatpush.msra.mxu0 0.0
        %432 = vmatpush.msra.mxu0 0.0
        %433 = vmatpush.msra.mxu0 0.0
        %434 = vmatpush.msra.mxu0 0.0
        %435 = vmatpush.msra.mxu0 %v410
        %436 = vmatmul.f32.gmra.mxu0 %v418
        %v437 = vpop.f32.mrf.mxu0
        %v438 = vadd.f32 0.0, %v437
        %439 = vdwg.mxu0
        %v440 = vadd.f32 %v408, %v438
        %s441 = scalar_lea.vmem %s1, 32
        %v442 = vld [vmem:[%s441] sm:$0xff]
        %v443 = vperm.slane %v288, 1
        %v444 = vperm.slane %v303, 1
        %v445 = vperm.slane %v290, 1
        %v446 = vperm.slane %v305, 1
        %v447 = vsel %vm317, %v444, %v443
        %v448 = vsel %vm319, %v445, %v447
        %v449 = vsel %vm321, %v446, %v448
        %v450 = vsel %vm323, %v449, 0
        %452 = vmatpush.msra.mxu0 0.0
        %453 = vmatpush.msra.mxu0 0.0
        %454 = vmatpush.msra.mxu0 0.0
        %455 = vmatpush.msra.mxu0 0.0
        %456 = vmatpush.msra.mxu0 0.0
        %457 = vmatpush.msra.mxu0 0.0
        %458 = vmatpush.msra.mxu0 0.0
        %459 = vmatpush.msra.mxu0 0.0
        %460 = vmatpush.msra.mxu0 0.0
        %461 = vmatpush.msra.mxu0 0.0
        %462 = vmatpush.msra.mxu0 0.0
        %463 = vmatpush.msra.mxu0 0.0
        %464 = vmatpush.msra.mxu0 0.0
        %465 = vmatpush.msra.mxu0 0.0
        %466 = vmatpush.msra.mxu0 0.0
        %467 = vmatpush.msra.mxu0 %v442
        %468 = vmatmul.f32.gmra.mxu0 %v450
        %v469 = vpop.f32.mrf.mxu0
        %v470 = vadd.f32 0.0, %v469
        %471 = vdwg.mxu0
        %v472 = vadd.f32 %v440, %v470
        %s473 = scalar_lea.vmem %s1, 40
        %v474 = vld [vmem:[%s473] sm:$0xff]
        %v475 = vperm.slane %v304, 0
        %v476 = vperm.slane %v306, 0
        %v477 = vsel %vm317, %v475, %v412
        %v478 = vsel %vm319, %v414, %v477
        %v479 = vsel %vm321, %v476, %v478
        %v480 = vsel %vm323, %v479, 0
        %482 = vmatpush.msra.mxu0 0.0
        %483 = vmatpush.msra.mxu0 0.0
        %484 = vmatpush.msra.mxu0 0.0
        %485 = vmatpush.msra.mxu0 0.0
        %486 = vmatpush.msra.mxu0 0.0
        %487 = vmatpush.msra.mxu0 0.0
        %488 = vmatpush.msra.mxu0 0.0
        %489 = vmatpush.msra.mxu0 0.0
        %490 = vmatpush.msra.mxu0 0.0
        %491 = vmatpush.msra.mxu0 0.0
        %492 = vmatpush.msra.mxu0 0.0
        %493 = vmatpush.msra.mxu0 0.0
        %494 = vmatpush.msra.mxu0 0.0
        %495 = vmatpush.msra.mxu0 0.0
        %496 = vmatpush.msra.mxu0 0.0
        %497 = vmatpush.msra.mxu0 %v474
        %498 = vmatmul.f32.gmra.mxu0 %v480
        %v499 = vpop.f32.mrf.mxu0
        %v500 = vadd.f32 0.0, %v499
        %501 = vdwg.mxu0
        %v502 = vadd.f32 %v472, %v500
        %s503 = scalar_lea.vmem %s1, 48
        %v504 = vld [vmem:[%s503] sm:$0xff]
        %v505 = vperm.slane %v291, 0
        %v506 = vperm.slane %v299, 0
        %v507 = vsel %vm317, %v316, %v315
        %v508 = vsel %vm319, %v505, %v507
        %v509 = vsel %vm321, %v506, %v508
        %v510 = vsel %vm323, %v509, 0
        %512 = vmatpush.msra.mxu0 0.0
        %513 = vmatpush.msra.mxu0 0.0
        %514 = vmatpush.msra.mxu0 0.0
        %515 = vmatpush.msra.mxu0 0.0
        %516 = vmatpush.msra.mxu0 0.0
        %517 = vmatpush.msra.mxu0 0.0
        %518 = vmatpush.msra.mxu0 0.0
        %519 = vmatpush.msra.mxu0 0.0
        %520 = vmatpush.msra.mxu0 0.0
        %521 = vmatpush.msra.mxu0 0.0
        %522 = vmatpush.msra.mxu0 0.0
        %523 = vmatpush.msra.mxu0 0.0
        %524 = vmatpush.msra.mxu0 0.0
        %525 = vmatpush.msra.mxu0 0.0
        %526 = vmatpush.msra.mxu0 0.0
        %527 = vmatpush.msra.mxu0 %v504
        %528 = vmatmul.f32.gmra.mxu0 %v510
        %v529 = vpop.f32.mrf.mxu0
        %v530 = vadd.f32 0.0, %v529
        %531 = vdwg.mxu0
        %v532 = vadd.f32 %v502, %v530
        %s533 = scalar_lea.vmem %s1, 56
        %v534 = vld [vmem:[%s533] sm:$0xff]
        %v535 = vperm.slane %v291, 1
        %v536 = vperm.slane %v299, 1
        %v537 = vsel %vm317, %v352, %v351
        %v538 = vsel %vm319, %v535, %v537
        %v539 = vsel %vm321, %v536, %v538
        %v540 = vsel %vm323, %v539, 0
        %542 = vmatpush.msra.mxu0 0.0
        %543 = vmatpush.msra.mxu0 0.0
        %544 = vmatpush.msra.mxu0 0.0
        %545 = vmatpush.msra.mxu0 0.0
        %546 = vmatpush.msra.mxu0 0.0
        %547 = vmatpush.msra.mxu0 0.0
        %548 = vmatpush.msra.mxu0 0.0
        %549 = vmatpush.msra.mxu0 0.0
        %550 = vmatpush.msra.mxu0 0.0
        %551 = vmatpush.msra.mxu0 0.0
        %552 = vmatpush.msra.mxu0 0.0
        %553 = vmatpush.msra.mxu0 0.0
        %554 = vmatpush.msra.mxu0 0.0
        %555 = vmatpush.msra.mxu0 0.0
        %556 = vmatpush.msra.mxu0 0.0
        %557 = vmatpush.msra.mxu0 %v534
        %558 = vmatmul.f32.gmra.mxu0 %v540
        %v559 = vpop.f32.mrf.mxu0
        %v560 = vadd.f32 0.0, %v559
        %561 = vdwg.mxu0
        %v562 = vadd.f32 %v532, %v560
        %s563 = scalar_lea.vmem %s1, 64
        %v564 = vld [vmem:[%s563] sm:$0xff]
        %v565 = vperm.slane %v300, 0
        %v566 = vsel %vm317, %v382, %v316
        %v567 = vsel %vm319, %v506, %v566
        %v568 = vsel %vm321, %v565, %v567
        %v569 = vsel %vm323, %v568, 0
        %571 = vmatpush.msra.mxu0 0.0
        %572 = vmatpush.msra.mxu0 0.0
        %573 = vmatpush.msra.mxu0 0.0
        %574 = vmatpush.msra.mxu0 0.0
        %575 = vmatpush.msra.mxu0 0.0
        %576 = vmatpush.msra.mxu0 0.0
        %577 = vmatpush.msra.mxu0 0.0
        %578 = vmatpush.msra.mxu0 0.0
        %579 = vmatpush.msra.mxu0 0.0
        %580 = vmatpush.msra.mxu0 0.0
        %581 = vmatpush.msra.mxu0 0.0
        %582 = vmatpush.msra.mxu0 0.0
        %583 = vmatpush.msra.mxu0 0.0
        %584 = vmatpush.msra.mxu0 0.0
        %585 = vmatpush.msra.mxu0 0.0
        %586 = vmatpush.msra.mxu0 %v564
        %587 = vmatmul.f32.gmra.mxu0 %v569
        %v588 = vpop.f32.mrf.mxu0
        %v589 = vadd.f32 0.0, %v588
        %590 = vdwg.mxu0
        %v591 = vadd.f32 %v562, %v589
        %592 = vst.msk [vmem:[%s248] sm:$0xf] %vm282, %v591
        %v593 = vmax.f32 %v591, 0.0
        %v595 = vrot.slane %v593, 2
        %597 = vst.msk [vmem:[#allocation3] sm:$0xf] %vm282, 0.0
        %s598 = scalar_lea.vmem [#allocation3], 12
        %599 = vst.msk [vmem:[%s598] sm:$0xf] %vm282, 0.0
        %600 = vst.msk [vmem:[#allocation3] sm:$0x1] %vm268, 0.0
        %601 = vst.msk [vmem:[#allocation3 + $0x4] sm:$0x1] %vm268, 0.0
        %602 = vst.msk [vmem:[#allocation3 + $0x8] sm:$0x1] %vm268, 0.0
        %603 = vst.msk [vmem:[#allocation3 + $0xc] sm:$0x1] %vm268, 0.0
        %604 = vst.msk [vmem:[#allocation3 + $0x3] sm:$0x1] %vm268, 0.0
        %605 = vst.msk [vmem:[#allocation3 + $0x7] sm:$0x1] %vm268, 0.0
        %606 = vst.msk [vmem:[#allocation3 + $0xb] sm:$0x1] %vm268, 0.0
        %607 = vst.msk [vmem:[#allocation3 + $0xf] sm:$0x1] %vm268, 0.0
        %s608 = scalar_lea.vmem [#allocation3], 4
        %vm609 = vcmask 58368
        %610 = vst.msk [vmem:[%s608 + $0x1] sm:$0x3] %vm609, %v593
        %611 = vst.msk [vmem:[%s608 + $0x5] sm:$0x3] %vm609, %v595
        %v612 = vld [vmem:[#allocation3] sm:$0xf]
        %v613 = vld [vmem:[#allocation3 + $0x4] sm:$0xf]
        %v614 = vld [vmem:[#allocation3 + $0x8] sm:$0xf]
        %v615 = vld [vmem:[%s4] sm:$0x1]
        %v616 = vadd.f32 %v615, 0.0
        %v617 = vld [vmem:[%s3] sm:$0xff]
        %v619 = vsel %vm323, %v612, 0
        %621 = vmatpush.msra.mxu0 0.0
        %622 = vmatpush.msra.mxu0 0.0
        %623 = vmatpush.msra.mxu0 0.0
        %624 = vmatpush.msra.mxu0 0.0
        %625 = vmatpush.msra.mxu0 0.0
        %626 = vmatpush.msra.mxu0 0.0
        %627 = vmatpush.msra.mxu0 0.0
        %628 = vmatpush.msra.mxu0 0.0
        %629 = vmatpush.msra.mxu0 0.0
        %630 = vmatpush.msra.mxu0 0.0
        %631 = vmatpush.msra.mxu0 0.0
        %632 = vmatpush.msra.mxu0 0.0
        %633 = vmatpush.msra.mxu0 0.0
        %634 = vmatpush.msra.mxu0 0.0
        %635 = vmatpush.msra.mxu0 0.0
        %636 = vmatpush.msra.mxu0 %v617
        %637 = vmatmul.f32.gmra.mxu0 %v619
        %v638 = vpop.f32.mrf.mxu0
        %v639 = vadd.f32 0.0, %v638
        %640 = vdwg.mxu0
        %v641 = vadd.f32 %v616, %v639
        %s642 = scalar_lea.vmem %s3, 8
        %v643 = vld [vmem:[%s642] sm:$0xff]
        %v644 = vrot.slane %v612, 1
        %v645 = vsel %vm323, %v644, 0
        %647 = vmatpush.msra.mxu0 0.0
        %648 = vmatpush.msra.mxu0 0.0
        %649 = vmatpush.msra.mxu0 0.0
        %650 = vmatpush.msra.mxu0 0.0
        %651 = vmatpush.msra.mxu0 0.0
        %652 = vmatpush.msra.mxu0 0.0
        %653 = vmatpush.msra.mxu0 0.0
        %654 = vmatpush.msra.mxu0 0.0
        %655 = vmatpush.msra.mxu0 0.0
        %656 = vmatpush.msra.mxu0 0.0
        %657 = vmatpush.msra.mxu0 0.0
        %658 = vmatpush.msra.mxu0 0.0
        %659 = vmatpush.msra.mxu0 0.0
        %660 = vmatpush.msra.mxu0 0.0
        %661 = vmatpush.msra.mxu0 0.0
        %662 = vmatpush.msra.mxu0 %v643
        %663 = vmatmul.f32.gmra.mxu0 %v645
        %v664 = vpop.f32.mrf.mxu0
        %v665 = vadd.f32 0.0, %v664
        %666 = vdwg.mxu0
        %v667 = vadd.f32 %v641, %v665
        %s668 = scalar_lea.vmem %s3, 16
        %v669 = vld [vmem:[%s668] sm:$0xff]
        %v670 = vrot.slane %v612, 2
        %v671 = vsel %vm323, %v670, 0
        %673 = vmatpush.msra.mxu0 0.0
        %674 = vmatpush.msra.mxu0 0.0
        %675 = vmatpush.msra.mxu0 0.0
        %676 = vmatpush.msra.mxu0 0.0
        %677 = vmatpush.msra.mxu0 0.0
        %678 = vmatpush.msra.mxu0 0.0
        %679 = vmatpush.msra.mxu0 0.0
        %680 = vmatpush.msra.mxu0 0.0
        %681 = vmatpush.msra.mxu0 0.0
        %682 = vmatpush.msra.mxu0 0.0
        %683 = vmatpush.msra.mxu0 0.0
        %684 = vmatpush.msra.mxu0 0.0
        %685 = vmatpush.msra.mxu0 0.0
        %686 = vmatpush.msra.mxu0 0.0
        %687 = vmatpush.msra.mxu0 0.0
        %688 = vmatpush.msra.mxu0 %v669
        %689 = vmatmul.f32.gmra.mxu0 %v671
        %v690 = vpop.f32.mrf.mxu0
        %v691 = vadd.f32 0.0, %v690
        %692 = vdwg.mxu0
        %v693 = vadd.f32 %v667, %v691
        %s694 = scalar_lea.vmem %s3, 24
        %v695 = vld [vmem:[%s694] sm:$0xff]
        %v697 = vsel %vm323, %v613, 0
        %699 = vmatpush.msra.mxu0 0.0
        %700 = vmatpush.msra.mxu0 0.0
        %701 = vmatpush.msra.mxu0 0.0
        %702 = vmatpush.msra.mxu0 0.0
        %703 = vmatpush.msra.mxu0 0.0
        %704 = vmatpush.msra.mxu0 0.0
        %705 = vmatpush.msra.mxu0 0.0
        %706 = vmatpush.msra.mxu0 0.0
        %707 = vmatpush.msra.mxu0 0.0
        %708 = vmatpush.msra.mxu0 0.0
        %709 = vmatpush.msra.mxu0 0.0
        %710 = vmatpush.msra.mxu0 0.0
        %711 = vmatpush.msra.mxu0 0.0
        %712 = vmatpush.msra.mxu0 0.0
        %713 = vmatpush.msra.mxu0 0.0
        %714 = vmatpush.msra.mxu0 %v695
        %715 = vmatmul.f32.gmra.mxu0 %v697
        %v716 = vpop.f32.mrf.mxu0
        %v717 = vadd.f32 0.0, %v716
        %718 = vdwg.mxu0
        %v719 = vadd.f32 %v693, %v717
        %s720 = scalar_lea.vmem %s3, 32
        %v721 = vld [vmem:[%s720] sm:$0xff]
        %v722 = vrot.slane %v613, 1
        %v723 = vsel %vm323, %v722, 0
        %725 = vmatpush.msra.mxu0 0.0
        %726 = vmatpush.msra.mxu0 0.0
        %727 = vmatpush.msra.mxu0 0.0
        %728 = vmatpush.msra.mxu0 0.0
        %729 = vmatpush.msra.mxu0 0.0
        %730 = vmatpush.msra.mxu0 0.0
        %731 = vmatpush.msra.mxu0 0.0
        %732 = vmatpush.msra.mxu0 0.0
        %733 = vmatpush.msra.mxu0 0.0
        %734 = vmatpush.msra.mxu0 0.0
        %735 = vmatpush.msra.mxu0 0.0
        %736 = vmatpush.msra.mxu0 0.0
        %737 = vmatpush.msra.mxu0 0.0
        %738 = vmatpush.msra.mxu0 0.0
        %739 = vmatpush.msra.mxu0 0.0
        %740 = vmatpush.msra.mxu0 %v721
        %741 = vmatmul.f32.gmra.mxu0 %v723
        %v742 = vpop.f32.mrf.mxu0
        %v743 = vadd.f32 0.0, %v742
        %744 = vdwg.mxu0
        %v745 = vadd.f32 %v719, %v743
        %s746 = scalar_lea.vmem %s3, 40
        %v747 = vld [vmem:[%s746] sm:$0xff]
        %v748 = vrot.slane %v613, 2
        %v749 = vsel %vm323, %v748, 0
        %751 = vmatpush.msra.mxu0 0.0
        %752 = vmatpush.msra.mxu0 0.0
        %753 = vmatpush.msra.mxu0 0.0
        %754 = vmatpush.msra.mxu0 0.0
        %755 = vmatpush.msra.mxu0 0.0
        %756 = vmatpush.msra.mxu0 0.0
        %757 = vmatpush.msra.mxu0 0.0
        %758 = vmatpush.msra.mxu0 0.0
        %759 = vmatpush.msra.mxu0 0.0
        %760 = vmatpush.msra.mxu0 0.0
        %761 = vmatpush.msra.mxu0 0.0
        %762 = vmatpush.msra.mxu0 0.0
        %763 = vmatpush.msra.mxu0 0.0
        %764 = vmatpush.msra.mxu0 0.0
        %765 = vmatpush.msra.mxu0 0.0
        %766 = vmatpush.msra.mxu0 %v747
        %767 = vmatmul.f32.gmra.mxu0 %v749
        %v768 = vpop.f32.mrf.mxu0
        %v769 = vadd.f32 0.0, %v768
        %770 = vdwg.mxu0
        %v771 = vadd.f32 %v745, %v769
        %s772 = scalar_lea.vmem %s3, 48
        %v773 = vld [vmem:[%s772] sm:$0xff]
        %v775 = vsel %vm323, %v614, 0
        %777 = vmatpush.msra.mxu0 0.0
        %778 = vmatpush.msra.mxu0 0.0
        %779 = vmatpush.msra.mxu0 0.0
        %780 = vmatpush.msra.mxu0 0.0
        %781 = vmatpush.msra.mxu0 0.0
        %782 = vmatpush.msra.mxu0 0.0
        %783 = vmatpush.msra.mxu0 0.0
        %784 = vmatpush.msra.mxu0 0.0
        %785 = vmatpush.msra.mxu0 0.0
        %786 = vmatpush.msra.mxu0 0.0
        %787 = vmatpush.msra.mxu0 0.0
        %788 = vmatpush.msra.mxu0 0.0
        %789 = vmatpush.msra.mxu0 0.0
        %790 = vmatpush.msra.mxu0 0.0
        %791 = vmatpush.msra.mxu0 0.0
        %792 = vmatpush.msra.mxu0 %v773
        %793 = vmatmul.f32.gmra.mxu0 %v775
        %v794 = vpop.f32.mrf.mxu0
        %v795 = vadd.f32 0.0, %v794
        %796 = vdwg.mxu0
        %v797 = vadd.f32 %v771, %v795
        %s798 = scalar_lea.vmem %s3, 56
        %v799 = vld [vmem:[%s798] sm:$0xff]
        %v800 = vrot.slane %v614, 1
        %v801 = vsel %vm323, %v800, 0
        %803 = vmatpush.msra.mxu0 0.0
        %804 = vmatpush.msra.mxu0 0.0
        %805 = vmatpush.msra.mxu0 0.0
        %806 = vmatpush.msra.mxu0 0.0
        %807 = vmatpush.msra.mxu0 0.0
        %808 = vmatpush.msra.mxu0 0.0
        %809 = vmatpush.msra.mxu0 0.0
        %810 = vmatpush.msra.mxu0 0.0
        %811 = vmatpush.msra.mxu0 0.0
        %812 = vmatpush.msra.mxu0 0.0
        %813 = vmatpush.msra.mxu0 0.0
        %814 = vmatpush.msra.mxu0 0.0
        %815 = vmatpush.msra.mxu0 0.0
        %816 = vmatpush.msra.mxu0 0.0
        %817 = vmatpush.msra.mxu0 0.0
        %818 = vmatpush.msra.mxu0 %v799
        %819 = vmatmul.f32.gmra.mxu0 %v801
        %v820 = vpop.f32.mrf.mxu0
        %v821 = vadd.f32 0.0, %v820
        %822 = vdwg.mxu0
        %v823 = vadd.f32 %v797, %v821
        %s824 = scalar_lea.vmem %s3, 64
        %v825 = vld [vmem:[%s824] sm:$0xff]
        %v826 = vrot.slane %v614, 2
        %v827 = vsel %vm323, %v826, 0
        %829 = vmatpush.msra.mxu0 0.0
        %830 = vmatpush.msra.mxu0 0.0
        %831 = vmatpush.msra.mxu0 0.0
        %832 = vmatpush.msra.mxu0 0.0
        %833 = vmatpush.msra.mxu0 0.0
        %834 = vmatpush.msra.mxu0 0.0
        %835 = vmatpush.msra.mxu0 0.0
        %836 = vmatpush.msra.mxu0 0.0
        %837 = vmatpush.msra.mxu0 0.0
        %838 = vmatpush.msra.mxu0 0.0
        %839 = vmatpush.msra.mxu0 0.0
        %840 = vmatpush.msra.mxu0 0.0
        %841 = vmatpush.msra.mxu0 0.0
        %842 = vmatpush.msra.mxu0 0.0
        %843 = vmatpush.msra.mxu0 0.0
        %844 = vmatpush.msra.mxu0 %v825
        %845 = vmatmul.f32.gmra.mxu0 %v827
        %v846 = vpop.f32.mrf.mxu0
        %v847 = vadd.f32 0.0, %v846
        %848 = vdwg.mxu0
        %v849 = vadd.f32 %v823, %v847
        %850 = vst.msk [vmem:[%s254] sm:$0x1] %vm268, %v849
        %s851 = sand.u32 %s142, 1
        %s852 = scalar_lea.sflag [#allocation5], %s851
        %s853 = sand.u32 %s142, 1
        %s854 = smul.addr %s853, 4
        %s855 = scalar_lea.vmem [#allocation4], %s854
        %s856 = sand.u32 %s168, 1
        %s857 = scalar_lea.sflag [#allocation7], %s856
        %s858 = sand.u32 %s168, 1
        %s859 = scalar_lea.vmem [#allocation6], %s858
        // Predicated region
        $region41: #{fpn_forward.3} parent=39 // pred_check
          %p860 = pneg %p152
        $region42: #{fpn_forward.3} parent=39 // pred_check_branch
          %862 = sbr.rel (%p860) target = $region44
        $region43: #{fpn_forward.3} parent=39 // pred_region
          %864 = vsyncadd %s852, 0
          %s865 = smul.addr %s24, 4
          %s866 = scalar_lea.hbm %s5, %s865
          %s868 = sshll.u32 %s855, 4
          %s869 = int_to_ptr.vmem [resolvable:$true] %s868
          %s870 = sshll.u32 %s866, 4
          %s871 = int_to_ptr.hbm [resolvable:$true] %s870
          %873 = dma.vmem_to_hbm [thread:$0]  %s869, 64, %s871, %s852
        $region44: #{fpn_forward.3} parent=39 // pred_fallthru
          _
        // Predicated region
        $region45: #{fpn_forward.3} parent=39 // pred_check
          %p874 = pneg %p178
        $region46: #{fpn_forward.3} parent=39 // pred_check_branch
          %876 = sbr.rel (%p874) target = $region48
        $region47: #{fpn_forward.3} parent=39 // pred_region
          %878 = vsyncadd %s857, 0
          %s879 = scalar_lea.hbm %s6, %s24
          %s881 = sshll.u32 %s859, 4
          %s882 = int_to_ptr.vmem [resolvable:$true] %s881
          %s883 = sshll.u32 %s879, 4
          %s884 = int_to_ptr.hbm [resolvable:$true] %s883
          %886 = dma.vmem_to_hbm [thread:$0]  %s882, 16, %s884, %s857
        $region48: #{fpn_forward.3} parent=39 // pred_fallthru
          _
      $region40: #{fpn_forward.3} parent=5 // pred_fallthru
        _
      %p887 = scmp.le.s32.totalorder 2, %s19
      // Predicated region
      $region49: #{fpn_forward.3} parent=5 // pred_check
        %p888 = pneg %p887
      $region50: #{fpn_forward.3} parent=5 // pred_check_branch
        %890 = sbr.rel (%p888) target = $region52
      $region51: #{fpn_forward.3} parent=5 // pred_region
        %s891 = ssub.s32 %s19, 2
        // Predicated region
        $region53: #{fpn_forward.3} parent=51 // pred_check
          %p892 = pneg %p158
        $region54: #{fpn_forward.3} parent=51 // pred_check_branch
          %894 = sbr.rel (%p892) target = $region56
        $region55: #{fpn_forward.3} parent=51 // pred_region
          %s895 = sand.u32 %s143, 1
          %s896 = scalar_lea.sflag [#allocation5], %s895
          %s897 = sand.u32 %s143, 1
          %s898 = smul.addr %s897, 4
          %s899 = scalar_lea.vmem [#allocation4], %s898
          %901 = dma.done %s896, 64
        $region56: #{fpn_forward.3} parent=51 // pred_fallthru
          _
        // Predicated region
        $region57: #{fpn_forward.3} parent=51 // pred_check
          %p902 = pneg %p184
        $region58: #{fpn_forward.3} parent=51 // pred_check_branch
          %904 = sbr.rel (%p902) target = $region60
        $region59: #{fpn_forward.3} parent=51 // pred_region
          %s905 = sand.u32 %s169, 1
          %s906 = scalar_lea.sflag [#allocation7], %s905
          %s907 = sand.u32 %s169, 1
          %s908 = scalar_lea.vmem [#allocation6], %s907
          %910 = dma.done %s906, 16
        $region60: #{fpn_forward.3} parent=51 // pred_fallthru
          _
      $region52: #{fpn_forward.3} parent=5 // pred_fallthru
        _
    $region6: #{fpn_forward.3} parent=1 // loop_footer
      %s23 = sadd.s32 1, %s19
    $region7: #{fpn_forward.3} parent=1 // loop_footer_branch
      %18 = sbr.rel target = $region3
    $region8: #{fpn_forward.3} parent=1 // loop_exit
      _
    %911 = vsyncpa [#allocation5], 1
    %s912 = scalar_lea.sflag [#allocation5], 1
    %913 = vsyncpa %s912, 1
    %914 = vsyncpa [#allocation7], 1
    %s915 = scalar_lea.sflag [#allocation7], 1
    %916 = vsyncpa %s915, 1

// kernel: fpn_forward.2
$region0: #{fpn_forward.2}
  #allocation0 [shape = 'u32[]', space=smem, size = 0x4, offset = 0x4, fixed_abs, tag = 'smem constant byte address 0x4 - core index']
  #allocation1 [shape = 'u32[72,128]{1,0:T(1,128)}', space=vmem, size = 0x9000, scoped, tag = 'internal scratch']
  #allocation2 [shape = 'f32[18,18,8]{2,1,0:T(8,128)}', space=vmem, size = 0x36000, scoped, tag = 'scratch operand']
  #allocation3 [shape = 'f32[10,10,8]{2,1,0:T(8,128)}', space=vmem, size = 0x14000, scoped, tag = 'scratch operand']
  #allocation4 [shape = 'f32[6,6,8]{2,1,0:T(8,128)}', space=vmem, size = 0x6000, scoped, tag = 'scratch operand']
  %s0 = inlined_call_operand.vmem [shape: f32[2,16,16,4], index: 0, kind: input, shape index: {}]
  %s1 = inlined_call_operand.vmem [shape: f32[2,8,8,6], index: 1, kind: input, shape index: {}]
  %s2 = inlined_call_operand.vmem [shape: f32[2,4,4,8], index: 2, kind: input, shape index: {}]
  %s3 = inlined_call_operand.vmem [shape: f32[4,8], index: 3, kind: input, shape index: {}]
  %s4 = inlined_call_operand.vmem [shape: f32[1,8], index: 4, kind: input, shape index: {}]
  %s5 = inlined_call_operand.vmem [shape: f32[6,8], index: 5, kind: input, shape index: {}]
  %s6 = inlined_call_operand.vmem [shape: f32[1,8], index: 6, kind: input, shape index: {}]
  %s7 = inlined_call_operand.vmem [shape: f32[8,8], index: 7, kind: input, shape index: {}]
  %s8 = inlined_call_operand.vmem [shape: f32[1,8], index: 8, kind: input, shape index: {}]
  %s9 = inlined_call_operand.vmem [shape: f32[9,8,8], index: 9, kind: input, shape index: {}]
  %s10 = inlined_call_operand.vmem [shape: f32[1,8], index: 10, kind: input, shape index: {}]
  %s11 = inlined_call_operand.vmem [shape: f32[9,8,8], index: 11, kind: input, shape index: {}]
  %s12 = inlined_call_operand.vmem [shape: f32[1,8], index: 12, kind: input, shape index: {}]
  %s13 = inlined_call_operand.vmem [shape: f32[9,8,8], index: 13, kind: input, shape index: {}]
  %s14 = inlined_call_operand.vmem [shape: f32[1,8], index: 14, kind: input, shape index: {}]
  %s15 = inlined_call_operand.vmem [shape: f32[2,256,8], index: 15, kind: output, shape index: {0}]
  %s16 = inlined_call_operand.hbm [shape: f32[2,64,8], index: 16, kind: output, shape index: {1}]
  %s17 = inlined_call_operand.hbm [shape: f32[2,16,8], index: 17, kind: output, shape index: {2}]
  %18 = xla_tuple %s15, %s16, %s17
  %s19 = sld [smem:[#allocation0]]
  $region109: #{fpn_forward.2} parent=0
    _
  %s21 = ssub.s32 1, %s19
  %s22 = scalar_select 0, %s21, %s19
  $region1: #{fpn_forward.2} parent=0
    #allocation5 [shape = 'u8[65536]{0}', space=vmem, size = 0x10000, scoped, tag = 'output window, operand 1']
    #allocation6 [shape = 's32[2]{0}', space=sflag, size = 0x8, scoped, tag = 'scoped memory for fpn_forward.2']
    #allocation7 [shape = 'u8[16384]{0}', space=vmem, size = 0x4000, scoped, tag = 'output window, operand 2']
    #allocation8 [shape = 's32[2]{0}', space=sflag, size = 0x8, scoped, tag = 'scoped memory for fpn_forward.2']
    %23 = vsyncpa [#allocation6], 0
    %s24 = scalar_lea.sflag [#allocation6], 1
    %25 = vsyncpa %s24, 0
    %26 = vsyncpa [#allocation8], 0
    %s27 = scalar_lea.sflag [#allocation8], 1
    %28 = vsyncpa %s27, 0
    loop: start=0, step=1, limit=4
    $region2: #{fpn_forward.2} parent=1 // loop_pre_header
      _
    $region3: #{fpn_forward.2} parent=1 // loop_header
      %s30 = sphi 0, %s34
      %p31 = scmp.ge.s32.totalorder %s30, 4
      %s40 = sphi 0, %s42
      %s43 = sphi 0, %s40
      %s44 = sphi 0, %s43
      %s60 = sphi 0, %s44
      %s66 = sphi 0, %s68
      %s69 = sphi 0, %s66
      %s70 = sphi 0, %s69
      %s86 = sphi 0, %s70
      %s92 = sphi 0, %s94
      %s95 = sphi 0, %s92
      %s96 = sphi 0, %s95
      %s112 = sphi 0, %s96
      %s116 = sphi 0, %s116
      %s118 = sphi 0, %s116
      %s119 = sphi 0, %s118
      %s133 = sphi 0, %s119
      %s137 = sphi 0, %s137
      %s139 = sphi 0, %s137
      %s140 = sphi 0, %s139
      %s154 = sphi 0, %s140
      %s158 = sphi 0, %s158
      %s160 = sphi 0, %s158
      %s161 = sphi 0, %s160
      %s175 = sphi 0, %s161
      %s179 = sphi 0, %s179
      %s181 = sphi 0, %s179
      %s182 = sphi 0, %s181
      %s196 = sphi 0, %s182
      %s200 = sphi 0, %s200
      %s202 = sphi 0, %s200
      %s203 = sphi 0, %s202
      %s217 = sphi 0, %s203
      %s221 = sphi 0, %s221
      %s223 = sphi 0, %s221
      %s224 = sphi 0, %s223
      %s238 = sphi 0, %s224
      %s242 = sphi 0, %s242
      %s244 = sphi 0, %s242
      %s245 = sphi 0, %s244
      %s259 = sphi 0, %s245
      %s263 = sphi 0, %s263
      %s265 = sphi 0, %s263
      %s266 = sphi 0, %s265
      %s280 = sphi 0, %s266
      %s284 = sphi 0, %s284
      %s286 = sphi 0, %s284
      %s287 = sphi 0, %s286
      %s301 = sphi 0, %s287
      %s305 = sphi 0, %s305
      %s307 = sphi 0, %s305
      %s308 = sphi 0, %s307
      %s322 = sphi 0, %s308
      %s326 = sphi 0, %s326
      %s328 = sphi 0, %s326
      %s329 = sphi 0, %s328
      %s343 = sphi 0, %s329
      %s347 = sphi 0, %s347
      %s349 = sphi 0, %s347
      %s350 = sphi 0, %s349
      %s364 = sphi 0, %s350
      %s370 = sphi 0, %s372
      %s373 = sphi 0, %s370
      %s374 = sphi 0, %s373
      %s390 = sphi 0, %s374
      %s396 = sphi 0, %s398
      %s399 = sphi 0, %s396
      %s400 = sphi 0, %s399
      %s416 = sphi 0, %s400
      %s422 = sphi 0, %s424
      %s425 = sphi 0, %s422
      %s426 = sphi 0, %s425
      %s442 = sphi 0, %s426
    $region4: #{fpn_forward.2} parent=1 // loop_header_branch
      %33 = sbr.rel (%p31) target = $region8
    $region5: #{fpn_forward.2} parent=1 // loop_body
      %s35 = ssub.s32 %s30, 1
      %s36 = ssub.s32 %s30, 2
      %s37 = sadd.s32 %s30, 1
      %s38 = ssub.s32 %s30, %s37
      %p39 = scmp.eq.s32.totalorder %s38, 0
      %s41 = sadd.s32 %s40, 1
      %s42 = scalar_select %p39, %s40, %s41
      %p45 = pneg %p39
      %p46 = scmp.eq.s32.totalorder %s30, 1
      %p47 = por %p45, %p46
      %p48 = scmp.ne.s32.totalorder %s40, %s43
      %p49 = scmp.eq.s32.totalorder %s30, 0
      %p50 = por %p48, %p49
      %p51 = scmp.ne.s32.totalorder %s40, %s43
      %p52 = scmp.eq.s32.totalorder %s35, 1
      %p53 = por %p51, %p52
      %p54 = scmp.ne.s32.totalorder %s43, %s44
      %p55 = scmp.eq.s32.totalorder %s35, 0
      %p56 = por %p54, %p55
      %p57 = scmp.ne.s32.totalorder %s43, %s44
      %p58 = scmp.eq.s32.totalorder %s36, 1
      %p59 = por %p57, %p58
      %p61 = scmp.ne.s32.totalorder %s44, %s60
      %p62 = scmp.eq.s32.totalorder %s36, 0
      %p63 = por %p61, %p62
      %s64 = ssub.s32 %s30, %s37
      %p65 = scmp.eq.s32.totalorder %s64, 0
      %s67 = sadd.s32 %s66, 1
      %s68 = scalar_select %p65, %s66, %s67
      %p71 = pneg %p65
      %p72 = scmp.eq.s32.totalorder %s30, 1
      %p73 = por %p71, %p72
      %p74 = scmp.ne.s32.totalorder %s66, %s69
      %p75 = scmp.eq.s32.totalorder %s30, 0
      %p76 = por %p74, %p75
      %p77 = scmp.ne.s32.totalorder %s66, %s69
      %p78 = scmp.eq.s32.totalorder %s35, 1
      %p79 = por %p77, %p78
      %p80 = scmp.ne.s32.totalorder %s69, %s70
      %p81 = scmp.eq.s32.totalorder %s35, 0
      %p82 = por %p80, %p81
      %p83 = scmp.ne.s32.totalorder %s69, %s70
      %p84 = scmp.eq.s32.totalorder %s36, 1
      %p85 = por %p83, %p84
      %p87 = scmp.ne.s32.totalorder %s70, %s86
      %p88 = scmp.eq.s32.totalorder %s36, 0
      %p89 = por %p87, %p88
      %s90 = ssub.s32 %s30, %s37
      %p91 = scmp.eq.s32.totalorder %s90, 0
      %s93 = sadd.s32 %s92, 1
      %s94 = scalar_select %p91, %s92, %s93
      %p97 = pneg %p91
      %p98 = scmp.eq.s32.totalorder %s30, 1
      %p99 = por %p97, %p98
      %p100 = scmp.ne.s32.totalorder %s92, %s95
      %p101 = scmp.eq.s32.totalorder %s30, 0
      %p102 = por %p100, %p101
      %p103 = scmp.ne.s32.totalorder %s92, %s95
      %p104 = scmp.eq.s32.totalorder %s35, 1
      %p105 = por %p103, %p104
      %p106 = scmp.ne.s32.totalorder %s95, %s96
      %p107 = scmp.eq.s32.totalorder %s35, 0
      %p108 = por %p106, %p107
      %p109 = scmp.ne.s32.totalorder %s95, %s96
      %p110 = scmp.eq.s32.totalorder %s36, 1
      %p111 = por %p109, %p110
      %p113 = scmp.ne.s32.totalorder %s96, %s112
      %p114 = scmp.eq.s32.totalorder %s36, 0
      %p115 = por %p113, %p114
      %s117 = sadd.s32 %s116, 1
      %p120 = scmp.eq.s32.totalorder %s30, 1
      %p121 = scmp.ne.s32.totalorder %s116, %s118
      %p122 = scmp.eq.s32.totalorder %s30, 0
      %p123 = por %p121, %p122
      %p124 = scmp.ne.s32.totalorder %s116, %s118
      %p125 = scmp.eq.s32.totalorder %s35, 1
      %p126 = por %p124, %p125
      %p127 = scmp.ne.s32.totalorder %s118, %s119
      %p128 = scmp.eq.s32.totalorder %s35, 0
      %p129 = por %p127, %p128
      %p130 = scmp.ne.s32.totalorder %s118, %s119
      %p131 = scmp.eq.s32.totalorder %s36, 1
      %p132 = por %p130, %p131
      %p134 = scmp.ne.s32.totalorder %s119, %s133
      %p135 = scmp.eq.s32.totalorder %s36, 0
      %p136 = por %p134, %p135
      %s138 = sadd.s32 %s137, 1
      %p141 = scmp.eq.s32.totalorder %s30, 1
      %p142 = scmp.ne.s32.totalorder %s137, %s139
      %p143 = scmp.eq.s32.totalorder %s30, 0
      %p144 = por %p142, %p143
      %p145 = scmp.ne.s32.totalorder %s137, %s139
      %p146 = scmp.eq.s32.totalorder %s35, 1
      %p147 = por %p145, %p146
      %p148 = scmp.ne.s32.totalorder %s139, %s140
      %p149 = scmp.eq.s32.totalorder %s35, 0
      %p150 = por %p148, %p149
      %p151 = scmp.ne.s32.totalorder %s139, %s140
      %p152 = scmp.eq.s32.totalorder %s36, 1
      %p153 = por %p151, %p152
      %p155 = scmp.ne.s32.totalorder %s140, %s154
      %p156 = scmp.eq.s32.totalorder %s36, 0
      %p157 = por %p155, %p156
      %s159 = sadd.s32 %s158, 1
      %p162 = scmp.eq.s32.totalorder %s30, 1
      %p163 = scmp.ne.s32.totalorder %s158, %s160
      %p164 = scmp.eq.s32.totalorder %s30, 0
      %p165 = por %p163, %p164
      %p166 = scmp.ne.s32.totalorder %s158, %s160
      %p167 = scmp.eq.s32.totalorder %s35, 1
      %p168 = por %p166, %p167
      %p169 = scmp.ne.s32.totalorder %s160, %s161
      %p170 = scmp.eq.s32.totalorder %s35, 0
      %p171 = por %p169, %p170
      %p172 = scmp.ne.s32.totalorder %s160, %s161
      %p173 = scmp.eq.s32.totalorder %s36, 1
      %p174 = por %p172, %p173
      %p176 = scmp.ne.s32.totalorder %s161, %s175
      %p177 = scmp.eq.s32.totalorder %s36, 0
      %p178 = por %p176, %p177
      %s180 = sadd.s32 %s179, 1
      %p183 = scmp.eq.s32.totalorder %s30, 1
      %p184 = scmp.ne.s32.totalorder %s179, %s181
      %p185 = scmp.eq.s32.totalorder %s30, 0
      %p186 = por %p184, %p185
      %p187 = scmp.ne.s32.totalorder %s179, %s181
      %p188 = scmp.eq.s32.totalorder %s35, 1
      %p189 = por %p187, %p188
      %p190 = scmp.ne.s32.totalorder %s181, %s182
      %p191 = scmp.eq.s32.totalorder %s35, 0
      %p192 = por %p190, %p191
      %p193 = scmp.ne.s32.totalorder %s181, %s182
      %p194 = scmp.eq.s32.totalorder %s36, 1
      %p195 = por %p193, %p194
      %p197 = scmp.ne.s32.totalorder %s182, %s196
      %p198 = scmp.eq.s32.totalorder %s36, 0
      %p199 = por %p197, %p198
      %s201 = sadd.s32 %s200, 1
      %p204 = scmp.eq.s32.totalorder %s30, 1
      %p205 = scmp.ne.s32.totalorder %s200, %s202
      %p206 = scmp.eq.s32.totalorder %s30, 0
      %p207 = por %p205, %p206
      %p208 = scmp.ne.s32.totalorder %s200, %s202
      %p209 = scmp.eq.s32.totalorder %s35, 1
      %p210 = por %p208, %p209
      %p211 = scmp.ne.s32.totalorder %s202, %s203
      %p212 = scmp.eq.s32.totalorder %s35, 0
      %p213 = por %p211, %p212
      %p214 = scmp.ne.s32.totalorder %s202, %s203
      %p215 = scmp.eq.s32.totalorder %s36, 1
      %p216 = por %p214, %p215
      %p218 = scmp.ne.s32.totalorder %s203, %s217
      %p219 = scmp.eq.s32.totalorder %s36, 0
      %p220 = por %p218, %p219
      %s222 = sadd.s32 %s221, 1
      %p225 = scmp.eq.s32.totalorder %s30, 1
      %p226 = scmp.ne.s32.totalorder %s221, %s223
      %p227 = scmp.eq.s32.totalorder %s30, 0
      %p228 = por %p226, %p227
      %p229 = scmp.ne.s32.totalorder %s221, %s223
      %p230 = scmp.eq.s32.totalorder %s35, 1
      %p231 = por %p229, %p230
      %p232 = scmp.ne.s32.totalorder %s223, %s224
      %p233 = scmp.eq.s32.totalorder %s35, 0
      %p234 = por %p232, %p233
      %p235 = scmp.ne.s32.totalorder %s223, %s224
      %p236 = scmp.eq.s32.totalorder %s36, 1
      %p237 = por %p235, %p236
      %p239 = scmp.ne.s32.totalorder %s224, %s238
      %p240 = scmp.eq.s32.totalorder %s36, 0
      %p241 = por %p239, %p240
      %s243 = sadd.s32 %s242, 1
      %p246 = scmp.eq.s32.totalorder %s30, 1
      %p247 = scmp.ne.s32.totalorder %s242, %s244
      %p248 = scmp.eq.s32.totalorder %s30, 0
      %p249 = por %p247, %p248
      %p250 = scmp.ne.s32.totalorder %s242, %s244
      %p251 = scmp.eq.s32.totalorder %s35, 1
      %p252 = por %p250, %p251
      %p253 = scmp.ne.s32.totalorder %s244, %s245
      %p254 = scmp.eq.s32.totalorder %s35, 0
      %p255 = por %p253, %p254
      %p256 = scmp.ne.s32.totalorder %s244, %s245
      %p257 = scmp.eq.s32.totalorder %s36, 1
      %p258 = por %p256, %p257
      %p260 = scmp.ne.s32.totalorder %s245, %s259
      %p261 = scmp.eq.s32.totalorder %s36, 0
      %p262 = por %p260, %p261
      %s264 = sadd.s32 %s263, 1
      %p267 = scmp.eq.s32.totalorder %s30, 1
      %p268 = scmp.ne.s32.totalorder %s263, %s265
      %p269 = scmp.eq.s32.totalorder %s30, 0
      %p270 = por %p268, %p269
      %p271 = scmp.ne.s32.totalorder %s263, %s265
      %p272 = scmp.eq.s32.totalorder %s35, 1
      %p273 = por %p271, %p272
      %p274 = scmp.ne.s32.totalorder %s265, %s266
      %p275 = scmp.eq.s32.totalorder %s35, 0
      %p276 = por %p274, %p275
      %p277 = scmp.ne.s32.totalorder %s265, %s266
      %p278 = scmp.eq.s32.totalorder %s36, 1
      %p279 = por %p277, %p278
      %p281 = scmp.ne.s32.totalorder %s266, %s280
      %p282 = scmp.eq.s32.totalorder %s36, 0
      %p283 = por %p281, %p282
      %s285 = sadd.s32 %s284, 1
      %p288 = scmp.eq.s32.totalorder %s30, 1
      %p289 = scmp.ne.s32.totalorder %s284, %s286
      %p290 = scmp.eq.s32.totalorder %s30, 0
      %p291 = por %p289, %p290
      %p292 = scmp.ne.s32.totalorder %s284, %s286
      %p293 = scmp.eq.s32.totalorder %s35, 1
      %p294 = por %p292, %p293
      %p295 = scmp.ne.s32.totalorder %s286, %s287
      %p296 = scmp.eq.s32.totalorder %s35, 0
      %p297 = por %p295, %p296
      %p298 = scmp.ne.s32.totalorder %s286, %s287
      %p299 = scmp.eq.s32.totalorder %s36, 1
      %p300 = por %p298, %p299
      %p302 = scmp.ne.s32.totalorder %s287, %s301
      %p303 = scmp.eq.s32.totalorder %s36, 0
      %p304 = por %p302, %p303
      %s306 = sadd.s32 %s305, 1
      %p309 = scmp.eq.s32.totalorder %s30, 1
      %p310 = scmp.ne.s32.totalorder %s305, %s307
      %p311 = scmp.eq.s32.totalorder %s30, 0
      %p312 = por %p310, %p311
      %p313 = scmp.ne.s32.totalorder %s305, %s307
      %p314 = scmp.eq.s32.totalorder %s35, 1
      %p315 = por %p313, %p314
      %p316 = scmp.ne.s32.totalorder %s307, %s308
      %p317 = scmp.eq.s32.totalorder %s35, 0
      %p318 = por %p316, %p317
      %p319 = scmp.ne.s32.totalorder %s307, %s308
      %p320 = scmp.eq.s32.totalorder %s36, 1
      %p321 = por %p319, %p320
      %p323 = scmp.ne.s32.totalorder %s308, %s322
      %p324 = scmp.eq.s32.totalorder %s36, 0
      %p325 = por %p323, %p324
      %s327 = sadd.s32 %s326, 1
      %p330 = scmp.eq.s32.totalorder %s30, 1
      %p331 = scmp.ne.s32.totalorder %s326, %s328
      %p332 = scmp.eq.s32.totalorder %s30, 0
      %p333 = por %p331, %p332
      %p334 = scmp.ne.s32.totalorder %s326, %s328
      %p335 = scmp.eq.s32.totalorder %s35, 1
      %p336 = por %p334, %p335
      %p337 = scmp.ne.s32.totalorder %s328, %s329
      %p338 = scmp.eq.s32.totalorder %s35, 0
      %p339 = por %p337, %p338
      %p340 = scmp.ne.s32.totalorder %s328, %s329
      %p341 = scmp.eq.s32.totalorder %s36, 1
      %p342 = por %p340, %p341
      %p344 = scmp.ne.s32.totalorder %s329, %s343
      %p345 = scmp.eq.s32.totalorder %s36, 0
      %p346 = por %p344, %p345
      %s348 = sadd.s32 %s347, 1
      %p351 = scmp.eq.s32.totalorder %s30, 1
      %p352 = scmp.ne.s32.totalorder %s347, %s349
      %p353 = scmp.eq.s32.totalorder %s30, 0
      %p354 = por %p352, %p353
      %p355 = scmp.ne.s32.totalorder %s347, %s349
      %p356 = scmp.eq.s32.totalorder %s35, 1
      %p357 = por %p355, %p356
      %p358 = scmp.ne.s32.totalorder %s349, %s350
      %p359 = scmp.eq.s32.totalorder %s35, 0
      %p360 = por %p358, %p359
      %p361 = scmp.ne.s32.totalorder %s349, %s350
      %p362 = scmp.eq.s32.totalorder %s36, 1
      %p363 = por %p361, %p362
      %p365 = scmp.ne.s32.totalorder %s350, %s364
      %p366 = scmp.eq.s32.totalorder %s36, 0
      %p367 = por %p365, %p366
      %s368 = ssub.s32 %s30, %s37
      %p369 = scmp.eq.s32.totalorder %s368, 0
      %s371 = sadd.s32 %s370, 1
      %s372 = scalar_select %p369, %s370, %s371
      %p375 = pneg %p369
      %p376 = scmp.eq.s32.totalorder %s30, 1
      %p377 = por %p375, %p376
      %p378 = scmp.ne.s32.totalorder %s370, %s373
      %p379 = scmp.eq.s32.totalorder %s30, 0
      %p380 = por %p378, %p379
      %p381 = scmp.ne.s32.totalorder %s370, %s373
      %p382 = scmp.eq.s32.totalorder %s35, 1
      %p383 = por %p381, %p382
      %p384 = scmp.ne.s32.totalorder %s373, %s374
      %p385 = scmp.eq.s32.totalorder %s35, 0
      %p386 = por %p384, %p385
      %p387 = scmp.ne.s32.totalorder %s373, %s374
      %p388 = scmp.eq.s32.totalorder %s36, 1
      %p389 = por %p387, %p388
      %p391 = scmp.ne.s32.totalorder %s374, %s390
      %p392 = scmp.eq.s32.totalorder %s36, 0
      %p393 = por %p391, %p392
      %s394 = ssub.s32 %s30, %s37
      %p395 = scmp.eq.s32.totalorder %s394, 0
      %s397 = sadd.s32 %s396, 1
      %s398 = scalar_select %p395, %s396, %s397
      %p401 = pneg %p395
      %p402 = scmp.eq.s32.totalorder %s30, 1
      %p403 = por %p401, %p402
      %p404 = scmp.ne.s32.totalorder %s396, %s399
      %p405 = scmp.eq.s32.totalorder %s30, 0
      %p406 = por %p404, %p405
      %p407 = scmp.ne.s32.totalorder %s396, %s399
      %p408 = scmp.eq.s32.totalorder %s35, 1
      %p409 = por %p407, %p408
      %p410 = scmp.ne.s32.totalorder %s399, %s400
      %p411 = scmp.eq.s32.totalorder %s35, 0
      %p412 = por %p410, %p411
      %p413 = scmp.ne.s32.totalorder %s399, %s400
      %p414 = scmp.eq.s32.totalorder %s36, 1
      %p415 = por %p413, %p414
      %p417 = scmp.ne.s32.totalorder %s400, %s416
      %p418 = scmp.eq.s32.totalorder %s36, 0
      %p419 = por %p417, %p418
      %s420 = ssub.s32 %s30, %s37
      %p421 = scmp.eq.s32.totalorder %s420, 0
      %s423 = sadd.s32 %s422, 1
      %s424 = scalar_select %p421, %s422, %s423
      %p427 = pneg %p421
      %p428 = scmp.eq.s32.totalorder %s30, 1
      %p429 = por %p427, %p428
      %p430 = scmp.ne.s32.totalorder %s422, %s425
      %p431 = scmp.eq.s32.totalorder %s30, 0
      %p432 = por %p430, %p431
      %p433 = scmp.ne.s32.totalorder %s422, %s425
      %p434 = scmp.eq.s32.totalorder %s35, 1
      %p435 = por %p433, %p434
      %p436 = scmp.ne.s32.totalorder %s425, %s426
      %p437 = scmp.eq.s32.totalorder %s35, 0
      %p438 = por %p436, %p437
      %p439 = scmp.ne.s32.totalorder %s425, %s426
      %p440 = scmp.eq.s32.totalorder %s36, 1
      %p441 = por %p439, %p440
      %p443 = scmp.ne.s32.totalorder %s426, %s442
      %p444 = scmp.eq.s32.totalorder %s36, 0
      %p445 = por %p443, %p444
      %p446 = scmp.le.s32.totalorder 1, %s30
      %p447 = scmp.lt.s32.totalorder %s30, 3
      %p448 = pnand %p446, %p447
      %p449 = pneg %p448
      // Predicated region
      $region9: #{fpn_forward.2} parent=5 // pred_check
        _
      $region10: #{fpn_forward.2} parent=5 // pred_check_branch
        %451 = sbr.rel (%p448) target = $region12
      $region11: #{fpn_forward.2} parent=5 // pred_region
        %s452 = ssub.s32 %s30, 1
        // Predicated region
        $region13: #{fpn_forward.2} parent=11 // pred_check
          %p453 = pneg %p129
        $region14: #{fpn_forward.2} parent=11 // pred_check_branch
          %455 = sbr.rel (%p453) target = $region16
        $region15: #{fpn_forward.2} parent=11 // pred_region
          _
        $region16: #{fpn_forward.2} parent=11 // pred_fallthru
          _
        // Predicated region
        $region17: #{fpn_forward.2} parent=11 // pred_check
          %p456 = pneg %p150
        $region18: #{fpn_forward.2} parent=11 // pred_check_branch
          %458 = sbr.rel (%p456) target = $region20
        $region19: #{fpn_forward.2} parent=11 // pred_region
          _
        $region20: #{fpn_forward.2} parent=11 // pred_fallthru
          _
        // Predicated region
        $region21: #{fpn_forward.2} parent=11 // pred_check
          %p459 = pneg %p171
        $region22: #{fpn_forward.2} parent=11 // pred_check_branch
          %461 = sbr.rel (%p459) target = $region24
        $region23: #{fpn_forward.2} parent=11 // pred_region
          _
        $region24: #{fpn_forward.2} parent=11 // pred_fallthru
          _
        // Predicated region
        $region25: #{fpn_forward.2} parent=11 // pred_check
          %p462 = pneg %p192
        $region26: #{fpn_forward.2} parent=11 // pred_check_branch
          %464 = sbr.rel (%p462) target = $region28
        $region27: #{fpn_forward.2} parent=11 // pred_region
          _
        $region28: #{fpn_forward.2} parent=11 // pred_fallthru
          _
        // Predicated region
        $region29: #{fpn_forward.2} parent=11 // pred_check
          %p465 = pneg %p213
        $region30: #{fpn_forward.2} parent=11 // pred_check_branch
          %467 = sbr.rel (%p465) target = $region32
        $region31: #{fpn_forward.2} parent=11 // pred_region
          _
        $region32: #{fpn_forward.2} parent=11 // pred_fallthru
          _
        // Predicated region
        $region33: #{fpn_forward.2} parent=11 // pred_check
          %p468 = pneg %p234
        $region34: #{fpn_forward.2} parent=11 // pred_check_branch
          %470 = sbr.rel (%p468) target = $region36
        $region35: #{fpn_forward.2} parent=11 // pred_region
          _
        $region36: #{fpn_forward.2} parent=11 // pred_fallthru
          _
        // Predicated region
        $region37: #{fpn_forward.2} parent=11 // pred_check
          %p471 = pneg %p255
        $region38: #{fpn_forward.2} parent=11 // pred_check_branch
          %473 = sbr.rel (%p471) target = $region40
        $region39: #{fpn_forward.2} parent=11 // pred_region
          _
        $region40: #{fpn_forward.2} parent=11 // pred_fallthru
          _
        // Predicated region
        $region41: #{fpn_forward.2} parent=11 // pred_check
          %p474 = pneg %p276
        $region42: #{fpn_forward.2} parent=11 // pred_check_branch
          %476 = sbr.rel (%p474) target = $region44
        $region43: #{fpn_forward.2} parent=11 // pred_region
          _
        $region44: #{fpn_forward.2} parent=11 // pred_fallthru
          _
        // Predicated region
        $region45: #{fpn_forward.2} parent=11 // pred_check
          %p477 = pneg %p297
        $region46: #{fpn_forward.2} parent=11 // pred_check_branch
          %479 = sbr.rel (%p477) target = $region48
        $region47: #{fpn_forward.2} parent=11 // pred_region
          _
        $region48: #{fpn_forward.2} parent=11 // pred_fallthru
          _
        // Predicated region
        $region49: #{fpn_forward.2} parent=11 // pred_check
          %p480 = pneg %p318
        $region50: #{fpn_forward.2} parent=11 // pred_check_branch
          %482 = sbr.rel (%p480) target = $region52
        $region51: #{fpn_forward.2} parent=11 // pred_region
          _
        $region52: #{fpn_forward.2} parent=11 // pred_fallthru
          _
        // Predicated region
        $region53: #{fpn_forward.2} parent=11 // pred_check
          %p483 = pneg %p339
        $region54: #{fpn_forward.2} parent=11 // pred_check_branch
          %485 = sbr.rel (%p483) target = $region56
        $region55: #{fpn_forward.2} parent=11 // pred_region
          _
        $region56: #{fpn_forward.2} parent=11 // pred_fallthru
          _
        // Predicated region
        $region57: #{fpn_forward.2} parent=11 // pred_check
          %p486 = pneg %p360
        $region58: #{fpn_forward.2} parent=11 // pred_check_branch
          %488 = sbr.rel (%p486) target = $region60
        $region59: #{fpn_forward.2} parent=11 // pred_region
          _
        $region60: #{fpn_forward.2} parent=11 // pred_fallthru
          _
      $region12: #{fpn_forward.2} parent=5 // pred_fallthru
        _
      %p489 = scmp.lt.s32.totalorder %s30, 2
      // Predicated region
      $region61: #{fpn_forward.2} parent=5 // pred_check
        %p490 = pneg %p489
      $region62: #{fpn_forward.2} parent=5 // pred_check_branch
        %492 = sbr.rel (%p490) target = $region64
      $region63: #{fpn_forward.2} parent=5 // pred_region
        // Predicated region
        $region65: #{fpn_forward.2} parent=63 // pred_check
          %p493 = pneg %p50
        $region66: #{fpn_forward.2} parent=63 // pred_check_branch
          %495 = sbr.rel (%p493) target = $region68
        $region67: #{fpn_forward.2} parent=63 // pred_region
          %p496 = scmp.lt.s32.totalorder %s30, 1
          %s497 = scalar_select %p496, %s30, 1
          %s498 = smul.addr %s497, 32
          %s499 = smul.addr %s498, 8
          %s500 = scalar_lea.vmem %s0, %s499
        $region68: #{fpn_forward.2} parent=63 // pred_fallthru
          _
        // Predicated region
        $region69: #{fpn_forward.2} parent=63 // pred_check
          %p501 = pneg %p76
        $region70: #{fpn_forward.2} parent=63 // pred_check_branch
          %503 = sbr.rel (%p501) target = $region72
        $region71: #{fpn_forward.2} parent=63 // pred_region
          %p504 = scmp.lt.s32.totalorder %s30, 1
          %s505 = scalar_select %p504, %s30, 1
          %s506 = smul.addr %s505, 8
          %s507 = smul.addr %s506, 8
          %s508 = scalar_lea.vmem %s1, %s507
        $region72: #{fpn_forward.2} parent=63 // pred_fallthru
          _
        // Predicated region
        $region73: #{fpn_forward.2} parent=63 // pred_check
          %p509 = pneg %p102
        $region74: #{fpn_forward.2} parent=63 // pred_check_branch
          %511 = sbr.rel (%p509) target = $region76
        $region75: #{fpn_forward.2} parent=63 // pred_region
          %p512 = scmp.lt.s32.totalorder %s30, 1
          %s513 = scalar_select %p512, %s30, 1
          %s514 = smul.addr %s513, 4
          %s515 = smul.addr %s514, 4
          %s516 = scalar_lea.vmem %s2, %s515
        $region76: #{fpn_forward.2} parent=63 // pred_fallthru
          _
      $region64: #{fpn_forward.2} parent=5 // pred_fallthru
        _
      %p517 = scmp.le.s32.totalorder 1, %s30
      %p518 = scmp.lt.s32.totalorder %s30, 3
      %p519 = pnand %p517, %p518
      %p520 = pneg %p519
      // Predicated region
      $region77: #{fpn_forward.2} parent=5 // pred_check
        _
      $region78: #{fpn_forward.2} parent=5 // pred_check_branch
        %522 = sbr.rel (%p519) target = $region80
      $region79: #{fpn_forward.2} parent=5 // pred_region
        %s523 = ssub.s32 %s30, 1
        %p524 = scmp.lt.s32.totalorder %s35, 1
        %s525 = scalar_select %p524, %s35, 1
        %s526 = smul.addr %s525, 32
        %s527 = smul.addr %s526, 8
        %s528 = scalar_lea.vmem %s0, %s527
        %p529 = pneg %p56
        %p530 = pneg %p53
        %p531 = scmp.lt.s32.totalorder %s35, 1
        %s532 = scalar_select %p531, %s35, 1
        %s533 = smul.addr %s532, 8
        %s534 = smul.addr %s533, 8
        %s535 = scalar_lea.vmem %s1, %s534
        %p536 = pneg %p82
        %p537 = pneg %p79
        %p538 = scmp.lt.s32.totalorder %s35, 1
        %s539 = scalar_select %p538, %s35, 1
        %s540 = smul.addr %s539, 4
        %s541 = smul.addr %s540, 4
        %s542 = scalar_lea.vmem %s2, %s541
        %p543 = pneg %p108
        %p544 = pneg %p105
        %p545 = pneg %p129
        %p546 = pneg %p126
        %p547 = pneg %p150
        %p548 = pneg %p147
        %p549 = pneg %p171
        %p550 = pneg %p168
        %p551 = pneg %p192
        %p552 = pneg %p189
        %p553 = pneg %p213
        %p554 = pneg %p210
        %p555 = pneg %p234
        %p556 = pneg %p231
        %p557 = pneg %p255
        %p558 = pneg %p252
        %p559 = pneg %p276
        %p560 = pneg %p273
        %p561 = pneg %p297
        %p562 = pneg %p294
        %p563 = pneg %p318
        %p564 = pneg %p315
        %p565 = pneg %p339
        %p566 = pneg %p336
        %p567 = pneg %p360
        %p568 = pneg %p357
        %p569 = pneg %p386
        %p570 = pneg %p383
        %p571 = scmp.lt.s32.totalorder %s35, 1
        %s572 = scalar_select %p571, %s35, 1
        %s573 = smul.addr %s572, 32
        %s574 = smul.addr %s573, 8
        %s575 = scalar_lea.vmem %s15, %s574
        %p576 = pneg %p412
        %p577 = pneg %p409
        %s578 = sand.u32 %s399, 1
        %s579 = scalar_lea.sflag [#allocation6], %s578
        %s580 = sand.u32 %s399, 1
        %s581 = smul.addr %s580, 64
        %s582 = scalar_lea.vmem [#allocation5], %s581
        %p583 = pneg %p438
        %p584 = pneg %p435
        %s585 = sand.u32 %s425, 1
        %s586 = scalar_lea.sflag [#allocation8], %s585
        %s587 = sand.u32 %s425, 1
        %s588 = smul.addr %s587, 16
        %s589 = scalar_lea.vmem [#allocation7], %s588
        %p590 = scmp.lt.s32.totalorder %s35, 1
        %s591 = scalar_select %p590, %s35, 1
        %s592 = smul.addr %s591, 32
        %s593 = smul.addr %s592, 8
        %s594 = scalar_lea.vmem %s0, %s593
        %p595 = scmp.lt.s32.totalorder %s35, 1
        %s596 = scalar_select %p595, %s35, 1
        %s597 = smul.addr %s596, 8
        %s598 = smul.addr %s597, 8
        %s599 = scalar_lea.vmem %s1, %s598
        %p600 = scmp.lt.s32.totalorder %s35, 1
        %s601 = scalar_select %p600, %s35, 1
        %s602 = smul.addr %s601, 4
        %s603 = smul.addr %s602, 4
        %s604 = scalar_lea.vmem %s2, %s603
        %p605 = scmp.lt.s32.totalorder %s35, 1
        %s606 = scalar_select %p605, %s35, 1
        %s607 = smul.addr %s606, 32
        %s608 = smul.addr %s607, 8
        %s609 = scalar_lea.vmem %s15, %s608
        %v610 = vld [vmem:[%s604] sm:$0xf]
        %v611 = vld [vmem:[%s604 + $0x4] sm:$0xf]
        %v612 = vld [vmem:[%s604 + $0x8] sm:$0xf]
        %v613 = vld [vmem:[%s604 + $0xc] sm:$0xf]
        %v614 = vld [vmem:[%s7] sm:$0xff]
        %v615 = vld [vmem:[%s8] sm:$0x1]
        %v617 = vperm.slane %v615, 0
        %623 = vst [vmem:[#allocation1] ss:$2 sm:$0xff] %v610
        %s624 = scalar_lea.vmem [#allocation1], 1
        %625 = vst [vmem:[%s624] ss:$2 sm:$0xff] %v611
        %s626 = scalar_lea.vmem [#allocation1], 16
        %627 = vst [vmem:[%s626] ss:$2 sm:$0xff] %v612
        %s628 = scalar_lea.vmem [#allocation1], 17
        %629 = vst [vmem:[%s628] ss:$2 sm:$0xff] %v613
        %v630 = vld.sshfl [vmem:[#allocation1] sm:$0xff pattern:$0x75316420]
        %v631 = vld.sshfl [vmem:[#allocation1 + $0x10] sm:$0xff pattern:$0x75316420]
        %vm632 = vcmask 64512
        %v633 = vsel %vm632, %v630, 0
        %v635 = vsel %vm632, %v631, 0
        %637 = vmatpush.msra.mxu0 0.0
        %638 = vmatpush.msra.mxu0 0.0
        %639 = vmatpush.msra.mxu0 0.0
        %640 = vmatpush.msra.mxu0 0.0
        %641 = vmatpush.msra.mxu0 0.0
        %642 = vmatpush.msra.mxu0 0.0
        %643 = vmatpush.msra.mxu0 0.0
        %644 = vmatpush.msra.mxu0 0.0
        %645 = vmatpush.msra.mxu0 0.0
        %646 = vmatpush.msra.mxu0 0.0
        %647 = vmatpush.msra.mxu0 0.0
        %648 = vmatpush.msra.mxu0 0.0
        %649 = vmatpush.msra.mxu0 0.0
        %650 = vmatpush.msra.mxu0 0.0
        %651 = vmatpush.msra.mxu0 0.0
        %652 = vmatpush.msra.mxu0 %v614
        %653 = vmatmul.f32.gmra.mxu0 %v633
        %v654 = vpop.f32.mrf.mxu0
        %v655 = vadd.f32 %v617, %v654
        %656 = vmatmul.f32.gmra.mxu0 %v635
        %v657 = vpop.f32.mrf.mxu0
        %v658 = vadd.f32 %v617, %v657
        %659 = vdwg.mxu0
        %v662 = vrot.slane %v655, 4
        %v663 = vrot.slane %v658, 4
        %vm666 = vcmask 62464
        %667 = vst.msk [vmem:[#allocation4] sm:$0x3f] %vm666, 0.0
        %s668 = scalar_lea.vmem [#allocation4], 40
        %669 = vst.msk [vmem:[%s668] sm:$0x3f] %vm666, 0.0
        %vm670 = vcmask 57344
        %671 = vst.msk [vmem:[#allocation4] sm:$0x1] %vm670, 0.0
        %672 = vst.msk [vmem:[#allocation4 + $0x8] sm:$0x1] %vm670, 0.0
        %673 = vst.msk [vmem:[#allocation4 + $0x10] sm:$0x1] %vm670, 0.0
        %674 = vst.msk [vmem:[#allocation4 + $0x18] sm:$0x1] %vm670, 0.0
        %675 = vst.msk [vmem:[#allocation4 + $0x20] sm:$0x1] %vm670, 0.0
        %676 = vst.msk [vmem:[#allocation4 + $0x28] sm:$0x1] %vm670, 0.0
        %677 = vst.msk [vmem:[#allocation4 + $0x5] sm:$0x1] %vm670, 0.0
        %678 = vst.msk [vmem:[#allocation4 + $0xd] sm:$0x1] %vm670, 0.0
        %679 = vst.msk [vmem:[#allocation4 + $0x15] sm:$0x1] %vm670, 0.0
        %680 = vst.msk [vmem:[#allocation4 + $0x1d] sm:$0x1] %vm670, 0.0
        %681 = vst.msk [vmem:[#allocation4 + $0x25] sm:$0x1] %vm670, 0.0
        %682 = vst.msk [vmem:[#allocation4 + $0x2d] sm:$0x1] %vm670, 0.0
        %s683 = scalar_lea.vmem [#allocation4], 8
        %vm684 = vcmask 60416
        %685 = vst.msk [vmem:[%s683 + $0x1] sm:$0xf] %vm684, %v655
        %686 = vst.msk [vmem:[%s683 + $0x9] sm:$0xf] %vm684, %v662
        %687 = vst.msk [vmem:[%s683 + $0x11] sm:$0xf] %vm684, %v658
        %688 = vst.msk [vmem:[%s683 + $0x19] sm:$0xf] %vm684, %v663
        %v689 = vld [vmem:[%s14] sm:$0x1]
        %v691 = vperm.slane %v689, 0
        %v693 = vadd.f32 %v691, 0.0
        %v694 = vld [vmem:[#allocation4] sm:$0xf]
        %v695 = vld [vmem:[#allocation4 + $0x8] sm:$0xf]
        %v696 = vld [vmem:[#allocation4 + $0x10] sm:$0xf]
        %v697 = vld [vmem:[#allocation4 + $0x18] sm:$0xf]
        %v698 = vld [vmem:[%s13] sm:$0xff]
        %703 = vst [vmem:[#allocation1] ss:$2 sm:$0xff] %v694
        %s704 = scalar_lea.vmem [#allocation1], 1
        %705 = vst [vmem:[%s704] ss:$2 sm:$0xff] %v695
        %s706 = scalar_lea.vmem [#allocation1], 16
        %707 = vst [vmem:[%s706] ss:$2 sm:$0xff] %v696
        %s708 = scalar_lea.vmem [#allocation1], 17
        %709 = vst [vmem:[%s708] ss:$2 sm:$0xff] %v697
        %v710 = vld.sshfl [vmem:[#allocation1] sm:$0xff pattern:$0x75316420]
        %v711 = vld.sshfl [vmem:[#allocation1 + $0x10] sm:$0xff pattern:$0x75316420]
        %v712 = vsel %vm632, %v710, 0
        %v714 = vsel %vm632, %v711, 0
        %716 = vmatpush.msra.mxu0 0.0
        %717 = vmatpush.msra.mxu0 0.0
        %718 = vmatpush.msra.mxu0 0.0
        %719 = vmatpush.msra.mxu0 0.0
        %720 = vmatpush.msra.mxu0 0.0
        %721 = vmatpush.msra.mxu0 0.0
        %722 = vmatpush.msra.mxu0 0.0
        %723 = vmatpush.msra.mxu0 0.0
        %724 = vmatpush.msra.mxu0 0.0
        %725 = vmatpush.msra.mxu0 0.0
        %726 = vmatpush.msra.mxu0 0.0
        %727 = vmatpush.msra.mxu0 0.0
        %728 = vmatpush.msra.mxu0 0.0
        %729 = vmatpush.msra.mxu0 0.0
        %730 = vmatpush.msra.mxu0 0.0
        %731 = vmatpush.msra.mxu0 %v698
        %732 = vmatmul.f32.gmra.mxu0 %v712
        %v733 = vpop.f32.mrf.mxu0
        %v734 = vadd.f32 0.0, %v733
        %735 = vmatmul.f32.gmra.mxu0 %v714
        %v736 = vpop.f32.mrf.mxu0
        %v737 = vadd.f32 0.0, %v736
        %738 = vdwg.mxu0
        %v739 = vadd.f32 %v693, %v734
        %v740 = vadd.f32 %v693, %v737
        %v741 = vld [vmem:[#allocation4 + $0x1] sm:$0xf]
        %v742 = vld [vmem:[#allocation4 + $0x9] sm:$0xf]
        %v743 = vld [vmem:[#allocation4 + $0x11] sm:$0xf]
        %v744 = vld [vmem:[#allocation4 + $0x19] sm:$0xf]
        %s745 = scalar_lea.vmem %s13, 8
        %v746 = vld [vmem:[%s745] sm:$0xff]
        %751 = vst [vmem:[#allocation1] ss:$2 sm:$0xff] %v741
        %s752 = scalar_lea.vmem [#allocation1], 1
        %753 = vst [vmem:[%s752] ss:$2 sm:$0xff] %v742
        %s754 = scalar_lea.vmem [#allocation1], 16
        %755 = vst [vmem:[%s754] ss:$2 sm:$0xff] %v743
        %s756 = scalar_lea.vmem [#allocation1], 17
        %757 = vst [vmem:[%s756] ss:$2 sm:$0xff] %v744
        %v758 = vld.sshfl [vmem:[#allocation1] sm:$0xff pattern:$0x75316420]
        %v759 = vld.sshfl [vmem:[#allocation1 + $0x10] sm:$0xff pattern:$0x75316420]
        %v760 = vsel %vm632, %v758, 0
        %v762 = vsel %vm632, %v759, 0
        %764 = vmatpush.msra.mxu0 0.0
        %765 = vmatpush.msra.mxu0 0.0
        %766 = vmatpush.msra.mxu0 0.0
        %767 = vmatpush.msra.mxu0 0.0
        %768 = vmatpush.msra.mxu0 0.0
        %769 = vmatpush.msra.mxu0 0.0
        %770 = vmatpush.msra.mxu0 0.0
        %771 = vmatpush.msra.mxu0 0.0
        %772 = vmatpush.msra.mxu0 0.0
        %773 = vmatpush.msra.mxu0 0.0
        %774 = vmatpush.msra.mxu0 0.0
        %775 = vmatpush.msra.mxu0 0.0
        %776 = vmatpush.msra.mxu0 0.0
        %777 = vmatpush.msra.mxu0 0.0
        %778 = vmatpush.msra.mxu0 0.0
        %779 = vmatpush.msra.mxu0 %v746
        %780 = vmatmul.f32.gmra.mxu0 %v760
        %v781 = vpop.f32.mrf.mxu0
        %v782 = vadd.f32 0.0, %v781
        %783 = vmatmul.f32.gmra.mxu0 %v762
        %v784 = vpop.f32.mrf.mxu0
        %v785 = vadd.f32 0.0, %v784
        %786 = vdwg.mxu0
        %v787 = vadd.f32 %v739, %v782
        %v788 = vadd.f32 %v740, %v785
        %v789 = vld [vmem:[#allocation4 + $0x2] sm:$0xf]
        %v790 = vld [vmem:[#allocation4 + $0xa] sm:$0xf]
        %v791 = vld [vmem:[#allocation4 + $0x12] sm:$0xf]
        %v792 = vld [vmem:[#allocation4 + $0x1a] sm:$0xf]
        %s793 = scalar_lea.vmem %s13, 16
        %v794 = vld [vmem:[%s793] sm:$0xff]
        %799 = vst [vmem:[#allocation1] ss:$2 sm:$0xff] %v789
        %s800 = scalar_lea.vmem [#allocation1], 1
        %801 = vst [vmem:[%s800] ss:$2 sm:$0xff] %v790
        %s802 = scalar_lea.vmem [#allocation1], 16
        %803 = vst [vmem:[%s802] ss:$2 sm:$0xff] %v791
        %s804 = scalar_lea.vmem [#allocation1], 17
        %805 = vst [vmem:[%s804] ss:$2 sm:$0xff] %v792
        %v806 = vld.sshfl [vmem:[#allocation1] sm:$0xff pattern:$0x75316420]
        %v807 = vld.sshfl [vmem:[#allocation1 + $0x10] sm:$0xff pattern:$0x75316420]
        %v808 = vsel %vm632, %v806, 0
        %v810 = vsel %vm632, %v807, 0
        %812 = vmatpush.msra.mxu0 0.0
        %813 = vmatpush.msra.mxu0 0.0
        %814 = vmatpush.msra.mxu0 0.0
        %815 = vmatpush.msra.mxu0 0.0
        %816 = vmatpush.msra.mxu0 0.0
        %817 = vmatpush.msra.mxu0 0.0
        %818 = vmatpush.msra.mxu0 0.0
        %819 = vmatpush.msra.mxu0 0.0
        %820 = vmatpush.msra.mxu0 0.0
        %821 = vmatpush.msra.mxu0 0.0
        %822 = vmatpush.msra.mxu0 0.0
        %823 = vmatpush.msra.mxu0 0.0
        %824 = vmatpush.msra.mxu0 0.0
        %825 = vmatpush.msra.mxu0 0.0
        %826 = vmatpush.msra.mxu0 0.0
        %827 = vmatpush.msra.mxu0 %v794
        %828 = vmatmul.f32.gmra.mxu0 %v808
        %v829 = vpop.f32.mrf.mxu0
        %v830 = vadd.f32 0.0, %v829
        %831 = vmatmul.f32.gmra.mxu0 %v810
        %v832 = vpop.f32.mrf.mxu0
        %v833 = vadd.f32 0.0, %v832
        %834 = vdwg.mxu0
        %v835 = vadd.f32 %v787, %v830
        %v836 = vadd.f32 %v788, %v833
        %v837 = vld [vmem:[%s683] sm:$0xf]
        %v838 = vld [vmem:[%s683 + $0x8] sm:$0xf]
        %v839 = vld [vmem:[%s683 + $0x10] sm:$0xf]
        %v840 = vld [vmem:[%s683 + $0x18] sm:$0xf]
        %s841 = scalar_lea.vmem %s13, 24
        %v842 = vld [vmem:[%s841] sm:$0xff]
        %847 = vst [vmem:[#allocation1] ss:$2 sm:$0xff] %v837
        %s848 = scalar_lea.vmem [#allocation1], 1
        %849 = vst [vmem:[%s848] ss:$2 sm:$0xff] %v838
        %s850 = scalar_lea.vmem [#allocation1], 16
        %851 = vst [vmem:[%s850] ss:$2 sm:$0xff] %v839
        %s852 = scalar_lea.vmem [#allocation1], 17
        %853 = vst [vmem:[%s852] ss:$2 sm:$0xff] %v840
        %v854 = vld.sshfl [vmem:[#allocation1] sm:$0xff pattern:$0x75316420]
        %v855 = vld.sshfl [vmem:[#allocation1 + $0x10] sm:$0xff pattern:$0x75316420]
        %v856 = vsel %vm632, %v854, 0
        %v858 = vsel %vm632, %v855, 0
        %860 = vmatpush.msra.mxu0 0.0
        %861 = vmatpush.msra.mxu0 0.0
        %862 = vmatpush.msra.mxu0 0.0
        %863 = vmatpush.msra.mxu0 0.0
        %864 = vmatpush.msra.mxu0 0.0
        %865 = vmatpush.msra.mxu0 0.0
        %866 = vmatpush.msra.mxu0 0.0
        %867 = vmatpush.msra.mxu0 0.0
        %868 = vmatpush.msra.mxu0 0.0
        %869 = vmatpush.msra.mxu0 0.0
        %870 = vmatpush.msra.mxu0 0.0
        %871 = vmatpush.msra.mxu0 0.0
        %872 = vmatpush.msra.mxu0 0.0
        %873 = vmatpush.msra.mxu0 0.0
        %874 = vmatpush.msra.mxu0 0.0
        %875 = vmatpush.msra.mxu0 %v842
        %876 = vmatmul.f32.gmra.mxu0 %v856
        %v877 = vpop.f32.mrf.mxu0
        %v878 = vadd.f32 0.0, %v877
        %879 = vmatmul.f32.gmra.mxu0 %v858
        %v880 = vpop.f32.mrf.mxu0
        %v881 = vadd.f32 0.0, %v880
        %882 = vdwg.mxu0
        %v883 = vadd.f32 %v835, %v878
        %v884 = vadd.f32 %v836, %v881
        %v885 = vld [vmem:[%s683 + $0x1] sm:$0xf]
        %v886 = vld [vmem:[%s683 + $0x9] sm:$0xf]
        %v887 = vld [vmem:[%s683 + $0x11] sm:$0xf]
        %v888 = vld [vmem:[%s683 + $0x19] sm:$0xf]
        %s889 = scalar_lea.vmem %s13, 32
        %v890 = vld [vmem:[%s889] sm:$0xff]
        %895 = vst [vmem:[#allocation1] ss:$2 sm:$0xff] %v885
        %s896 = scalar_lea.vmem [#allocation1], 1
        %897 = vst [vmem:[%s896] ss:$2 sm:$0xff] %v886
        %s898 = scalar_lea.vmem [#allocation1], 16
        %899 = vst [vmem:[%s898] ss:$2 sm:$0xff] %v887
        %s900 = scalar_lea.vmem [#allocation1], 17
        %901 = vst [vmem:[%s900] ss:$2 sm:$0xff] %v888
        %v902 = vld.sshfl [vmem:[#allocation1] sm:$0xff pattern:$0x75316420]
        %v903 = vld.sshfl [vmem:[#allocation1 + $0x10] sm:$0xff pattern:$0x75316420]
        %v904 = vsel %vm632, %v902, 0
        %v906 = vsel %vm632, %v903, 0
        %908 = vmatpush.msra.mxu0 0.0
        %909 = vmatpush.msra.mxu0 0.0
        %910 = vmatpush.msra.mxu0 0.0
        %911 = vmatpush.msra.mxu0 0.0
        %912 = vmatpush.msra.mxu0 0.0
        %913 = vmatpush.msra.mxu0 0.0
        %914 = vmatpush.msra.mxu0 0.0
        %915 = vmatpush.msra.mxu0 0.0
        %916 = vmatpush.msra.mxu0 0.0
        %917 = vmatpush.msra.mxu0 0.0
        %918 = vmatpush.msra.mxu0 0.0
        %919 = vmatpush.msra.mxu0 0.0
        %920 = vmatpush.msra.mxu0 0.0
        %921 = vmatpush.msra.mxu0 0.0
        %922 = vmatpush.msra.mxu0 0.0
        %923 = vmatpush.msra.mxu0 %v890
        %924 = vmatmul.f32.gmra.mxu0 %v904
        %v925 = vpop.f32.mrf.mxu0
        %v926 = vadd.f32 0.0, %v925
        %927 = vmatmul.f32.gmra.mxu0 %v906
        %v928 = vpop.f32.mrf.mxu0
        %v929 = vadd.f32 0.0, %v928
        %930 = vdwg.mxu0
        %v931 = vadd.f32 %v883, %v926
        %v932 = vadd.f32 %v884, %v929
        %v933 = vld [vmem:[%s683 + $0x2] sm:$0xf]
        %v934 = vld [vmem:[%s683 + $0xa] sm:$0xf]
        %v935 = vld [vmem:[%s683 + $0x12] sm:$0xf]
        %v936 = vld [vmem:[%s683 + $0x1a] sm:$0xf]
        %s937 = scalar_lea.vmem %s13, 40
        %v938 = vld [vmem:[%s937] sm:$0xff]
        %943 = vst [vmem:[#allocation1] ss:$2 sm:$0xff] %v933
        %s944 = scalar_lea.vmem [#allocation1], 1
        %945 = vst [vmem:[%s944] ss:$2 sm:$0xff] %v934
        %s946 = scalar_lea.vmem [#allocation1], 16
        %947 = vst [vmem:[%s946] ss:$2 sm:$0xff] %v935
        %s948 = scalar_lea.vmem [#allocation1], 17
        %949 = vst [vmem:[%s948] ss:$2 sm:$0xff] %v936
        %v950 = vld.sshfl [vmem:[#allocation1] sm:$0xff pattern:$0x75316420]
        %v951 = vld.sshfl [vmem:[#allocation1 + $0x10] sm:$0xff pattern:$0x75316420]
        %v952 = vsel %vm632, %v950, 0
        %v954 = vsel %vm632, %v951, 0
        %956 = vmatpush.msra.mxu0 0.0
        %957 = vmatpush.msra.mxu0 0.0
        %958 = vmatpush.msra.mxu0 0.0
        %959 = vmatpush.msra.mxu0 0.0
        %960 = vmatpush.msra.mxu0 0.0
        %961 = vmatpush.msra.mxu0 0.0
        %962 = vmatpush.msra.mxu0 0.0
        %963 = vmatpush.msra.mxu0 0.0
        %964 = vmatpush.msra.mxu0 0.0
        %965 = vmatpush.msra.mxu0 0.0
        %966 = vmatpush.msra.mxu0 0.0
        %967 = vmatpush.msra.mxu0 0.0
        %968 = vmatpush.msra.mxu0 0.0
        %969 = vmatpush.msra.mxu0 0.0
        %970 = vmatpush.msra.mxu0 0.0
        %971 = vmatpush.msra.mxu0 %v938
        %972 = vmatmul.f32.gmra.mxu0 %v952
        %v973 = vpop.f32.mrf.mxu0
        %v974 = vadd.f32 0.0, %v973
        %975 = vmatmul.f32.gmra.mxu0 %v954
        %v976 = vpop.f32.mrf.mxu0
        %v977 = vadd.f32 0.0, %v976
        %978 = vdwg.mxu0
        %v979 = vadd.f32 %v931, %v974
        %v980 = vadd.f32 %v932, %v977
        %s981 = scalar_lea.vmem [#allocation4], 16
        %v982 = vld [vmem:[%s981] sm:$0xf]
        %v983 = vld [vmem:[%s981 + $0x8] sm:$0xf]
        %v984 = vld [vmem:[%s981 + $0x10] sm:$0xf]
        %v985 = vld [vmem:[%s981 + $0x18] sm:$0xf]
        %s986 = scalar_lea.vmem %s13, 48
        %v987 = vld [vmem:[%s986] sm:$0xff]
        %992 = vst [vmem:[#allocation1] ss:$2 sm:$0xff] %v982
        %s993 = scalar_lea.vmem [#allocation1], 1
        %994 = vst [vmem:[%s993] ss:$2 sm:$0xff] %v983
        %s995 = scalar_lea.vmem [#allocation1], 16
        %996 = vst [vmem:[%s995] ss:$2 sm:$0xff] %v984
        %s997 = scalar_lea.vmem [#allocation1], 17
        %998 = vst [vmem:[%s997] ss:$2 sm:$0xff] %v985
        %v999 = vld.sshfl [vmem:[#allocation1] sm:$0xff pattern:$0x75316420]
        %v1000 = vld.sshfl [vmem:[#allocation1 + $0x10] sm:$0xff pattern:$0x75316420]
        %v1001 = vsel %vm632, %v999, 0
        %v1003 = vsel %vm632, %v1000, 0
        %1005 = vmatpush.msra.mxu0 0.0
        %1006 = vmatpush.msra.mxu0 0.0
        %1007 = vmatpush.msra.mxu0 0.0
        %1008 = vmatpush.msra.mxu0 0.0
        %1009 = vmatpush.msra.mxu0 0.0
        %1010 = vmatpush.msra.mxu0 0.0
        %1011 = vmatpush.msra.mxu0 0.0
        %1012 = vmatpush.msra.mxu0 0.0
        %1013 = vmatpush.msra.mxu0 0.0
        %1014 = vmatpush.msra.mxu0 0.0
        %1015 = vmatpush.msra.mxu0 0.0
        %1016 = vmatpush.msra.mxu0 0.0
        %1017 = vmatpush.msra.mxu0 0.0
        %1018 = vmatpush.msra.mxu0 0.0
        %1019 = vmatpush.msra.mxu0 0.0
        %1020 = vmatpush.msra.mxu0 %v987
        %1021 = vmatmul.f32.gmra.mxu0 %v1001
        %v1022 = vpop.f32.mrf.mxu0
        %v1023 = vadd.f32 0.0, %v1022
        %1024 = vmatmul.f32.gmra.mxu0 %v1003
        %v1025 = vpop.f32.mrf.mxu0
        %v1026 = vadd.f32 0.0, %v1025
        %1027 = vdwg.mxu0
        %v1028 = vadd.f32 %v979, %v1023
        %v1029 = vadd.f32 %v980, %v1026
        %v1030 = vld [vmem:[%s981 + $0x1] sm:$0xf]
        %v1031 = vld [vmem:[%s981 + $0x9] sm:$0xf]
        %v1032 = vld [vmem:[%s981 + $0x11] sm:$0xf]
        %v1033 = vld [vmem:[%s981 + $0x19] sm:$0xf]
        %s1034 = scalar_lea.vmem %s13, 56
        %v1035 = vld [vmem:[%s1034] sm:$0xff]
        %1040 = vst [vmem:[#allocation1] ss:$2 sm:$0xff] %v1030
        %s1041 = scalar_lea.vmem [#allocation1], 1
        %1042 = vst [vmem:[%s1041] ss:$2 sm:$0xff] %v1031
        %s1043 = scalar_lea.vmem [#allocation1], 16
        %1044 = vst [vmem:[%s1043] ss:$2 sm:$0xff] %v1032
        %s1045 = scalar_lea.vmem [#allocation1], 17
        %1046 = vst [vmem:[%s1045] ss:$2 sm:$0xff] %v1033
        %v1047 = vld.sshfl [vmem:[#allocation1] sm:$0xff pattern:$0x75316420]
        %v1048 = vld.sshfl [vmem:[#allocation1 + $0x10] sm:$0xff pattern:$0x75316420]
        %v1049 = vsel %vm632, %v1047, 0
        %v1051 = vsel %vm632, %v1048, 0
        %1053 = vmatpush.msra.mxu0 0.0
        %1054 = vmatpush.msra.mxu0 0.0
        %1055 = vmatpush.msra.mxu0 0.0
        %1056 = vmatpush.msra.mxu0 0.0
        %1057 = vmatpush.msra.mxu0 0.0
        %1058 = vmatpush.msra.mxu0 0.0
        %1059 = vmatpush.msra.mxu0 0.0
        %1060 = vmatpush.msra.mxu0 0.0
        %1061 = vmatpush.msra.mxu0 0.0
        %1062 = vmatpush.msra.mxu0 0.0
        %1063 = vmatpush.msra.mxu0 0.0
        %1064 = vmatpush.msra.mxu0 0.0
        %1065 = vmatpush.msra.mxu0 0.0
        %1066 = vmatpush.msra.mxu0 0.0
        %1067 = vmatpush.msra.mxu0 0.0
        %1068 = vmatpush.msra.mxu0 %v1035
        %1069 = vmatmul.f32.gmra.mxu0 %v1049
        %v1070 = vpop.f32.mrf.mxu0
        %v1071 = vadd.f32 0.0, %v1070
        %1072 = vmatmul.f32.gmra.mxu0 %v1051
        %v1073 = vpop.f32.mrf.mxu0
        %v1074 = vadd.f32 0.0, %v1073
        %1075 = vdwg.mxu0
        %v1076 = vadd.f32 %v1028, %v1071
        %v1077 = vadd.f32 %v1029, %v1074
        %v1078 = vld [vmem:[%s981 + $0x2] sm:$0xf]
        %v1079 = vld [vmem:[%s981 + $0xa] sm:$0xf]
        %v1080 = vld [vmem:[%s981 + $0x12] sm:$0xf]
        %v1081 = vld [vmem:[%s981 + $0x1a] sm:$0xf]
        %s1082 = scalar_lea.vmem %s13, 64
        %v1083 = vld [vmem:[%s1082] sm:$0xff]
        %1088 = vst [vmem:[#allocation1] ss:$2 sm:$0xff] %v1078
        %s1089 = scalar_lea.vmem [#allocation1], 1
        %1090 = vst [vmem:[%s1089] ss:$2 sm:$0xff] %v1079
        %s1091 = scalar_lea.vmem [#allocation1], 16
        %1092 = vst [vmem:[%s1091] ss:$2 sm:$0xff] %v1080
        %s1093 = scalar_lea.vmem [#allocation1], 17
        %1094 = vst [vmem:[%s1093] ss:$2 sm:$0xff] %v1081
        %v1095 = vld.sshfl [vmem:[#allocation1] sm:$0xff pattern:$0x75316420]
        %v1096 = vld.sshfl [vmem:[#allocation1 + $0x10] sm:$0xff pattern:$0x75316420]
        %v1097 = vsel %vm632, %v1095, 0
        %v1099 = vsel %vm632, %v1096, 0
        %1101 = vmatpush.msra.mxu0 0.0
        %1102 = vmatpush.msra.mxu0 0.0
        %1103 = vmatpush.msra.mxu0 0.0
        %1104 = vmatpush.msra.mxu0 0.0
        %1105 = vmatpush.msra.mxu0 0.0
        %1106 = vmatpush.msra.mxu0 0.0
        %1107 = vmatpush.msra.mxu0 0.0
        %1108 = vmatpush.msra.mxu0 0.0
        %1109 = vmatpush.msra.mxu0 0.0
        %1110 = vmatpush.msra.mxu0 0.0
        %1111 = vmatpush.msra.mxu0 0.0
        %1112 = vmatpush.msra.mxu0 0.0
        %1113 = vmatpush.msra.mxu0 0.0
        %1114 = vmatpush.msra.mxu0 0.0
        %1115 = vmatpush.msra.mxu0 0.0
        %1116 = vmatpush.msra.mxu0 %v1083
        %1117 = vmatmul.f32.gmra.mxu0 %v1097
        %v1118 = vpop.f32.mrf.mxu0
        %v1119 = vadd.f32 0.0, %v1118
        %1120 = vmatmul.f32.gmra.mxu0 %v1099
        %v1121 = vpop.f32.mrf.mxu0
        %v1122 = vadd.f32 0.0, %v1121
        %1123 = vdwg.mxu0
        %v1124 = vadd.f32 %v1076, %v1119
        %v1125 = vadd.f32 %v1077, %v1122
        %1126 = vst.msk [vmem:[%s589] sm:$0xff] %vm632, %v1124
        %1127 = vst.msk [vmem:[%s589 + $0x8] sm:$0xff] %vm632, %v1125
        %v1128 = vld [vmem:[%s599] sm:$0xff]
        %v1129 = vld [vmem:[%s599 + $0x8] sm:$0xff]
        %v1130 = vld [vmem:[%s599 + $0x10] sm:$0xff]
        %v1131 = vld [vmem:[%s599 + $0x18] sm:$0xff]
        %v1132 = vld [vmem:[%s599 + $0x20] sm:$0xff]
        %v1133 = vld [vmem:[%s599 + $0x28] sm:$0xff]
        %v1134 = vld [vmem:[%s599 + $0x30] sm:$0xff]
        %v1135 = vld [vmem:[%s599 + $0x38] sm:$0xff]
        %v1136 = vld [vmem:[%s5] sm:$0x3f]
        %v1137 = vld [vmem:[%s6] sm:$0x1]
        %v1139 = vperm.slane %v1137, 0
        %vm1141 = vcmask 48128
        %v1143 = vsel %vm1141, %v1128, 0
        %v1146 = vsel %vm1141, %v1129, 0
        %v1149 = vsel %vm1141, %v1130, 0
        %v1152 = vsel %vm1141, %v1131, 0
        %v1155 = vsel %vm1141, %v1132, 0
        %v1158 = vsel %vm1141, %v1133, 0
        %v1161 = vsel %vm1141, %v1134, 0
        %v1164 = vsel %vm1141, %v1135, 0
        %vm1166 = vcmask 1045504
        %v1168 = vsel %vm1166, %v1136, 0
        %1170 = vmatpush.msra.mxu0 0.0
        %1171 = vmatpush.msra.mxu0 0.0
        %1172 = vmatpush.msra.mxu0 0.0
        %1173 = vmatpush.msra.mxu0 0.0
        %1174 = vmatpush.msra.mxu0 0.0
        %1175 = vmatpush.msra.mxu0 0.0
        %1176 = vmatpush.msra.mxu0 0.0
        %1177 = vmatpush.msra.mxu0 0.0
        %1178 = vmatpush.msra.mxu0 0.0
        %1179 = vmatpush.msra.mxu0 0.0
        %1180 = vmatpush.msra.mxu0 0.0
        %1181 = vmatpush.msra.mxu0 0.0
        %1182 = vmatpush.msra.mxu0 0.0
        %1183 = vmatpush.msra.mxu0 0.0
        %1184 = vmatpush.msra.mxu0 0.0
        %1185 = vmatpush.msra.mxu0 %v1168
        %1186 = vmatmul.f32.gmra.mxu0 %v1143
        %v1187 = vpop.f32.mrf.mxu0
        %v1188 = vadd.f32 %v1139, %v1187
        %1189 = vmatmul.f32.gmra.mxu0 %v1146
        %v1190 = vpop.f32.mrf.mxu0
        %v1191 = vadd.f32 %v1139, %v1190
        %1192 = vmatmul.f32.gmra.mxu0 %v1149
        %v1193 = vpop.f32.mrf.mxu0
        %v1194 = vadd.f32 %v1139, %v1193
        %1195 = vmatmul.f32.gmra.mxu0 %v1152
        %v1196 = vpop.f32.mrf.mxu0
        %v1197 = vadd.f32 %v1139, %v1196
        %1198 = vmatmul.f32.gmra.mxu0 %v1155
        %v1199 = vpop.f32.mrf.mxu0
        %v1200 = vadd.f32 %v1139, %v1199
        %1201 = vmatmul.f32.gmra.mxu0 %v1158
        %v1202 = vpop.f32.mrf.mxu0
        %v1203 = vadd.f32 %v1139, %v1202
        %1204 = vmatmul.f32.gmra.mxu0 %v1161
        %v1205 = vpop.f32.mrf.mxu0
        %v1206 = vadd.f32 %v1139, %v1205
        %1207 = vmatmul.f32.gmra.mxu0 %v1164
        %v1208 = vpop.f32.mrf.mxu0
        %v1209 = vadd.f32 %v1139, %v1208
        %1210 = vdwg.mxu0
        %v1211 = vrot.slane %v655, 3
        %v1212 = vrot.slane %v662, 3
        %v1213 = vrot.slane %v658, 3
        %v1214 = vrot.slane %v663, 3
        %vm1215 = vcmask 1040384
        %v1216 = vsel %vm1215, %v655, %v1211
        %vm1217 = vcmask 1041409
        %v1218 = vsel %vm1217, %v655, %v1211
        %v1219 = vrot.slane %v1218, 1
        %vm1220 = vcmask 1042434
        %v1221 = vsel %vm1220, %v655, %v1211
        %v1222 = vrot.slane %v1221, 2
        %vm1223 = vcmask 1043459
        %v1224 = vsel %vm1223, %v655, %v1211
        %v1225 = vrot.slane %v1224, 3
        %v1226 = vsel %vm1215, %v662, %v1212
        %v1227 = vsel %vm1217, %v662, %v1212
        %v1228 = vrot.slane %v1227, 1
        %v1229 = vsel %vm1220, %v662, %v1212
        %v1230 = vrot.slane %v1229, 2
        %v1231 = vsel %vm1223, %v662, %v1212
        %v1232 = vrot.slane %v1231, 3
        %v1233 = vsel %vm1215, %v658, %v1213
        %v1234 = vsel %vm1217, %v658, %v1213
        %v1235 = vrot.slane %v1234, 1
        %v1236 = vsel %vm1220, %v658, %v1213
        %v1237 = vrot.slane %v1236, 2
        %v1238 = vsel %vm1223, %v658, %v1213
        %v1239 = vrot.slane %v1238, 3
        %v1240 = vsel %vm1215, %v663, %v1214
        %v1241 = vsel %vm1217, %v663, %v1214
        %v1242 = vrot.slane %v1241, 1
        %v1243 = vsel %vm1220, %v663, %v1214
        %v1244 = vrot.slane %v1243, 2
        %v1245 = vsel %vm1223, %v663, %v1214
        %v1246 = vrot.slane %v1245, 3
        %v1247 = vperm.slane %v1216, 0
        %v1248 = vperm.slane %v1219, 0
        %v1249 = vperm.slane %v1222, 0
        %v1250 = vperm.slane %v1225, 0
        %v1251 = vperm.slane %v1226, 0
        %v1252 = vperm.slane %v1228, 0
        %v1253 = vperm.slane %v1230, 0
        %v1254 = vperm.slane %v1232, 0
        %v1255 = vperm.slane %v1233, 0
        %v1256 = vperm.slane %v1235, 0
        %v1257 = vperm.slane %v1237, 0
        %v1258 = vperm.slane %v1239, 0
        %v1259 = vperm.slane %v1240, 0
        %v1260 = vperm.slane %v1242, 0
        %v1261 = vperm.slane %v1244, 0
        %v1262 = vperm.slane %v1246, 0
        %v1287 = vrot.slane %v1188, 2
        %v1288 = vrot.slane %v1188, 4
        %v1289 = vrot.slane %v1188, 6
        %v1290 = vrot.slane %v1191, 2
        %v1291 = vrot.slane %v1191, 4
        %v1292 = vrot.slane %v1191, 6
        %v1293 = vrot.slane %v1194, 2
        %v1294 = vrot.slane %v1194, 4
        %v1295 = vrot.slane %v1194, 6
        %v1296 = vrot.slane %v1197, 2
        %v1297 = vrot.slane %v1197, 4
        %v1298 = vrot.slane %v1197, 6
        %v1299 = vrot.slane %v1200, 2
        %v1300 = vrot.slane %v1200, 4
        %v1301 = vrot.slane %v1200, 6
        %v1302 = vrot.slane %v1203, 2
        %v1303 = vrot.slane %v1203, 4
        %v1304 = vrot.slane %v1203, 6
        %v1305 = vrot.slane %v1206, 2
        %v1306 = vrot.slane %v1206, 4
        %v1307 = vrot.slane %v1206, 6
        %v1308 = vrot.slane %v1209, 2
        %v1309 = vrot.slane %v1209, 4
        %v1310 = vrot.slane %v1209, 6
        %v1335 = vadd.f32 %v1247, %v1188
        %v1336 = vadd.f32 %v1248, %v1287
        %v1337 = vadd.f32 %v1249, %v1288
        %v1338 = vadd.f32 %v1250, %v1289
        %v1339 = vadd.f32 %v1247, %v1191
        %v1340 = vadd.f32 %v1248, %v1290
        %v1341 = vadd.f32 %v1249, %v1291
        %v1342 = vadd.f32 %v1250, %v1292
        %v1343 = vadd.f32 %v1251, %v1194
        %v1344 = vadd.f32 %v1252, %v1293
        %v1345 = vadd.f32 %v1253, %v1294
        %v1346 = vadd.f32 %v1254, %v1295
        %v1347 = vadd.f32 %v1251, %v1197
        %v1348 = vadd.f32 %v1252, %v1296
        %v1349 = vadd.f32 %v1253, %v1297
        %v1350 = vadd.f32 %v1254, %v1298
        %v1351 = vadd.f32 %v1255, %v1200
        %v1352 = vadd.f32 %v1256, %v1299
        %v1353 = vadd.f32 %v1257, %v1300
        %v1354 = vadd.f32 %v1258, %v1301
        %v1355 = vadd.f32 %v1255, %v1203
        %v1356 = vadd.f32 %v1256, %v1302
        %v1357 = vadd.f32 %v1257, %v1303
        %v1358 = vadd.f32 %v1258, %v1304
        %v1359 = vadd.f32 %v1259, %v1206
        %v1360 = vadd.f32 %v1260, %v1305
        %v1361 = vadd.f32 %v1261, %v1306
        %v1362 = vadd.f32 %v1262, %v1307
        %v1363 = vadd.f32 %v1259, %v1209
        %v1364 = vadd.f32 %v1260, %v1308
        %v1365 = vadd.f32 %v1261, %v1309
        %v1366 = vadd.f32 %v1262, %v1310
        %1367 = vst.msk [vmem:[#allocation3] sm:$0xff] %vm632, 0.0
        %vm1368 = vcmask 58368
        %1369 = vst.msk [vmem:[#allocation3 + $0x8] sm:$0x3] %vm1368, 0.0
        %s1370 = scalar_lea.vmem [#allocation3], 144
        %1371 = vst.msk [vmem:[%s1370] sm:$0xff] %vm632, 0.0
        %1372 = vst.msk [vmem:[%s1370 + $0x8] sm:$0x3] %vm1368, 0.0
        %1373 = vst.msk [vmem:[#allocation3] sm:$0x1] %vm670, 0.0
        %1374 = vst.msk [vmem:[#allocation3 + $0x10] sm:$0x1] %vm670, 0.0
        %1375 = vst.msk [vmem:[#allocation3 + $0x20] sm:$0x1] %vm670, 0.0
        %1376 = vst.msk [vmem:[#allocation3 + $0x30] sm:$0x1] %vm670, 0.0
        %1377 = vst.msk [vmem:[#allocation3 + $0x40] sm:$0x1] %vm670, 0.0
        %1378 = vst.msk [vmem:[#allocation3 + $0x50] sm:$0x1] %vm670, 0.0
        %1379 = vst.msk [vmem:[#allocation3 + $0x60] sm:$0x1] %vm670, 0.0
        %1380 = vst.msk [vmem:[#allocation3 + $0x70] sm:$0x1] %vm670, 0.0
        %1381 = vst.msk [vmem:[#allocation3 + $0x80] sm:$0x1] %vm670, 0.0
        %1382 = vst.msk [vmem:[#allocation3 + $0x90] sm:$0x1] %vm670, 0.0
        %1383 = vst.msk [vmem:[#allocation3 + $0x9] sm:$0x1] %vm670, 0.0
        %1384 = vst.msk [vmem:[#allocation3 + $0x19] sm:$0x1] %vm670, 0.0
        %1385 = vst.msk [vmem:[#allocation3 + $0x29] sm:$0x1] %vm670, 0.0
        %1386 = vst.msk [vmem:[#allocation3 + $0x39] sm:$0x1] %vm670, 0.0
        %1387 = vst.msk [vmem:[#allocation3 + $0x49] sm:$0x1] %vm670, 0.0
        %1388 = vst.msk [vmem:[#allocation3 + $0x59] sm:$0x1] %vm670, 0.0
        %1389 = vst.msk [vmem:[#allocation3 + $0x69] sm:$0x1] %vm670, 0.0
        %1390 = vst.msk [vmem:[#allocation3 + $0x79] sm:$0x1] %vm670, 0.0
        %1391 = vst.msk [vmem:[#allocation3 + $0x89] sm:$0x1] %vm670, 0.0
        %1392 = vst.msk [vmem:[#allocation3 + $0x99] sm:$0x1] %vm670, 0.0
        %1425 = vst [vmem:[#allocation1] ss:$4 sm:$0xff] %v1335
        %s1426 = scalar_lea.vmem [#allocation1], 1
        %1427 = vst [vmem:[%s1426] ss:$4 sm:$0xff] %v1336
        %s1428 = scalar_lea.vmem [#allocation1], 2
        %1429 = vst [vmem:[%s1428] ss:$4 sm:$0xff] %v1337
        %s1430 = scalar_lea.vmem [#allocation1], 3
        %1431 = vst [vmem:[%s1430] ss:$4 sm:$0xff] %v1338
        %v1432 = vld.sshfl [vmem:[#allocation1] sm:$0xff pattern:$0x73625140]
        %s1433 = scalar_lea.vmem [#allocation1], 32
        %1434 = vst [vmem:[%s1433] ss:$4 sm:$0xff] %v1339
        %s1435 = scalar_lea.vmem [#allocation1], 33
        %1436 = vst [vmem:[%s1435] ss:$4 sm:$0xff] %v1340
        %s1437 = scalar_lea.vmem [#allocation1], 34
        %1438 = vst [vmem:[%s1437] ss:$4 sm:$0xff] %v1341
        %s1439 = scalar_lea.vmem [#allocation1], 35
        %1440 = vst [vmem:[%s1439] ss:$4 sm:$0xff] %v1342
        %v1441 = vld.sshfl [vmem:[#allocation1 + $0x20] sm:$0xff pattern:$0x73625140]
        %1442 = vst [vmem:[#allocation1] ss:$4 sm:$0xff] %v1343
        %1443 = vst [vmem:[%s1426] ss:$4 sm:$0xff] %v1344
        %1444 = vst [vmem:[%s1428] ss:$4 sm:$0xff] %v1345
        %1445 = vst [vmem:[%s1430] ss:$4 sm:$0xff] %v1346
        %v1446 = vld.sshfl [vmem:[#allocation1] sm:$0xff pattern:$0x73625140]
        %1447 = vst [vmem:[%s1433] ss:$4 sm:$0xff] %v1347
        %1448 = vst [vmem:[%s1435] ss:$4 sm:$0xff] %v1348
        %1449 = vst [vmem:[%s1437] ss:$4 sm:$0xff] %v1349
        %1450 = vst [vmem:[%s1439] ss:$4 sm:$0xff] %v1350
        %v1451 = vld.sshfl [vmem:[#allocation1 + $0x20] sm:$0xff pattern:$0x73625140]
        %1452 = vst [vmem:[#allocation1] ss:$4 sm:$0xff] %v1351
        %1453 = vst [vmem:[%s1426] ss:$4 sm:$0xff] %v1352
        %1454 = vst [vmem:[%s1428] ss:$4 sm:$0xff] %v1353
        %1455 = vst [vmem:[%s1430] ss:$4 sm:$0xff] %v1354
        %v1456 = vld.sshfl [vmem:[#allocation1] sm:$0xff pattern:$0x73625140]
        %1457 = vst [vmem:[%s1433] ss:$4 sm:$0xff] %v1355
        %1458 = vst [vmem:[%s1435] ss:$4 sm:$0xff] %v1356
        %1459 = vst [vmem:[%s1437] ss:$4 sm:$0xff] %v1357
        %1460 = vst [vmem:[%s1439] ss:$4 sm:$0xff] %v1358
        %v1461 = vld.sshfl [vmem:[#allocation1 + $0x20] sm:$0xff pattern:$0x73625140]
        %1462 = vst [vmem:[#allocation1] ss:$4 sm:$0xff] %v1359
        %1463 = vst [vmem:[%s1426] ss:$4 sm:$0xff] %v1360
        %1464 = vst [vmem:[%s1428] ss:$4 sm:$0xff] %v1361
        %1465 = vst [vmem:[%s1430] ss:$4 sm:$0xff] %v1362
        %v1466 = vld.sshfl [vmem:[#allocation1] sm:$0xff pattern:$0x73625140]
        %1467 = vst [vmem:[%s1433] ss:$4 sm:$0xff] %v1363
        %1468 = vst [vmem:[%s1435] ss:$4 sm:$0xff] %v1364
        %1469 = vst [vmem:[%s1437] ss:$4 sm:$0xff] %v1365
        %1470 = vst [vmem:[%s1439] ss:$4 sm:$0xff] %v1366
        %v1471 = vld.sshfl [vmem:[#allocation1 + $0x20] sm:$0xff pattern:$0x73625140]
        %s1480 = scalar_lea.vmem [#allocation3], 16
        %1481 = vst.msk [vmem:[%s1480 + $0x1] sm:$0xff] %vm632, %v1432
        %1482 = vst.msk [vmem:[%s1480 + $0x11] sm:$0xff] %vm632, %v1441
        %1483 = vst.msk [vmem:[%s1480 + $0x21] sm:$0xff] %vm632, %v1446
        %1484 = vst.msk [vmem:[%s1480 + $0x31] sm:$0xff] %vm632, %v1451
        %1485 = vst.msk [vmem:[%s1480 + $0x41] sm:$0xff] %vm632, %v1456
        %1486 = vst.msk [vmem:[%s1480 + $0x51] sm:$0xff] %vm632, %v1461
        %1487 = vst.msk [vmem:[%s1480 + $0x61] sm:$0xff] %vm632, %v1466
        %1488 = vst.msk [vmem:[%s1480 + $0x71] sm:$0xff] %vm632, %v1471
        %v1489 = vld [vmem:[%s12] sm:$0x1]
        %v1491 = vperm.slane %v1489, 0
        %v1493 = vadd.f32 %v1491, 0.0
        %v1494 = vld [vmem:[#allocation3] sm:$0xff]
        %v1495 = vld [vmem:[#allocation3 + $0x10] sm:$0xff]
        %v1496 = vld [vmem:[#allocation3 + $0x20] sm:$0xff]
        %v1497 = vld [vmem:[#allocation3 + $0x30] sm:$0xff]
        %v1498 = vld [vmem:[#allocation3 + $0x40] sm:$0xff]
        %v1499 = vld [vmem:[#allocation3 + $0x50] sm:$0xff]
        %v1500 = vld [vmem:[#allocation3 + $0x60] sm:$0xff]
        %v1501 = vld [vmem:[#allocation3 + $0x70] sm:$0xff]
        %v1502 = vld [vmem:[%s11] sm:$0xff]
        %v1504 = vsel %vm632, %v1494, 0
        %v1507 = vsel %vm632, %v1495, 0
        %v1510 = vsel %vm632, %v1496, 0
        %v1513 = vsel %vm632, %v1497, 0
        %v1516 = vsel %vm632, %v1498, 0
        %v1519 = vsel %vm632, %v1499, 0
        %v1522 = vsel %vm632, %v1500, 0
        %v1525 = vsel %vm632, %v1501, 0
        %1527 = vmatpush.msra.mxu0 0.0
        %1528 = vmatpush.msra.mxu0 0.0
        %1529 = vmatpush.msra.mxu0 0.0
        %1530 = vmatpush.msra.mxu0 0.0
        %1531 = vmatpush.msra.mxu0 0.0
        %1532 = vmatpush.msra.mxu0 0.0
        %1533 = vmatpush.msra.mxu0 0.0
        %1534 = vmatpush.msra.mxu0 0.0
        %1535 = vmatpush.msra.mxu0 0.0
        %1536 = vmatpush.msra.mxu0 0.0
        %1537 = vmatpush.msra.mxu0 0.0
        %1538 = vmatpush.msra.mxu0 0.0
        %1539 = vmatpush.msra.mxu0 0.0
        %1540 = vmatpush.msra.mxu0 0.0
        %1541 = vmatpush.msra.mxu0 0.0
        %1542 = vmatpush.msra.mxu0 %v1502
        %1543 = vmatmul.f32.gmra.mxu0 %v1504
        %v1544 = vpop.f32.mrf.mxu0
        %v1545 = vadd.f32 0.0, %v1544
        %1546 = vmatmul.f32.gmra.mxu0 %v1507
        %v1547 = vpop.f32.mrf.mxu0
        %v1548 = vadd.f32 0.0, %v1547
        %1549 = vmatmul.f32.gmra.mxu0 %v1510
        %v1550 = vpop.f32.mrf.mxu0
        %v1551 = vadd.f32 0.0, %v1550
        %1552 = vmatmul.f32.gmra.mxu0 %v1513
        %v1553 = vpop.f32.mrf.mxu0
        %v1554 = vadd.f32 0.0, %v1553
        %1555 = vmatmul.f32.gmra.mxu0 %v1516
        %v1556 = vpop.f32.mrf.mxu0
        %v1557 = vadd.f32 0.0, %v1556
        %1558 = vmatmul.f32.gmra.mxu0 %v1519
        %v1559 = vpop.f32.mrf.mxu0
        %v1560 = vadd.f32 0.0, %v1559
        %1561 = vmatmul.f32.gmra.mxu0 %v1522
        %v1562 = vpop.f32.mrf.mxu0
        %v1563 = vadd.f32 0.0, %v1562
        %1564 = vmatmul.f32.gmra.mxu0 %v1525
        %v1565 = vpop.f32.mrf.mxu0
        %v1566 = vadd.f32 0.0, %v1565
        %1567 = vdwg.mxu0
        %v1568 = vadd.f32 %v1493, %v1545
        %v1569 = vadd.f32 %v1493, %v1548
        %v1570 = vadd.f32 %v1493, %v1551
        %v1571 = vadd.f32 %v1493, %v1554
        %v1572 = vadd.f32 %v1493, %v1557
        %v1573 = vadd.f32 %v1493, %v1560
        %v1574 = vadd.f32 %v1493, %v1563
        %v1575 = vadd.f32 %v1493, %v1566
        %v1576 = vld [vmem:[#allocation3 + $0x1] sm:$0xff]
        %v1577 = vld [vmem:[#allocation3 + $0x11] sm:$0xff]
        %v1578 = vld [vmem:[#allocation3 + $0x21] sm:$0xff]
        %v1579 = vld [vmem:[#allocation3 + $0x31] sm:$0xff]
        %v1580 = vld [vmem:[#allocation3 + $0x41] sm:$0xff]
        %v1581 = vld [vmem:[#allocation3 + $0x51] sm:$0xff]
        %v1582 = vld [vmem:[#allocation3 + $0x61] sm:$0xff]
        %v1583 = vld [vmem:[#allocation3 + $0x71] sm:$0xff]
        %s1584 = scalar_lea.vmem %s11, 8
        %v1585 = vld [vmem:[%s1584] sm:$0xff]
        %v1587 = vsel %vm632, %v1576, 0
        %v1590 = vsel %vm632, %v1577, 0
        %v1593 = vsel %vm632, %v1578, 0
        %v1596 = vsel %vm632, %v1579, 0
        %v1599 = vsel %vm632, %v1580, 0
        %v1602 = vsel %vm632, %v1581, 0
        %v1605 = vsel %vm632, %v1582, 0
        %v1608 = vsel %vm632, %v1583, 0
        %1610 = vmatpush.msra.mxu0 0.0
        %1611 = vmatpush.msra.mxu0 0.0
        %1612 = vmatpush.msra.mxu0 0.0
        %1613 = vmatpush.msra.mxu0 0.0
        %1614 = vmatpush.msra.mxu0 0.0
        %1615 = vmatpush.msra.mxu0 0.0
        %1616 = vmatpush.msra.mxu0 0.0
        %1617 = vmatpush.msra.mxu0 0.0
        %1618 = vmatpush.msra.mxu0 0.0
        %1619 = vmatpush.msra.mxu0 0.0
        %1620 = vmatpush.msra.mxu0 0.0
        %1621 = vmatpush.msra.mxu0 0.0
        %1622 = vmatpush.msra.mxu0 0.0
        %1623 = vmatpush.msra.mxu0 0.0
        %1624 = vmatpush.msra.mxu0 0.0
        %1625 = vmatpush.msra.mxu0 %v1585
        %1626 = vmatmul.f32.gmra.mxu0 %v1587
        %v1627 = vpop.f32.mrf.mxu0
        %v1628 = vadd.f32 0.0, %v1627
        %1629 = vmatmul.f32.gmra.mxu0 %v1590
        %v1630 = vpop.f32.mrf.mxu0
        %v1631 = vadd.f32 0.0, %v1630
        %1632 = vmatmul.f32.gmra.mxu0 %v1593
        %v1633 = vpop.f32.mrf.mxu0
        %v1634 = vadd.f32 0.0, %v1633
        %1635 = vmatmul.f32.gmra.mxu0 %v1596
        %v1636 = vpop.f32.mrf.mxu0
        %v1637 = vadd.f32 0.0, %v1636
        %1638 = vmatmul.f32.gmra.mxu0 %v1599
        %v1639 = vpop.f32.mrf.mxu0
        %v1640 = vadd.f32 0.0, %v1639
        %1641 = vmatmul.f32.gmra.mxu0 %v1602
        %v1642 = vpop.f32.mrf.mxu0
        %v1643 = vadd.f32 0.0, %v1642
        %1644 = vmatmul.f32.gmra.mxu0 %v1605
        %v1645 = vpop.f32.mrf.mxu0
        %v1646 = vadd.f32 0.0, %v1645
        %1647 = vmatmul.f32.gmra.mxu0 %v1608
        %v1648 = vpop.f32.mrf.mxu0
        %v1649 = vadd.f32 0.0, %v1648
        %1650 = vdwg.mxu0
        %v1651 = vadd.f32 %v1568, %v1628
        %v1652 = vadd.f32 %v1569, %v1631
        %v1653 = vadd.f32 %v1570, %v1634
        %v1654 = vadd.f32 %v1571, %v1637
        %v1655 = vadd.f32 %v1572, %v1640
        %v1656 = vadd.f32 %v1573, %v1643
        %v1657 = vadd.f32 %v1574, %v1646
        %v1658 = vadd.f32 %v1575, %v1649
        %v1659 = vld [vmem:[#allocation3 + $0x2] sm:$0xff]
        %v1660 = vld [vmem:[#allocation3 + $0x12] sm:$0xff]
        %v1661 = vld [vmem:[#allocation3 + $0x22] sm:$0xff]
        %v1662 = vld [vmem:[#allocation3 + $0x32] sm:$0xff]
        %v1663 = vld [vmem:[#allocation3 + $0x42] sm:$0xff]
        %v1664 = vld [vmem:[#allocation3 + $0x52] sm:$0xff]
        %v1665 = vld [vmem:[#allocation3 + $0x62] sm:$0xff]
        %v1666 = vld [vmem:[#allocation3 + $0x72] sm:$0xff]
        %s1667 = scalar_lea.vmem %s11, 16
        %v1668 = vld [vmem:[%s1667] sm:$0xff]
        %v1670 = vsel %vm632, %v1659, 0
        %v1673 = vsel %vm632, %v1660, 0
        %v1676 = vsel %vm632, %v1661, 0
        %v1679 = vsel %vm632, %v1662, 0
        %v1682 = vsel %vm632, %v1663, 0
        %v1685 = vsel %vm632, %v1664, 0
        %v1688 = vsel %vm632, %v1665, 0
        %v1691 = vsel %vm632, %v1666, 0
        %1693 = vmatpush.msra.mxu0 0.0
        %1694 = vmatpush.msra.mxu0 0.0
        %1695 = vmatpush.msra.mxu0 0.0
        %1696 = vmatpush.msra.mxu0 0.0
        %1697 = vmatpush.msra.mxu0 0.0
        %1698 = vmatpush.msra.mxu0 0.0
        %1699 = vmatpush.msra.mxu0 0.0
        %1700 = vmatpush.msra.mxu0 0.0
        %1701 = vmatpush.msra.mxu0 0.0
        %1702 = vmatpush.msra.mxu0 0.0
        %1703 = vmatpush.msra.mxu0 0.0
        %1704 = vmatpush.msra.mxu0 0.0
        %1705 = vmatpush.msra.mxu0 0.0
        %1706 = vmatpush.msra.mxu0 0.0
        %1707 = vmatpush.msra.mxu0 0.0
        %1708 = vmatpush.msra.mxu0 %v1668
        %1709 = vmatmul.f32.gmra.mxu0 %v1670
        %v1710 = vpop.f32.mrf.mxu0
        %v1711 = vadd.f32 0.0, %v1710
        %1712 = vmatmul.f32.gmra.mxu0 %v1673
        %v1713 = vpop.f32.mrf.mxu0
        %v1714 = vadd.f32 0.0, %v1713
        %1715 = vmatmul.f32.gmra.mxu0 %v1676
        %v1716 = vpop.f32.mrf.mxu0
        %v1717 = vadd.f32 0.0, %v1716
        %1718 = vmatmul.f32.gmra.mxu0 %v1679
        %v1719 = vpop.f32.mrf.mxu0
        %v1720 = vadd.f32 0.0, %v1719
        %1721 = vmatmul.f32.gmra.mxu0 %v1682
        %v1722 = vpop.f32.mrf.mxu0
        %v1723 = vadd.f32 0.0, %v1722
        %1724 = vmatmul.f32.gmra.mxu0 %v1685
        %v1725 = vpop.f32.mrf.mxu0
        %v1726 = vadd.f32 0.0, %v1725
        %1727 = vmatmul.f32.gmra.mxu0 %v1688
        %v1728 = vpop.f32.mrf.mxu0
        %v1729 = vadd.f32 0.0, %v1728
        %1730 = vmatmul.f32.gmra.mxu0 %v1691
        %v1731 = vpop.f32.mrf.mxu0
        %v1732 = vadd.f32 0.0, %v1731
        %1733 = vdwg.mxu0
        %v1734 = vadd.f32 %v1651, %v1711
        %v1735 = vadd.f32 %v1652, %v1714
        %v1736 = vadd.f32 %v1653, %v1717
        %v1737 = vadd.f32 %v1654, %v1720
        %v1738 = vadd.f32 %v1655, %v1723
        %v1739 = vadd.f32 %v1656, %v1726
        %v1740 = vadd.f32 %v1657, %v1729
        %v1741 = vadd.f32 %v1658, %v1732
        %v1742 = vld [vmem:[%s1480] sm:$0xff]
        %v1743 = vld [vmem:[%s1480 + $0x10] sm:$0xff]
        %v1744 = vld [vmem:[%s1480 + $0x20] sm:$0xff]
        %v1745 = vld [vmem:[%s1480 + $0x30] sm:$0xff]
        %v1746 = vld [vmem:[%s1480 + $0x40] sm:$0xff]
        %v1747 = vld [vmem:[%s1480 + $0x50] sm:$0xff]
        %v1748 = vld [vmem:[%s1480 + $0x60] sm:$0xff]
        %v1749 = vld [vmem:[%s1480 + $0x70] sm:$0xff]
        %s1750 = scalar_lea.vmem %s11, 24
        %v1751 = vld [vmem:[%s1750] sm:$0xff]
        %v1753 = vsel %vm632, %v1742, 0
        %v1756 = vsel %vm632, %v1743, 0
        %v1759 = vsel %vm632, %v1744, 0
        %v1762 = vsel %vm632, %v1745, 0
        %v1765 = vsel %vm632, %v1746, 0
        %v1768 = vsel %vm632, %v1747, 0
        %v1771 = vsel %vm632, %v1748, 0
        %v1774 = vsel %vm632, %v1749, 0
        %1776 = vmatpush.msra.mxu0 0.0
        %1777 = vmatpush.msra.mxu0 0.0
        %1778 = vmatpush.msra.mxu0 0.0
        %1779 = vmatpush.msra.mxu0 0.0
        %1780 = vmatpush.msra.mxu0 0.0
        %1781 = vmatpush.msra.mxu0 0.0
        %1782 = vmatpush.msra.mxu0 0.0
        %1783 = vmatpush.msra.mxu0 0.0
        %1784 = vmatpush.msra.mxu0 0.0
        %1785 = vmatpush.msra.mxu0 0.0
        %1786 = vmatpush.msra.mxu0 0.0
        %1787 = vmatpush.msra.mxu0 0.0
        %1788 = vmatpush.msra.mxu0 0.0
        %1789 = vmatpush.msra.mxu0 0.0
        %1790 = vmatpush.msra.mxu0 0.0
        %1791 = vmatpush.msra.mxu0 %v1751
        %1792 = vmatmul.f32.gmra.mxu0 %v1753
        %v1793 = vpop.f32.mrf.mxu0
        %v1794 = vadd.f32 0.0, %v1793
        %1795 = vmatmul.f32.gmra.mxu0 %v1756
        %v1796 = vpop.f32.mrf.mxu0
        %v1797 = vadd.f32 0.0, %v1796
        %1798 = vmatmul.f32.gmra.mxu0 %v1759
        %v1799 = vpop.f32.mrf.mxu0
        %v1800 = vadd.f32 0.0, %v1799
        %1801 = vmatmul.f32.gmra.mxu0 %v1762
        %v1802 = vpop.f32.mrf.mxu0
        %v1803 = vadd.f32 0.0, %v1802
        %1804 = vmatmul.f32.gmra.mxu0 %v1765
        %v1805 = vpop.f32.mrf.mxu0
        %v1806 = vadd.f32 0.0, %v1805
        %1807 = vmatmul.f32.gmra.mxu0 %v1768
        %v1808 = vpop.f32.mrf.mxu0
        %v1809 = vadd.f32 0.0, %v1808
        %1810 = vmatmul.f32.gmra.mxu0 %v1771
        %v1811 = vpop.f32.mrf.mxu0
        %v1812 = vadd.f32 0.0, %v1811
        %1813 = vmatmul.f32.gmra.mxu0 %v1774
        %v1814 = vpop.f32.mrf.mxu0
        %v1815 = vadd.f32 0.0, %v1814
        %1816 = vdwg.mxu0
        %v1817 = vadd.f32 %v1734, %v1794
        %v1818 = vadd.f32 %v1735, %v1797
        %v1819 = vadd.f32 %v1736, %v1800
        %v1820 = vadd.f32 %v1737, %v1803
        %v1821 = vadd.f32 %v1738, %v1806
        %v1822 = vadd.f32 %v1739, %v1809
        %v1823 = vadd.f32 %v1740, %v1812
        %v1824 = vadd.f32 %v1741, %v1815
        %v1825 = vld [vmem:[%s1480 + $0x1] sm:$0xff]
        %v1826 = vld [vmem:[%s1480 + $0x11] sm:$0xff]
        %v1827 = vld [vmem:[%s1480 + $0x21] sm:$0xff]
        %v1828 = vld [vmem:[%s1480 + $0x31] sm:$0xff]
        %v1829 = vld [vmem:[%s1480 + $0x41] sm:$0xff]
        %v1830 = vld [vmem:[%s1480 + $0x51] sm:$0xff]
        %v1831 = vld [vmem:[%s1480 + $0x61] sm:$0xff]
        %v1832 = vld [vmem:[%s1480 + $0x71] sm:$0xff]
        %s1833 = scalar_lea.vmem %s11, 32
        %v1834 = vld [vmem:[%s1833] sm:$0xff]
        %v1836 = vsel %vm632, %v1825, 0
        %v1839 = vsel %vm632, %v1826, 0
        %v1842 = vsel %vm632, %v1827, 0
        %v1845 = vsel %vm632, %v1828, 0
        %v1848 = vsel %vm632, %v1829, 0
        %v1851 = vsel %vm632, %v1830, 0
        %v1854 = vsel %vm632, %v1831, 0
        %v1857 = vsel %vm632, %v1832, 0
        %1859 = vmatpush.msra.mxu0 0.0
        %1860 = vmatpush.msra.mxu0 0.0
        %1861 = vmatpush.msra.mxu0 0.0
        %1862 = vmatpush.msra.mxu0 0.0
        %1863 = vmatpush.msra.mxu0 0.0
        %1864 = vmatpush.msra.mxu0 0.0
        %1865 = vmatpush.msra.mxu0 0.0
        %1866 = vmatpush.msra.mxu0 0.0
        %1867 = vmatpush.msra.mxu0 0.0
        %1868 = vmatpush.msra.mxu0 0.0
        %1869 = vmatpush.msra.mxu0 0.0
        %1870 = vmatpush.msra.mxu0 0.0
        %1871 = vmatpush.msra.mxu0 0.0
        %1872 = vmatpush.msra.mxu0 0.0
        %1873 = vmatpush.msra.mxu0 0.0
        %1874 = vmatpush.msra.mxu0 %v1834
        %1875 = vmatmul.f32.gmra.mxu0 %v1836
        %v1876 = vpop.f32.mrf.mxu0
        %v1877 = vadd.f32 0.0, %v1876
        %1878 = vmatmul.f32.gmra.mxu0 %v1839
        %v1879 = vpop.f32.mrf.mxu0
        %v1880 = vadd.f32 0.0, %v1879
        %1881 = vmatmul.f32.gmra.mxu0 %v1842
        %v1882 = vpop.f32.mrf.mxu0
        %v1883 = vadd.f32 0.0, %v1882
        %1884 = vmatmul.f32.gmra.mxu0 %v1845
        %v1885 = vpop.f32.mrf.mxu0
        %v1886 = vadd.f32 0.0, %v1885
        %1887 = vmatmul.f32.gmra.mxu0 %v1848
        %v1888 = vpop.f32.mrf.mxu0
        %v1889 = vadd.f32 0.0, %v1888
        %1890 = vmatmul.f32.gmra.mxu0 %v1851
        %v1891 = vpop.f32.mrf.mxu0
        %v1892 = vadd.f32 0.0, %v1891
        %1893 = vmatmul.f32.gmra.mxu0 %v1854
        %v1894 = vpop.f32.mrf.mxu0
        %v1895 = vadd.f32 0.0, %v1894
        %1896 = vmatmul.f32.gmra.mxu0 %v1857
        %v1897 = vpop.f32.mrf.mxu0
        %v1898 = vadd.f32 0.0, %v1897
        %1899 = vdwg.mxu0
        %v1900 = vadd.f32 %v1817, %v1877
        %v1901 = vadd.f32 %v1818, %v1880
        %v1902 = vadd.f32 %v1819, %v1883
        %v1903 = vadd.f32 %v1820, %v1886
        %v1904 = vadd.f32 %v1821, %v1889
        %v1905 = vadd.f32 %v1822, %v1892
        %v1906 = vadd.f32 %v1823, %v1895
        %v1907 = vadd.f32 %v1824, %v1898
        %v1908 = vld [vmem:[%s1480 + $0x2] sm:$0xff]
        %v1909 = vld [vmem:[%s1480 + $0x12] sm:$0xff]
        %v1910 = vld [vmem:[%s1480 + $0x22] sm:$0xff]
        %v1911 = vld [vmem:[%s1480 + $0x32] sm:$0xff]
        %v1912 = vld [vmem:[%s1480 + $0x42] sm:$0xff]
        %v1913 = vld [vmem:[%s1480 + $0x52] sm:$0xff]
        %v1914 = vld [vmem:[%s1480 + $0x62] sm:$0xff]
        %v1915 = vld [vmem:[%s1480 + $0x72] sm:$0xff]
        %s1916 = scalar_lea.vmem %s11, 40
        %v1917 = vld [vmem:[%s1916] sm:$0xff]
        %v1919 = vsel %vm632, %v1908, 0
        %v1922 = vsel %vm632, %v1909, 0
        %v1925 = vsel %vm632, %v1910, 0
        %v1928 = vsel %vm632, %v1911, 0
        %v1931 = vsel %vm632, %v1912, 0
        %v1934 = vsel %vm632, %v1913, 0
        %v1937 = vsel %vm632, %v1914, 0
        %v1940 = vsel %vm632, %v1915, 0
        %1942 = vmatpush.msra.mxu0 0.0
        %1943 = vmatpush.msra.mxu0 0.0
        %1944 = vmatpush.msra.mxu0 0.0
        %1945 = vmatpush.msra.mxu0 0.0
        %1946 = vmatpush.msra.mxu0 0.0
        %1947 = vmatpush.msra.mxu0 0.0
        %1948 = vmatpush.msra.mxu0 0.0
        %1949 = vmatpush.msra.mxu0 0.0
        %1950 = vmatpush.msra.mxu0 0.0
        %1951 = vmatpush.msra.mxu0 0.0
        %1952 = vmatpush.msra.mxu0 0.0
        %1953 = vmatpush.msra.mxu0 0.0
        %1954 = vmatpush.msra.mxu0 0.0
        %1955 = vmatpush.msra.mxu0 0.0
        %1956 = vmatpush.msra.mxu0 0.0
        %1957 = vmatpush.msra.mxu0 %v1917
        %1958 = vmatmul.f32.gmra.mxu0 %v1919
        %v1959 = vpop.f32.mrf.mxu0
        %v1960 = vadd.f32 0.0, %v1959
        %1961 = vmatmul.f32.gmra.mxu0 %v1922
        %v1962 = vpop.f32.mrf.mxu0
        %v1963 = vadd.f32 0.0, %v1962
        %1964 = vmatmul.f32.gmra.mxu0 %v1925
        %v1965 = vpop.f32.mrf.mxu0
        %v1966 = vadd.f32 0.0, %v1965
        %1967 = vmatmul.f32.gmra.mxu0 %v1928
        %v1968 = vpop.f32.mrf.mxu0
        %v1969 = vadd.f32 0.0, %v1968
        %1970 = vmatmul.f32.gmra.mxu0 %v1931
        %v1971 = vpop.f32.mrf.mxu0
        %v1972 = vadd.f32 0.0, %v1971
        %1973 = vmatmul.f32.gmra.mxu0 %v1934
        %v1974 = vpop.f32.mrf.mxu0
        %v1975 = vadd.f32 0.0, %v1974
        %1976 = vmatmul.f32.gmra.mxu0 %v1937
        %v1977 = vpop.f32.mrf.mxu0
        %v1978 = vadd.f32 0.0, %v1977
        %1979 = vmatmul.f32.gmra.mxu0 %v1940
        %v1980 = vpop.f32.mrf.mxu0
        %v1981 = vadd.f32 0.0, %v1980
        %1982 = vdwg.mxu0
        %v1983 = vadd.f32 %v1900, %v1960
        %v1984 = vadd.f32 %v1901, %v1963
        %v1985 = vadd.f32 %v1902, %v1966
        %v1986 = vadd.f32 %v1903, %v1969
        %v1987 = vadd.f32 %v1904, %v1972
        %v1988 = vadd.f32 %v1905, %v1975
        %v1989 = vadd.f32 %v1906, %v1978
        %v1990 = vadd.f32 %v1907, %v1981
        %s1991 = scalar_lea.vmem [#allocation3], 32
        %v1992 = vld [vmem:[%s1991] sm:$0xff]
        %v1993 = vld [vmem:[%s1991 + $0x10] sm:$0xff]
        %v1994 = vld [vmem:[%s1991 + $0x20] sm:$0xff]
        %v1995 = vld [vmem:[%s1991 + $0x30] sm:$0xff]
        %v1996 = vld [vmem:[%s1991 + $0x40] sm:$0xff]
        %v1997 = vld [vmem:[%s1991 + $0x50] sm:$0xff]
        %v1998 = vld [vmem:[%s1991 + $0x60] sm:$0xff]
        %v1999 = vld [vmem:[%s1991 + $0x70] sm:$0xff]
        %s2000 = scalar_lea.vmem %s11, 48
        %v2001 = vld [vmem:[%s2000] sm:$0xff]
        %v2003 = vsel %vm632, %v1992, 0
        %v2006 = vsel %vm632, %v1993, 0
        %v2009 = vsel %vm632, %v1994, 0
        %v2012 = vsel %vm632, %v1995, 0
        %v2015 = vsel %vm632, %v1996, 0
        %v2018 = vsel %vm632, %v1997, 0
        %v2021 = vsel %vm632, %v1998, 0
        %v2024 = vsel %vm632, %v1999, 0
        %2026 = vmatpush.msra.mxu0 0.0
        %2027 = vmatpush.msra.mxu0 0.0
        %2028 = vmatpush.msra.mxu0 0.0
        %2029 = vmatpush.msra.mxu0 0.0
        %2030 = vmatpush.msra.mxu0 0.0
        %2031 = vmatpush.msra.mxu0 0.0
        %2032 = vmatpush.msra.mxu0 0.0
        %2033 = vmatpush.msra.mxu0 0.0
        %2034 = vmatpush.msra.mxu0 0.0
        %2035 = vmatpush.msra.mxu0 0.0
        %2036 = vmatpush.msra.mxu0 0.0
        %2037 = vmatpush.msra.mxu0 0.0
        %2038 = vmatpush.msra.mxu0 0.0
        %2039 = vmatpush.msra.mxu0 0.0
        %2040 = vmatpush.msra.mxu0 0.0
        %2041 = vmatpush.msra.mxu0 %v2001
        %2042 = vmatmul.f32.gmra.mxu0 %v2003
        %v2043 = vpop.f32.mrf.mxu0
        %v2044 = vadd.f32 0.0, %v2043
        %2045 = vmatmul.f32.gmra.mxu0 %v2006
        %v2046 = vpop.f32.mrf.mxu0
        %v2047 = vadd.f32 0.0, %v2046
        %2048 = vmatmul.f32.gmra.mxu0 %v2009
        %v2049 = vpop.f32.mrf.mxu0
        %v2050 = vadd.f32 0.0, %v2049
        %2051 = vmatmul.f32.gmra.mxu0 %v2012
        %v2052 = vpop.f32.mrf.mxu0
        %v2053 = vadd.f32 0.0, %v2052
        %2054 = vmatmul.f32.gmra.mxu0 %v2015
        %v2055 = vpop.f32.mrf.mxu0
        %v2056 = vadd.f32 0.0, %v2055
        %2057 = vmatmul.f32.gmra.mxu0 %v2018
        %v2058 = vpop.f32.mrf.mxu0
        %v2059 = vadd.f32 0.0, %v2058
        %2060 = vmatmul.f32.gmra.mxu0 %v2021
        %v2061 = vpop.f32.mrf.mxu0
        %v2062 = vadd.f32 0.0, %v2061
        %2063 = vmatmul.f32.gmra.mxu0 %v2024
        %v2064 = vpop.f32.mrf.mxu0
        %v2065 = vadd.f32 0.0, %v2064
        %2066 = vdwg.mxu0
        %v2067 = vadd.f32 %v1983, %v2044
        %v2068 = vadd.f32 %v1984, %v2047
        %v2069 = vadd.f32 %v1985, %v2050
        %v2070 = vadd.f32 %v1986, %v2053
        %v2071 = vadd.f32 %v1987, %v2056
        %v2072 = vadd.f32 %v1988, %v2059
        %v2073 = vadd.f32 %v1989, %v2062
        %v2074 = vadd.f32 %v1990, %v2065
        %v2075 = vld [vmem:[%s1991 + $0x1] sm:$0xff]
        %v2076 = vld [vmem:[%s1991 + $0x11] sm:$0xff]
        %v2077 = vld [vmem:[%s1991 + $0x21] sm:$0xff]
        %v2078 = vld [vmem:[%s1991 + $0x31] sm:$0xff]
        %v2079 = vld [vmem:[%s1991 + $0x41] sm:$0xff]
        %v2080 = vld [vmem:[%s1991 + $0x51] sm:$0xff]
        %v2081 = vld [vmem:[%s1991 + $0x61] sm:$0xff]
        %v2082 = vld [vmem:[%s1991 + $0x71] sm:$0xff]
        %s2083 = scalar_lea.vmem %s11, 56
        %v2084 = vld [vmem:[%s2083] sm:$0xff]
        %v2086 = vsel %vm632, %v2075, 0
        %v2089 = vsel %vm632, %v2076, 0
        %v2092 = vsel %vm632, %v2077, 0
        %v2095 = vsel %vm632, %v2078, 0
        %v2098 = vsel %vm632, %v2079, 0
        %v2101 = vsel %vm632, %v2080, 0
        %v2104 = vsel %vm632, %v2081, 0
        %v2107 = vsel %vm632, %v2082, 0
        %2109 = vmatpush.msra.mxu0 0.0
        %2110 = vmatpush.msra.mxu0 0.0
        %2111 = vmatpush.msra.mxu0 0.0
        %2112 = vmatpush.msra.mxu0 0.0
        %2113 = vmatpush.msra.mxu0 0.0
        %2114 = vmatpush.msra.mxu0 0.0
        %2115 = vmatpush.msra.mxu0 0.0
        %2116 = vmatpush.msra.mxu0 0.0
        %2117 = vmatpush.msra.mxu0 0.0
        %2118 = vmatpush.msra.mxu0 0.0
        %2119 = vmatpush.msra.mxu0 0.0
        %2120 = vmatpush.msra.mxu0 0.0
        %2121 = vmatpush.msra.mxu0 0.0
        %2122 = vmatpush.msra.mxu0 0.0
        %2123 = vmatpush.msra.mxu0 0.0
        %2124 = vmatpush.msra.mxu0 %v2084
        %2125 = vmatmul.f32.gmra.mxu0 %v2086
        %v2126 = vpop.f32.mrf.mxu0
        %v2127 = vadd.f32 0.0, %v2126
        %2128 = vmatmul.f32.gmra.mxu0 %v2089
        %v2129 = vpop.f32.mrf.mxu0
        %v2130 = vadd.f32 0.0, %v2129
        %2131 = vmatmul.f32.gmra.mxu0 %v2092
        %v2132 = vpop.f32.mrf.mxu0
        %v2133 = vadd.f32 0.0, %v2132
        %2134 = vmatmul.f32.gmra.mxu0 %v2095
        %v2135 = vpop.f32.mrf.mxu0
        %v2136 = vadd.f32 0.0, %v2135
        %2137 = vmatmul.f32.gmra.mxu0 %v2098
        %v2138 = vpop.f32.mrf.mxu0
        %v2139 = vadd.f32 0.0, %v2138
        %2140 = vmatmul.f32.gmra.mxu0 %v2101
        %v2141 = vpop.f32.mrf.mxu0
        %v2142 = vadd.f32 0.0, %v2141
        %2143 = vmatmul.f32.gmra.mxu0 %v2104
        %v2144 = vpop.f32.mrf.mxu0
        %v2145 = vadd.f32 0.0, %v2144
        %2146 = vmatmul.f32.gmra.mxu0 %v2107
        %v2147 = vpop.f32.mrf.mxu0
        %v2148 = vadd.f32 0.0, %v2147
        %2149 = vdwg.mxu0
        %v2150 = vadd.f32 %v2067, %v2127
        %v2151 = vadd.f32 %v2068, %v2130
        %v2152 = vadd.f32 %v2069, %v2133
        %v2153 = vadd.f32 %v2070, %v2136
        %v2154 = vadd.f32 %v2071, %v2139
        %v2155 = vadd.f32 %v2072, %v2142
        %v2156 = vadd.f32 %v2073, %v2145
        %v2157 = vadd.f32 %v2074, %v2148
        %v2158 = vld [vmem:[%s1991 + $0x2] sm:$0xff]
        %v2159 = vld [vmem:[%s1991 + $0x12] sm:$0xff]
        %v2160 = vld [vmem:[%s1991 + $0x22] sm:$0xff]
        %v2161 = vld [vmem:[%s1991 + $0x32] sm:$0xff]
        %v2162 = vld [vmem:[%s1991 + $0x42] sm:$0xff]
        %v2163 = vld [vmem:[%s1991 + $0x52] sm:$0xff]
        %v2164 = vld [vmem:[%s1991 + $0x62] sm:$0xff]
        %v2165 = vld [vmem:[%s1991 + $0x72] sm:$0xff]
        %s2166 = scalar_lea.vmem %s11, 64
        %v2167 = vld [vmem:[%s2166] sm:$0xff]
        %v2169 = vsel %vm632, %v2158, 0
        %v2172 = vsel %vm632, %v2159, 0
        %v2175 = vsel %vm632, %v2160, 0
        %v2178 = vsel %vm632, %v2161, 0
        %v2181 = vsel %vm632, %v2162, 0
        %v2184 = vsel %vm632, %v2163, 0
        %v2187 = vsel %vm632, %v2164, 0
        %v2190 = vsel %vm632, %v2165, 0
        %2192 = vmatpush.msra.mxu0 0.0
        %2193 = vmatpush.msra.mxu0 0.0
        %2194 = vmatpush.msra.mxu0 0.0
        %2195 = vmatpush.msra.mxu0 0.0
        %2196 = vmatpush.msra.mxu0 0.0
        %2197 = vmatpush.msra.mxu0 0.0
        %2198 = vmatpush.msra.mxu0 0.0
        %2199 = vmatpush.msra.mxu0 0.0
        %2200 = vmatpush.msra.mxu0 0.0
        %2201 = vmatpush.msra.mxu0 0.0
        %2202 = vmatpush.msra.mxu0 0.0
        %2203 = vmatpush.msra.mxu0 0.0
        %2204 = vmatpush.msra.mxu0 0.0
        %2205 = vmatpush.msra.mxu0 0.0
        %2206 = vmatpush.msra.mxu0 0.0
        %2207 = vmatpush.msra.mxu0 %v2167
        %2208 = vmatmul.f32.gmra.mxu0 %v2169
        %v2209 = vpop.f32.mrf.mxu0
        %v2210 = vadd.f32 0.0, %v2209
        %2211 = vmatmul.f32.gmra.mxu0 %v2172
        %v2212 = vpop.f32.mrf.mxu0
        %v2213 = vadd.f32 0.0, %v2212
        %2214 = vmatmul.f32.gmra.mxu0 %v2175
        %v2215 = vpop.f32.mrf.mxu0
        %v2216 = vadd.f32 0.0, %v2215
        %2217 = vmatmul.f32.gmra.mxu0 %v2178
        %v2218 = vpop.f32.mrf.mxu0
        %v2219 = vadd.f32 0.0, %v2218
        %2220 = vmatmul.f32.gmra.mxu0 %v2181
        %v2221 = vpop.f32.mrf.mxu0
        %v2222 = vadd.f32 0.0, %v2221
        %2223 = vmatmul.f32.gmra.mxu0 %v2184
        %v2224 = vpop.f32.mrf.mxu0
        %v2225 = vadd.f32 0.0, %v2224
        %2226 = vmatmul.f32.gmra.mxu0 %v2187
        %v2227 = vpop.f32.mrf.mxu0
        %v2228 = vadd.f32 0.0, %v2227
        %2229 = vmatmul.f32.gmra.mxu0 %v2190
        %v2230 = vpop.f32.mrf.mxu0
        %v2231 = vadd.f32 0.0, %v2230
        %2232 = vdwg.mxu0
        %v2233 = vadd.f32 %v2150, %v2210
        %v2234 = vadd.f32 %v2151, %v2213
        %v2235 = vadd.f32 %v2152, %v2216
        %v2236 = vadd.f32 %v2153, %v2219
        %v2237 = vadd.f32 %v2154, %v2222
        %v2238 = vadd.f32 %v2155, %v2225
        %v2239 = vadd.f32 %v2156, %v2228
        %v2240 = vadd.f32 %v2157, %v2231
        %2241 = vst.msk [vmem:[%s582] sm:$0xff] %vm632, %v2233
        %2242 = vst.msk [vmem:[%s582 + $0x8] sm:$0xff] %vm632, %v2234
        %2243 = vst.msk [vmem:[%s582 + $0x10] sm:$0xff] %vm632, %v2235
        %2244 = vst.msk [vmem:[%s582 + $0x18] sm:$0xff] %vm632, %v2236
        %2245 = vst.msk [vmem:[%s582 + $0x20] sm:$0xff] %vm632, %v2237
        %2246 = vst.msk [vmem:[%s582 + $0x28] sm:$0xff] %vm632, %v2238
        %2247 = vst.msk [vmem:[%s582 + $0x30] sm:$0xff] %vm632, %v2239
        %2248 = vst.msk [vmem:[%s582 + $0x38] sm:$0xff] %vm632, %v2240
        %v2249 = vld [vmem:[%s594] sm:$0xff]
        %v2250 = vld [vmem:[%s594 + $0x8] sm:$0xff]
        %v2251 = vld [vmem:[%s594 + $0x10] sm:$0xff]
        %v2252 = vld [vmem:[%s594 + $0x18] sm:$0xff]
        %v2253 = vld [vmem:[%s594 + $0x20] sm:$0xff]
        %v2254 = vld [vmem:[%s594 + $0x28] sm:$0xff]
        %v2255 = vld [vmem:[%s594 + $0x30] sm:$0xff]
        %v2256 = vld [vmem:[%s594 + $0x38] sm:$0xff]
        %v2257 = vld [vmem:[%s594 + $0x40] sm:$0xff]
        %v2258 = vld [vmem:[%s594 + $0x48] sm:$0xff]
        %v2259 = vld [vmem:[%s594 + $0x50] sm:$0xff]
        %v2260 = vld [vmem:[%s594 + $0x58] sm:$0xff]
        %v2261 = vld [vmem:[%s594 + $0x60] sm:$0xff]
        %v2262 = vld [vmem:[%s594 + $0x68] sm:$0xff]
        %v2263 = vld [vmem:[%s594 + $0x70] sm:$0xff]
        %v2264 = vld [vmem:[%s594 + $0x78] sm:$0xff]
        %v2265 = vld [vmem:[%s594 + $0x80] sm:$0xff]
        %v2266 = vld [vmem:[%s594 + $0x88] sm:$0xff]
        %v2267 = vld [vmem:[%s594 + $0x90] sm:$0xff]
        %v2268 = vld [vmem:[%s594 + $0x98] sm:$0xff]
        %v2269 = vld [vmem:[%s594 + $0xa0] sm:$0xff]
        %v2270 = vld [vmem:[%s594 + $0xa8] sm:$0xff]
        %v2271 = vld [vmem:[%s594 + $0xb0] sm:$0xff]
        %v2272 = vld [vmem:[%s594 + $0xb8] sm:$0xff]
        %v2273 = vld [vmem:[%s594 + $0xc0] sm:$0xff]
        %v2274 = vld [vmem:[%s594 + $0xc8] sm:$0xff]
        %v2275 = vld [vmem:[%s594 + $0xd0] sm:$0xff]
        %v2276 = vld [vmem:[%s594 + $0xd8] sm:$0xff]
        %v2277 = vld [vmem:[%s594 + $0xe0] sm:$0xff]
        %v2278 = vld [vmem:[%s594 + $0xe8] sm:$0xff]
        %v2279 = vld [vmem:[%s594 + $0xf0] sm:$0xff]
        %v2280 = vld [vmem:[%s594 + $0xf8] sm:$0xff]
        %v2281 = vld [vmem:[%s3] sm:$0xf]
        %v2282 = vld [vmem:[%s4] sm:$0x1]
        %v2284 = vperm.slane %v2282, 0
        %vm2286 = vcmask 31744
        %v2288 = vsel %vm2286, %v2249, 0
        %v2291 = vsel %vm2286, %v2250, 0
        %v2294 = vsel %vm2286, %v2251, 0
        %v2297 = vsel %vm2286, %v2252, 0
        %v2300 = vsel %vm2286, %v2253, 0
        %v2303 = vsel %vm2286, %v2254, 0
        %v2306 = vsel %vm2286, %v2255, 0
        %v2309 = vsel %vm2286, %v2256, 0
        %v2312 = vsel %vm2286, %v2257, 0
        %v2315 = vsel %vm2286, %v2258, 0
        %v2318 = vsel %vm2286, %v2259, 0
        %v2321 = vsel %vm2286, %v2260, 0
        %v2324 = vsel %vm2286, %v2261, 0
        %v2327 = vsel %vm2286, %v2262, 0
        %v2330 = vsel %vm2286, %v2263, 0
        %v2333 = vsel %vm2286, %v2264, 0
        %v2336 = vsel %vm2286, %v2265, 0
        %v2339 = vsel %vm2286, %v2266, 0
        %v2342 = vsel %vm2286, %v2267, 0
        %v2345 = vsel %vm2286, %v2268, 0
        %v2348 = vsel %vm2286, %v2269, 0
        %v2351 = vsel %vm2286, %v2270, 0
        %v2354 = vsel %vm2286, %v2271, 0
        %v2357 = vsel %vm2286, %v2272, 0
        %v2360 = vsel %vm2286, %v2273, 0
        %v2363 = vsel %vm2286, %v2274, 0
        %v2366 = vsel %vm2286, %v2275, 0
        %v2369 = vsel %vm2286, %v2276, 0
        %v2372 = vsel %vm2286, %v2277, 0
        %v2375 = vsel %vm2286, %v2278, 0
        %v2378 = vsel %vm2286, %v2279, 0
        %v2381 = vsel %vm2286, %v2280, 0
        %vm2383 = vcmask 1043456
        %v2385 = vsel %vm2383, %v2281, 0
        %2387 = vmatpush.msra.mxu0 0.0
        %2388 = vmatpush.msra.mxu0 0.0
        %2389 = vmatpush.msra.mxu0 0.0
        %2390 = vmatpush.msra.mxu0 0.0
        %2391 = vmatpush.msra.mxu0 0.0
        %2392 = vmatpush.msra.mxu0 0.0
        %2393 = vmatpush.msra.mxu0 0.0
        %2394 = vmatpush.msra.mxu0 0.0
        %2395 = vmatpush.msra.mxu0 0.0
        %2396 = vmatpush.msra.mxu0 0.0
        %2397 = vmatpush.msra.mxu0 0.0
        %2398 = vmatpush.msra.mxu0 0.0
        %2399 = vmatpush.msra.mxu0 0.0
        %2400 = vmatpush.msra.mxu0 0.0
        %2401 = vmatpush.msra.mxu0 0.0
        %2402 = vmatpush.msra.mxu0 %v2385
        %2403 = vmatmul.f32.gmra.mxu0 %v2288
        %v2404 = vpop.f32.mrf.mxu0
        %v2405 = vadd.f32 %v2284, %v2404
        %2406 = vmatmul.f32.gmra.mxu0 %v2291
        %v2407 = vpop.f32.mrf.mxu0
        %v2408 = vadd.f32 %v2284, %v2407
        %2409 = vmatmul.f32.gmra.mxu0 %v2294
        %v2410 = vpop.f32.mrf.mxu0
        %v2411 = vadd.f32 %v2284, %v2410
        %2412 = vmatmul.f32.gmra.mxu0 %v2297
        %v2413 = vpop.f32.mrf.mxu0
        %v2414 = vadd.f32 %v2284, %v2413
        %2415 = vmatmul.f32.gmra.mxu0 %v2300
        %v2416 = vpop.f32.mrf.mxu0
        %v2417 = vadd.f32 %v2284, %v2416
        %2418 = vmatmul.f32.gmra.mxu0 %v2303
        %v2419 = vpop.f32.mrf.mxu0
        %v2420 = vadd.f32 %v2284, %v2419
        %2421 = vmatmul.f32.gmra.mxu0 %v2306
        %v2422 = vpop.f32.mrf.mxu0
        %v2423 = vadd.f32 %v2284, %v2422
        %2424 = vmatmul.f32.gmra.mxu0 %v2309
        %v2425 = vpop.f32.mrf.mxu0
        %v2426 = vadd.f32 %v2284, %v2425
        %2427 = vmatmul.f32.gmra.mxu0 %v2312
        %v2428 = vpop.f32.mrf.mxu0
        %v2429 = vadd.f32 %v2284, %v2428
        %2430 = vmatmul.f32.gmra.mxu0 %v2315
        %v2431 = vpop.f32.mrf.mxu0
        %v2432 = vadd.f32 %v2284, %v2431
        %2433 = vmatmul.f32.gmra.mxu0 %v2318
        %v2434 = vpop.f32.mrf.mxu0
        %v2435 = vadd.f32 %v2284, %v2434
        %2436 = vmatmul.f32.gmra.mxu0 %v2321
        %v2437 = vpop.f32.mrf.mxu0
        %v2438 = vadd.f32 %v2284, %v2437
        %2439 = vmatmul.f32.gmra.mxu0 %v2324
        %v2440 = vpop.f32.mrf.mxu0
        %v2441 = vadd.f32 %v2284, %v2440
        %2442 = vmatmul.f32.gmra.mxu0 %v2327
        %v2443 = vpop.f32.mrf.mxu0
        %v2444 = vadd.f32 %v2284, %v2443
        %2445 = vmatmul.f32.gmra.mxu0 %v2330
        %v2446 = vpop.f32.mrf.mxu0
        %v2447 = vadd.f32 %v2284, %v2446
        %2448 = vmatmul.f32.gmra.mxu0 %v2333
        %v2449 = vpop.f32.mrf.mxu0
        %v2450 = vadd.f32 %v2284, %v2449
        %2451 = vmatmul.f32.gmra.mxu0 %v2336
        %v2452 = vpop.f32.mrf.mxu0
        %v2453 = vadd.f32 %v2284, %v2452
        %2454 = vmatmul.f32.gmra.mxu0 %v2339
        %v2455 = vpop.f32.mrf.mxu0
        %v2456 = vadd.f32 %v2284, %v2455
        %2457 = vmatmul.f32.gmra.mxu0 %v2342
        %v2458 = vpop.f32.mrf.mxu0
        %v2459 = vadd.f32 %v2284, %v2458
        %2460 = vmatmul.f32.gmra.mxu0 %v2345
        %v2461 = vpop.f32.mrf.mxu0
        %v2462 = vadd.f32 %v2284, %v2461
        %2463 = vmatmul.f32.gmra.mxu0 %v2348
        %v2464 = vpop.f32.mrf.mxu0
        %v2465 = vadd.f32 %v2284, %v2464
        %2466 = vmatmul.f32.gmra.mxu0 %v2351
        %v2467 = vpop.f32.mrf.mxu0
        %v2468 = vadd.f32 %v2284, %v2467
        %2469 = vmatmul.f32.gmra.mxu0 %v2354
        %v2470 = vpop.f32.mrf.mxu0
        %v2471 = vadd.f32 %v2284, %v2470
        %2472 = vmatmul.f32.gmra.mxu0 %v2357
        %v2473 = vpop.f32.mrf.mxu0
        %v2474 = vadd.f32 %v2284, %v2473
        %2475 = vmatmul.f32.gmra.mxu0 %v2360
        %v2476 = vpop.f32.mrf.mxu0
        %v2477 = vadd.f32 %v2284, %v2476
        %2478 = vmatmul.f32.gmra.mxu0 %v2363
        %v2479 = vpop.f32.mrf.mxu0
        %v2480 = vadd.f32 %v2284, %v2479
        %2481 = vmatmul.f32.gmra.mxu0 %v2366
        %v2482 = vpop.f32.mrf.mxu0
        %v2483 = vadd.f32 %v2284, %v2482
        %2484 = vmatmul.f32.gmra.mxu0 %v2369
        %v2485 = vpop.f32.mrf.mxu0
        %v2486 = vadd.f32 %v2284, %v2485
        %2487 = vmatmul.f32.gmra.mxu0 %v2372
        %v2488 = vpop.f32.mrf.mxu0
        %v2489 = vadd.f32 %v2284, %v2488
        %2490 = vmatmul.f32.gmra.mxu0 %v2375
        %v2491 = vpop.f32.mrf.mxu0
        %v2492 = vadd.f32 %v2284, %v2491
        %2493 = vmatmul.f32.gmra.mxu0 %v2378
        %v2494 = vpop.f32.mrf.mxu0
        %v2495 = vadd.f32 %v2284, %v2494
        %2496 = vmatmul.f32.gmra.mxu0 %v2381
        %v2497 = vpop.f32.mrf.mxu0
        %v2498 = vadd.f32 %v2284, %v2497
        %2499 = vdwg.mxu0
        %v2500 = vrot.slane %v1335, 1
        %v2501 = vrot.slane %v1335, 2
        %v2502 = vrot.slane %v1335, 3
        %v2503 = vrot.slane %v1336, 1
        %v2504 = vrot.slane %v1336, 2
        %v2505 = vrot.slane %v1336, 3
        %v2506 = vrot.slane %v1337, 1
        %v2507 = vrot.slane %v1337, 2
        %v2508 = vrot.slane %v1337, 3
        %v2509 = vrot.slane %v1338, 1
        %v2510 = vrot.slane %v1338, 2
        %v2511 = vrot.slane %v1338, 3
        %v2512 = vrot.slane %v1339, 1
        %v2513 = vrot.slane %v1339, 2
        %v2514 = vrot.slane %v1339, 3
        %v2515 = vrot.slane %v1340, 1
        %v2516 = vrot.slane %v1340, 2
        %v2517 = vrot.slane %v1340, 3
        %v2518 = vrot.slane %v1341, 1
        %v2519 = vrot.slane %v1341, 2
        %v2520 = vrot.slane %v1341, 3
        %v2521 = vrot.slane %v1342, 1
        %v2522 = vrot.slane %v1342, 2
        %v2523 = vrot.slane %v1342, 3
        %v2524 = vrot.slane %v1343, 1
        %v2525 = vrot.slane %v1343, 2
        %v2526 = vrot.slane %v1343, 3
        %v2527 = vrot.slane %v1344, 1
        %v2528 = vrot.slane %v1344, 2
        %v2529 = vrot.slane %v1344, 3
        %v2530 = vrot.slane %v1345, 1
        %v2531 = vrot.slane %v1345, 2
        %v2532 = vrot.slane %v1345, 3
        %v2533 = vrot.slane %v1346, 1
        %v2534 = vrot.slane %v1346, 2
        %v2535 = vrot.slane %v1346, 3
        %v2536 = vrot.slane %v1347, 1
        %v2537 = vrot.slane %v1347, 2
        %v2538 = vrot.slane %v1347, 3
        %v2539 = vrot.slane %v1348, 1
        %v2540 = vrot.slane %v1348, 2
        %v2541 = vrot.slane %v1348, 3
        %v2542 = vrot.slane %v1349, 1
        %v2543 = vrot.slane %v1349, 2
        %v2544 = vrot.slane %v1349, 3
        %v2545 = vrot.slane %v1350, 1
        %v2546 = vrot.slane %v1350, 2
        %v2547 = vrot.slane %v1350, 3
        %v2548 = vrot.slane %v1351, 1
        %v2549 = vrot.slane %v1351, 2
        %v2550 = vrot.slane %v1351, 3
        %v2551 = vrot.slane %v1352, 1
        %v2552 = vrot.slane %v1352, 2
        %v2553 = vrot.slane %v1352, 3
        %v2554 = vrot.slane %v1353, 1
        %v2555 = vrot.slane %v1353, 2
        %v2556 = vrot.slane %v1353, 3
        %v2557 = vrot.slane %v1354, 1
        %v2558 = vrot.slane %v1354, 2
        %v2559 = vrot.slane %v1354, 3
        %v2560 = vrot.slane %v1355, 1
        %v2561 = vrot.slane %v1355, 2
        %v2562 = vrot.slane %v1355, 3
        %v2563 = vrot.slane %v1356, 1
        %v2564 = vrot.slane %v1356, 2
        %v2565 = vrot.slane %v1356, 3
        %v2566 = vrot.slane %v1357, 1
        %v2567 = vrot.slane %v1357, 2
        %v2568 = vrot.slane %v1357, 3
        %v2569 = vrot.slane %v1358, 1
        %v2570 = vrot.slane %v1358, 2
        %v2571 = vrot.slane %v1358, 3
        %v2572 = vrot.slane %v1359, 1
        %v2573 = vrot.slane %v1359, 2
        %v2574 = vrot.slane %v1359, 3
        %v2575 = vrot.slane %v1360, 1
        %v2576 = vrot.slane %v1360, 2
        %v2577 = vrot.slane %v1360, 3
        %v2578 = vrot.slane %v1361, 1
        %v2579 = vrot.slane %v1361, 2
        %v2580 = vrot.slane %v1361, 3
        %v2581 = vrot.slane %v1362, 1
        %v2582 = vrot.slane %v1362, 2
        %v2583 = vrot.slane %v1362, 3
        %v2584 = vrot.slane %v1363, 1
        %v2585 = vrot.slane %v1363, 2
        %v2586 = vrot.slane %v1363, 3
        %v2587 = vrot.slane %v1364, 1
        %v2588 = vrot.slane %v1364, 2
        %v2589 = vrot.slane %v1364, 3
        %v2590 = vrot.slane %v1365, 1
        %v2591 = vrot.slane %v1365, 2
        %v2592 = vrot.slane %v1365, 3
        %v2593 = vrot.slane %v1366, 1
        %v2594 = vrot.slane %v1366, 2
        %v2595 = vrot.slane %v1366, 3
        %v2596 = vsel %vm1215, %v1335, %v2500
        %v2597 = vsel %vm1220, %v2501, %v2502
        %vm2598 = vcmask 1041408
        %v2599 = vsel %vm2598, %v2596, %v2597
        %v2600 = vsel %vm1217, %v1335, %v2500
        %v2601 = vsel %vm1223, %v2501, %v2502
        %vm2602 = vcmask 1042433
        %v2603 = vsel %vm2602, %v2600, %v2601
        %v2604 = vrot.slane %v2603, 1
        %v2605 = vsel %vm1215, %v1336, %v2503
        %v2606 = vsel %vm1220, %v2504, %v2505
        %v2607 = vsel %vm2598, %v2605, %v2606
        %v2608 = vsel %vm1217, %v1336, %v2503
        %v2609 = vsel %vm1223, %v2504, %v2505
        %v2610 = vsel %vm2602, %v2608, %v2609
        %v2611 = vrot.slane %v2610, 1
        %v2612 = vsel %vm1215, %v1337, %v2506
        %v2613 = vsel %vm1220, %v2507, %v2508
        %v2614 = vsel %vm2598, %v2612, %v2613
        %v2615 = vsel %vm1217, %v1337, %v2506
        %v2616 = vsel %vm1223, %v2507, %v2508
        %v2617 = vsel %vm2602, %v2615, %v2616
        %v2618 = vrot.slane %v2617, 1
        %v2619 = vsel %vm1215, %v1338, %v2509
        %v2620 = vsel %vm1220, %v2510, %v2511
        %v2621 = vsel %vm2598, %v2619, %v2620
        %v2622 = vsel %vm1217, %v1338, %v2509
        %v2623 = vsel %vm1223, %v2510, %v2511
        %v2624 = vsel %vm2602, %v2622, %v2623
        %v2625 = vrot.slane %v2624, 1
        %v2626 = vsel %vm1215, %v1339, %v2512
        %v2627 = vsel %vm1220, %v2513, %v2514
        %v2628 = vsel %vm2598, %v2626, %v2627
        %v2629 = vsel %vm1217, %v1339, %v2512
        %v2630 = vsel %vm1223, %v2513, %v2514
        %v2631 = vsel %vm2602, %v2629, %v2630
        %v2632 = vrot.slane %v2631, 1
        %v2633 = vsel %vm1215, %v1340, %v2515
        %v2634 = vsel %vm1220, %v2516, %v2517
        %v2635 = vsel %vm2598, %v2633, %v2634
        %v2636 = vsel %vm1217, %v1340, %v2515
        %v2637 = vsel %vm1223, %v2516, %v2517
        %v2638 = vsel %vm2602, %v2636, %v2637
        %v2639 = vrot.slane %v2638, 1
        %v2640 = vsel %vm1215, %v1341, %v2518
        %v2641 = vsel %vm1220, %v2519, %v2520
        %v2642 = vsel %vm2598, %v2640, %v2641
        %v2643 = vsel %vm1217, %v1341, %v2518
        %v2644 = vsel %vm1223, %v2519, %v2520
        %v2645 = vsel %vm2602, %v2643, %v2644
        %v2646 = vrot.slane %v2645, 1
        %v2647 = vsel %vm1215, %v1342, %v2521
        %v2648 = vsel %vm1220, %v2522, %v2523
        %v2649 = vsel %vm2598, %v2647, %v2648
        %v2650 = vsel %vm1217, %v1342, %v2521
        %v2651 = vsel %vm1223, %v2522, %v2523
        %v2652 = vsel %vm2602, %v2650, %v2651
        %v2653 = vrot.slane %v2652, 1
        %v2654 = vsel %vm1215, %v1343, %v2524
        %v2655 = vsel %vm1220, %v2525, %v2526
        %v2656 = vsel %vm2598, %v2654, %v2655
        %v2657 = vsel %vm1217, %v1343, %v2524
        %v2658 = vsel %vm1223, %v2525, %v2526
        %v2659 = vsel %vm2602, %v2657, %v2658
        %v2660 = vrot.slane %v2659, 1
        %v2661 = vsel %vm1215, %v1344, %v2527
        %v2662 = vsel %vm1220, %v2528, %v2529
        %v2663 = vsel %vm2598, %v2661, %v2662
        %v2664 = vsel %vm1217, %v1344, %v2527
        %v2665 = vsel %vm1223, %v2528, %v2529
        %v2666 = vsel %vm2602, %v2664, %v2665
        %v2667 = vrot.slane %v2666, 1
        %v2668 = vsel %vm1215, %v1345, %v2530
        %v2669 = vsel %vm1220, %v2531, %v2532
        %v2670 = vsel %vm2598, %v2668, %v2669
        %v2671 = vsel %vm1217, %v1345, %v2530
        %v2672 = vsel %vm1223, %v2531, %v2532
        %v2673 = vsel %vm2602, %v2671, %v2672
        %v2674 = vrot.slane %v2673, 1
        %v2675 = vsel %vm1215, %v1346, %v2533
        %v2676 = vsel %vm1220, %v2534, %v2535
        %v2677 = vsel %vm2598, %v2675, %v2676
        %v2678 = vsel %vm1217, %v1346, %v2533
        %v2679 = vsel %vm1223, %v2534, %v2535
        %v2680 = vsel %vm2602, %v2678, %v2679
        %v2681 = vrot.slane %v2680, 1
        %v2682 = vsel %vm1215, %v1347, %v2536
        %v2683 = vsel %vm1220, %v2537, %v2538
        %v2684 = vsel %vm2598, %v2682, %v2683
        %v2685 = vsel %vm1217, %v1347, %v2536
        %v2686 = vsel %vm1223, %v2537, %v2538
        %v2687 = vsel %vm2602, %v2685, %v2686
        %v2688 = vrot.slane %v2687, 1
        %v2689 = vsel %vm1215, %v1348, %v2539
        %v2690 = vsel %vm1220, %v2540, %v2541
        %v2691 = vsel %vm2598, %v2689, %v2690
        %v2692 = vsel %vm1217, %v1348, %v2539
        %v2693 = vsel %vm1223, %v2540, %v2541
        %v2694 = vsel %vm2602, %v2692, %v2693
        %v2695 = vrot.slane %v2694, 1
        %v2696 = vsel %vm1215, %v1349, %v2542
        %v2697 = vsel %vm1220, %v2543, %v2544
        %v2698 = vsel %vm2598, %v2696, %v2697
        %v2699 = vsel %vm1217, %v1349, %v2542
        %v2700 = vsel %vm1223, %v2543, %v2544
        %v2701 = vsel %vm2602, %v2699, %v2700
        %v2702 = vrot.slane %v2701, 1
        %v2703 = vsel %vm1215, %v1350, %v2545
        %v2704 = vsel %vm1220, %v2546, %v2547
        %v2705 = vsel %vm2598, %v2703, %v2704
        %v2706 = vsel %vm1217, %v1350, %v2545
        %v2707 = vsel %vm1223, %v2546, %v2547
        %v2708 = vsel %vm2602, %v2706, %v2707
        %v2709 = vrot.slane %v2708, 1
        %v2710 = vsel %vm1215, %v1351, %v2548
        %v2711 = vsel %vm1220, %v2549, %v2550
        %v2712 = vsel %vm2598, %v2710, %v2711
        %v2713 = vsel %vm1217, %v1351, %v2548
        %v2714 = vsel %vm1223, %v2549, %v2550
        %v2715 = vsel %vm2602, %v2713, %v2714
        %v2716 = vrot.slane %v2715, 1
        %v2717 = vsel %vm1215, %v1352, %v2551
        %v2718 = vsel %vm1220, %v2552, %v2553
        %v2719 = vsel %vm2598, %v2717, %v2718
        %v2720 = vsel %vm1217, %v1352, %v2551
        %v2721 = vsel %vm1223, %v2552, %v2553
        %v2722 = vsel %vm2602, %v2720, %v2721
        %v2723 = vrot.slane %v2722, 1
        %v2724 = vsel %vm1215, %v1353, %v2554
        %v2725 = vsel %vm1220, %v2555, %v2556
        %v2726 = vsel %vm2598, %v2724, %v2725
        %v2727 = vsel %vm1217, %v1353, %v2554
        %v2728 = vsel %vm1223, %v2555, %v2556
        %v2729 = vsel %vm2602, %v2727, %v2728
        %v2730 = vrot.slane %v2729, 1
        %v2731 = vsel %vm1215, %v1354, %v2557
        %v2732 = vsel %vm1220, %v2558, %v2559
        %v2733 = vsel %vm2598, %v2731, %v2732
        %v2734 = vsel %vm1217, %v1354, %v2557
        %v2735 = vsel %vm1223, %v2558, %v2559
        %v2736 = vsel %vm2602, %v2734, %v2735
        %v2737 = vrot.slane %v2736, 1
        %v2738 = vsel %vm1215, %v1355, %v2560
        %v2739 = vsel %vm1220, %v2561, %v2562
        %v2740 = vsel %vm2598, %v2738, %v2739
        %v2741 = vsel %vm1217, %v1355, %v2560
        %v2742 = vsel %vm1223, %v2561, %v2562
        %v2743 = vsel %vm2602, %v2741, %v2742
        %v2744 = vrot.slane %v2743, 1
        %v2745 = vsel %vm1215, %v1356, %v2563
        %v2746 = vsel %vm1220, %v2564, %v2565
        %v2747 = vsel %vm2598, %v2745, %v2746
        %v2748 = vsel %vm1217, %v1356, %v2563
        %v2749 = vsel %vm1223, %v2564, %v2565
        %v2750 = vsel %vm2602, %v2748, %v2749
        %v2751 = vrot.slane %v2750, 1
        %v2752 = vsel %vm1215, %v1357, %v2566
        %v2753 = vsel %vm1220, %v2567, %v2568
        %v2754 = vsel %vm2598, %v2752, %v2753
        %v2755 = vsel %vm1217, %v1357, %v2566
        %v2756 = vsel %vm1223, %v2567, %v2568
        %v2757 = vsel %vm2602, %v2755, %v2756
        %v2758 = vrot.slane %v2757, 1
        %v2759 = vsel %vm1215, %v1358, %v2569
        %v2760 = vsel %vm1220, %v2570, %v2571
        %v2761 = vsel %vm2598, %v2759, %v2760
        %v2762 = vsel %vm1217, %v1358, %v2569
        %v2763 = vsel %vm1223, %v2570, %v2571
        %v2764 = vsel %vm2602, %v2762, %v2763
        %v2765 = vrot.slane %v2764, 1
        %v2766 = vsel %vm1215, %v1359, %v2572
        %v2767 = vsel %vm1220, %v2573, %v2574
        %v2768 = vsel %vm2598, %v2766, %v2767
        %v2769 = vsel %vm1217, %v1359, %v2572
        %v2770 = vsel %vm1223, %v2573, %v2574
        %v2771 = vsel %vm2602, %v2769, %v2770
        %v2772 = vrot.slane %v2771, 1
        %v2773 = vsel %vm1215, %v1360, %v2575
        %v2774 = vsel %vm1220, %v2576, %v2577
        %v2775 = vsel %vm2598, %v2773, %v2774
        %v2776 = vsel %vm1217, %v1360, %v2575
        %v2777 = vsel %vm1223, %v2576, %v2577
        %v2778 = vsel %vm2602, %v2776, %v2777
        %v2779 = vrot.slane %v2778, 1
        %v2780 = vsel %vm1215, %v1361, %v2578
        %v2781 = vsel %vm1220, %v2579, %v2580
        %v2782 = vsel %vm2598, %v2780, %v2781
        %v2783 = vsel %vm1217, %v1361, %v2578
        %v2784 = vsel %vm1223, %v2579, %v2580
        %v2785 = vsel %vm2602, %v2783, %v2784
        %v2786 = vrot.slane %v2785, 1
        %v2787 = vsel %vm1215, %v1362, %v2581
        %v2788 = vsel %vm1220, %v2582, %v2583
        %v2789 = vsel %vm2598, %v2787, %v2788
        %v2790 = vsel %vm1217, %v1362, %v2581
        %v2791 = vsel %vm1223, %v2582, %v2583
        %v2792 = vsel %vm2602, %v2790, %v2791
        %v2793 = vrot.slane %v2792, 1
        %v2794 = vsel %vm1215, %v1363, %v2584
        %v2795 = vsel %vm1220, %v2585, %v2586
        %v2796 = vsel %vm2598, %v2794, %v2795
        %v2797 = vsel %vm1217, %v1363, %v2584
        %v2798 = vsel %vm1223, %v2585, %v2586
        %v2799 = vsel %vm2602, %v2797, %v2798
        %v2800 = vrot.slane %v2799, 1
        %v2801 = vsel %vm1215, %v1364, %v2587
        %v2802 = vsel %vm1220, %v2588, %v2589
        %v2803 = vsel %vm2598, %v2801, %v2802
        %v2804 = vsel %vm1217, %v1364, %v2587
        %v2805 = vsel %vm1223, %v2588, %v2589
        %v2806 = vsel %vm2602, %v2804, %v2805
        %v2807 = vrot.slane %v2806, 1
        %v2808 = vsel %vm1215, %v1365, %v2590
        %v2809 = vsel %vm1220, %v2591, %v2592
        %v2810 = vsel %vm2598, %v2808, %v2809
        %v2811 = vsel %vm1217, %v1365, %v2590
        %v2812 = vsel %vm1223, %v2591, %v2592
        %v2813 = vsel %vm2602, %v2811, %v2812
        %v2814 = vrot.slane %v2813, 1
        %v2815 = vsel %vm1215, %v1366, %v2593
        %v2816 = vsel %vm1220, %v2594, %v2595
        %v2817 = vsel %vm2598, %v2815, %v2816
        %v2818 = vsel %vm1217, %v1366, %v2593
        %v2819 = vsel %vm1223, %v2594, %v2595
        %v2820 = vsel %vm2602, %v2818, %v2819
        %v2821 = vrot.slane %v2820, 1
        %v2822 = vperm.slane %v2599, 0
        %v2823 = vperm.slane %v2604, 0
        %v2824 = vperm.slane %v2607, 0
        %v2825 = vperm.slane %v2611, 0
        %v2826 = vperm.slane %v2614, 0
        %v2827 = vperm.slane %v2618, 0
        %v2828 = vperm.slane %v2621, 0
        %v2829 = vperm.slane %v2625, 0
        %v2830 = vperm.slane %v2628, 0
        %v2831 = vperm.slane %v2632, 0
        %v2832 = vperm.slane %v2635, 0
        %v2833 = vperm.slane %v2639, 0
        %v2834 = vperm.slane %v2642, 0
        %v2835 = vperm.slane %v2646, 0
        %v2836 = vperm.slane %v2649, 0
        %v2837 = vperm.slane %v2653, 0
        %v2838 = vperm.slane %v2656, 0
        %v2839 = vperm.slane %v2660, 0
        %v2840 = vperm.slane %v2663, 0
        %v2841 = vperm.slane %v2667, 0
        %v2842 = vperm.slane %v2670, 0
        %v2843 = vperm.slane %v2674, 0
        %v2844 = vperm.slane %v2677, 0
        %v2845 = vperm.slane %v2681, 0
        %v2846 = vperm.slane %v2684, 0
        %v2847 = vperm.slane %v2688, 0
        %v2848 = vperm.slane %v2691, 0
        %v2849 = vperm.slane %v2695, 0
        %v2850 = vperm.slane %v2698, 0
        %v2851 = vperm.slane %v2702, 0
        %v2852 = vperm.slane %v2705, 0
        %v2853 = vperm.slane %v2709, 0
        %v2854 = vperm.slane %v2712, 0
        %v2855 = vperm.slane %v2716, 0
        %v2856 = vperm.slane %v2719, 0
        %v2857 = vperm.slane %v2723, 0
        %v2858 = vperm.slane %v2726, 0
        %v2859 = vperm.slane %v2730, 0
        %v2860 = vperm.slane %v2733, 0
        %v2861 = vperm.slane %v2737, 0
        %v2862 = vperm.slane %v2740, 0
        %v2863 = vperm.slane %v2744, 0
        %v2864 = vperm.slane %v2747, 0
        %v2865 = vperm.slane %v2751, 0
        %v2866 = vperm.slane %v2754, 0
        %v2867 = vperm.slane %v2758, 0
        %v2868 = vperm.slane %v2761, 0
        %v2869 = vperm.slane %v2765, 0
        %v2870 = vperm.slane %v2768, 0
        %v2871 = vperm.slane %v2772, 0
        %v2872 = vperm.slane %v2775, 0
        %v2873 = vperm.slane %v2779, 0
        %v2874 = vperm.slane %v2782, 0
        %v2875 = vperm.slane %v2786, 0
        %v2876 = vperm.slane %v2789, 0
        %v2877 = vperm.slane %v2793, 0
        %v2878 = vperm.slane %v2796, 0
        %v2879 = vperm.slane %v2800, 0
        %v2880 = vperm.slane %v2803, 0
        %v2881 = vperm.slane %v2807, 0
        %v2882 = vperm.slane %v2810, 0
        %v2883 = vperm.slane %v2814, 0
        %v2884 = vperm.slane %v2817, 0
        %v2885 = vperm.slane %v2821, 0
        %v2982 = vrot.slane %v2405, 2
        %v2983 = vrot.slane %v2405, 4
        %v2984 = vrot.slane %v2405, 6
        %v2985 = vrot.slane %v2408, 2
        %v2986 = vrot.slane %v2408, 4
        %v2987 = vrot.slane %v2408, 6
        %v2988 = vrot.slane %v2411, 2
        %v2989 = vrot.slane %v2411, 4
        %v2990 = vrot.slane %v2411, 6
        %v2991 = vrot.slane %v2414, 2
        %v2992 = vrot.slane %v2414, 4
        %v2993 = vrot.slane %v2414, 6
        %v2994 = vrot.slane %v2417, 2
        %v2995 = vrot.slane %v2417, 4
        %v2996 = vrot.slane %v2417, 6
        %v2997 = vrot.slane %v2420, 2
        %v2998 = vrot.slane %v2420, 4
        %v2999 = vrot.slane %v2420, 6
        %v3000 = vrot.slane %v2423, 2
        %v3001 = vrot.slane %v2423, 4
        %v3002 = vrot.slane %v2423, 6
        %v3003 = vrot.slane %v2426, 2
        %v3004 = vrot.slane %v2426, 4
        %v3005 = vrot.slane %v2426, 6
        %v3006 = vrot.slane %v2429, 2
        %v3007 = vrot.slane %v2429, 4
        %v3008 = vrot.slane %v2429, 6
        %v3009 = vrot.slane %v2432, 2
        %v3010 = vrot.slane %v2432, 4
        %v3011 = vrot.slane %v2432, 6
        %v3012 = vrot.slane %v2435, 2
        %v3013 = vrot.slane %v2435, 4
        %v3014 = vrot.slane %v2435, 6
        %v3015 = vrot.slane %v2438, 2
        %v3016 = vrot.slane %v2438, 4
        %v3017 = vrot.slane %v2438, 6
        %v3018 = vrot.slane %v2441, 2
        %v3019 = vrot.slane %v2441, 4
        %v3020 = vrot.slane %v2441, 6
        %v3021 = vrot.slane %v2444, 2
        %v3022 = vrot.slane %v2444, 4
        %v3023 = vrot.slane %v2444, 6
        %v3024 = vrot.slane %v2447, 2
        %v3025 = vrot.slane %v2447, 4
        %v3026 = vrot.slane %v2447, 6
        %v3027 = vrot.slane %v2450, 2
        %v3028 = vrot.slane %v2450, 4
        %v3029 = vrot.slane %v2450, 6
        %v3030 = vrot.slane %v2453, 2
        %v3031 = vrot.slane %v2453, 4
        %v3032 = vrot.slane %v2453, 6
        %v3033 = vrot.slane %v2456, 2
        %v3034 = vrot.slane %v2456, 4
        %v3035 = vrot.slane %v2456, 6
        %v3036 = vrot.slane %v2459, 2
        %v3037 = vrot.slane %v2459, 4
        %v3038 = vrot.slane %v2459, 6
        %v3039 = vrot.slane %v2462, 2
        %v3040 = vrot.slane %v2462, 4
        %v3041 = vrot.slane %v2462, 6
        %v3042 = vrot.slane %v2465, 2
        %v3043 = vrot.slane %v2465, 4
        %v3044 = vrot.slane %v2465, 6
        %v3045 = vrot.slane %v2468, 2
        %v3046 = vrot.slane %v2468, 4
        %v3047 = vrot.slane %v2468, 6
        %v3048 = vrot.slane %v2471, 2
        %v3049 = vrot.slane %v2471, 4
        %v3050 = vrot.slane %v2471, 6
        %v3051 = vrot.slane %v2474, 2
        %v3052 = vrot.slane %v2474, 4
        %v3053 = vrot.slane %v2474, 6
        %v3054 = vrot.slane %v2477, 2
        %v3055 = vrot.slane %v2477, 4
        %v3056 = vrot.slane %v2477, 6
        %v3057 = vrot.slane %v2480, 2
        %v3058 = vrot.slane %v2480, 4
        %v3059 = vrot.slane %v2480, 6
        %v3060 = vrot.slane %v2483, 2
        %v3061 = vrot.slane %v2483, 4
        %v3062 = vrot.slane %v2483, 6
        %v3063 = vrot.slane %v2486, 2
        %v3064 = vrot.slane %v2486, 4
        %v3065 = vrot.slane %v2486, 6
        %v3066 = vrot.slane %v2489, 2
        %v3067 = vrot.slane %v2489, 4
        %v3068 = vrot.slane %v2489, 6
        %v3069 = vrot.slane %v2492, 2
        %v3070 = vrot.slane %v2492, 4
        %v3071 = vrot.slane %v2492, 6
        %v3072 = vrot.slane %v2495, 2
        %v3073 = vrot.slane %v2495, 4
        %v3074 = vrot.slane %v2495, 6
        %v3075 = vrot.slane %v2498, 2
        %v3076 = vrot.slane %v2498, 4
        %v3077 = vrot.slane %v2498, 6
        %v3174 = vadd.f32 %v2822, %v2405
        %v3175 = vadd.f32 %v2823, %v2982
        %v3176 = vadd.f32 %v2824, %v2983
        %v3177 = vadd.f32 %v2825, %v2984
        %v3178 = vadd.f32 %v2826, %v2408
        %v3179 = vadd.f32 %v2827, %v2985
        %v3180 = vadd.f32 %v2828, %v2986
        %v3181 = vadd.f32 %v2829, %v2987
        %v3182 = vadd.f32 %v2822, %v2411
        %v3183 = vadd.f32 %v2823, %v2988
        %v3184 = vadd.f32 %v2824, %v2989
        %v3185 = vadd.f32 %v2825, %v2990
        %v3186 = vadd.f32 %v2826, %v2414
        %v3187 = vadd.f32 %v2827, %v2991
        %v3188 = vadd.f32 %v2828, %v2992
        %v3189 = vadd.f32 %v2829, %v2993
        %v3190 = vadd.f32 %v2830, %v2417
        %v3191 = vadd.f32 %v2831, %v2994
        %v3192 = vadd.f32 %v2832, %v2995
        %v3193 = vadd.f32 %v2833, %v2996
        %v3194 = vadd.f32 %v2834, %v2420
        %v3195 = vadd.f32 %v2835, %v2997
        %v3196 = vadd.f32 %v2836, %v2998
        %v3197 = vadd.f32 %v2837, %v2999
        %v3198 = vadd.f32 %v2830, %v2423
        %v3199 = vadd.f32 %v2831, %v3000
        %v3200 = vadd.f32 %v2832, %v3001
        %v3201 = vadd.f32 %v2833, %v3002
        %v3202 = vadd.f32 %v2834, %v2426
        %v3203 = vadd.f32 %v2835, %v3003
        %v3204 = vadd.f32 %v2836, %v3004
        %v3205 = vadd.f32 %v2837, %v3005
        %v3206 = vadd.f32 %v2838, %v2429
        %v3207 = vadd.f32 %v2839, %v3006
        %v3208 = vadd.f32 %v2840, %v3007
        %v3209 = vadd.f32 %v2841, %v3008
        %v3210 = vadd.f32 %v2842, %v2432
        %v3211 = vadd.f32 %v2843, %v3009
        %v3212 = vadd.f32 %v2844, %v3010
        %v3213 = vadd.f32 %v2845, %v3011
        %v3214 = vadd.f32 %v2838, %v2435
        %v3215 = vadd.f32 %v2839, %v3012
        %v3216 = vadd.f32 %v2840, %v3013
        %v3217 = vadd.f32 %v2841, %v3014
        %v3218 = vadd.f32 %v2842, %v2438
        %v3219 = vadd.f32 %v2843, %v3015
        %v3220 = vadd.f32 %v2844, %v3016
        %v3221 = vadd.f32 %v2845, %v3017
        %v3222 = vadd.f32 %v2846, %v2441
        %v3223 = vadd.f32 %v2847, %v3018
        %v3224 = vadd.f32 %v2848, %v3019
        %v3225 = vadd.f32 %v2849, %v3020
        %v3226 = vadd.f32 %v2850, %v2444
        %v3227 = vadd.f32 %v2851, %v3021
        %v3228 = vadd.f32 %v2852, %v3022
        %v3229 = vadd.f32 %v2853, %v3023
        %v3230 = vadd.f32 %v2846, %v2447
        %v3231 = vadd.f32 %v2847, %v3024
        %v3232 = vadd.f32 %v2848, %v3025
        %v3233 = vadd.f32 %v2849, %v3026
        %v3234 = vadd.f32 %v2850, %v2450
        %v3235 = vadd.f32 %v2851, %v3027
        %v3236 = vadd.f32 %v2852, %v3028
        %v3237 = vadd.f32 %v2853, %v3029
        %v3238 = vadd.f32 %v2854, %v2453
        %v3239 = vadd.f32 %v2855, %v3030
        %v3240 = vadd.f32 %v2856, %v3031
        %v3241 = vadd.f32 %v2857, %v3032
        %v3242 = vadd.f32 %v2858, %v2456
        %v3243 = vadd.f32 %v2859, %v3033
        %v3244 = vadd.f32 %v2860, %v3034
        %v3245 = vadd.f32 %v2861, %v3035
        %v3246 = vadd.f32 %v2854, %v2459
        %v3247 = vadd.f32 %v2855, %v3036
        %v3248 = vadd.f32 %v2856, %v3037
        %v3249 = vadd.f32 %v2857, %v3038
        %v3250 = vadd.f32 %v2858, %v2462
        %v3251 = vadd.f32 %v2859, %v3039
        %v3252 = vadd.f32 %v2860, %v3040
        %v3253 = vadd.f32 %v2861, %v3041
        %v3254 = vadd.f32 %v2862, %v2465
        %v3255 = vadd.f32 %v2863, %v3042
        %v3256 = vadd.f32 %v2864, %v3043
        %v3257 = vadd.f32 %v2865, %v3044
        %v3258 = vadd.f32 %v2866, %v2468
        %v3259 = vadd.f32 %v2867, %v3045
        %v3260 = vadd.f32 %v2868, %v3046
        %v3261 = vadd.f32 %v2869, %v3047
        %v3262 = vadd.f32 %v2862, %v2471
        %v3263 = vadd.f32 %v2863, %v3048
        %v3264 = vadd.f32 %v2864, %v3049
        %v3265 = vadd.f32 %v2865, %v3050
        %v3266 = vadd.f32 %v2866, %v2474
        %v3267 = vadd.f32 %v2867, %v3051
        %v3268 = vadd.f32 %v2868, %v3052
        %v3269 = vadd.f32 %v2869, %v3053
        %v3270 = vadd.f32 %v2870, %v2477
        %v3271 = vadd.f32 %v2871, %v3054
        %v3272 = vadd.f32 %v2872, %v3055
        %v3273 = vadd.f32 %v2873, %v3056
        %v3274 = vadd.f32 %v2874, %v2480
        %v3275 = vadd.f32 %v2875, %v3057
        %v3276 = vadd.f32 %v2876, %v3058
        %v3277 = vadd.f32 %v2877, %v3059
        %v3278 = vadd.f32 %v2870, %v2483
        %v3279 = vadd.f32 %v2871, %v3060
        %v3280 = vadd.f32 %v2872, %v3061
        %v3281 = vadd.f32 %v2873, %v3062
        %v3282 = vadd.f32 %v2874, %v2486
        %v3283 = vadd.f32 %v2875, %v3063
        %v3284 = vadd.f32 %v2876, %v3064
        %v3285 = vadd.f32 %v2877, %v3065
        %v3286 = vadd.f32 %v2878, %v2489
        %v3287 = vadd.f32 %v2879, %v3066
        %v3288 = vadd.f32 %v2880, %v3067
        %v3289 = vadd.f32 %v2881, %v3068
        %v3290 = vadd.f32 %v2882, %v2492
        %v3291 = vadd.f32 %v2883, %v3069
        %v3292 = vadd.f32 %v2884, %v3070
        %v3293 = vadd.f32 %v2885, %v3071
        %v3294 = vadd.f32 %v2878, %v2495
        %v3295 = vadd.f32 %v2879, %v3072
        %v3296 = vadd.f32 %v2880, %v3073
        %v3297 = vadd.f32 %v2881, %v3074
        %v3298 = vadd.f32 %v2882, %v2498
        %v3299 = vadd.f32 %v2883, %v3075
        %v3300 = vadd.f32 %v2884, %v3076
        %v3301 = vadd.f32 %v2885, %v3077
        %3302 = vst.msk [vmem:[#allocation2] sm:$0xff] %vm632, 0.0
        %3303 = vst.msk [vmem:[#allocation2 + $0x8] sm:$0xff] %vm632, 0.0
        %3304 = vst.msk [vmem:[#allocation2 + $0x10] sm:$0x3] %vm1368, 0.0
        %s3305 = scalar_lea.vmem [#allocation2], 408
        %3306 = vst.msk [vmem:[%s3305] sm:$0xff] %vm632, 0.0
        %3307 = vst.msk [vmem:[%s3305 + $0x8] sm:$0xff] %vm632, 0.0
        %3308 = vst.msk [vmem:[%s3305 + $0x10] sm:$0x3] %vm1368, 0.0
        %3309 = vst.msk [vmem:[#allocation2] sm:$0x1] %vm670, 0.0
        %3310 = vst.msk [vmem:[#allocation2 + $0x18] sm:$0x1] %vm670, 0.0
        %3311 = vst.msk [vmem:[#allocation2 + $0x30] sm:$0x1] %vm670, 0.0
        %3312 = vst.msk [vmem:[#allocation2 + $0x48] sm:$0x1] %vm670, 0.0
        %3313 = vst.msk [vmem:[#allocation2 + $0x60] sm:$0x1] %vm670, 0.0
        %3314 = vst.msk [vmem:[#allocation2 + $0x78] sm:$0x1] %vm670, 0.0
        %3315 = vst.msk [vmem:[#allocation2 + $0x90] sm:$0x1] %vm670, 0.0
        %3316 = vst.msk [vmem:[#allocation2 + $0xa8] sm:$0x1] %vm670, 0.0
        %3317 = vst.msk [vmem:[#allocation2 + $0xc0] sm:$0x1] %vm670, 0.0
        %3318 = vst.msk [vmem:[#allocation2 + $0xd8] sm:$0x1] %vm670, 0.0
        %3319 = vst.msk [vmem:[#allocation2 + $0xf0] sm:$0x1] %vm670, 0.0
        %3320 = vst.msk [vmem:[#allocation2 + $0x108] sm:$0x1] %vm670, 0.0
        %3321 = vst.msk [vmem:[#allocation2 + $0x120] sm:$0x1] %vm670, 0.0
        %3322 = vst.msk [vmem:[#allocation2 + $0x138] sm:$0x1] %vm670, 0.0
        %3323 = vst.msk [vmem:[#allocation2 + $0x150] sm:$0x1] %vm670, 0.0
        %3324 = vst.msk [vmem:[#allocation2 + $0x168] sm:$0x1] %vm670, 0.0
        %3325 = vst.msk [vmem:[#allocation2 + $0x180] sm:$0x1] %vm670, 0.0
        %3326 = vst.msk [vmem:[#allocation2 + $0x198] sm:$0x1] %vm670, 0.0
        %3327 = vst.msk [vmem:[#allocation2 + $0x11] sm:$0x1] %vm670, 0.0
        %3328 = vst.msk [vmem:[#allocation2 + $0x29] sm:$0x1] %vm670, 0.0
        %3329 = vst.msk [vmem:[#allocation2 + $0x41] sm:$0x1] %vm670, 0.0
        %3330 = vst.msk [vmem:[#allocation2 + $0x59] sm:$0x1] %vm670, 0.0
        %3331 = vst.msk [vmem:[#allocation2 + $0x71] sm:$0x1] %vm670, 0.0
        %3332 = vst.msk [vmem:[#allocation2 + $0x89] sm:$0x1] %vm670, 0.0
        %3333 = vst.msk [vmem:[#allocation2 + $0xa1] sm:$0x1] %vm670, 0.0
        %3334 = vst.msk [vmem:[#allocation2 + $0xb9] sm:$0x1] %vm670, 0.0
        %3335 = vst.msk [vmem:[#allocation2 + $0xd1] sm:$0x1] %vm670, 0.0
        %3336 = vst.msk [vmem:[#allocation2 + $0xe9] sm:$0x1] %vm670, 0.0
        %3337 = vst.msk [vmem:[#allocation2 + $0x101] sm:$0x1] %vm670, 0.0
        %3338 = vst.msk [vmem:[#allocation2 + $0x119] sm:$0x1] %vm670, 0.0
        %3339 = vst.msk [vmem:[#allocation2 + $0x131] sm:$0x1] %vm670, 0.0
        %3340 = vst.msk [vmem:[#allocation2 + $0x149] sm:$0x1] %vm670, 0.0
        %3341 = vst.msk [vmem:[#allocation2 + $0x161] sm:$0x1] %vm670, 0.0
        %3342 = vst.msk [vmem:[#allocation2 + $0x179] sm:$0x1] %vm670, 0.0
        %3343 = vst.msk [vmem:[#allocation2 + $0x191] sm:$0x1] %vm670, 0.0
        %3344 = vst.msk [vmem:[#allocation2 + $0x1a9] sm:$0x1] %vm670, 0.0
        %3473 = vst [vmem:[#allocation1] ss:$4 sm:$0xff] %v3174
        %s3474 = scalar_lea.vmem [#allocation1], 1
        %3475 = vst [vmem:[%s3474] ss:$4 sm:$0xff] %v3175
        %s3476 = scalar_lea.vmem [#allocation1], 2
        %3477 = vst [vmem:[%s3476] ss:$4 sm:$0xff] %v3176
        %s3478 = scalar_lea.vmem [#allocation1], 3
        %3479 = vst [vmem:[%s3478] ss:$4 sm:$0xff] %v3177
        %s3480 = scalar_lea.vmem [#allocation1], 32
        %3481 = vst [vmem:[%s3480] ss:$4 sm:$0xff] %v3178
        %s3482 = scalar_lea.vmem [#allocation1], 33
        %3483 = vst [vmem:[%s3482] ss:$4 sm:$0xff] %v3179
        %s3484 = scalar_lea.vmem [#allocation1], 34
        %3485 = vst [vmem:[%s3484] ss:$4 sm:$0xff] %v3180
        %s3486 = scalar_lea.vmem [#allocation1], 35
        %3487 = vst [vmem:[%s3486] ss:$4 sm:$0xff] %v3181
        %v3488 = vld.sshfl [vmem:[#allocation1] sm:$0xff pattern:$0x73625140]
        %v3489 = vld.sshfl [vmem:[#allocation1 + $0x20] sm:$0xff pattern:$0x73625140]
        %3490 = vst [vmem:[#allocation1] ss:$4 sm:$0xff] %v3182
        %3491 = vst [vmem:[%s3474] ss:$4 sm:$0xff] %v3183
        %3492 = vst [vmem:[%s3476] ss:$4 sm:$0xff] %v3184
        %3493 = vst [vmem:[%s3478] ss:$4 sm:$0xff] %v3185
        %3494 = vst [vmem:[%s3480] ss:$4 sm:$0xff] %v3186
        %3495 = vst [vmem:[%s3482] ss:$4 sm:$0xff] %v3187
        %3496 = vst [vmem:[%s3484] ss:$4 sm:$0xff] %v3188
        %3497 = vst [vmem:[%s3486] ss:$4 sm:$0xff] %v3189
        %v3498 = vld.sshfl [vmem:[#allocation1] sm:$0xff pattern:$0x73625140]
        %v3499 = vld.sshfl [vmem:[#allocation1 + $0x20] sm:$0xff pattern:$0x73625140]
        %3500 = vst [vmem:[#allocation1] ss:$4 sm:$0xff] %v3190
        %3501 = vst [vmem:[%s3474] ss:$4 sm:$0xff] %v3191
        %3502 = vst [vmem:[%s3476] ss:$4 sm:$0xff] %v3192
        %3503 = vst [vmem:[%s3478] ss:$4 sm:$0xff] %v3193
        %3504 = vst [vmem:[%s3480] ss:$4 sm:$0xff] %v3194
        %3505 = vst [vmem:[%s3482] ss:$4 sm:$0xff] %v3195
        %3506 = vst [vmem:[%s3484] ss:$4 sm:$0xff] %v3196
        %3507 = vst [vmem:[%s3486] ss:$4 sm:$0xff] %v3197
        %v3508 = vld.sshfl [vmem:[#allocation1] sm:$0xff pattern:$0x73625140]
        %v3509 = vld.sshfl [vmem:[#allocation1 + $0x20] sm:$0xff pattern:$0x73625140]
        %3510 = vst [vmem:[#allocation1] ss:$4 sm:$0xff] %v3198
        %3511 = vst [vmem:[%s3474] ss:$4 sm:$0xff] %v3199
        %3512 = vst [vmem:[%s3476] ss:$4 sm:$0xff] %v3200
        %3513 = vst [vmem:[%s3478] ss:$4 sm:$0xff] %v3201
        %3514 = vst [vmem:[%s3480] ss:$4 sm:$0xff] %v3202
        %3515 = vst [vmem:[%s3482] ss:$4 sm:$0xff] %v3203
        %3516 = vst [vmem:[%s3484] ss:$4 sm:$0xff] %v3204
        %3517 = vst [vmem:[%s3486] ss:$4 sm:$0xff] %v3205
        %v3518 = vld.sshfl [vmem:[#allocation1] sm:$0xff pattern:$0x73625140]
        %v3519 = vld.sshfl [vmem:[#allocation1 + $0x20] sm:$0xff pattern:$0x73625140]
        %3520 = vst [vmem:[#allocation1] ss:$4 sm:$0xff] %v3206
        %3521 = vst [vmem:[%s3474] ss:$4 sm:$0xff] %v3207
        %3522 = vst [vmem:[%s3476] ss:$4 sm:$0xff] %v3208
        %3523 = vst [vmem:[%s3478] ss:$4 sm:$0xff] %v3209
        %3524 = vst [vmem:[%s3480] ss:$4 sm:$0xff] %v3210
        %3525 = vst [vmem:[%s3482] ss:$4 sm:$0xff] %v3211
        %3526 = vst [vmem:[%s3484] ss:$4 sm:$0xff] %v3212
        %3527 = vst [vmem:[%s3486] ss:$4 sm:$0xff] %v3213
        %v3528 = vld.sshfl [vmem:[#allocation1] sm:$0xff pattern:$0x73625140]
        %v3529 = vld.sshfl [vmem:[#allocation1 + $0x20] sm:$0xff pattern:$0x73625140]
        %3530 = vst [vmem:[#allocation1] ss:$4 sm:$0xff] %v3214
        %3531 = vst [vmem:[%s3474] ss:$4 sm:$0xff] %v3215
        %3532 = vst [vmem:[%s3476] ss:$4 sm:$0xff] %v3216
        %3533 = vst [vmem:[%s3478] ss:$4 sm:$0xff] %v3217
        %3534 = vst [vmem:[%s3480] ss:$4 sm:$0xff] %v3218
        %3535 = vst [vmem:[%s3482] ss:$4 sm:$0xff] %v3219
        %3536 = vst [vmem:[%s3484] ss:$4 sm:$0xff] %v3220
        %3537 = vst [vmem:[%s3486] ss:$4 sm:$0xff] %v3221
        %v3538 = vld.sshfl [vmem:[#allocation1] sm:$0xff pattern:$0x73625140]
        %v3539 = vld.sshfl [vmem:[#allocation1 + $0x20] sm:$0xff pattern:$0x73625140]
        %3540 = vst [vmem:[#allocation1] ss:$4 sm:$0xff] %v3222
        %3541 = vst [vmem:[%s3474] ss:$4 sm:$0xff] %v3223
        %3542 = vst [vmem:[%s3476] ss:$4 sm:$0xff] %v3224
        %3543 = vst [vmem:[%s3478] ss:$4 sm:$0xff] %v3225
        %3544 = vst [vmem:[%s3480] ss:$4 sm:$0xff] %v3226
        %3545 = vst [vmem:[%s3482] ss:$4 sm:$0xff] %v3227
        %3546 = vst [vmem:[%s3484] ss:$4 sm:$0xff] %v3228
        %3547 = vst [vmem:[%s3486] ss:$4 sm:$0xff] %v3229
        %v3548 = vld.sshfl [vmem:[#allocation1] sm:$0xff pattern:$0x73625140]
        %v3549 = vld.sshfl [vmem:[#allocation1 + $0x20] sm:$0xff pattern:$0x73625140]
        %3550 = vst [vmem:[#allocation1] ss:$4 sm:$0xff] %v3230
        %3551 = vst [vmem:[%s3474] ss:$4 sm:$0xff] %v3231
        %3552 = vst [vmem:[%s3476] ss:$4 sm:$0xff] %v3232
        %3553 = vst [vmem:[%s3478] ss:$4 sm:$0xff] %v3233
        %3554 = vst [vmem:[%s3480] ss:$4 sm:$0xff] %v3234
        %3555 = vst [vmem:[%s3482] ss:$4 sm:$0xff] %v3235
        %3556 = vst [vmem:[%s3484] ss:$4 sm:$0xff] %v3236
        %3557 = vst [vmem:[%s3486] ss:$4 sm:$0xff] %v3237
        %v3558 = vld.sshfl [vmem:[#allocation1] sm:$0xff pattern:$0x73625140]
        %v3559 = vld.sshfl [vmem:[#allocation1 + $0x20] sm:$0xff pattern:$0x73625140]
        %3560 = vst [vmem:[#allocation1] ss:$4 sm:$0xff] %v3238
        %3561 = vst [vmem:[%s3474] ss:$4 sm:$0xff] %v3239
        %3562 = vst [vmem:[%s3476] ss:$4 sm:$0xff] %v3240
        %3563 = vst [vmem:[%s3478] ss:$4 sm:$0xff] %v3241
        %3564 = vst [vmem:[%s3480] ss:$4 sm:$0xff] %v3242
        %3565 = vst [vmem:[%s3482] ss:$4 sm:$0xff] %v3243
        %3566 = vst [vmem:[%s3484] ss:$4 sm:$0xff] %v3244
        %3567 = vst [vmem:[%s3486] ss:$4 sm:$0xff] %v3245
        %v3568 = vld.sshfl [vmem:[#allocation1] sm:$0xff pattern:$0x73625140]
        %v3569 = vld.sshfl [vmem:[#allocation1 + $0x20] sm:$0xff pattern:$0x73625140]
        %3570 = vst [vmem:[#allocation1] ss:$4 sm:$0xff] %v3246
        %3571 = vst [vmem:[%s3474] ss:$4 sm:$0xff] %v3247
        %3572 = vst [vmem:[%s3476] ss:$4 sm:$0xff] %v3248
        %3573 = vst [vmem:[%s3478] ss:$4 sm:$0xff] %v3249
        %3574 = vst [vmem:[%s3480] ss:$4 sm:$0xff] %v3250
        %3575 = vst [vmem:[%s3482] ss:$4 sm:$0xff] %v3251
        %3576 = vst [vmem:[%s3484] ss:$4 sm:$0xff] %v3252
        %3577 = vst [vmem:[%s3486] ss:$4 sm:$0xff] %v3253
        %v3578 = vld.sshfl [vmem:[#allocation1] sm:$0xff pattern:$0x73625140]
        %v3579 = vld.sshfl [vmem:[#allocation1 + $0x20] sm:$0xff pattern:$0x73625140]
        %3580 = vst [vmem:[#allocation1] ss:$4 sm:$0xff] %v3254
        %3581 = vst [vmem:[%s3474] ss:$4 sm:$0xff] %v3255
        %3582 = vst [vmem:[%s3476] ss:$4 sm:$0xff] %v3256
        %3583 = vst [vmem:[%s3478] ss:$4 sm:$0xff] %v3257
        %3584 = vst [vmem:[%s3480] ss:$4 sm:$0xff] %v3258
        %3585 = vst [vmem:[%s3482] ss:$4 sm:$0xff] %v3259
        %3586 = vst [vmem:[%s3484] ss:$4 sm:$0xff] %v3260
        %3587 = vst [vmem:[%s3486] ss:$4 sm:$0xff] %v3261
        %v3588 = vld.sshfl [vmem:[#allocation1] sm:$0xff pattern:$0x73625140]
        %v3589 = vld.sshfl [vmem:[#allocation1 + $0x20] sm:$0xff pattern:$0x73625140]
        %3590 = vst [vmem:[#allocation1] ss:$4 sm:$0xff] %v3262
        %3591 = vst [vmem:[%s3474] ss:$4 sm:$0xff] %v3263
        %3592 = vst [vmem:[%s3476] ss:$4 sm:$0xff] %v3264
        %3593 = vst [vmem:[%s3478] ss:$4 sm:$0xff] %v3265
        %3594 = vst [vmem:[%s3480] ss:$4 sm:$0xff] %v3266
        %3595 = vst [vmem:[%s3482] ss:$4 sm:$0xff] %v3267
        %3596 = vst [vmem:[%s3484] ss:$4 sm:$0xff] %v3268
        %3597 = vst [vmem:[%s3486] ss:$4 sm:$0xff] %v3269
        %v3598 = vld.sshfl [vmem:[#allocation1] sm:$0xff pattern:$0x73625140]
        %v3599 = vld.sshfl [vmem:[#allocation1 + $0x20] sm:$0xff pattern:$0x73625140]
        %3600 = vst [vmem:[#allocation1] ss:$4 sm:$0xff] %v3270
        %3601 = vst [vmem:[%s3474] ss:$4 sm:$0xff] %v3271
        %3602 = vst [vmem:[%s3476] ss:$4 sm:$0xff] %v3272
        %3603 = vst [vmem:[%s3478] ss:$4 sm:$0xff] %v3273
        %3604 = vst [vmem:[%s3480] ss:$4 sm:$0xff] %v3274
        %3605 = vst [vmem:[%s3482] ss:$4 sm:$0xff] %v3275
        %3606 = vst [vmem:[%s3484] ss:$4 sm:$0xff] %v3276
        %3607 = vst [vmem:[%s3486] ss:$4 sm:$0xff] %v3277
        %v3608 = vld.sshfl [vmem:[#allocation1] sm:$0xff pattern:$0x73625140]
        %v3609 = vld.sshfl [vmem:[#allocation1 + $0x20] sm:$0xff pattern:$0x73625140]
        %3610 = vst [vmem:[#allocation1] ss:$4 sm:$0xff] %v3278
        %3611 = vst [vmem:[%s3474] ss:$4 sm:$0xff] %v3279
        %3612 = vst [vmem:[%s3476] ss:$4 sm:$0xff] %v3280
        %3613 = vst [vmem:[%s3478] ss:$4 sm:$0xff] %v3281
        %3614 = vst [vmem:[%s3480] ss:$4 sm:$0xff] %v3282
        %3615 = vst [vmem:[%s3482] ss:$4 sm:$0xff] %v3283
        %3616 = vst [vmem:[%s3484] ss:$4 sm:$0xff] %v3284
        %3617 = vst [vmem:[%s3486] ss:$4 sm:$0xff] %v3285
        %v3618 = vld.sshfl [vmem:[#allocation1] sm:$0xff pattern:$0x73625140]
        %v3619 = vld.sshfl [vmem:[#allocation1 + $0x20] sm:$0xff pattern:$0x73625140]
        %3620 = vst [vmem:[#allocation1] ss:$4 sm:$0xff] %v3286
        %3621 = vst [vmem:[%s3474] ss:$4 sm:$0xff] %v3287
        %3622 = vst [vmem:[%s3476] ss:$4 sm:$0xff] %v3288
        %3623 = vst [vmem:[%s3478] ss:$4 sm:$0xff] %v3289
        %3624 = vst [vmem:[%s3480] ss:$4 sm:$0xff] %v3290
        %3625 = vst [vmem:[%s3482] ss:$4 sm:$0xff] %v3291
        %3626 = vst [vmem:[%s3484] ss:$4 sm:$0xff] %v3292
        %3627 = vst [vmem:[%s3486] ss:$4 sm:$0xff] %v3293
        %v3628 = vld.sshfl [vmem:[#allocation1] sm:$0xff pattern:$0x73625140]
        %v3629 = vld.sshfl [vmem:[#allocation1 + $0x20] sm:$0xff pattern:$0x73625140]
        %3630 = vst [vmem:[#allocation1] ss:$4 sm:$0xff] %v3294
        %3631 = vst [vmem:[%s3474] ss:$4 sm:$0xff] %v3295
        %3632 = vst [vmem:[%s3476] ss:$4 sm:$0xff] %v3296
        %3633 = vst [vmem:[%s3478] ss:$4 sm:$0xff] %v3297
        %3634 = vst [vmem:[%s3480] ss:$4 sm:$0xff] %v3298
        %3635 = vst [vmem:[%s3482] ss:$4 sm:$0xff] %v3299
        %3636 = vst [vmem:[%s3484] ss:$4 sm:$0xff] %v3300
        %3637 = vst [vmem:[%s3486] ss:$4 sm:$0xff] %v3301
        %v3638 = vld.sshfl [vmem:[#allocation1] sm:$0xff pattern:$0x73625140]
        %v3639 = vld.sshfl [vmem:[#allocation1 + $0x20] sm:$0xff pattern:$0x73625140]
        %s3672 = scalar_lea.vmem [#allocation2], 24
        %3673 = vst.msk [vmem:[%s3672 + $0x1] sm:$0xff] %vm632, %v3488
        %3674 = vst.msk [vmem:[%s3672 + $0x9] sm:$0xff] %vm632, %v3489
        %3675 = vst.msk [vmem:[%s3672 + $0x19] sm:$0xff] %vm632, %v3498
        %3676 = vst.msk [vmem:[%s3672 + $0x21] sm:$0xff] %vm632, %v3499
        %3677 = vst.msk [vmem:[%s3672 + $0x31] sm:$0xff] %vm632, %v3508
        %3678 = vst.msk [vmem:[%s3672 + $0x39] sm:$0xff] %vm632, %v3509
        %3679 = vst.msk [vmem:[%s3672 + $0x49] sm:$0xff] %vm632, %v3518
        %3680 = vst.msk [vmem:[%s3672 + $0x51] sm:$0xff] %vm632, %v3519
        %3681 = vst.msk [vmem:[%s3672 + $0x61] sm:$0xff] %vm632, %v3528
        %3682 = vst.msk [vmem:[%s3672 + $0x69] sm:$0xff] %vm632, %v3529
        %3683 = vst.msk [vmem:[%s3672 + $0x79] sm:$0xff] %vm632, %v3538
        %3684 = vst.msk [vmem:[%s3672 + $0x81] sm:$0xff] %vm632, %v3539
        %3685 = vst.msk [vmem:[%s3672 + $0x91] sm:$0xff] %vm632, %v3548
        %3686 = vst.msk [vmem:[%s3672 + $0x99] sm:$0xff] %vm632, %v3549
        %3687 = vst.msk [vmem:[%s3672 + $0xa9] sm:$0xff] %vm632, %v3558
        %3688 = vst.msk [vmem:[%s3672 + $0xb1] sm:$0xff] %vm632, %v3559
        %3689 = vst.msk [vmem:[%s3672 + $0xc1] sm:$0xff] %vm632, %v3568
        %3690 = vst.msk [vmem:[%s3672 + $0xc9] sm:$0xff] %vm632, %v3569
        %3691 = vst.msk [vmem:[%s3672 + $0xd9] sm:$0xff] %vm632, %v3578
        %3692 = vst.msk [vmem:[%s3672 + $0xe1] sm:$0xff] %vm632, %v3579
        %3693 = vst.msk [vmem:[%s3672 + $0xf1] sm:$0xff] %vm632, %v3588
        %3694 = vst.msk [vmem:[%s3672 + $0xf9] sm:$0xff] %vm632, %v3589
        %3695 = vst.msk [vmem:[%s3672 + $0x109] sm:$0xff] %vm632, %v3598
        %3696 = vst.msk [vmem:[%s3672 + $0x111] sm:$0xff] %vm632, %v3599
        %3697 = vst.msk [vmem:[%s3672 + $0x121] sm:$0xff] %vm632, %v3608
        %3698 = vst.msk [vmem:[%s3672 + $0x129] sm:$0xff] %vm632, %v3609
        %3699 = vst.msk [vmem:[%s3672 + $0x139] sm:$0xff] %vm632, %v3618
        %3700 = vst.msk [vmem:[%s3672 + $0x141] sm:$0xff] %vm632, %v3619
        %3701 = vst.msk [vmem:[%s3672 + $0x151] sm:$0xff] %vm632, %v3628
        %3702 = vst.msk [vmem:[%s3672 + $0x159] sm:$0xff] %vm632, %v3629
        %3703 = vst.msk [vmem:[%s3672 + $0x169] sm:$0xff] %vm632, %v3638
        %3704 = vst.msk [vmem:[%s3672 + $0x171] sm:$0xff] %vm632, %v3639
        %v3705 = vld [vmem:[%s10] sm:$0x1]
        %v3707 = vperm.slane %v3705, 0
        %v3709 = vadd.f32 %v3707, 0.0
        %v3710 = vld [vmem:[#allocation2] sm:$0xff]
        %v3711 = vld [vmem:[#allocation2 + $0x8] sm:$0xff]
        %v3712 = vld [vmem:[#allocation2 + $0x18] sm:$0xff]
        %v3713 = vld [vmem:[#allocation2 + $0x20] sm:$0xff]
        %v3714 = vld [vmem:[#allocation2 + $0x30] sm:$0xff]
        %v3715 = vld [vmem:[#allocation2 + $0x38] sm:$0xff]
        %v3716 = vld [vmem:[#allocation2 + $0x48] sm:$0xff]
        %v3717 = vld [vmem:[#allocation2 + $0x50] sm:$0xff]
        %v3718 = vld [vmem:[#allocation2 + $0x60] sm:$0xff]
        %v3719 = vld [vmem:[#allocation2 + $0x68] sm:$0xff]
        %v3720 = vld [vmem:[#allocation2 + $0x78] sm:$0xff]
        %v3721 = vld [vmem:[#allocation2 + $0x80] sm:$0xff]
        %v3722 = vld [vmem:[#allocation2 + $0x90] sm:$0xff]
        %v3723 = vld [vmem:[#allocation2 + $0x98] sm:$0xff]
        %v3724 = vld [vmem:[#allocation2 + $0xa8] sm:$0xff]
        %v3725 = vld [vmem:[#allocation2 + $0xb0] sm:$0xff]
        %v3726 = vld [vmem:[#allocation2 + $0xc0] sm:$0xff]
        %v3727 = vld [vmem:[#allocation2 + $0xc8] sm:$0xff]
        %v3728 = vld [vmem:[#allocation2 + $0xd8] sm:$0xff]
        %v3729 = vld [vmem:[#allocation2 + $0xe0] sm:$0xff]
        %v3730 = vld [vmem:[#allocation2 + $0xf0] sm:$0xff]
        %v3731 = vld [vmem:[#allocation2 + $0xf8] sm:$0xff]
        %v3732 = vld [vmem:[#allocation2 + $0x108] sm:$0xff]
        %v3733 = vld [vmem:[#allocation2 + $0x110] sm:$0xff]
        %v3734 = vld [vmem:[#allocation2 + $0x120] sm:$0xff]
        %v3735 = vld [vmem:[#allocation2 + $0x128] sm:$0xff]
        %v3736 = vld [vmem:[#allocation2 + $0x138] sm:$0xff]
        %v3737 = vld [vmem:[#allocation2 + $0x140] sm:$0xff]
        %v3738 = vld [vmem:[#allocation2 + $0x150] sm:$0xff]
        %v3739 = vld [vmem:[#allocation2 + $0x158] sm:$0xff]
        %v3740 = vld [vmem:[#allocation2 + $0x168] sm:$0xff]
        %v3741 = vld [vmem:[#allocation2 + $0x170] sm:$0xff]
        %v3742 = vld [vmem:[%s9] sm:$0xff]
        %v3744 = vsel %vm632, %v3710, 0
        %v3747 = vsel %vm632, %v3711, 0
        %v3750 = vsel %vm632, %v3712, 0
        %v3753 = vsel %vm632, %v3713, 0
        %v3756 = vsel %vm632, %v3714, 0
        %v3759 = vsel %vm632, %v3715, 0
        %v3762 = vsel %vm632, %v3716, 0
        %v3765 = vsel %vm632, %v3717, 0
        %v3768 = vsel %vm632, %v3718, 0
        %v3771 = vsel %vm632, %v3719, 0
        %v3774 = vsel %vm632, %v3720, 0
        %v3777 = vsel %vm632, %v3721, 0
        %v3780 = vsel %vm632, %v3722, 0
        %v3783 = vsel %vm632, %v3723, 0
        %v3786 = vsel %vm632, %v3724, 0
        %v3789 = vsel %vm632, %v3725, 0
        %v3792 = vsel %vm632, %v3726, 0
        %v3795 = vsel %vm632, %v3727, 0
        %v3798 = vsel %vm632, %v3728, 0
        %v3801 = vsel %vm632, %v3729, 0
        %v3804 = vsel %vm632, %v3730, 0
        %v3807 = vsel %vm632, %v3731, 0
        %v3810 = vsel %vm632, %v3732, 0
        %v3813 = vsel %vm632, %v3733, 0
        %v3816 = vsel %vm632, %v3734, 0
        %v3819 = vsel %vm632, %v3735, 0
        %v3822 = vsel %vm632, %v3736, 0
        %v3825 = vsel %vm632, %v3737, 0
        %v3828 = vsel %vm632, %v3738, 0
        %v3831 = vsel %vm632, %v3739, 0
        %v3834 = vsel %vm632, %v3740, 0
        %v3837 = vsel %vm632, %v3741, 0
        %3839 = vmatpush.msra.mxu0 0.0
        %3840 = vmatpush.msra.mxu0 0.0
        %3841 = vmatpush.msra.mxu0 0.0
        %3842 = vmatpush.msra.mxu0 0.0
        %3843 = vmatpush.msra.mxu0 0.0
        %3844 = vmatpush.msra.mxu0 0.0
        %3845 = vmatpush.msra.mxu0 0.0
        %3846 = vmatpush.msra.mxu0 0.0
        %3847 = vmatpush.msra.mxu0 0.0
        %3848 = vmatpush.msra.mxu0 0.0
        %3849 = vmatpush.msra.mxu0 0.0
        %3850 = vmatpush.msra.mxu0 0.0
        %3851 = vmatpush.msra.mxu0 0.0
        %3852 = vmatpush.msra.mxu0 0.0
        %3853 = vmatpush.msra.mxu0 0.0
        %3854 = vmatpush.msra.mxu0 %v3742
        %3855 = vmatmul.f32.gmra.mxu0 %v3744
        %v3856 = vpop.f32.mrf.mxu0
        %v3857 = vadd.f32 0.0, %v3856
        %3858 = vmatmul.f32.gmra.mxu0 %v3747
        %v3859 = vpop.f32.mrf.mxu0
        %v3860 = vadd.f32 0.0, %v3859
        %3861 = vmatmul.f32.gmra.mxu0 %v3750
        %v3862 = vpop.f32.mrf.mxu0
        %v3863 = vadd.f32 0.0, %v3862
        %3864 = vmatmul.f32.gmra.mxu0 %v3753
        %v3865 = vpop.f32.mrf.mxu0
        %v3866 = vadd.f32 0.0, %v3865
        %3867 = vmatmul.f32.gmra.mxu0 %v3756
        %v3868 = vpop.f32.mrf.mxu0
        %v3869 = vadd.f32 0.0, %v3868
        %3870 = vmatmul.f32.gmra.mxu0 %v3759
        %v3871 = vpop.f32.mrf.mxu0
        %v3872 = vadd.f32 0.0, %v3871
        %3873 = vmatmul.f32.gmra.mxu0 %v3762
        %v3874 = vpop.f32.mrf.mxu0
        %v3875 = vadd.f32 0.0, %v3874
        %3876 = vmatmul.f32.gmra.mxu0 %v3765
        %v3877 = vpop.f32.mrf.mxu0
        %v3878 = vadd.f32 0.0, %v3877
        %3879 = vmatmul.f32.gmra.mxu0 %v3768
        %v3880 = vpop.f32.mrf.mxu0
        %v3881 = vadd.f32 0.0, %v3880
        %3882 = vmatmul.f32.gmra.mxu0 %v3771
        %v3883 = vpop.f32.mrf.mxu0
        %v3884 = vadd.f32 0.0, %v3883
        %3885 = vmatmul.f32.gmra.mxu0 %v3774
        %v3886 = vpop.f32.mrf.mxu0
        %v3887 = vadd.f32 0.0, %v3886
        %3888 = vmatmul.f32.gmra.mxu0 %v3777
        %v3889 = vpop.f32.mrf.mxu0
        %v3890 = vadd.f32 0.0, %v3889
        %3891 = vmatmul.f32.gmra.mxu0 %v3780
        %v3892 = vpop.f32.mrf.mxu0
        %v3893 = vadd.f32 0.0, %v3892
        %3894 = vmatmul.f32.gmra.mxu0 %v3783
        %v3895 = vpop.f32.mrf.mxu0
        %v3896 = vadd.f32 0.0, %v3895
        %3897 = vmatmul.f32.gmra.mxu0 %v3786
        %v3898 = vpop.f32.mrf.mxu0
        %v3899 = vadd.f32 0.0, %v3898
        %3900 = vmatmul.f32.gmra.mxu0 %v3789
        %v3901 = vpop.f32.mrf.mxu0
        %v3902 = vadd.f32 0.0, %v3901
        %3903 = vmatmul.f32.gmra.mxu0 %v3792
        %v3904 = vpop.f32.mrf.mxu0
        %v3905 = vadd.f32 0.0, %v3904
        %3906 = vmatmul.f32.gmra.mxu0 %v3795
        %v3907 = vpop.f32.mrf.mxu0
        %v3908 = vadd.f32 0.0, %v3907
        %3909 = vmatmul.f32.gmra.mxu0 %v3798
        %v3910 = vpop.f32.mrf.mxu0
        %v3911 = vadd.f32 0.0, %v3910
        %3912 = vmatmul.f32.gmra.mxu0 %v3801
        %v3913 = vpop.f32.mrf.mxu0
        %v3914 = vadd.f32 0.0, %v3913
        %3915 = vmatmul.f32.gmra.mxu0 %v3804
        %v3916 = vpop.f32.mrf.mxu0
        %v3917 = vadd.f32 0.0, %v3916
        %3918 = vmatmul.f32.gmra.mxu0 %v3807
        %v3919 = vpop.f32.mrf.mxu0
        %v3920 = vadd.f32 0.0, %v3919
        %3921 = vmatmul.f32.gmra.mxu0 %v3810
        %v3922 = vpop.f32.mrf.mxu0
        %v3923 = vadd.f32 0.0, %v3922
        %3924 = vmatmul.f32.gmra.mxu0 %v3813
        %v3925 = vpop.f32.mrf.mxu0
        %v3926 = vadd.f32 0.0, %v3925
        %3927 = vmatmul.f32.gmra.mxu0 %v3816
        %v3928 = vpop.f32.mrf.mxu0
        %v3929 = vadd.f32 0.0, %v3928
        %3930 = vmatmul.f32.gmra.mxu0 %v3819
        %v3931 = vpop.f32.mrf.mxu0
        %v3932 = vadd.f32 0.0, %v3931
        %3933 = vmatmul.f32.gmra.mxu0 %v3822
        %v3934 = vpop.f32.mrf.mxu0
        %v3935 = vadd.f32 0.0, %v3934
        %3936 = vmatmul.f32.gmra.mxu0 %v3825
        %v3937 = vpop.f32.mrf.mxu0
        %v3938 = vadd.f32 0.0, %v3937
        %3939 = vmatmul.f32.gmra.mxu0 %v3828
        %v3940 = vpop.f32.mrf.mxu0
        %v3941 = vadd.f32 0.0, %v3940
        %3942 = vmatmul.f32.gmra.mxu0 %v3831
        %v3943 = vpop.f32.mrf.mxu0
        %v3944 = vadd.f32 0.0, %v3943
        %3945 = vmatmul.f32.gmra.mxu0 %v3834
        %v3946 = vpop.f32.mrf.mxu0
        %v3947 = vadd.f32 0.0, %v3946
        %3948 = vmatmul.f32.gmra.mxu0 %v3837
        %v3949 = vpop.f32.mrf.mxu0
        %v3950 = vadd.f32 0.0, %v3949
        %3951 = vdwg.mxu0
        %v3952 = vadd.f32 %v3709, %v3857
        %v3953 = vadd.f32 %v3709, %v3860
        %v3954 = vadd.f32 %v3709, %v3863
        %v3955 = vadd.f32 %v3709, %v3866
        %v3956 = vadd.f32 %v3709, %v3869
        %v3957 = vadd.f32 %v3709, %v3872
        %v3958 = vadd.f32 %v3709, %v3875
        %v3959 = vadd.f32 %v3709, %v3878
        %v3960 = vadd.f32 %v3709, %v3881
        %v3961 = vadd.f32 %v3709, %v3884
        %v3962 = vadd.f32 %v3709, %v3887
        %v3963 = vadd.f32 %v3709, %v3890
        %v3964 = vadd.f32 %v3709, %v3893
        %v3965 = vadd.f32 %v3709, %v3896
        %v3966 = vadd.f32 %v3709, %v3899
        %v3967 = vadd.f32 %v3709, %v3902
        %v3968 = vadd.f32 %v3709, %v3905
        %v3969 = vadd.f32 %v3709, %v3908
        %v3970 = vadd.f32 %v3709, %v3911
        %v3971 = vadd.f32 %v3709, %v3914
        %v3972 = vadd.f32 %v3709, %v3917
        %v3973 = vadd.f32 %v3709, %v3920
        %v3974 = vadd.f32 %v3709, %v3923
        %v3975 = vadd.f32 %v3709, %v3926
        %v3976 = vadd.f32 %v3709, %v3929
        %v3977 = vadd.f32 %v3709, %v3932
        %v3978 = vadd.f32 %v3709, %v3935
        %v3979 = vadd.f32 %v3709, %v3938
        %v3980 = vadd.f32 %v3709, %v3941
        %v3981 = vadd.f32 %v3709, %v3944
        %v3982 = vadd.f32 %v3709, %v3947
        %v3983 = vadd.f32 %v3709, %v3950
        %v3984 = vld [vmem:[#allocation2 + $0x1] sm:$0xff]
        %v3985 = vld [vmem:[#allocation2 + $0x9] sm:$0xff]
        %v3986 = vld [vmem:[#allocation2 + $0x19] sm:$0xff]
        %v3987 = vld [vmem:[#allocation2 + $0x21] sm:$0xff]
        %v3988 = vld [vmem:[#allocation2 + $0x31] sm:$0xff]
        %v3989 = vld [vmem:[#allocation2 + $0x39] sm:$0xff]
        %v3990 = vld [vmem:[#allocation2 + $0x49] sm:$0xff]
        %v3991 = vld [vmem:[#allocation2 + $0x51] sm:$0xff]
        %v3992 = vld [vmem:[#allocation2 + $0x61] sm:$0xff]
        %v3993 = vld [vmem:[#allocation2 + $0x69] sm:$0xff]
        %v3994 = vld [vmem:[#allocation2 + $0x79] sm:$0xff]
        %v3995 = vld [vmem:[#allocation2 + $0x81] sm:$0xff]
        %v3996 = vld [vmem:[#allocation2 + $0x91] sm:$0xff]
        %v3997 = vld [vmem:[#allocation2 + $0x99] sm:$0xff]
        %v3998 = vld [vmem:[#allocation2 + $0xa9] sm:$0xff]
        %v3999 = vld [vmem:[#allocation2 + $0xb1] sm:$0xff]
        %v4000 = vld [vmem:[#allocation2 + $0xc1] sm:$0xff]
        %v4001 = vld [vmem:[#allocation2 + $0xc9] sm:$0xff]
        %v4002 = vld [vmem:[#allocation2 + $0xd9] sm:$0xff]
        %v4003 = vld [vmem:[#allocation2 + $0xe1] sm:$0xff]
        %v4004 = vld [vmem:[#allocation2 + $0xf1] sm:$0xff]
        %v4005 = vld [vmem:[#allocation2 + $0xf9] sm:$0xff]
        %v4006 = vld [vmem:[#allocation2 + $0x109] sm:$0xff]
        %v4007 = vld [vmem:[#allocation2 + $0x111] sm:$0xff]
        %v4008 = vld [vmem:[#allocation2 + $0x121] sm:$0xff]
        %v4009 = vld [vmem:[#allocation2 + $0x129] sm:$0xff]
        %v4010 = vld [vmem:[#allocation2 + $0x139] sm:$0xff]
        %v4011 = vld [vmem:[#allocation2 + $0x141] sm:$0xff]
        %v4012 = vld [vmem:[#allocation2 + $0x151] sm:$0xff]
        %v4013 = vld [vmem:[#allocation2 + $0x159] sm:$0xff]
        %v4014 = vld [vmem:[#allocation2 + $0x169] sm:$0xff]
        %v4015 = vld [vmem:[#allocation2 + $0x171] sm:$0xff]
        %s4016 = scalar_lea.vmem %s9, 8
        %v4017 = vld [vmem:[%s4016] sm:$0xff]
        %v4019 = vsel %vm632, %v3984, 0
        %v4022 = vsel %vm632, %v3985, 0
        %v4025 = vsel %vm632, %v3986, 0
        %v4028 = vsel %vm632, %v3987, 0
        %v4031 = vsel %vm632, %v3988, 0
        %v4034 = vsel %vm632, %v3989, 0
        %v4037 = vsel %vm632, %v3990, 0
        %v4040 = vsel %vm632, %v3991, 0
        %v4043 = vsel %vm632, %v3992, 0
        %v4046 = vsel %vm632, %v3993, 0
        %v4049 = vsel %vm632, %v3994, 0
        %v4052 = vsel %vm632, %v3995, 0
        %v4055 = vsel %vm632, %v3996, 0
        %v4058 = vsel %vm632, %v3997, 0
        %v4061 = vsel %vm632, %v3998, 0
        %v4064 = vsel %vm632, %v3999, 0
        %v4067 = vsel %vm632, %v4000, 0
        %v4070 = vsel %vm632, %v4001, 0
        %v4073 = vsel %vm632, %v4002, 0
        %v4076 = vsel %vm632, %v4003, 0
        %v4079 = vsel %vm632, %v4004, 0
        %v4082 = vsel %vm632, %v4005, 0
        %v4085 = vsel %vm632, %v4006, 0
        %v4088 = vsel %vm632, %v4007, 0
        %v4091 = vsel %vm632, %v4008, 0
        %v4094 = vsel %vm632, %v4009, 0
        %v4097 = vsel %vm632, %v4010, 0
        %v4100 = vsel %vm632, %v4011, 0
        %v4103 = vsel %vm632, %v4012, 0
        %v4106 = vsel %vm632, %v4013, 0
        %v4109 = vsel %vm632, %v4014, 0
        %v4112 = vsel %vm632, %v4015, 0
        %4114 = vmatpush.msra.mxu0 0.0
        %4115 = vmatpush.msra.mxu0 0.0
        %4116 = vmatpush.msra.mxu0 0.0
        %4117 = vmatpush.msra.mxu0 0.0
        %4118 = vmatpush.msra.mxu0 0.0
        %4119 = vmatpush.msra.mxu0 0.0
        %4120 = vmatpush.msra.mxu0 0.0
        %4121 = vmatpush.msra.mxu0 0.0
        %4122 = vmatpush.msra.mxu0 0.0
        %4123 = vmatpush.msra.mxu0 0.0
        %4124 = vmatpush.msra.mxu0 0.0
        %4125 = vmatpush.msra.mxu0 0.0
        %4126 = vmatpush.msra.mxu0 0.0
        %4127 = vmatpush.msra.mxu0 0.0
        %4128 = vmatpush.msra.mxu0 0.0
        %4129 = vmatpush.msra.mxu0 %v4017
        %4130 = vmatmul.f32.gmra.mxu0 %v4019
        %v4131 = vpop.f32.mrf.mxu0
        %v4132 = vadd.f32 0.0, %v4131
        %4133 = vmatmul.f32.gmra.mxu0 %v4022
        %v4134 = vpop.f32.mrf.mxu0
        %v4135 = vadd.f32 0.0, %v4134
        %4136 = vmatmul.f32.gmra.mxu0 %v4025
        %v4137 = vpop.f32.mrf.mxu0
        %v4138 = vadd.f32 0.0, %v4137
        %4139 = vmatmul.f32.gmra.mxu0 %v4028
        %v4140 = vpop.f32.mrf.mxu0
        %v4141 = vadd.f32 0.0, %v4140
        %4142 = vmatmul.f32.gmra.mxu0 %v4031
        %v4143 = vpop.f32.mrf.mxu0
        %v4144 = vadd.f32 0.0, %v4143
        %4145 = vmatmul.f32.gmra.mxu0 %v4034
        %v4146 = vpop.f32.mrf.mxu0
        %v4147 = vadd.f32 0.0, %v4146
        %4148 = vmatmul.f32.gmra.mxu0 %v4037
        %v4149 = vpop.f32.mrf.mxu0
        %v4150 = vadd.f32 0.0, %v4149
        %4151 = vmatmul.f32.gmra.mxu0 %v4040
        %v4152 = vpop.f32.mrf.mxu0
        %v4153 = vadd.f32 0.0, %v4152
        %4154 = vmatmul.f32.gmra.mxu0 %v4043
        %v4155 = vpop.f32.mrf.mxu0
        %v4156 = vadd.f32 0.0, %v4155
        %4157 = vmatmul.f32.gmra.mxu0 %v4046
        %v4158 = vpop.f32.mrf.mxu0
        %v4159 = vadd.f32 0.0, %v4158
        %4160 = vmatmul.f32.gmra.mxu0 %v4049
        %v4161 = vpop.f32.mrf.mxu0
        %v4162 = vadd.f32 0.0, %v4161
        %4163 = vmatmul.f32.gmra.mxu0 %v4052
        %v4164 = vpop.f32.mrf.mxu0
        %v4165 = vadd.f32 0.0, %v4164
        %4166 = vmatmul.f32.gmra.mxu0 %v4055
        %v4167 = vpop.f32.mrf.mxu0
        %v4168 = vadd.f32 0.0, %v4167
        %4169 = vmatmul.f32.gmra.mxu0 %v4058
        %v4170 = vpop.f32.mrf.mxu0
        %v4171 = vadd.f32 0.0, %v4170
        %4172 = vmatmul.f32.gmra.mxu0 %v4061
        %v4173 = vpop.f32.mrf.mxu0
        %v4174 = vadd.f32 0.0, %v4173
        %4175 = vmatmul.f32.gmra.mxu0 %v4064
        %v4176 = vpop.f32.mrf.mxu0
        %v4177 = vadd.f32 0.0, %v4176
        %4178 = vmatmul.f32.gmra.mxu0 %v4067
        %v4179 = vpop.f32.mrf.mxu0
        %v4180 = vadd.f32 0.0, %v4179
        %4181 = vmatmul.f32.gmra.mxu0 %v4070
        %v4182 = vpop.f32.mrf.mxu0
        %v4183 = vadd.f32 0.0, %v4182
        %4184 = vmatmul.f32.gmra.mxu0 %v4073
        %v4185 = vpop.f32.mrf.mxu0
        %v4186 = vadd.f32 0.0, %v4185
        %4187 = vmatmul.f32.gmra.mxu0 %v4076
        %v4188 = vpop.f32.mrf.mxu0
        %v4189 = vadd.f32 0.0, %v4188
        %4190 = vmatmul.f32.gmra.mxu0 %v4079
        %v4191 = vpop.f32.mrf.mxu0
        %v4192 = vadd.f32 0.0, %v4191
        %4193 = vmatmul.f32.gmra.mxu0 %v4082
        %v4194 = vpop.f32.mrf.mxu0
        %v4195 = vadd.f32 0.0, %v4194
        %4196 = vmatmul.f32.gmra.mxu0 %v4085
        %v4197 = vpop.f32.mrf.mxu0
        %v4198 = vadd.f32 0.0, %v4197
        %4199 = vmatmul.f32.gmra.mxu0 %v4088
        %v4200 = vpop.f32.mrf.mxu0
        %v4201 = vadd.f32 0.0, %v4200
        %4202 = vmatmul.f32.gmra.mxu0 %v4091
        %v4203 = vpop.f32.mrf.mxu0
        %v4204 = vadd.f32 0.0, %v4203
        %4205 = vmatmul.f32.gmra.mxu0 %v4094
        %v4206 = vpop.f32.mrf.mxu0
        %v4207 = vadd.f32 0.0, %v4206
        %4208 = vmatmul.f32.gmra.mxu0 %v4097
        %v4209 = vpop.f32.mrf.mxu0
        %v4210 = vadd.f32 0.0, %v4209
        %4211 = vmatmul.f32.gmra.mxu0 %v4100
        %v4212 = vpop.f32.mrf.mxu0
        %v4213 = vadd.f32 0.0, %v4212
        %4214 = vmatmul.f32.gmra.mxu0 %v4103
        %v4215 = vpop.f32.mrf.mxu0
        %v4216 = vadd.f32 0.0, %v4215
        %4217 = vmatmul.f32.gmra.mxu0 %v4106
        %v4218 = vpop.f32.mrf.mxu0
        %v4219 = vadd.f32 0.0, %v4218
        %4220 = vmatmul.f32.gmra.mxu0 %v4109
        %v4221 = vpop.f32.mrf.mxu0
        %v4222 = vadd.f32 0.0, %v4221
        %4223 = vmatmul.f32.gmra.mxu0 %v4112
        %v4224 = vpop.f32.mrf.mxu0
        %v4225 = vadd.f32 0.0, %v4224
        %4226 = vdwg.mxu0
        %v4227 = vadd.f32 %v3952, %v4132
        %v4228 = vadd.f32 %v3953, %v4135
        %v4229 = vadd.f32 %v3954, %v4138
        %v4230 = vadd.f32 %v3955, %v4141
        %v4231 = vadd.f32 %v3956, %v4144
        %v4232 = vadd.f32 %v3957, %v4147
        %v4233 = vadd.f32 %v3958, %v4150
        %v4234 = vadd.f32 %v3959, %v4153
        %v4235 = vadd.f32 %v3960, %v4156
        %v4236 = vadd.f32 %v3961, %v4159
        %v4237 = vadd.f32 %v3962, %v4162
        %v4238 = vadd.f32 %v3963, %v4165
        %v4239 = vadd.f32 %v3964, %v4168
        %v4240 = vadd.f32 %v3965, %v4171
        %v4241 = vadd.f32 %v3966, %v4174
        %v4242 = vadd.f32 %v3967, %v4177
        %v4243 = vadd.f32 %v3968, %v4180
        %v4244 = vadd.f32 %v3969, %v4183
        %v4245 = vadd.f32 %v3970, %v4186
        %v4246 = vadd.f32 %v3971, %v4189
        %v4247 = vadd.f32 %v3972, %v4192
        %v4248 = vadd.f32 %v3973, %v4195
        %v4249 = vadd.f32 %v3974, %v4198
        %v4250 = vadd.f32 %v3975, %v4201
        %v4251 = vadd.f32 %v3976, %v4204
        %v4252 = vadd.f32 %v3977, %v4207
        %v4253 = vadd.f32 %v3978, %v4210
        %v4254 = vadd.f32 %v3979, %v4213
        %v4255 = vadd.f32 %v3980, %v4216
        %v4256 = vadd.f32 %v3981, %v4219
        %v4257 = vadd.f32 %v3982, %v4222
        %v4258 = vadd.f32 %v3983, %v4225
        %v4259 = vld [vmem:[#allocation2 + $0x2] sm:$0xff]
        %v4260 = vld [vmem:[#allocation2 + $0xa] sm:$0xff]
        %v4261 = vld [vmem:[#allocation2 + $0x1a] sm:$0xff]
        %v4262 = vld [vmem:[#allocation2 + $0x22] sm:$0xff]
        %v4263 = vld [vmem:[#allocation2 + $0x32] sm:$0xff]
        %v4264 = vld [vmem:[#allocation2 + $0x3a] sm:$0xff]
        %v4265 = vld [vmem:[#allocation2 + $0x4a] sm:$0xff]
        %v4266 = vld [vmem:[#allocation2 + $0x52] sm:$0xff]
        %v4267 = vld [vmem:[#allocation2 + $0x62] sm:$0xff]
        %v4268 = vld [vmem:[#allocation2 + $0x6a] sm:$0xff]
        %v4269 = vld [vmem:[#allocation2 + $0x7a] sm:$0xff]
        %v4270 = vld [vmem:[#allocation2 + $0x82] sm:$0xff]
        %v4271 = vld [vmem:[#allocation2 + $0x92] sm:$0xff]
        %v4272 = vld [vmem:[#allocation2 + $0x9a] sm:$0xff]
        %v4273 = vld [vmem:[#allocation2 + $0xaa] sm:$0xff]
        %v4274 = vld [vmem:[#allocation2 + $0xb2] sm:$0xff]
        %v4275 = vld [vmem:[#allocation2 + $0xc2] sm:$0xff]
        %v4276 = vld [vmem:[#allocation2 + $0xca] sm:$0xff]
        %v4277 = vld [vmem:[#allocation2 + $0xda] sm:$0xff]
        %v4278 = vld [vmem:[#allocation2 + $0xe2] sm:$0xff]
        %v4279 = vld [vmem:[#allocation2 + $0xf2] sm:$0xff]
        %v4280 = vld [vmem:[#allocation2 + $0xfa] sm:$0xff]
        %v4281 = vld [vmem:[#allocation2 + $0x10a] sm:$0xff]
        %v4282 = vld [vmem:[#allocation2 + $0x112] sm:$0xff]
        %v4283 = vld [vmem:[#allocation2 + $0x122] sm:$0xff]
        %v4284 = vld [vmem:[#allocation2 + $0x12a] sm:$0xff]
        %v4285 = vld [vmem:[#allocation2 + $0x13a] sm:$0xff]
        %v4286 = vld [vmem:[#allocation2 + $0x142] sm:$0xff]
        %v4287 = vld [vmem:[#allocation2 + $0x152] sm:$0xff]
        %v4288 = vld [vmem:[#allocation2 + $0x15a] sm:$0xff]
        %v4289 = vld [vmem:[#allocation2 + $0x16a] sm:$0xff]
        %v4290 = vld [vmem:[#allocation2 + $0x172] sm:$0xff]
        %s4291 = scalar_lea.vmem %s9, 16
        %v4292 = vld [vmem:[%s4291] sm:$0xff]
        %v4294 = vsel %vm632, %v4259, 0
        %v4297 = vsel %vm632, %v4260, 0
        %v4300 = vsel %vm632, %v4261, 0
        %v4303 = vsel %vm632, %v4262, 0
        %v4306 = vsel %vm632, %v4263, 0
        %v4309 = vsel %vm632, %v4264, 0
        %v4312 = vsel %vm632, %v4265, 0
        %v4315 = vsel %vm632, %v4266, 0
        %v4318 = vsel %vm632, %v4267, 0
        %v4321 = vsel %vm632, %v4268, 0
        %v4324 = vsel %vm632, %v4269, 0
        %v4327 = vsel %vm632, %v4270, 0
        %v4330 = vsel %vm632, %v4271, 0
        %v4333 = vsel %vm632, %v4272, 0
        %v4336 = vsel %vm632, %v4273, 0
        %v4339 = vsel %vm632, %v4274, 0
        %v4342 = vsel %vm632, %v4275, 0
        %v4345 = vsel %vm632, %v4276, 0
        %v4348 = vsel %vm632, %v4277, 0
        %v4351 = vsel %vm632, %v4278, 0
        %v4354 = vsel %vm632, %v4279, 0
        %v4357 = vsel %vm632, %v4280, 0
        %v4360 = vsel %vm632, %v4281, 0
        %v4363 = vsel %vm632, %v4282, 0
        %v4366 = vsel %vm632, %v4283, 0
        %v4369 = vsel %vm632, %v4284, 0
        %v4372 = vsel %vm632, %v4285, 0
        %v4375 = vsel %vm632, %v4286, 0
        %v4378 = vsel %vm632, %v4287, 0
        %v4381 = vsel %vm632, %v4288, 0
        %v4384 = vsel %vm632, %v4289, 0
        %v4387 = vsel %vm632, %v4290, 0
        %4389 = vmatpush.msra.mxu0 0.0
        %4390 = vmatpush.msra.mxu0 0.0
        %4391 = vmatpush.msra.mxu0 0.0
        %4392 = vmatpush.msra.mxu0 0.0
        %4393 = vmatpush.msra.mxu0 0.0
        %4394 = vmatpush.msra.mxu0 0.0
        %4395 = vmatpush.msra.mxu0 0.0
        %4396 = vmatpush.msra.mxu0 0.0
        %4397 = vmatpush.msra.mxu0 0.0
        %4398 = vmatpush.msra.mxu0 0.0
        %4399 = vmatpush.msra.mxu0 0.0
        %4400 = vmatpush.msra.mxu0 0.0
        %4401 = vmatpush.msra.mxu0 0.0
        %4402 = vmatpush.msra.mxu0 0.0
        %4403 = vmatpush.msra.mxu0 0.0
        %4404 = vmatpush.msra.mxu0 %v4292
        %4405 = vmatmul.f32.gmra.mxu0 %v4294
        %v4406 = vpop.f32.mrf.mxu0
        %v4407 = vadd.f32 0.0, %v4406
        %4408 = vmatmul.f32.gmra.mxu0 %v4297
        %v4409 = vpop.f32.mrf.mxu0
        %v4410 = vadd.f32 0.0, %v4409
        %4411 = vmatmul.f32.gmra.mxu0 %v4300
        %v4412 = vpop.f32.mrf.mxu0
        %v4413 = vadd.f32 0.0, %v4412
        %4414 = vmatmul.f32.gmra.mxu0 %v4303
        %v4415 = vpop.f32.mrf.mxu0
        %v4416 = vadd.f32 0.0, %v4415
        %4417 = vmatmul.f32.gmra.mxu0 %v4306
        %v4418 = vpop.f32.mrf.mxu0
        %v4419 = vadd.f32 0.0, %v4418
        %4420 = vmatmul.f32.gmra.mxu0 %v4309
        %v4421 = vpop.f32.mrf.mxu0
        %v4422 = vadd.f32 0.0, %v4421
        %4423 = vmatmul.f32.gmra.mxu0 %v4312
        %v4424 = vpop.f32.mrf.mxu0
        %v4425 = vadd.f32 0.0, %v4424
        %4426 = vmatmul.f32.gmra.mxu0 %v4315
        %v4427 = vpop.f32.mrf.mxu0
        %v4428 = vadd.f32 0.0, %v4427
        %4429 = vmatmul.f32.gmra.mxu0 %v4318
        %v4430 = vpop.f32.mrf.mxu0
        %v4431 = vadd.f32 0.0, %v4430
        %4432 = vmatmul.f32.gmra.mxu0 %v4321
        %v4433 = vpop.f32.mrf.mxu0
        %v4434 = vadd.f32 0.0, %v4433
        %4435 = vmatmul.f32.gmra.mxu0 %v4324
        %v4436 = vpop.f32.mrf.mxu0
        %v4437 = vadd.f32 0.0, %v4436
        %4438 = vmatmul.f32.gmra.mxu0 %v4327
        %v4439 = vpop.f32.mrf.mxu0
        %v4440 = vadd.f32 0.0, %v4439
        %4441 = vmatmul.f32.gmra.mxu0 %v4330
        %v4442 = vpop.f32.mrf.mxu0
        %v4443 = vadd.f32 0.0, %v4442
        %4444 = vmatmul.f32.gmra.mxu0 %v4333
        %v4445 = vpop.f32.mrf.mxu0
        %v4446 = vadd.f32 0.0, %v4445
        %4447 = vmatmul.f32.gmra.mxu0 %v4336
        %v4448 = vpop.f32.mrf.mxu0
        %v4449 = vadd.f32 0.0, %v4448
        %4450 = vmatmul.f32.gmra.mxu0 %v4339
        %v4451 = vpop.f32.mrf.mxu0
        %v4452 = vadd.f32 0.0, %v4451
        %4453 = vmatmul.f32.gmra.mxu0 %v4342
        %v4454 = vpop.f32.mrf.mxu0
        %v4455 = vadd.f32 0.0, %v4454
        %4456 = vmatmul.f32.gmra.mxu0 %v4345
        %v4457 = vpop.f32.mrf.mxu0
        %v4458 = vadd.f32 0.0, %v4457
        %4459 = vmatmul.f32.gmra.mxu0 %v4348
        %v4460 = vpop.f32.mrf.mxu0
        %v4461 = vadd.f32 0.0, %v4460
        %4462 = vmatmul.f32.gmra.mxu0 %v4351
        %v4463 = vpop.f32.mrf.mxu0
        %v4464 = vadd.f32 0.0, %v4463
        %4465 = vmatmul.f32.gmra.mxu0 %v4354
        %v4466 = vpop.f32.mrf.mxu0
        %v4467 = vadd.f32 0.0, %v4466
        %4468 = vmatmul.f32.gmra.mxu0 %v4357
        %v4469 = vpop.f32.mrf.mxu0
        %v4470 = vadd.f32 0.0, %v4469
        %4471 = vmatmul.f32.gmra.mxu0 %v4360
        %v4472 = vpop.f32.mrf.mxu0
        %v4473 = vadd.f32 0.0, %v4472
        %4474 = vmatmul.f32.gmra.mxu0 %v4363
        %v4475 = vpop.f32.mrf.mxu0
        %v4476 = vadd.f32 0.0, %v4475
        %4477 = vmatmul.f32.gmra.mxu0 %v4366
        %v4478 = vpop.f32.mrf.mxu0
        %v4479 = vadd.f32 0.0, %v4478
        %4480 = vmatmul.f32.gmra.mxu0 %v4369
        %v4481 = vpop.f32.mrf.mxu0
        %v4482 = vadd.f32 0.0, %v4481
        %4483 = vmatmul.f32.gmra.mxu0 %v4372
        %v4484 = vpop.f32.mrf.mxu0
        %v4485 = vadd.f32 0.0, %v4484
        %4486 = vmatmul.f32.gmra.mxu0 %v4375
        %v4487 = vpop.f32.mrf.mxu0
        %v4488 = vadd.f32 0.0, %v4487
        %4489 = vmatmul.f32.gmra.mxu0 %v4378
        %v4490 = vpop.f32.mrf.mxu0
        %v4491 = vadd.f32 0.0, %v4490
        %4492 = vmatmul.f32.gmra.mxu0 %v4381
        %v4493 = vpop.f32.mrf.mxu0
        %v4494 = vadd.f32 0.0, %v4493
        %4495 = vmatmul.f32.gmra.mxu0 %v4384
        %v4496 = vpop.f32.mrf.mxu0
        %v4497 = vadd.f32 0.0, %v4496
        %4498 = vmatmul.f32.gmra.mxu0 %v4387
        %v4499 = vpop.f32.mrf.mxu0
        %v4500 = vadd.f32 0.0, %v4499
        %4501 = vdwg.mxu0
        %v4502 = vadd.f32 %v4227, %v4407
        %v4503 = vadd.f32 %v4228, %v4410
        %v4504 = vadd.f32 %v4229, %v4413
        %v4505 = vadd.f32 %v4230, %v4416
        %v4506 = vadd.f32 %v4231, %v4419
        %v4507 = vadd.f32 %v4232, %v4422
        %v4508 = vadd.f32 %v4233, %v4425
        %v4509 = vadd.f32 %v4234, %v4428
        %v4510 = vadd.f32 %v4235, %v4431
        %v4511 = vadd.f32 %v4236, %v4434
        %v4512 = vadd.f32 %v4237, %v4437
        %v4513 = vadd.f32 %v4238, %v4440
        %v4514 = vadd.f32 %v4239, %v4443
        %v4515 = vadd.f32 %v4240, %v4446
        %v4516 = vadd.f32 %v4241, %v4449
        %v4517 = vadd.f32 %v4242, %v4452
        %v4518 = vadd.f32 %v4243, %v4455
        %v4519 = vadd.f32 %v4244, %v4458
        %v4520 = vadd.f32 %v4245, %v4461
        %v4521 = vadd.f32 %v4246, %v4464
        %v4522 = vadd.f32 %v4247, %v4467
        %v4523 = vadd.f32 %v4248, %v4470
        %v4524 = vadd.f32 %v4249, %v4473
        %v4525 = vadd.f32 %v4250, %v4476
        %v4526 = vadd.f32 %v4251, %v4479
        %v4527 = vadd.f32 %v4252, %v4482
        %v4528 = vadd.f32 %v4253, %v4485
        %v4529 = vadd.f32 %v4254, %v4488
        %v4530 = vadd.f32 %v4255, %v4491
        %v4531 = vadd.f32 %v4256, %v4494
        %v4532 = vadd.f32 %v4257, %v4497
        %v4533 = vadd.f32 %v4258, %v4500
        %v4534 = vld [vmem:[%s3672] sm:$0xff]
        %v4535 = vld [vmem:[%s3672 + $0x8] sm:$0xff]
        %v4536 = vld [vmem:[%s3672 + $0x18] sm:$0xff]
        %v4537 = vld [vmem:[%s3672 + $0x20] sm:$0xff]
        %v4538 = vld [vmem:[%s3672 + $0x30] sm:$0xff]
        %v4539 = vld [vmem:[%s3672 + $0x38] sm:$0xff]
        %v4540 = vld [vmem:[%s3672 + $0x48] sm:$0xff]
        %v4541 = vld [vmem:[%s3672 + $0x50] sm:$0xff]
        %v4542 = vld [vmem:[%s3672 + $0x60] sm:$0xff]
        %v4543 = vld [vmem:[%s3672 + $0x68] sm:$0xff]
        %v4544 = vld [vmem:[%s3672 + $0x78] sm:$0xff]
        %v4545 = vld [vmem:[%s3672 + $0x80] sm:$0xff]
        %v4546 = vld [vmem:[%s3672 + $0x90] sm:$0xff]
        %v4547 = vld [vmem:[%s3672 + $0x98] sm:$0xff]
        %v4548 = vld [vmem:[%s3672 + $0xa8] sm:$0xff]
        %v4549 = vld [vmem:[%s3672 + $0xb0] sm:$0xff]
        %v4550 = vld [vmem:[%s3672 + $0xc0] sm:$0xff]
        %v4551 = vld [vmem:[%s3672 + $0xc8] sm:$0xff]
        %v4552 = vld [vmem:[%s3672 + $0xd8] sm:$0xff]
        %v4553 = vld [vmem:[%s3672 + $0xe0] sm:$0xff]
        %v4554 = vld [vmem:[%s3672 + $0xf0] sm:$0xff]
        %v4555 = vld [vmem:[%s3672 + $0xf8] sm:$0xff]
        %v4556 = vld [vmem:[%s3672 + $0x108] sm:$0xff]
        %v4557 = vld [vmem:[%s3672 + $0x110] sm:$0xff]
        %v4558 = vld [vmem:[%s3672 + $0x120] sm:$0xff]
        %v4559 = vld [vmem:[%s3672 + $0x128] sm:$0xff]
        %v4560 = vld [vmem:[%s3672 + $0x138] sm:$0xff]
        %v4561 = vld [vmem:[%s3672 + $0x140] sm:$0xff]
        %v4562 = vld [vmem:[%s3672 + $0x150] sm:$0xff]
        %v4563 = vld [vmem:[%s3672 + $0x158] sm:$0xff]
        %v4564 = vld [vmem:[%s3672 + $0x168] sm:$0xff]
        %v4565 = vld [vmem:[%s3672 + $0x170] sm:$0xff]
        %s4566 = scalar_lea.vmem %s9, 24
        %v4567 = vld [vmem:[%s4566] sm:$0xff]
        %v4569 = vsel %vm632, %v4534, 0
        %v4572 = vsel %vm632, %v4535, 0
        %v4575 = vsel %vm632, %v4536, 0
        %v4578 = vsel %vm632, %v4537, 0
        %v4581 = vsel %vm632, %v4538, 0
        %v4584 = vsel %vm632, %v4539, 0
        %v4587 = vsel %vm632, %v4540, 0
        %v4590 = vsel %vm632, %v4541, 0
        %v4593 = vsel %vm632, %v4542, 0
        %v4596 = vsel %vm632, %v4543, 0
        %v4599 = vsel %vm632, %v4544, 0
        %v4602 = vsel %vm632, %v4545, 0
        %v4605 = vsel %vm632, %v4546, 0
        %v4608 = vsel %vm632, %v4547, 0
        %v4611 = vsel %vm632, %v4548, 0
        %v4614 = vsel %vm632, %v4549, 0
        %v4617 = vsel %vm632, %v4550, 0
        %v4620 = vsel %vm632, %v4551, 0
        %v4623 = vsel %vm632, %v4552, 0
        %v4626 = vsel %vm632, %v4553, 0
        %v4629 = vsel %vm632, %v4554, 0
        %v4632 = vsel %vm632, %v4555, 0
        %v4635 = vsel %vm632, %v4556, 0
        %v4638 = vsel %vm632, %v4557, 0
        %v4641 = vsel %vm632, %v4558, 0
        %v4644 = vsel %vm632, %v4559, 0
        %v4647 = vsel %vm632, %v4560, 0
        %v4650 = vsel %vm632, %v4561, 0
        %v4653 = vsel %vm632, %v4562, 0
        %v4656 = vsel %vm632, %v4563, 0
        %v4659 = vsel %vm632, %v4564, 0
        %v4662 = vsel %vm632, %v4565, 0
        %4664 = vmatpush.msra.mxu0 0.0
        %4665 = vmatpush.msra.mxu0 0.0
        %4666 = vmatpush.msra.mxu0 0.0
        %4667 = vmatpush.msra.mxu0 0.0
        %4668 = vmatpush.msra.mxu0 0.0
        %4669 = vmatpush.msra.mxu0 0.0
        %4670 = vmatpush.msra.mxu0 0.0
        %4671 = vmatpush.msra.mxu0 0.0
        %4672 = vmatpush.msra.mxu0 0.0
        %4673 = vmatpush.msra.mxu0 0.0
        %4674 = vmatpush.msra.mxu0 0.0
        %4675 = vmatpush.msra.mxu0 0.0
        %4676 = vmatpush.msra.mxu0 0.0
        %4677 = vmatpush.msra.mxu0 0.0
        %4678 = vmatpush.msra.mxu0 0.0
        %4679 = vmatpush.msra.mxu0 %v4567
        %4680 = vmatmul.f32.gmra.mxu0 %v4569
        %v4681 = vpop.f32.mrf.mxu0
        %v4682 = vadd.f32 0.0, %v4681
        %4683 = vmatmul.f32.gmra.mxu0 %v4572
        %v4684 = vpop.f32.mrf.mxu0
        %v4685 = vadd.f32 0.0, %v4684
        %4686 = vmatmul.f32.gmra.mxu0 %v4575
        %v4687 = vpop.f32.mrf.mxu0
        %v4688 = vadd.f32 0.0, %v4687
        %4689 = vmatmul.f32.gmra.mxu0 %v4578
        %v4690 = vpop.f32.mrf.mxu0
        %v4691 = vadd.f32 0.0, %v4690
        %4692 = vmatmul.f32.gmra.mxu0 %v4581
        %v4693 = vpop.f32.mrf.mxu0
        %v4694 = vadd.f32 0.0, %v4693
        %4695 = vmatmul.f32.gmra.mxu0 %v4584
        %v4696 = vpop.f32.mrf.mxu0
        %v4697 = vadd.f32 0.0, %v4696
        %4698 = vmatmul.f32.gmra.mxu0 %v4587
        %v4699 = vpop.f32.mrf.mxu0
        %v4700 = vadd.f32 0.0, %v4699
        %4701 = vmatmul.f32.gmra.mxu0 %v4590
        %v4702 = vpop.f32.mrf.mxu0
        %v4703 = vadd.f32 0.0, %v4702
        %4704 = vmatmul.f32.gmra.mxu0 %v4593
        %v4705 = vpop.f32.mrf.mxu0
        %v4706 = vadd.f32 0.0, %v4705
        %4707 = vmatmul.f32.gmra.mxu0 %v4596
        %v4708 = vpop.f32.mrf.mxu0
        %v4709 = vadd.f32 0.0, %v4708
        %4710 = vmatmul.f32.gmra.mxu0 %v4599
        %v4711 = vpop.f32.mrf.mxu0
        %v4712 = vadd.f32 0.0, %v4711
        %4713 = vmatmul.f32.gmra.mxu0 %v4602
        %v4714 = vpop.f32.mrf.mxu0
        %v4715 = vadd.f32 0.0, %v4714
        %4716 = vmatmul.f32.gmra.mxu0 %v4605
        %v4717 = vpop.f32.mrf.mxu0
        %v4718 = vadd.f32 0.0, %v4717
        %4719 = vmatmul.f32.gmra.mxu0 %v4608
        %v4720 = vpop.f32.mrf.mxu0
        %v4721 = vadd.f32 0.0, %v4720
        %4722 = vmatmul.f32.gmra.mxu0 %v4611
        %v4723 = vpop.f32.mrf.mxu0
        %v4724 = vadd.f32 0.0, %v4723
        %4725 = vmatmul.f32.gmra.mxu0 %v4614
        %v4726 = vpop.f32.mrf.mxu0
        %v4727 = vadd.f32 0.0, %v4726
        %4728 = vmatmul.f32.gmra.mxu0 %v4617
        %v4729 = vpop.f32.mrf.mxu0
        %v4730 = vadd.f32 0.0, %v4729
        %4731 = vmatmul.f32.gmra.mxu0 %v4620
        %v4732 = vpop.f32.mrf.mxu0
        %v4733 = vadd.f32 0.0, %v4732
        %4734 = vmatmul.f32.gmra.mxu0 %v4623
        %v4735 = vpop.f32.mrf.mxu0
        %v4736 = vadd.f32 0.0, %v4735
        %4737 = vmatmul.f32.gmra.mxu0 %v4626
        %v4738 = vpop.f32.mrf.mxu0
        %v4739 = vadd.f32 0.0, %v4738
        %4740 = vmatmul.f32.gmra.mxu0 %v4629
        %v4741 = vpop.f32.mrf.mxu0
        %v4742 = vadd.f32 0.0, %v4741
        %4743 = vmatmul.f32.gmra.mxu0 %v4632
        %v4744 = vpop.f32.mrf.mxu0
        %v4745 = vadd.f32 0.0, %v4744
        %4746 = vmatmul.f32.gmra.mxu0 %v4635
        %v4747 = vpop.f32.mrf.mxu0
        %v4748 = vadd.f32 0.0, %v4747
        %4749 = vmatmul.f32.gmra.mxu0 %v4638
        %v4750 = vpop.f32.mrf.mxu0
        %v4751 = vadd.f32 0.0, %v4750
        %4752 = vmatmul.f32.gmra.mxu0 %v4641
        %v4753 = vpop.f32.mrf.mxu0
        %v4754 = vadd.f32 0.0, %v4753
        %4755 = vmatmul.f32.gmra.mxu0 %v4644
        %v4756 = vpop.f32.mrf.mxu0
        %v4757 = vadd.f32 0.0, %v4756
        %4758 = vmatmul.f32.gmra.mxu0 %v4647
        %v4759 = vpop.f32.mrf.mxu0
        %v4760 = vadd.f32 0.0, %v4759
        %4761 = vmatmul.f32.gmra.mxu0 %v4650
        %v4762 = vpop.f32.mrf.mxu0
        %v4763 = vadd.f32 0.0, %v4762
        %4764 = vmatmul.f32.gmra.mxu0 %v4653
        %v4765 = vpop.f32.mrf.mxu0
        %v4766 = vadd.f32 0.0, %v4765
        %4767 = vmatmul.f32.gmra.mxu0 %v4656
        %v4768 = vpop.f32.mrf.mxu0
        %v4769 = vadd.f32 0.0, %v4768
        %4770 = vmatmul.f32.gmra.mxu0 %v4659
        %v4771 = vpop.f32.mrf.mxu0
        %v4772 = vadd.f32 0.0, %v4771
        %4773 = vmatmul.f32.gmra.mxu0 %v4662
        %v4774 = vpop.f32.mrf.mxu0
        %v4775 = vadd.f32 0.0, %v4774
        %4776 = vdwg.mxu0
        %v4777 = vadd.f32 %v4502, %v4682
        %v4778 = vadd.f32 %v4503, %v4685
        %v4779 = vadd.f32 %v4504, %v4688
        %v4780 = vadd.f32 %v4505, %v4691
        %v4781 = vadd.f32 %v4506, %v4694
        %v4782 = vadd.f32 %v4507, %v4697
        %v4783 = vadd.f32 %v4508, %v4700
        %v4784 = vadd.f32 %v4509, %v4703
        %v4785 = vadd.f32 %v4510, %v4706
        %v4786 = vadd.f32 %v4511, %v4709
        %v4787 = vadd.f32 %v4512, %v4712
        %v4788 = vadd.f32 %v4513, %v4715
        %v4789 = vadd.f32 %v4514, %v4718
        %v4790 = vadd.f32 %v4515, %v4721
        %v4791 = vadd.f32 %v4516, %v4724
        %v4792 = vadd.f32 %v4517, %v4727
        %v4793 = vadd.f32 %v4518, %v4730
        %v4794 = vadd.f32 %v4519, %v4733
        %v4795 = vadd.f32 %v4520, %v4736
        %v4796 = vadd.f32 %v4521, %v4739
        %v4797 = vadd.f32 %v4522, %v4742
        %v4798 = vadd.f32 %v4523, %v4745
        %v4799 = vadd.f32 %v4524, %v4748
        %v4800 = vadd.f32 %v4525, %v4751
        %v4801 = vadd.f32 %v4526, %v4754
        %v4802 = vadd.f32 %v4527, %v4757
        %v4803 = vadd.f32 %v4528, %v4760
        %v4804 = vadd.f32 %v4529, %v4763
        %v4805 = vadd.f32 %v4530, %v4766
        %v4806 = vadd.f32 %v4531, %v4769
        %v4807 = vadd.f32 %v4532, %v4772
        %v4808 = vadd.f32 %v4533, %v4775
        %v4809 = vld [vmem:[%s3672 + $0x1] sm:$0xff]
        %v4810 = vld [vmem:[%s3672 + $0x9] sm:$0xff]
        %v4811 = vld [vmem:[%s3672 + $0x19] sm:$0xff]
        %v4812 = vld [vmem:[%s3672 + $0x21] sm:$0xff]
        %v4813 = vld [vmem:[%s3672 + $0x31] sm:$0xff]
        %v4814 = vld [vmem:[%s3672 + $0x39] sm:$0xff]
        %v4815 = vld [vmem:[%s3672 + $0x49] sm:$0xff]
        %v4816 = vld [vmem:[%s3672 + $0x51] sm:$0xff]
        %v4817 = vld [vmem:[%s3672 + $0x61] sm:$0xff]
        %v4818 = vld [vmem:[%s3672 + $0x69] sm:$0xff]
        %v4819 = vld [vmem:[%s3672 + $0x79] sm:$0xff]
        %v4820 = vld [vmem:[%s3672 + $0x81] sm:$0xff]
        %v4821 = vld [vmem:[%s3672 + $0x91] sm:$0xff]
        %v4822 = vld [vmem:[%s3672 + $0x99] sm:$0xff]
        %v4823 = vld [vmem:[%s3672 + $0xa9] sm:$0xff]
        %v4824 = vld [vmem:[%s3672 + $0xb1] sm:$0xff]
        %v4825 = vld [vmem:[%s3672 + $0xc1] sm:$0xff]
        %v4826 = vld [vmem:[%s3672 + $0xc9] sm:$0xff]
        %v4827 = vld [vmem:[%s3672 + $0xd9] sm:$0xff]
        %v4828 = vld [vmem:[%s3672 + $0xe1] sm:$0xff]
        %v4829 = vld [vmem:[%s3672 + $0xf1] sm:$0xff]
        %v4830 = vld [vmem:[%s3672 + $0xf9] sm:$0xff]
        %v4831 = vld [vmem:[%s3672 + $0x109] sm:$0xff]
        %v4832 = vld [vmem:[%s3672 + $0x111] sm:$0xff]
        %v4833 = vld [vmem:[%s3672 + $0x121] sm:$0xff]
        %v4834 = vld [vmem:[%s3672 + $0x129] sm:$0xff]
        %v4835 = vld [vmem:[%s3672 + $0x139] sm:$0xff]
        %v4836 = vld [vmem:[%s3672 + $0x141] sm:$0xff]
        %v4837 = vld [vmem:[%s3672 + $0x151] sm:$0xff]
        %v4838 = vld [vmem:[%s3672 + $0x159] sm:$0xff]
        %v4839 = vld [vmem:[%s3672 + $0x169] sm:$0xff]
        %v4840 = vld [vmem:[%s3672 + $0x171] sm:$0xff]
        %s4841 = scalar_lea.vmem %s9, 32
        %v4842 = vld [vmem:[%s4841] sm:$0xff]
        %v4844 = vsel %vm632, %v4809, 0
        %v4847 = vsel %vm632, %v4810, 0
        %v4850 = vsel %vm632, %v4811, 0
        %v4853 = vsel %vm632, %v4812, 0
        %v4856 = vsel %vm632, %v4813, 0
        %v4859 = vsel %vm632, %v4814, 0
        %v4862 = vsel %vm632, %v4815, 0
        %v4865 = vsel %vm632, %v4816, 0
        %v4868 = vsel %vm632, %v4817, 0
        %v4871 = vsel %vm632, %v4818, 0
        %v4874 = vsel %vm632, %v4819, 0
        %v4877 = vsel %vm632, %v4820, 0
        %v4880 = vsel %vm632, %v4821, 0
        %v4883 = vsel %vm632, %v4822, 0
        %v4886 = vsel %vm632, %v4823, 0
        %v4889 = vsel %vm632, %v4824, 0
        %v4892 = vsel %vm632, %v4825, 0
        %v4895 = vsel %vm632, %v4826, 0
        %v4898 = vsel %vm632, %v4827, 0
        %v4901 = vsel %vm632, %v4828, 0
        %v4904 = vsel %vm632, %v4829, 0
        %v4907 = vsel %vm632, %v4830, 0
        %v4910 = vsel %vm632, %v4831, 0
        %v4913 = vsel %vm632, %v4832, 0
        %v4916 = vsel %vm632, %v4833, 0
        %v4919 = vsel %vm632, %v4834, 0
        %v4922 = vsel %vm632, %v4835, 0
        %v4925 = vsel %vm632, %v4836, 0
        %v4928 = vsel %vm632, %v4837, 0
        %v4931 = vsel %vm632, %v4838, 0
        %v4934 = vsel %vm632, %v4839, 0
        %v4937 = vsel %vm632, %v4840, 0
        %4939 = vmatpush.msra.mxu0 0.0
        %4940 = vmatpush.msra.mxu0 0.0
        %4941 = vmatpush.msra.mxu0 0.0
        %4942 = vmatpush.msra.mxu0 0.0
        %4943 = vmatpush.msra.mxu0 0.0
        %4944 = vmatpush.msra.mxu0 0.0
        %4945 = vmatpush.msra.mxu0 0.0
        %4946 = vmatpush.msra.mxu0 0.0
        %4947 = vmatpush.msra.mxu0 0.0
        %4948 = vmatpush.msra.mxu0 0.0
        %4949 = vmatpush.msra.mxu0 0.0
        %4950 = vmatpush.msra.mxu0 0.0
        %4951 = vmatpush.msra.mxu0 0.0
        %4952 = vmatpush.msra.mxu0 0.0
        %4953 = vmatpush.msra.mxu0 0.0
        %4954 = vmatpush.msra.mxu0 %v4842
        %4955 = vmatmul.f32.gmra.mxu0 %v4844
        %v4956 = vpop.f32.mrf.mxu0
        %v4957 = vadd.f32 0.0, %v4956
        %4958 = vmatmul.f32.gmra.mxu0 %v4847
        %v4959 = vpop.f32.mrf.mxu0
        %v4960 = vadd.f32 0.0, %v4959
        %4961 = vmatmul.f32.gmra.mxu0 %v4850
        %v4962 = vpop.f32.mrf.mxu0
        %v4963 = vadd.f32 0.0, %v4962
        %4964 = vmatmul.f32.gmra.mxu0 %v4853
        %v4965 = vpop.f32.mrf.mxu0
        %v4966 = vadd.f32 0.0, %v4965
        %4967 = vmatmul.f32.gmra.mxu0 %v4856
        %v4968 = vpop.f32.mrf.mxu0
        %v4969 = vadd.f32 0.0, %v4968
        %4970 = vmatmul.f32.gmra.mxu0 %v4859
        %v4971 = vpop.f32.mrf.mxu0
        %v4972 = vadd.f32 0.0, %v4971
        %4973 = vmatmul.f32.gmra.mxu0 %v4862
        %v4974 = vpop.f32.mrf.mxu0
        %v4975 = vadd.f32 0.0, %v4974
        %4976 = vmatmul.f32.gmra.mxu0 %v4865
        %v4977 = vpop.f32.mrf.mxu0
        %v4978 = vadd.f32 0.0, %v4977
        %4979 = vmatmul.f32.gmra.mxu0 %v4868
        %v4980 = vpop.f32.mrf.mxu0
        %v4981 = vadd.f32 0.0, %v4980
        %4982 = vmatmul.f32.gmra.mxu0 %v4871
        %v4983 = vpop.f32.mrf.mxu0
        %v4984 = vadd.f32 0.0, %v4983
        %4985 = vmatmul.f32.gmra.mxu0 %v4874
        %v4986 = vpop.f32.mrf.mxu0
        %v4987 = vadd.f32 0.0, %v4986
        %4988 = vmatmul.f32.gmra.mxu0 %v4877
        %v4989 = vpop.f32.mrf.mxu0
        %v4990 = vadd.f32 0.0, %v4989
        %4991 = vmatmul.f32.gmra.mxu0 %v4880
        %v4992 = vpop.f32.mrf.mxu0
        %v4993 = vadd.f32 0.0, %v4992
        %4994 = vmatmul.f32.gmra.mxu0 %v4883
        %v4995 = vpop.f32.mrf.mxu0
        %v4996 = vadd.f32 0.0, %v4995
        %4997 = vmatmul.f32.gmra.mxu0 %v4886
        %v4998 = vpop.f32.mrf.mxu0
        %v4999 = vadd.f32 0.0, %v4998
        %5000 = vmatmul.f32.gmra.mxu0 %v4889
        %v5001 = vpop.f32.mrf.mxu0
        %v5002 = vadd.f32 0.0, %v5001
        %5003 = vmatmul.f32.gmra.mxu0 %v4892
        %v5004 = vpop.f32.mrf.mxu0
        %v5005 = vadd.f32 0.0, %v5004
        %5006 = vmatmul.f32.gmra.mxu0 %v4895
        %v5007 = vpop.f32.mrf.mxu0
        %v5008 = vadd.f32 0.0, %v5007
        %5009 = vmatmul.f32.gmra.mxu0 %v4898
        %v5010 = vpop.f32.mrf.mxu0
        %v5011 = vadd.f32 0.0, %v5010
        %5012 = vmatmul.f32.gmra.mxu0 %v4901
        %v5013 = vpop.f32.mrf.mxu0
        %v5014 = vadd.f32 0.0, %v5013
        %5015 = vmatmul.f32.gmra.mxu0 %v4904
        %v5016 = vpop.f32.mrf.mxu0
        %v5017 = vadd.f32 0.0, %v5016
        %5018 = vmatmul.f32.gmra.mxu0 %v4907
        %v5019 = vpop.f32.mrf.mxu0
        %v5020 = vadd.f32 0.0, %v5019
        %5021 = vmatmul.f32.gmra.mxu0 %v4910
        %v5022 = vpop.f32.mrf.mxu0
        %v5023 = vadd.f32 0.0, %v5022
        %5024 = vmatmul.f32.gmra.mxu0 %v4913
        %v5025 = vpop.f32.mrf.mxu0
        %v5026 = vadd.f32 0.0, %v5025
        %5027 = vmatmul.f32.gmra.mxu0 %v4916
        %v5028 = vpop.f32.mrf.mxu0
        %v5029 = vadd.f32 0.0, %v5028
        %5030 = vmatmul.f32.gmra.mxu0 %v4919
        %v5031 = vpop.f32.mrf.mxu0
        %v5032 = vadd.f32 0.0, %v5031
        %5033 = vmatmul.f32.gmra.mxu0 %v4922
        %v5034 = vpop.f32.mrf.mxu0
        %v5035 = vadd.f32 0.0, %v5034
        %5036 = vmatmul.f32.gmra.mxu0 %v4925
        %v5037 = vpop.f32.mrf.mxu0
        %v5038 = vadd.f32 0.0, %v5037
        %5039 = vmatmul.f32.gmra.mxu0 %v4928
        %v5040 = vpop.f32.mrf.mxu0
        %v5041 = vadd.f32 0.0, %v5040
        %5042 = vmatmul.f32.gmra.mxu0 %v4931
        %v5043 = vpop.f32.mrf.mxu0
        %v5044 = vadd.f32 0.0, %v5043
        %5045 = vmatmul.f32.gmra.mxu0 %v4934
        %v5046 = vpop.f32.mrf.mxu0
        %v5047 = vadd.f32 0.0, %v5046
        %5048 = vmatmul.f32.gmra.mxu0 %v4937
        %v5049 = vpop.f32.mrf.mxu0
        %v5050 = vadd.f32 0.0, %v5049
        %5051 = vdwg.mxu0
        %v5052 = vadd.f32 %v4777, %v4957
        %v5053 = vadd.f32 %v4778, %v4960
        %v5054 = vadd.f32 %v4779, %v4963
        %v5055 = vadd.f32 %v4780, %v4966
        %v5056 = vadd.f32 %v4781, %v4969
        %v5057 = vadd.f32 %v4782, %v4972
        %v5058 = vadd.f32 %v4783, %v4975
        %v5059 = vadd.f32 %v4784, %v4978
        %v5060 = vadd.f32 %v4785, %v4981
        %v5061 = vadd.f32 %v4786, %v4984
        %v5062 = vadd.f32 %v4787, %v4987
        %v5063 = vadd.f32 %v4788, %v4990
        %v5064 = vadd.f32 %v4789, %v4993
        %v5065 = vadd.f32 %v4790, %v4996
        %v5066 = vadd.f32 %v4791, %v4999
        %v5067 = vadd.f32 %v4792, %v5002
        %v5068 = vadd.f32 %v4793, %v5005
        %v5069 = vadd.f32 %v4794, %v5008
        %v5070 = vadd.f32 %v4795, %v5011
        %v5071 = vadd.f32 %v4796, %v5014
        %v5072 = vadd.f32 %v4797, %v5017
        %v5073 = vadd.f32 %v4798, %v5020
        %v5074 = vadd.f32 %v4799, %v5023
        %v5075 = vadd.f32 %v4800, %v5026
        %v5076 = vadd.f32 %v4801, %v5029
        %v5077 = vadd.f32 %v4802, %v5032
        %v5078 = vadd.f32 %v4803, %v5035
        %v5079 = vadd.f32 %v4804, %v5038
        %v5080 = vadd.f32 %v4805, %v5041
        %v5081 = vadd.f32 %v4806, %v5044
        %v5082 = vadd.f32 %v4807, %v5047
        %v5083 = vadd.f32 %v4808, %v5050
        %v5084 = vld [vmem:[%s3672 + $0x2] sm:$0xff]
        %v5085 = vld [vmem:[%s3672 + $0xa] sm:$0xff]
        %v5086 = vld [vmem:[%s3672 + $0x1a] sm:$0xff]
        %v5087 = vld [vmem:[%s3672 + $0x22] sm:$0xff]
        %v5088 = vld [vmem:[%s3672 + $0x32] sm:$0xff]
        %v5089 = vld [vmem:[%s3672 + $0x3a] sm:$0xff]
        %v5090 = vld [vmem:[%s3672 + $0x4a] sm:$0xff]
        %v5091 = vld [vmem:[%s3672 + $0x52] sm:$0xff]
        %v5092 = vld [vmem:[%s3672 + $0x62] sm:$0xff]
        %v5093 = vld [vmem:[%s3672 + $0x6a] sm:$0xff]
        %v5094 = vld [vmem:[%s3672 + $0x7a] sm:$0xff]
        %v5095 = vld [vmem:[%s3672 + $0x82] sm:$0xff]
        %v5096 = vld [vmem:[%s3672 + $0x92] sm:$0xff]
        %v5097 = vld [vmem:[%s3672 + $0x9a] sm:$0xff]
        %v5098 = vld [vmem:[%s3672 + $0xaa] sm:$0xff]
        %v5099 = vld [vmem:[%s3672 + $0xb2] sm:$0xff]
        %v5100 = vld [vmem:[%s3672 + $0xc2] sm:$0xff]
        %v5101 = vld [vmem:[%s3672 + $0xca] sm:$0xff]
        %v5102 = vld [vmem:[%s3672 + $0xda] sm:$0xff]
        %v5103 = vld [vmem:[%s3672 + $0xe2] sm:$0xff]
        %v5104 = vld [vmem:[%s3672 + $0xf2] sm:$0xff]
        %v5105 = vld [vmem:[%s3672 + $0xfa] sm:$0xff]
        %v5106 = vld [vmem:[%s3672 + $0x10a] sm:$0xff]
        %v5107 = vld [vmem:[%s3672 + $0x112] sm:$0xff]
        %v5108 = vld [vmem:[%s3672 + $0x122] sm:$0xff]
        %v5109 = vld [vmem:[%s3672 + $0x12a] sm:$0xff]
        %v5110 = vld [vmem:[%s3672 + $0x13a] sm:$0xff]
        %v5111 = vld [vmem:[%s3672 + $0x142] sm:$0xff]
        %v5112 = vld [vmem:[%s3672 + $0x152] sm:$0xff]
        %v5113 = vld [vmem:[%s3672 + $0x15a] sm:$0xff]
        %v5114 = vld [vmem:[%s3672 + $0x16a] sm:$0xff]
        %v5115 = vld [vmem:[%s3672 + $0x172] sm:$0xff]
        %s5116 = scalar_lea.vmem %s9, 40
        %v5117 = vld [vmem:[%s5116] sm:$0xff]
        %v5119 = vsel %vm632, %v5084, 0
        %v5122 = vsel %vm632, %v5085, 0
        %v5125 = vsel %vm632, %v5086, 0
        %v5128 = vsel %vm632, %v5087, 0
        %v5131 = vsel %vm632, %v5088, 0
        %v5134 = vsel %vm632, %v5089, 0
        %v5137 = vsel %vm632, %v5090, 0
        %v5140 = vsel %vm632, %v5091, 0
        %v5143 = vsel %vm632, %v5092, 0
        %v5146 = vsel %vm632, %v5093, 0
        %v5149 = vsel %vm632, %v5094, 0
        %v5152 = vsel %vm632, %v5095, 0
        %v5155 = vsel %vm632, %v5096, 0
        %v5158 = vsel %vm632, %v5097, 0
        %v5161 = vsel %vm632, %v5098, 0
        %v5164 = vsel %vm632, %v5099, 0
        %v5167 = vsel %vm632, %v5100, 0
        %v5170 = vsel %vm632, %v5101, 0
        %v5173 = vsel %vm632, %v5102, 0
        %v5176 = vsel %vm632, %v5103, 0
        %v5179 = vsel %vm632, %v5104, 0
        %v5182 = vsel %vm632, %v5105, 0
        %v5185 = vsel %vm632, %v5106, 0
        %v5188 = vsel %vm632, %v5107, 0
        %v5191 = vsel %vm632, %v5108, 0
        %v5194 = vsel %vm632, %v5109, 0
        %v5197 = vsel %vm632, %v5110, 0
        %v5200 = vsel %vm632, %v5111, 0
        %v5203 = vsel %vm632, %v5112, 0
        %v5206 = vsel %vm632, %v5113, 0
        %v5209 = vsel %vm632, %v5114, 0
        %v5212 = vsel %vm632, %v5115, 0
        %5214 = vmatpush.msra.mxu0 0.0
        %5215 = vmatpush.msra.mxu0 0.0
        %5216 = vmatpush.msra.mxu0 0.0
        %5217 = vmatpush.msra.mxu0 0.0
        %5218 = vmatpush.msra.mxu0 0.0
        %5219 = vmatpush.msra.mxu0 0.0
        %5220 = vmatpush.msra.mxu0 0.0
        %5221 = vmatpush.msra.mxu0 0.0
        %5222 = vmatpush.msra.mxu0 0.0
        %5223 = vmatpush.msra.mxu0 0.0
        %5224 = vmatpush.msra.mxu0 0.0
        %5225 = vmatpush.msra.mxu0 0.0
        %5226 = vmatpush.msra.mxu0 0.0
        %5227 = vmatpush.msra.mxu0 0.0
        %5228 = vmatpush.msra.mxu0 0.0
        %5229 = vmatpush.msra.mxu0 %v5117
        %5230 = vmatmul.f32.gmra.mxu0 %v5119
        %v5231 = vpop.f32.mrf.mxu0
        %v5232 = vadd.f32 0.0, %v5231
        %5233 = vmatmul.f32.gmra.mxu0 %v5122
        %v5234 = vpop.f32.mrf.mxu0
        %v5235 = vadd.f32 0.0, %v5234
        %5236 = vmatmul.f32.gmra.mxu0 %v5125
        %v5237 = vpop.f32.mrf.mxu0
        %v5238 = vadd.f32 0.0, %v5237
        %5239 = vmatmul.f32.gmra.mxu0 %v5128
        %v5240 = vpop.f32.mrf.mxu0
        %v5241 = vadd.f32 0.0, %v5240
        %5242 = vmatmul.f32.gmra.mxu0 %v5131
        %v5243 = vpop.f32.mrf.mxu0
        %v5244 = vadd.f32 0.0, %v5243
        %5245 = vmatmul.f32.gmra.mxu0 %v5134
        %v5246 = vpop.f32.mrf.mxu0
        %v5247 = vadd.f32 0.0, %v5246
        %5248 = vmatmul.f32.gmra.mxu0 %v5137
        %v5249 = vpop.f32.mrf.mxu0
        %v5250 = vadd.f32 0.0, %v5249
        %5251 = vmatmul.f32.gmra.mxu0 %v5140
        %v5252 = vpop.f32.mrf.mxu0
        %v5253 = vadd.f32 0.0, %v5252
        %5254 = vmatmul.f32.gmra.mxu0 %v5143
        %v5255 = vpop.f32.mrf.mxu0
        %v5256 = vadd.f32 0.0, %v5255
        %5257 = vmatmul.f32.gmra.mxu0 %v5146
        %v5258 = vpop.f32.mrf.mxu0
        %v5259 = vadd.f32 0.0, %v5258
        %5260 = vmatmul.f32.gmra.mxu0 %v5149
        %v5261 = vpop.f32.mrf.mxu0
        %v5262 = vadd.f32 0.0, %v5261
        %5263 = vmatmul.f32.gmra.mxu0 %v5152
        %v5264 = vpop.f32.mrf.mxu0
        %v5265 = vadd.f32 0.0, %v5264
        %5266 = vmatmul.f32.gmra.mxu0 %v5155
        %v5267 = vpop.f32.mrf.mxu0
        %v5268 = vadd.f32 0.0, %v5267
        %5269 = vmatmul.f32.gmra.mxu0 %v5158
        %v5270 = vpop.f32.mrf.mxu0
        %v5271 = vadd.f32 0.0, %v5270
        %5272 = vmatmul.f32.gmra.mxu0 %v5161
        %v5273 = vpop.f32.mrf.mxu0
        %v5274 = vadd.f32 0.0, %v5273
        %5275 = vmatmul.f32.gmra.mxu0 %v5164
        %v5276 = vpop.f32.mrf.mxu0
        %v5277 = vadd.f32 0.0, %v5276
        %5278 = vmatmul.f32.gmra.mxu0 %v5167
        %v5279 = vpop.f32.mrf.mxu0
        %v5280 = vadd.f32 0.0, %v5279
        %5281 = vmatmul.f32.gmra.mxu0 %v5170
        %v5282 = vpop.f32.mrf.mxu0
        %v5283 = vadd.f32 0.0, %v5282
        %5284 = vmatmul.f32.gmra.mxu0 %v5173
        %v5285 = vpop.f32.mrf.mxu0
        %v5286 = vadd.f32 0.0, %v5285
        %5287 = vmatmul.f32.gmra.mxu0 %v5176
        %v5288 = vpop.f32.mrf.mxu0
        %v5289 = vadd.f32 0.0, %v5288
        %5290 = vmatmul.f32.gmra.mxu0 %v5179
        %v5291 = vpop.f32.mrf.mxu0
        %v5292 = vadd.f32 0.0, %v5291
        %5293 = vmatmul.f32.gmra.mxu0 %v5182
        %v5294 = vpop.f32.mrf.mxu0
        %v5295 = vadd.f32 0.0, %v5294
        %5296 = vmatmul.f32.gmra.mxu0 %v5185
        %v5297 = vpop.f32.mrf.mxu0
        %v5298 = vadd.f32 0.0, %v5297
        %5299 = vmatmul.f32.gmra.mxu0 %v5188
        %v5300 = vpop.f32.mrf.mxu0
        %v5301 = vadd.f32 0.0, %v5300
        %5302 = vmatmul.f32.gmra.mxu0 %v5191
        %v5303 = vpop.f32.mrf.mxu0
        %v5304 = vadd.f32 0.0, %v5303
        %5305 = vmatmul.f32.gmra.mxu0 %v5194
        %v5306 = vpop.f32.mrf.mxu0
        %v5307 = vadd.f32 0.0, %v5306
        %5308 = vmatmul.f32.gmra.mxu0 %v5197
        %v5309 = vpop.f32.mrf.mxu0
        %v5310 = vadd.f32 0.0, %v5309
        %5311 = vmatmul.f32.gmra.mxu0 %v5200
        %v5312 = vpop.f32.mrf.mxu0
        %v5313 = vadd.f32 0.0, %v5312
        %5314 = vmatmul.f32.gmra.mxu0 %v5203
        %v5315 = vpop.f32.mrf.mxu0
        %v5316 = vadd.f32 0.0, %v5315
        %5317 = vmatmul.f32.gmra.mxu0 %v5206
        %v5318 = vpop.f32.mrf.mxu0
        %v5319 = vadd.f32 0.0, %v5318
        %5320 = vmatmul.f32.gmra.mxu0 %v5209
        %v5321 = vpop.f32.mrf.mxu0
        %v5322 = vadd.f32 0.0, %v5321
        %5323 = vmatmul.f32.gmra.mxu0 %v5212
        %v5324 = vpop.f32.mrf.mxu0
        %v5325 = vadd.f32 0.0, %v5324
        %5326 = vdwg.mxu0
        %v5327 = vadd.f32 %v5052, %v5232
        %v5328 = vadd.f32 %v5053, %v5235
        %v5329 = vadd.f32 %v5054, %v5238
        %v5330 = vadd.f32 %v5055, %v5241
        %v5331 = vadd.f32 %v5056, %v5244
        %v5332 = vadd.f32 %v5057, %v5247
        %v5333 = vadd.f32 %v5058, %v5250
        %v5334 = vadd.f32 %v5059, %v5253
        %v5335 = vadd.f32 %v5060, %v5256
        %v5336 = vadd.f32 %v5061, %v5259
        %v5337 = vadd.f32 %v5062, %v5262
        %v5338 = vadd.f32 %v5063, %v5265
        %v5339 = vadd.f32 %v5064, %v5268
        %v5340 = vadd.f32 %v5065, %v5271
        %v5341 = vadd.f32 %v5066, %v5274
        %v5342 = vadd.f32 %v5067, %v5277
        %v5343 = vadd.f32 %v5068, %v5280
        %v5344 = vadd.f32 %v5069, %v5283
        %v5345 = vadd.f32 %v5070, %v5286
        %v5346 = vadd.f32 %v5071, %v5289
        %v5347 = vadd.f32 %v5072, %v5292
        %v5348 = vadd.f32 %v5073, %v5295
        %v5349 = vadd.f32 %v5074, %v5298
        %v5350 = vadd.f32 %v5075, %v5301
        %v5351 = vadd.f32 %v5076, %v5304
        %v5352 = vadd.f32 %v5077, %v5307
        %v5353 = vadd.f32 %v5078, %v5310
        %v5354 = vadd.f32 %v5079, %v5313
        %v5355 = vadd.f32 %v5080, %v5316
        %v5356 = vadd.f32 %v5081, %v5319
        %v5357 = vadd.f32 %v5082, %v5322
        %v5358 = vadd.f32 %v5083, %v5325
        %s5359 = scalar_lea.vmem [#allocation2], 48
        %v5360 = vld [vmem:[%s5359] sm:$0xff]
        %v5361 = vld [vmem:[%s5359 + $0x8] sm:$0xff]
        %v5362 = vld [vmem:[%s5359 + $0x18] sm:$0xff]
        %v5363 = vld [vmem:[%s5359 + $0x20] sm:$0xff]
        %v5364 = vld [vmem:[%s5359 + $0x30] sm:$0xff]
        %v5365 = vld [vmem:[%s5359 + $0x38] sm:$0xff]
        %v5366 = vld [vmem:[%s5359 + $0x48] sm:$0xff]
        %v5367 = vld [vmem:[%s5359 + $0x50] sm:$0xff]
        %v5368 = vld [vmem:[%s5359 + $0x60] sm:$0xff]
        %v5369 = vld [vmem:[%s5359 + $0x68] sm:$0xff]
        %v5370 = vld [vmem:[%s5359 + $0x78] sm:$0xff]
        %v5371 = vld [vmem:[%s5359 + $0x80] sm:$0xff]
        %v5372 = vld [vmem:[%s5359 + $0x90] sm:$0xff]
        %v5373 = vld [vmem:[%s5359 + $0x98] sm:$0xff]
        %v5374 = vld [vmem:[%s5359 + $0xa8] sm:$0xff]
        %v5375 = vld [vmem:[%s5359 + $0xb0] sm:$0xff]
        %v5376 = vld [vmem:[%s5359 + $0xc0] sm:$0xff]
        %v5377 = vld [vmem:[%s5359 + $0xc8] sm:$0xff]
        %v5378 = vld [vmem:[%s5359 + $0xd8] sm:$0xff]
        %v5379 = vld [vmem:[%s5359 + $0xe0] sm:$0xff]
        %v5380 = vld [vmem:[%s5359 + $0xf0] sm:$0xff]
        %v5381 = vld [vmem:[%s5359 + $0xf8] sm:$0xff]
        %v5382 = vld [vmem:[%s5359 + $0x108] sm:$0xff]
        %v5383 = vld [vmem:[%s5359 + $0x110] sm:$0xff]
        %v5384 = vld [vmem:[%s5359 + $0x120] sm:$0xff]
        %v5385 = vld [vmem:[%s5359 + $0x128] sm:$0xff]
        %v5386 = vld [vmem:[%s5359 + $0x138] sm:$0xff]
        %v5387 = vld [vmem:[%s5359 + $0x140] sm:$0xff]
        %v5388 = vld [vmem:[%s5359 + $0x150] sm:$0xff]
        %v5389 = vld [vmem:[%s5359 + $0x158] sm:$0xff]
        %v5390 = vld [vmem:[%s5359 + $0x168] sm:$0xff]
        %v5391 = vld [vmem:[%s5359 + $0x170] sm:$0xff]
        %s5392 = scalar_lea.vmem %s9, 48
        %v5393 = vld [vmem:[%s5392] sm:$0xff]
        %v5395 = vsel %vm632, %v5360, 0
        %v5398 = vsel %vm632, %v5361, 0
        %v5401 = vsel %vm632, %v5362, 0
        %v5404 = vsel %vm632, %v5363, 0
        %v5407 = vsel %vm632, %v5364, 0
        %v5410 = vsel %vm632, %v5365, 0
        %v5413 = vsel %vm632, %v5366, 0
        %v5416 = vsel %vm632, %v5367, 0
        %v5419 = vsel %vm632, %v5368, 0
        %v5422 = vsel %vm632, %v5369, 0
        %v5425 = vsel %vm632, %v5370, 0
        %v5428 = vsel %vm632, %v5371, 0
        %v5431 = vsel %vm632, %v5372, 0
        %v5434 = vsel %vm632, %v5373, 0
        %v5437 = vsel %vm632, %v5374, 0
        %v5440 = vsel %vm632, %v5375, 0
        %v5443 = vsel %vm632, %v5376, 0
        %v5446 = vsel %vm632, %v5377, 0
        %v5449 = vsel %vm632, %v5378, 0
        %v5452 = vsel %vm632, %v5379, 0
        %v5455 = vsel %vm632, %v5380, 0
        %v5458 = vsel %vm632, %v5381, 0
        %v5461 = vsel %vm632, %v5382, 0
        %v5464 = vsel %vm632, %v5383, 0
        %v5467 = vsel %vm632, %v5384, 0
        %v5470 = vsel %vm632, %v5385, 0
        %v5473 = vsel %vm632, %v5386, 0
        %v5476 = vsel %vm632, %v5387, 0
        %v5479 = vsel %vm632, %v5388, 0
        %v5482 = vsel %vm632, %v5389, 0
        %v5485 = vsel %vm632, %v5390, 0
        %v5488 = vsel %vm632, %v5391, 0
        %5490 = vmatpush.msra.mxu0 0.0
        %5491 = vmatpush.msra.mxu0 0.0
        %5492 = vmatpush.msra.mxu0 0.0
        %5493 = vmatpush.msra.mxu0 0.0
        %5494 = vmatpush.msra.mxu0 0.0
        %5495 = vmatpush.msra.mxu0 0.0
        %5496 = vmatpush.msra.mxu0 0.0
        %5497 = vmatpush.msra.mxu0 0.0
        %5498 = vmatpush.msra.mxu0 0.0
        %5499 = vmatpush.msra.mxu0 0.0
        %5500 = vmatpush.msra.mxu0 0.0
        %5501 = vmatpush.msra.mxu0 0.0
        %5502 = vmatpush.msra.mxu0 0.0
        %5503 = vmatpush.msra.mxu0 0.0
        %5504 = vmatpush.msra.mxu0 0.0
        %5505 = vmatpush.msra.mxu0 %v5393
        %5506 = vmatmul.f32.gmra.mxu0 %v5395
        %v5507 = vpop.f32.mrf.mxu0
        %v5508 = vadd.f32 0.0, %v5507
        %5509 = vmatmul.f32.gmra.mxu0 %v5398
        %v5510 = vpop.f32.mrf.mxu0
        %v5511 = vadd.f32 0.0, %v5510
        %5512 = vmatmul.f32.gmra.mxu0 %v5401
        %v5513 = vpop.f32.mrf.mxu0
        %v5514 = vadd.f32 0.0, %v5513
        %5515 = vmatmul.f32.gmra.mxu0 %v5404
        %v5516 = vpop.f32.mrf.mxu0
        %v5517 = vadd.f32 0.0, %v5516
        %5518 = vmatmul.f32.gmra.mxu0 %v5407
        %v5519 = vpop.f32.mrf.mxu0
        %v5520 = vadd.f32 0.0, %v5519
        %5521 = vmatmul.f32.gmra.mxu0 %v5410
        %v5522 = vpop.f32.mrf.mxu0
        %v5523 = vadd.f32 0.0, %v5522
        %5524 = vmatmul.f32.gmra.mxu0 %v5413
        %v5525 = vpop.f32.mrf.mxu0
        %v5526 = vadd.f32 0.0, %v5525
        %5527 = vmatmul.f32.gmra.mxu0 %v5416
        %v5528 = vpop.f32.mrf.mxu0
        %v5529 = vadd.f32 0.0, %v5528
        %5530 = vmatmul.f32.gmra.mxu0 %v5419
        %v5531 = vpop.f32.mrf.mxu0
        %v5532 = vadd.f32 0.0, %v5531
        %5533 = vmatmul.f32.gmra.mxu0 %v5422
        %v5534 = vpop.f32.mrf.mxu0
        %v5535 = vadd.f32 0.0, %v5534
        %5536 = vmatmul.f32.gmra.mxu0 %v5425
        %v5537 = vpop.f32.mrf.mxu0
        %v5538 = vadd.f32 0.0, %v5537
        %5539 = vmatmul.f32.gmra.mxu0 %v5428
        %v5540 = vpop.f32.mrf.mxu0
        %v5541 = vadd.f32 0.0, %v5540
        %5542 = vmatmul.f32.gmra.mxu0 %v5431
        %v5543 = vpop.f32.mrf.mxu0
        %v5544 = vadd.f32 0.0, %v5543
        %5545 = vmatmul.f32.gmra.mxu0 %v5434
        %v5546 = vpop.f32.mrf.mxu0
        %v5547 = vadd.f32 0.0, %v5546
        %5548 = vmatmul.f32.gmra.mxu0 %v5437
        %v5549 = vpop.f32.mrf.mxu0
        %v5550 = vadd.f32 0.0, %v5549
        %5551 = vmatmul.f32.gmra.mxu0 %v5440
        %v5552 = vpop.f32.mrf.mxu0
        %v5553 = vadd.f32 0.0, %v5552
        %5554 = vmatmul.f32.gmra.mxu0 %v5443
        %v5555 = vpop.f32.mrf.mxu0
        %v5556 = vadd.f32 0.0, %v5555
        %5557 = vmatmul.f32.gmra.mxu0 %v5446
        %v5558 = vpop.f32.mrf.mxu0
        %v5559 = vadd.f32 0.0, %v5558
        %5560 = vmatmul.f32.gmra.mxu0 %v5449
        %v5561 = vpop.f32.mrf.mxu0
        %v5562 = vadd.f32 0.0, %v5561
        %5563 = vmatmul.f32.gmra.mxu0 %v5452
        %v5564 = vpop.f32.mrf.mxu0
        %v5565 = vadd.f32 0.0, %v5564
        %5566 = vmatmul.f32.gmra.mxu0 %v5455
        %v5567 = vpop.f32.mrf.mxu0
        %v5568 = vadd.f32 0.0, %v5567
        %5569 = vmatmul.f32.gmra.mxu0 %v5458
        %v5570 = vpop.f32.mrf.mxu0
        %v5571 = vadd.f32 0.0, %v5570
        %5572 = vmatmul.f32.gmra.mxu0 %v5461
        %v5573 = vpop.f32.mrf.mxu0
        %v5574 = vadd.f32 0.0, %v5573
        %5575 = vmatmul.f32.gmra.mxu0 %v5464
        %v5576 = vpop.f32.mrf.mxu0
        %v5577 = vadd.f32 0.0, %v5576
        %5578 = vmatmul.f32.gmra.mxu0 %v5467
        %v5579 = vpop.f32.mrf.mxu0
        %v5580 = vadd.f32 0.0, %v5579
        %5581 = vmatmul.f32.gmra.mxu0 %v5470
        %v5582 = vpop.f32.mrf.mxu0
        %v5583 = vadd.f32 0.0, %v5582
        %5584 = vmatmul.f32.gmra.mxu0 %v5473
        %v5585 = vpop.f32.mrf.mxu0
        %v5586 = vadd.f32 0.0, %v5585
        %5587 = vmatmul.f32.gmra.mxu0 %v5476
        %v5588 = vpop.f32.mrf.mxu0
        %v5589 = vadd.f32 0.0, %v5588
        %5590 = vmatmul.f32.gmra.mxu0 %v5479
        %v5591 = vpop.f32.mrf.mxu0
        %v5592 = vadd.f32 0.0, %v5591
        %5593 = vmatmul.f32.gmra.mxu0 %v5482
        %v5594 = vpop.f32.mrf.mxu0
        %v5595 = vadd.f32 0.0, %v5594
        %5596 = vmatmul.f32.gmra.mxu0 %v5485
        %v5597 = vpop.f32.mrf.mxu0
        %v5598 = vadd.f32 0.0, %v5597
        %5599 = vmatmul.f32.gmra.mxu0 %v5488
        %v5600 = vpop.f32.mrf.mxu0
        %v5601 = vadd.f32 0.0, %v5600
        %5602 = vdwg.mxu0
        %v5603 = vadd.f32 %v5327, %v5508
        %v5604 = vadd.f32 %v5328, %v5511
        %v5605 = vadd.f32 %v5329, %v5514
        %v5606 = vadd.f32 %v5330, %v5517
        %v5607 = vadd.f32 %v5331, %v5520
        %v5608 = vadd.f32 %v5332, %v5523
        %v5609 = vadd.f32 %v5333, %v5526
        %v5610 = vadd.f32 %v5334, %v5529
        %v5611 = vadd.f32 %v5335, %v5532
        %v5612 = vadd.f32 %v5336, %v5535
        %v5613 = vadd.f32 %v5337, %v5538
        %v5614 = vadd.f32 %v5338, %v5541
        %v5615 = vadd.f32 %v5339, %v5544
        %v5616 = vadd.f32 %v5340, %v5547
        %v5617 = vadd.f32 %v5341, %v5550
        %v5618 = vadd.f32 %v5342, %v5553
        %v5619 = vadd.f32 %v5343, %v5556
        %v5620 = vadd.f32 %v5344, %v5559
        %v5621 = vadd.f32 %v5345, %v5562
        %v5622 = vadd.f32 %v5346, %v5565
        %v5623 = vadd.f32 %v5347, %v5568
        %v5624 = vadd.f32 %v5348, %v5571
        %v5625 = vadd.f32 %v5349, %v5574
        %v5626 = vadd.f32 %v5350, %v5577
        %v5627 = vadd.f32 %v5351, %v5580
        %v5628 = vadd.f32 %v5352, %v5583
        %v5629 = vadd.f32 %v5353, %v5586
        %v5630 = vadd.f32 %v5354, %v5589
        %v5631 = vadd.f32 %v5355, %v5592
        %v5632 = vadd.f32 %v5356, %v5595
        %v5633 = vadd.f32 %v5357, %v5598
        %v5634 = vadd.f32 %v5358, %v5601
        %v5635 = vld [vmem:[%s5359 + $0x1] sm:$0xff]
        %v5636 = vld [vmem:[%s5359 + $0x9] sm:$0xff]
        %v5637 = vld [vmem:[%s5359 + $0x19] sm:$0xff]
        %v5638 = vld [vmem:[%s5359 + $0x21] sm:$0xff]
        %v5639 = vld [vmem:[%s5359 + $0x31] sm:$0xff]
        %v5640 = vld [vmem:[%s5359 + $0x39] sm:$0xff]
        %v5641 = vld [vmem:[%s5359 + $0x49] sm:$0xff]
        %v5642 = vld [vmem:[%s5359 + $0x51] sm:$0xff]
        %v5643 = vld [vmem:[%s5359 + $0x61] sm:$0xff]
        %v5644 = vld [vmem:[%s5359 + $0x69] sm:$0xff]
        %v5645 = vld [vmem:[%s5359 + $0x79] sm:$0xff]
        %v5646 = vld [vmem:[%s5359 + $0x81] sm:$0xff]
        %v5647 = vld [vmem:[%s5359 + $0x91] sm:$0xff]
        %v5648 = vld [vmem:[%s5359 + $0x99] sm:$0xff]
        %v5649 = vld [vmem:[%s5359 + $0xa9] sm:$0xff]
        %v5650 = vld [vmem:[%s5359 + $0xb1] sm:$0xff]
        %v5651 = vld [vmem:[%s5359 + $0xc1] sm:$0xff]
        %v5652 = vld [vmem:[%s5359 + $0xc9] sm:$0xff]
        %v5653 = vld [vmem:[%s5359 + $0xd9] sm:$0xff]
        %v5654 = vld [vmem:[%s5359 + $0xe1] sm:$0xff]
        %v5655 = vld [vmem:[%s5359 + $0xf1] sm:$0xff]
        %v5656 = vld [vmem:[%s5359 + $0xf9] sm:$0xff]
        %v5657 = vld [vmem:[%s5359 + $0x109] sm:$0xff]
        %v5658 = vld [vmem:[%s5359 + $0x111] sm:$0xff]
        %v5659 = vld [vmem:[%s5359 + $0x121] sm:$0xff]
        %v5660 = vld [vmem:[%s5359 + $0x129] sm:$0xff]
        %v5661 = vld [vmem:[%s5359 + $0x139] sm:$0xff]
        %v5662 = vld [vmem:[%s5359 + $0x141] sm:$0xff]
        %v5663 = vld [vmem:[%s5359 + $0x151] sm:$0xff]
        %v5664 = vld [vmem:[%s5359 + $0x159] sm:$0xff]
        %v5665 = vld [vmem:[%s5359 + $0x169] sm:$0xff]
        %v5666 = vld [vmem:[%s5359 + $0x171] sm:$0xff]
        %s5667 = scalar_lea.vmem %s9, 56
        %v5668 = vld [vmem:[%s5667] sm:$0xff]
        %v5670 = vsel %vm632, %v5635, 0
        %v5673 = vsel %vm632, %v5636, 0
        %v5676 = vsel %vm632, %v5637, 0
        %v5679 = vsel %vm632, %v5638, 0
        %v5682 = vsel %vm632, %v5639, 0
        %v5685 = vsel %vm632, %v5640, 0
        %v5688 = vsel %vm632, %v5641, 0
        %v5691 = vsel %vm632, %v5642, 0
        %v5694 = vsel %vm632, %v5643, 0
        %v5697 = vsel %vm632, %v5644, 0
        %v5700 = vsel %vm632, %v5645, 0
        %v5703 = vsel %vm632, %v5646, 0
        %v5706 = vsel %vm632, %v5647, 0
        %v5709 = vsel %vm632, %v5648, 0
        %v5712 = vsel %vm632, %v5649, 0
        %v5715 = vsel %vm632, %v5650, 0
        %v5718 = vsel %vm632, %v5651, 0
        %v5721 = vsel %vm632, %v5652, 0
        %v5724 = vsel %vm632, %v5653, 0
        %v5727 = vsel %vm632, %v5654, 0
        %v5730 = vsel %vm632, %v5655, 0
        %v5733 = vsel %vm632, %v5656, 0
        %v5736 = vsel %vm632, %v5657, 0
        %v5739 = vsel %vm632, %v5658, 0
        %v5742 = vsel %vm632, %v5659, 0
        %v5745 = vsel %vm632, %v5660, 0
        %v5748 = vsel %vm632, %v5661, 0
        %v5751 = vsel %vm632, %v5662, 0
        %v5754 = vsel %vm632, %v5663, 0
        %v5757 = vsel %vm632, %v5664, 0
        %v5760 = vsel %vm632, %v5665, 0
        %v5763 = vsel %vm632, %v5666, 0
        %5765 = vmatpush.msra.mxu0 0.0
        %5766 = vmatpush.msra.mxu0 0.0
        %5767 = vmatpush.msra.mxu0 0.0
        %5768 = vmatpush.msra.mxu0 0.0
        %5769 = vmatpush.msra.mxu0 0.0
        %5770 = vmatpush.msra.mxu0 0.0
        %5771 = vmatpush.msra.mxu0 0.0
        %5772 = vmatpush.msra.mxu0 0.0
        %5773 = vmatpush.msra.mxu0 0.0
        %5774 = vmatpush.msra.mxu0 0.0
        %5775 = vmatpush.msra.mxu0 0.0
        %5776 = vmatpush.msra.mxu0 0.0
        %5777 = vmatpush.msra.mxu0 0.0
        %5778 = vmatpush.msra.mxu0 0.0
        %5779 = vmatpush.msra.mxu0 0.0
        %5780 = vmatpush.msra.mxu0 %v5668
        %5781 = vmatmul.f32.gmra.mxu0 %v5670
        %v5782 = vpop.f32.mrf.mxu0
        %v5783 = vadd.f32 0.0, %v5782
        %5784 = vmatmul.f32.gmra.mxu0 %v5673
        %v5785 = vpop.f32.mrf.mxu0
        %v5786 = vadd.f32 0.0, %v5785
        %5787 = vmatmul.f32.gmra.mxu0 %v5676
        %v5788 = vpop.f32.mrf.mxu0
        %v5789 = vadd.f32 0.0, %v5788
        %5790 = vmatmul.f32.gmra.mxu0 %v5679
        %v5791 = vpop.f32.mrf.mxu0
        %v5792 = vadd.f32 0.0, %v5791
        %5793 = vmatmul.f32.gmra.mxu0 %v5682
        %v5794 = vpop.f32.mrf.mxu0
        %v5795 = vadd.f32 0.0, %v5794
        %5796 = vmatmul.f32.gmra.mxu0 %v5685
        %v5797 = vpop.f32.mrf.mxu0
        %v5798 = vadd.f32 0.0, %v5797
        %5799 = vmatmul.f32.gmra.mxu0 %v5688
        %v5800 = vpop.f32.mrf.mxu0
        %v5801 = vadd.f32 0.0, %v5800
        %5802 = vmatmul.f32.gmra.mxu0 %v5691
        %v5803 = vpop.f32.mrf.mxu0
        %v5804 = vadd.f32 0.0, %v5803
        %5805 = vmatmul.f32.gmra.mxu0 %v5694
        %v5806 = vpop.f32.mrf.mxu0
        %v5807 = vadd.f32 0.0, %v5806
        %5808 = vmatmul.f32.gmra.mxu0 %v5697
        %v5809 = vpop.f32.mrf.mxu0
        %v5810 = vadd.f32 0.0, %v5809
        %5811 = vmatmul.f32.gmra.mxu0 %v5700
        %v5812 = vpop.f32.mrf.mxu0
        %v5813 = vadd.f32 0.0, %v5812
        %5814 = vmatmul.f32.gmra.mxu0 %v5703
        %v5815 = vpop.f32.mrf.mxu0
        %v5816 = vadd.f32 0.0, %v5815
        %5817 = vmatmul.f32.gmra.mxu0 %v5706
        %v5818 = vpop.f32.mrf.mxu0
        %v5819 = vadd.f32 0.0, %v5818
        %5820 = vmatmul.f32.gmra.mxu0 %v5709
        %v5821 = vpop.f32.mrf.mxu0
        %v5822 = vadd.f32 0.0, %v5821
        %5823 = vmatmul.f32.gmra.mxu0 %v5712
        %v5824 = vpop.f32.mrf.mxu0
        %v5825 = vadd.f32 0.0, %v5824
        %5826 = vmatmul.f32.gmra.mxu0 %v5715
        %v5827 = vpop.f32.mrf.mxu0
        %v5828 = vadd.f32 0.0, %v5827
        %5829 = vmatmul.f32.gmra.mxu0 %v5718
        %v5830 = vpop.f32.mrf.mxu0
        %v5831 = vadd.f32 0.0, %v5830
        %5832 = vmatmul.f32.gmra.mxu0 %v5721
        %v5833 = vpop.f32.mrf.mxu0
        %v5834 = vadd.f32 0.0, %v5833
        %5835 = vmatmul.f32.gmra.mxu0 %v5724
        %v5836 = vpop.f32.mrf.mxu0
        %v5837 = vadd.f32 0.0, %v5836
        %5838 = vmatmul.f32.gmra.mxu0 %v5727
        %v5839 = vpop.f32.mrf.mxu0
        %v5840 = vadd.f32 0.0, %v5839
        %5841 = vmatmul.f32.gmra.mxu0 %v5730
        %v5842 = vpop.f32.mrf.mxu0
        %v5843 = vadd.f32 0.0, %v5842
        %5844 = vmatmul.f32.gmra.mxu0 %v5733
        %v5845 = vpop.f32.mrf.mxu0
        %v5846 = vadd.f32 0.0, %v5845
        %5847 = vmatmul.f32.gmra.mxu0 %v5736
        %v5848 = vpop.f32.mrf.mxu0
        %v5849 = vadd.f32 0.0, %v5848
        %5850 = vmatmul.f32.gmra.mxu0 %v5739
        %v5851 = vpop.f32.mrf.mxu0
        %v5852 = vadd.f32 0.0, %v5851
        %5853 = vmatmul.f32.gmra.mxu0 %v5742
        %v5854 = vpop.f32.mrf.mxu0
        %v5855 = vadd.f32 0.0, %v5854
        %5856 = vmatmul.f32.gmra.mxu0 %v5745
        %v5857 = vpop.f32.mrf.mxu0
        %v5858 = vadd.f32 0.0, %v5857
        %5859 = vmatmul.f32.gmra.mxu0 %v5748
        %v5860 = vpop.f32.mrf.mxu0
        %v5861 = vadd.f32 0.0, %v5860
        %5862 = vmatmul.f32.gmra.mxu0 %v5751
        %v5863 = vpop.f32.mrf.mxu0
        %v5864 = vadd.f32 0.0, %v5863
        %5865 = vmatmul.f32.gmra.mxu0 %v5754
        %v5866 = vpop.f32.mrf.mxu0
        %v5867 = vadd.f32 0.0, %v5866
        %5868 = vmatmul.f32.gmra.mxu0 %v5757
        %v5869 = vpop.f32.mrf.mxu0
        %v5870 = vadd.f32 0.0, %v5869
        %5871 = vmatmul.f32.gmra.mxu0 %v5760
        %v5872 = vpop.f32.mrf.mxu0
        %v5873 = vadd.f32 0.0, %v5872
        %5874 = vmatmul.f32.gmra.mxu0 %v5763
        %v5875 = vpop.f32.mrf.mxu0
        %v5876 = vadd.f32 0.0, %v5875
        %5877 = vdwg.mxu0
        %v5878 = vadd.f32 %v5603, %v5783
        %v5879 = vadd.f32 %v5604, %v5786
        %v5880 = vadd.f32 %v5605, %v5789
        %v5881 = vadd.f32 %v5606, %v5792
        %v5882 = vadd.f32 %v5607, %v5795
        %v5883 = vadd.f32 %v5608, %v5798
        %v5884 = vadd.f32 %v5609, %v5801
        %v5885 = vadd.f32 %v5610, %v5804
        %v5886 = vadd.f32 %v5611, %v5807
        %v5887 = vadd.f32 %v5612, %v5810
        %v5888 = vadd.f32 %v5613, %v5813
        %v5889 = vadd.f32 %v5614, %v5816
        %v5890 = vadd.f32 %v5615, %v5819
        %v5891 = vadd.f32 %v5616, %v5822
        %v5892 = vadd.f32 %v5617, %v5825
        %v5893 = vadd.f32 %v5618, %v5828
        %v5894 = vadd.f32 %v5619, %v5831
        %v5895 = vadd.f32 %v5620, %v5834
        %v5896 = vadd.f32 %v5621, %v5837
        %v5897 = vadd.f32 %v5622, %v5840
        %v5898 = vadd.f32 %v5623, %v5843
        %v5899 = vadd.f32 %v5624, %v5846
        %v5900 = vadd.f32 %v5625, %v5849
        %v5901 = vadd.f32 %v5626, %v5852
        %v5902 = vadd.f32 %v5627, %v5855
        %v5903 = vadd.f32 %v5628, %v5858
        %v5904 = vadd.f32 %v5629, %v5861
        %v5905 = vadd.f32 %v5630, %v5864
        %v5906 = vadd.f32 %v5631, %v5867
        %v5907 = vadd.f32 %v5632, %v5870
        %v5908 = vadd.f32 %v5633, %v5873
        %v5909 = vadd.f32 %v5634, %v5876
        %v5910 = vld [vmem:[%s5359 + $0x2] sm:$0xff]
        %v5911 = vld [vmem:[%s5359 + $0xa] sm:$0xff]
        %v5912 = vld [vmem:[%s5359 + $0x1a] sm:$0xff]
        %v5913 = vld [vmem:[%s5359 + $0x22] sm:$0xff]
        %v5914 = vld [vmem:[%s5359 + $0x32] sm:$0xff]
        %v5915 = vld [vmem:[%s5359 + $0x3a] sm:$0xff]
        %v5916 = vld [vmem:[%s5359 + $0x4a] sm:$0xff]
        %v5917 = vld [vmem:[%s5359 + $0x52] sm:$0xff]
        %v5918 = vld [vmem:[%s5359 + $0x62] sm:$0xff]
        %v5919 = vld [vmem:[%s5359 + $0x6a] sm:$0xff]
        %v5920 = vld [vmem:[%s5359 + $0x7a] sm:$0xff]
        %v5921 = vld [vmem:[%s5359 + $0x82] sm:$0xff]
        %v5922 = vld [vmem:[%s5359 + $0x92] sm:$0xff]
        %v5923 = vld [vmem:[%s5359 + $0x9a] sm:$0xff]
        %v5924 = vld [vmem:[%s5359 + $0xaa] sm:$0xff]
        %v5925 = vld [vmem:[%s5359 + $0xb2] sm:$0xff]
        %v5926 = vld [vmem:[%s5359 + $0xc2] sm:$0xff]
        %v5927 = vld [vmem:[%s5359 + $0xca] sm:$0xff]
        %v5928 = vld [vmem:[%s5359 + $0xda] sm:$0xff]
        %v5929 = vld [vmem:[%s5359 + $0xe2] sm:$0xff]
        %v5930 = vld [vmem:[%s5359 + $0xf2] sm:$0xff]
        %v5931 = vld [vmem:[%s5359 + $0xfa] sm:$0xff]
        %v5932 = vld [vmem:[%s5359 + $0x10a] sm:$0xff]
        %v5933 = vld [vmem:[%s5359 + $0x112] sm:$0xff]
        %v5934 = vld [vmem:[%s5359 + $0x122] sm:$0xff]
        %v5935 = vld [vmem:[%s5359 + $0x12a] sm:$0xff]
        %v5936 = vld [vmem:[%s5359 + $0x13a] sm:$0xff]
        %v5937 = vld [vmem:[%s5359 + $0x142] sm:$0xff]
        %v5938 = vld [vmem:[%s5359 + $0x152] sm:$0xff]
        %v5939 = vld [vmem:[%s5359 + $0x15a] sm:$0xff]
        %v5940 = vld [vmem:[%s5359 + $0x16a] sm:$0xff]
        %v5941 = vld [vmem:[%s5359 + $0x172] sm:$0xff]
        %s5942 = scalar_lea.vmem %s9, 64
        %v5943 = vld [vmem:[%s5942] sm:$0xff]
        %v5945 = vsel %vm632, %v5910, 0
        %v5948 = vsel %vm632, %v5911, 0
        %v5951 = vsel %vm632, %v5912, 0
        %v5954 = vsel %vm632, %v5913, 0
        %v5957 = vsel %vm632, %v5914, 0
        %v5960 = vsel %vm632, %v5915, 0
        %v5963 = vsel %vm632, %v5916, 0
        %v5966 = vsel %vm632, %v5917, 0
        %v5969 = vsel %vm632, %v5918, 0
        %v5972 = vsel %vm632, %v5919, 0
        %v5975 = vsel %vm632, %v5920, 0
        %v5978 = vsel %vm632, %v5921, 0
        %v5981 = vsel %vm632, %v5922, 0
        %v5984 = vsel %vm632, %v5923, 0
        %v5987 = vsel %vm632, %v5924, 0
        %v5990 = vsel %vm632, %v5925, 0
        %v5993 = vsel %vm632, %v5926, 0
        %v5996 = vsel %vm632, %v5927, 0
        %v5999 = vsel %vm632, %v5928, 0
        %v6002 = vsel %vm632, %v5929, 0
        %v6005 = vsel %vm632, %v5930, 0
        %v6008 = vsel %vm632, %v5931, 0
        %v6011 = vsel %vm632, %v5932, 0
        %v6014 = vsel %vm632, %v5933, 0
        %v6017 = vsel %vm632, %v5934, 0
        %v6020 = vsel %vm632, %v5935, 0
        %v6023 = vsel %vm632, %v5936, 0
        %v6026 = vsel %vm632, %v5937, 0
        %v6029 = vsel %vm632, %v5938, 0
        %v6032 = vsel %vm632, %v5939, 0
        %v6035 = vsel %vm632, %v5940, 0
        %v6038 = vsel %vm632, %v5941, 0
        %6040 = vmatpush.msra.mxu0 0.0
        %6041 = vmatpush.msra.mxu0 0.0
        %6042 = vmatpush.msra.mxu0 0.0
        %6043 = vmatpush.msra.mxu0 0.0
        %6044 = vmatpush.msra.mxu0 0.0
        %6045 = vmatpush.msra.mxu0 0.0
        %6046 = vmatpush.msra.mxu0 0.0
        %6047 = vmatpush.msra.mxu0 0.0
        %6048 = vmatpush.msra.mxu0 0.0
        %6049 = vmatpush.msra.mxu0 0.0
        %6050 = vmatpush.msra.mxu0 0.0
        %6051 = vmatpush.msra.mxu0 0.0
        %6052 = vmatpush.msra.mxu0 0.0
        %6053 = vmatpush.msra.mxu0 0.0
        %6054 = vmatpush.msra.mxu0 0.0
        %6055 = vmatpush.msra.mxu0 %v5943
        %6056 = vmatmul.f32.gmra.mxu0 %v5945
        %v6057 = vpop.f32.mrf.mxu0
        %v6058 = vadd.f32 0.0, %v6057
        %6059 = vmatmul.f32.gmra.mxu0 %v5948
        %v6060 = vpop.f32.mrf.mxu0
        %v6061 = vadd.f32 0.0, %v6060
        %6062 = vmatmul.f32.gmra.mxu0 %v5951
        %v6063 = vpop.f32.mrf.mxu0
        %v6064 = vadd.f32 0.0, %v6063
        %6065 = vmatmul.f32.gmra.mxu0 %v5954
        %v6066 = vpop.f32.mrf.mxu0
        %v6067 = vadd.f32 0.0, %v6066
        %6068 = vmatmul.f32.gmra.mxu0 %v5957
        %v6069 = vpop.f32.mrf.mxu0
        %v6070 = vadd.f32 0.0, %v6069
        %6071 = vmatmul.f32.gmra.mxu0 %v5960
        %v6072 = vpop.f32.mrf.mxu0
        %v6073 = vadd.f32 0.0, %v6072
        %6074 = vmatmul.f32.gmra.mxu0 %v5963
        %v6075 = vpop.f32.mrf.mxu0
        %v6076 = vadd.f32 0.0, %v6075
        %6077 = vmatmul.f32.gmra.mxu0 %v5966
        %v6078 = vpop.f32.mrf.mxu0
        %v6079 = vadd.f32 0.0, %v6078
        %6080 = vmatmul.f32.gmra.mxu0 %v5969
        %v6081 = vpop.f32.mrf.mxu0
        %v6082 = vadd.f32 0.0, %v6081
        %6083 = vmatmul.f32.gmra.mxu0 %v5972
        %v6084 = vpop.f32.mrf.mxu0
        %v6085 = vadd.f32 0.0, %v6084
        %6086 = vmatmul.f32.gmra.mxu0 %v5975
        %v6087 = vpop.f32.mrf.mxu0
        %v6088 = vadd.f32 0.0, %v6087
        %6089 = vmatmul.f32.gmra.mxu0 %v5978
        %v6090 = vpop.f32.mrf.mxu0
        %v6091 = vadd.f32 0.0, %v6090
        %6092 = vmatmul.f32.gmra.mxu0 %v5981
        %v6093 = vpop.f32.mrf.mxu0
        %v6094 = vadd.f32 0.0, %v6093
        %6095 = vmatmul.f32.gmra.mxu0 %v5984
        %v6096 = vpop.f32.mrf.mxu0
        %v6097 = vadd.f32 0.0, %v6096
        %6098 = vmatmul.f32.gmra.mxu0 %v5987
        %v6099 = vpop.f32.mrf.mxu0
        %v6100 = vadd.f32 0.0, %v6099
        %6101 = vmatmul.f32.gmra.mxu0 %v5990
        %v6102 = vpop.f32.mrf.mxu0
        %v6103 = vadd.f32 0.0, %v6102
        %6104 = vmatmul.f32.gmra.mxu0 %v5993
        %v6105 = vpop.f32.mrf.mxu0
        %v6106 = vadd.f32 0.0, %v6105
        %6107 = vmatmul.f32.gmra.mxu0 %v5996
        %v6108 = vpop.f32.mrf.mxu0
        %v6109 = vadd.f32 0.0, %v6108
        %6110 = vmatmul.f32.gmra.mxu0 %v5999
        %v6111 = vpop.f32.mrf.mxu0
        %v6112 = vadd.f32 0.0, %v6111
        %6113 = vmatmul.f32.gmra.mxu0 %v6002
        %v6114 = vpop.f32.mrf.mxu0
        %v6115 = vadd.f32 0.0, %v6114
        %6116 = vmatmul.f32.gmra.mxu0 %v6005
        %v6117 = vpop.f32.mrf.mxu0
        %v6118 = vadd.f32 0.0, %v6117
        %6119 = vmatmul.f32.gmra.mxu0 %v6008
        %v6120 = vpop.f32.mrf.mxu0
        %v6121 = vadd.f32 0.0, %v6120
        %6122 = vmatmul.f32.gmra.mxu0 %v6011
        %v6123 = vpop.f32.mrf.mxu0
        %v6124 = vadd.f32 0.0, %v6123
        %6125 = vmatmul.f32.gmra.mxu0 %v6014
        %v6126 = vpop.f32.mrf.mxu0
        %v6127 = vadd.f32 0.0, %v6126
        %6128 = vmatmul.f32.gmra.mxu0 %v6017
        %v6129 = vpop.f32.mrf.mxu0
        %v6130 = vadd.f32 0.0, %v6129
        %6131 = vmatmul.f32.gmra.mxu0 %v6020
        %v6132 = vpop.f32.mrf.mxu0
        %v6133 = vadd.f32 0.0, %v6132
        %6134 = vmatmul.f32.gmra.mxu0 %v6023
        %v6135 = vpop.f32.mrf.mxu0
        %v6136 = vadd.f32 0.0, %v6135
        %6137 = vmatmul.f32.gmra.mxu0 %v6026
        %v6138 = vpop.f32.mrf.mxu0
        %v6139 = vadd.f32 0.0, %v6138
        %6140 = vmatmul.f32.gmra.mxu0 %v6029
        %v6141 = vpop.f32.mrf.mxu0
        %v6142 = vadd.f32 0.0, %v6141
        %6143 = vmatmul.f32.gmra.mxu0 %v6032
        %v6144 = vpop.f32.mrf.mxu0
        %v6145 = vadd.f32 0.0, %v6144
        %6146 = vmatmul.f32.gmra.mxu0 %v6035
        %v6147 = vpop.f32.mrf.mxu0
        %v6148 = vadd.f32 0.0, %v6147
        %6149 = vmatmul.f32.gmra.mxu0 %v6038
        %v6150 = vpop.f32.mrf.mxu0
        %v6151 = vadd.f32 0.0, %v6150
        %6152 = vdwg.mxu0
        %v6153 = vadd.f32 %v5878, %v6058
        %v6154 = vadd.f32 %v5879, %v6061
        %v6155 = vadd.f32 %v5880, %v6064
        %v6156 = vadd.f32 %v5881, %v6067
        %v6157 = vadd.f32 %v5882, %v6070
        %v6158 = vadd.f32 %v5883, %v6073
        %v6159 = vadd.f32 %v5884, %v6076
        %v6160 = vadd.f32 %v5885, %v6079
        %v6161 = vadd.f32 %v5886, %v6082
        %v6162 = vadd.f32 %v5887, %v6085
        %v6163 = vadd.f32 %v5888, %v6088
        %v6164 = vadd.f32 %v5889, %v6091
        %v6165 = vadd.f32 %v5890, %v6094
        %v6166 = vadd.f32 %v5891, %v6097
        %v6167 = vadd.f32 %v5892, %v6100
        %v6168 = vadd.f32 %v5893, %v6103
        %v6169 = vadd.f32 %v5894, %v6106
        %v6170 = vadd.f32 %v5895, %v6109
        %v6171 = vadd.f32 %v5896, %v6112
        %v6172 = vadd.f32 %v5897, %v6115
        %v6173 = vadd.f32 %v5898, %v6118
        %v6174 = vadd.f32 %v5899, %v6121
        %v6175 = vadd.f32 %v5900, %v6124
        %v6176 = vadd.f32 %v5901, %v6127
        %v6177 = vadd.f32 %v5902, %v6130
        %v6178 = vadd.f32 %v5903, %v6133
        %v6179 = vadd.f32 %v5904, %v6136
        %v6180 = vadd.f32 %v5905, %v6139
        %v6181 = vadd.f32 %v5906, %v6142
        %v6182 = vadd.f32 %v5907, %v6145
        %v6183 = vadd.f32 %v5908, %v6148
        %v6184 = vadd.f32 %v5909, %v6151
        %6185 = vst.msk [vmem:[%s609] sm:$0xff] %vm632, %v6153
        %6186 = vst.msk [vmem:[%s609 + $0x8] sm:$0xff] %vm632, %v6154
        %6187 = vst.msk [vmem:[%s609 + $0x10] sm:$0xff] %vm632, %v6155
        %6188 = vst.msk [vmem:[%s609 + $0x18] sm:$0xff] %vm632, %v6156
        %6189 = vst.msk [vmem:[%s609 + $0x20] sm:$0xff] %vm632, %v6157
        %6190 = vst.msk [vmem:[%s609 + $0x28] sm:$0xff] %vm632, %v6158
        %6191 = vst.msk [vmem:[%s609 + $0x30] sm:$0xff] %vm632, %v6159
        %6192 = vst.msk [vmem:[%s609 + $0x38] sm:$0xff] %vm632, %v6160
        %6193 = vst.msk [vmem:[%s609 + $0x40] sm:$0xff] %vm632, %v6161
        %6194 = vst.msk [vmem:[%s609 + $0x48] sm:$0xff] %vm632, %v6162
        %6195 = vst.msk [vmem:[%s609 + $0x50] sm:$0xff] %vm632, %v6163
        %6196 = vst.msk [vmem:[%s609 + $0x58] sm:$0xff] %vm632, %v6164
        %6197 = vst.msk [vmem:[%s609 + $0x60] sm:$0xff] %vm632, %v6165
        %6198 = vst.msk [vmem:[%s609 + $0x68] sm:$0xff] %vm632, %v6166
        %6199 = vst.msk [vmem:[%s609 + $0x70] sm:$0xff] %vm632, %v6167
        %6200 = vst.msk [vmem:[%s609 + $0x78] sm:$0xff] %vm632, %v6168
        %6201 = vst.msk [vmem:[%s609 + $0x80] sm:$0xff] %vm632, %v6169
        %6202 = vst.msk [vmem:[%s609 + $0x88] sm:$0xff] %vm632, %v6170
        %6203 = vst.msk [vmem:[%s609 + $0x90] sm:$0xff] %vm632, %v6171
        %6204 = vst.msk [vmem:[%s609 + $0x98] sm:$0xff] %vm632, %v6172
        %6205 = vst.msk [vmem:[%s609 + $0xa0] sm:$0xff] %vm632, %v6173
        %6206 = vst.msk [vmem:[%s609 + $0xa8] sm:$0xff] %vm632, %v6174
        %6207 = vst.msk [vmem:[%s609 + $0xb0] sm:$0xff] %vm632, %v6175
        %6208 = vst.msk [vmem:[%s609 + $0xb8] sm:$0xff] %vm632, %v6176
        %6209 = vst.msk [vmem:[%s609 + $0xc0] sm:$0xff] %vm632, %v6177
        %6210 = vst.msk [vmem:[%s609 + $0xc8] sm:$0xff] %vm632, %v6178
        %6211 = vst.msk [vmem:[%s609 + $0xd0] sm:$0xff] %vm632, %v6179
        %6212 = vst.msk [vmem:[%s609 + $0xd8] sm:$0xff] %vm632, %v6180
        %6213 = vst.msk [vmem:[%s609 + $0xe0] sm:$0xff] %vm632, %v6181
        %6214 = vst.msk [vmem:[%s609 + $0xe8] sm:$0xff] %vm632, %v6182
        %6215 = vst.msk [vmem:[%s609 + $0xf0] sm:$0xff] %vm632, %v6183
        %6216 = vst.msk [vmem:[%s609 + $0xf8] sm:$0xff] %vm632, %v6184
        %p6217 = scmp.lt.s32.totalorder %s35, 1
        %s6218 = scalar_select %p6217, %s35, 1
        %s6219 = smul.addr %s6218, 32
        %s6220 = smul.addr %s6219, 8
        %s6221 = scalar_lea.vmem %s15, %s6220
        %s6222 = sand.u32 %s399, 1
        %s6223 = scalar_lea.sflag [#allocation6], %s6222
        %s6224 = sand.u32 %s399, 1
        %s6225 = smul.addr %s6224, 64
        %s6226 = scalar_lea.vmem [#allocation5], %s6225
        %s6227 = sand.u32 %s425, 1
        %s6228 = scalar_lea.sflag [#allocation8], %s6227
        %s6229 = sand.u32 %s425, 1
        %s6230 = smul.addr %s6229, 16
        %s6231 = scalar_lea.vmem [#allocation7], %s6230
        // Predicated region
        $region81: #{fpn_forward.2} parent=79 // pred_check
          %p6232 = pneg %p383
        $region82: #{fpn_forward.2} parent=79 // pred_check_branch
          %6234 = sbr.rel (%p6232) target = $region84
        $region83: #{fpn_forward.2} parent=79 // pred_region
          _
        $region84: #{fpn_forward.2} parent=79 // pred_fallthru
          _
        // Predicated region
        $region85: #{fpn_forward.2} parent=79 // pred_check
          %p6235 = pneg %p409
        $region86: #{fpn_forward.2} parent=79 // pred_check_branch
          %6237 = sbr.rel (%p6235) target = $region88
        $region87: #{fpn_forward.2} parent=79 // pred_region
          %6239 = vsyncadd %s6223, 0
          %s6240 = smul.addr %s35, 8
          %s6241 = smul.addr %s6240, 8
          %s6242 = scalar_lea.hbm %s16, %s6241
          %s6243 = sshll.u32 %s6226, 4
          %s6244 = int_to_ptr.vmem [resolvable:$true] %s6243
          %s6245 = sshll.u32 %s6242, 4
          %s6246 = int_to_ptr.hbm [resolvable:$true] %s6245
          %6251 = dma.vmem_to_hbm [thread:$0]  %s6244, 1024, %s6246, %s6223, 128, 128, 8
        $region88: #{fpn_forward.2} parent=79 // pred_fallthru
          _
        // Predicated region
        $region89: #{fpn_forward.2} parent=79 // pred_check
          %p6252 = pneg %p435
        $region90: #{fpn_forward.2} parent=79 // pred_check_branch
          %6254 = sbr.rel (%p6252) target = $region92
        $region91: #{fpn_forward.2} parent=79 // pred_region
          %6256 = vsyncadd %s6228, 0
          %s6257 = smul.addr %s35, 2
          %s6258 = smul.addr %s6257, 8
          %s6259 = scalar_lea.hbm %s17, %s6258
          %s6260 = sshll.u32 %s6231, 4
          %s6261 = int_to_ptr.vmem [resolvable:$true] %s6260
          %s6262 = sshll.u32 %s6259, 4
          %s6263 = int_to_ptr.hbm [resolvable:$true] %s6262
          %6268 = dma.vmem_to_hbm [thread:$0]  %s6261, 256, %s6263, %s6228, 128, 128, 8
        $region92: #{fpn_forward.2} parent=79 // pred_fallthru
          _
      $region80: #{fpn_forward.2} parent=5 // pred_fallthru
        _
      %p6269 = scmp.le.s32.totalorder 2, %s30
      // Predicated region
      $region93: #{fpn_forward.2} parent=5 // pred_check
        %p6270 = pneg %p6269
      $region94: #{fpn_forward.2} parent=5 // pred_check_branch
        %6272 = sbr.rel (%p6270) target = $region96
      $region95: #{fpn_forward.2} parent=5 // pred_region
        %s6273 = ssub.s32 %s30, 2
        // Predicated region
        $region97: #{fpn_forward.2} parent=95 // pred_check
          %p6274 = pneg %p389
        $region98: #{fpn_forward.2} parent=95 // pred_check_branch
          %6276 = sbr.rel (%p6274) target = $region100
        $region99: #{fpn_forward.2} parent=95 // pred_region
          %p6277 = scmp.lt.s32.totalorder %s36, 1
          %s6278 = scalar_select %p6277, %s36, 1
          %s6279 = smul.addr %s6278, 32
          %s6280 = smul.addr %s6279, 8
          %s6281 = scalar_lea.vmem %s15, %s6280
        $region100: #{fpn_forward.2} parent=95 // pred_fallthru
          _
        // Predicated region
        $region101: #{fpn_forward.2} parent=95 // pred_check
          %p6282 = pneg %p415
        $region102: #{fpn_forward.2} parent=95 // pred_check_branch
          %6284 = sbr.rel (%p6282) target = $region104
        $region103: #{fpn_forward.2} parent=95 // pred_region
          %s6285 = sand.u32 %s400, 1
          %s6286 = scalar_lea.sflag [#allocation6], %s6285
          %s6287 = sand.u32 %s400, 1
          %s6288 = smul.addr %s6287, 64
          %s6289 = scalar_lea.vmem [#allocation5], %s6288
          %6291 = dma.done %s6286, 1024
        $region104: #{fpn_forward.2} parent=95 // pred_fallthru
          _
        // Predicated region
        $region105: #{fpn_forward.2} parent=95 // pred_check
          %p6292 = pneg %p441
        $region106: #{fpn_forward.2} parent=95 // pred_check_branch
          %6294 = sbr.rel (%p6292) target = $region108
        $region107: #{fpn_forward.2} parent=95 // pred_region
          %s6295 = sand.u32 %s426, 1
          %s6296 = scalar_lea.sflag [#allocation8], %s6295
          %s6297 = sand.u32 %s426, 1
          %s6298 = smul.addr %s6297, 16
          %s6299 = scalar_lea.vmem [#allocation7], %s6298
          %6301 = dma.done %s6296, 256
        $region108: #{fpn_forward.2} parent=95 // pred_fallthru
          _
      $region96: #{fpn_forward.2} parent=5 // pred_fallthru
        _
    $region6: #{fpn_forward.2} parent=1 // loop_footer
      %s34 = sadd.s32 1, %s30
    $region7: #{fpn_forward.2} parent=1 // loop_footer_branch
      %29 = sbr.rel target = $region3
    $region8: #{fpn_forward.2} parent=1 // loop_exit
      _
    %6302 = vsyncpa [#allocation6], 1
    %s6303 = scalar_lea.sflag [#allocation6], 1
    %6304 = vsyncpa %s6303, 1
    %6305 = vsyncpa [#allocation8], 1
    %s6306 = scalar_lea.sflag [#allocation8], 1
    %6307 = vsyncpa %s6306, 1

</llo_original>
